<compile_context>
chip_gen: v6e
topology: v6e:2x2x1
jax: 0.10.0
libtpu: 0.0.40
codegen_flags: <defaults>
</compile_context>

<pallas_src>
import jax
import jax.numpy as jnp
from jax.experimental import pallas as pl
from jax.experimental.pallas import tpu as pltpu

_HI = jax.lax.Precision.HIGHEST       # reference only
_LN_EPS = 1e-6                        # nn.LayerNorm(eps=1e-6) everywhere in AFNONet
_NUM_BLOCKS = 4                       # AdaptiveFourierNeuralOperator.num_blocks


# --------------------------------------------------------------------------------------
# small in-kernel helpers (pure jnp, trace-time inlined)
# --------------------------------------------------------------------------------------
def _dot(a, b):
    # bf16 operands -> single-pass MXU matmul, f32 accumulation.
    return jnp.dot(a.astype(jnp.bfloat16), b.astype(jnp.bfloat16),
                   preferred_element_type=jnp.float32)


def _layer_norm(x, g, b):
    mu = jnp.mean(x, axis=-1, keepdims=True)
    var = jnp.mean(jnp.square(x - mu), axis=-1, keepdims=True)
    return (x - mu) * jax.lax.rsqrt(var + _LN_EPS) * g + b


def _gelu(x):
    # PyTorch nn.GELU (erf based); erf via Abramowitz & Stegun 7.1.26 (|err| < 1.5e-7).
    # exp() and the reciprocal go to the EUP slot; the polynomial stays on the VPU.
    u = x * 0.7071067811865476
    au = jnp.abs(u)
    t = pl.reciprocal(1.0 + 0.3275911 * au, approx=True)
    poly = ((((1.061405429 * t - 1.453152027) * t + 1.421413741) * t
             - 0.284496736) * t + 0.254829592) * t
    erf_abs = 1.0 - poly * jnp.exp(-au * au)
    erf_u = jnp.where(u >= 0, erf_abs, -erf_abs)
    return 0.5 * x * (1.0 + erf_u)


# --------------------------------------------------------------------------------------
# Pallas kernels
# --------------------------------------------------------------------------------------
def _blocks_kernel(patches_ref, wp_ref, posb_ref, fr_ref, fi_ref, gr_ref, gi_ref,
                   wmat_ref, wfc1_ref, vec_ref, bfc1_ref, o_ref):
    """One grid step == one transformer Block; the token slab is the resident output."""
    BN, D = o_ref.shape
    Sp, N = fr_ref.shape
    B = BN // N
    Hd = wfc1_ref.shape[-1]
    r = Hd // D

    # Grid step 0 also does the patch embedding (bias + pos folded into posb).
    @pl.when(pl.program_id(0) == 0)
    def _():
        o_ref[...] = _dot(patches_ref[...], wp_ref[...]) + posb_ref[...]

    x = o_ref[...]                                            # (B*N, D) residual stream

    wm = wmat_ref[0]                                          # (5, D, D) bf16
    wb, w1r, w1i, w2r, w2i = wm[0], wm[1], wm[2], wm[3], wm[4]
    vec = vec_ref[0]                                          # (9, D) f32
    ln1g, ln1b, bb = vec[0:1], vec[1:2], vec[2:3]
    b1r, b1i, b2r, b2i = vec[3:4], vec[4:5], vec[5:6], vec[6:7]
    ln2g, ln2b = vec[7:8], vec[8:9]

    # ---- norm1 + AFNO filter -----------------------------------------------------
    xn = _layer_norm(x, ln1g, ln1b)
    bias = _dot(xn, wb) + bb                                  # Conv1d(k=1) bias path

    # rfft2 (ortho) as real matmuls against (row-padded) DFT matrices, per batch image.
    # TODO(synk): replace the dense (S,N) contraction by separable row/column DFTs
    # inside the kernel for production h, w.
    fr, fi = fr_ref[...], fi_ref[...]
    xb = xn.reshape(B, N, D)
    zr = jnp.concatenate([_dot(fr, xb[b]) for b in range(B)], axis=0)   # (B*Sp, D)
    zi = jnp.concatenate([_dot(fi, xb[b]) for b in range(B)], axis=0)

    # Block-diagonal complex spectral MLP (weights pre-assembled as dense D x D: at
    # D=32 this is below one MXU tile so block-diag costs nothing extra).
    o1r = jnp.maximum(_dot(zr, w1r) - _dot(zi, w1i) + b1r, 0.0)
    o1i = jnp.maximum(_dot(zr, w1i) + _dot(zi, w1r) + b1i, 0.0)
    o2r = _dot(o1r, w2r) - _dot(o1i, w2i) + b2r
    # NOTE: matches the original module exactly: imag update uses the *new* real part.
    o2i = _dot(o2r, w2i) + _dot(o1i, w2r) + b2i

    # irfft2 (ortho); padded spectral rows hit the zero columns of Gr/Gi (no effect).
    gr, gi = gr_ref[...], gi_ref[...]
    o2r_b = o2r.reshape(B, Sp, D)
    o2i_b = o2i.reshape(B, Sp, D)
    filt = jnp.concatenate(
        [_dot(gr, o2r_b[b]) + _dot(gi, o2i_b[b]) for b in range(B)], axis=0)  # (BN, D)

    # ---- double skip + norm2 + Mlp -------------------------------------------------
    x = x + filt + bias
    xn2 = _layer_norm(x, ln2g, ln2b)
    g = _gelu(_dot(xn2, wfc1_ref[0]) + bfc1_ref[0])
    pooled = jnp.mean(g.reshape(BN, D, r), axis=-1)           # AdaptiveAvgPool1d on VPU
    o_ref[...] = x + pooled


def _decoder_kernel(x_ref, g_ref, b_ref, w1_ref, b1_ref, w2_ref, b2_ref,
                    w3_ref, b3_ref, o_ref):
    """Fused: final LayerNorm + three ConvTranspose(k=2,s=2) as per-token matmuls."""
    xn = _layer_norm(x_ref[...], g_ref[...], b_ref[...])
    y = jnp.tanh(_dot(xn, w1_ref[...]) + b1_ref[...])
    y = jnp.tanh(_dot(y, w2_ref[...]) + b2_ref[...])
    o_ref[...] = (_dot(y, w3_ref[...]) + b3_ref[...]).astype(o_ref.dtype)


# --------------------------------------------------------------------------------------
# BlockSpec helpers
# --------------------------------------------------------------------------------------
def _const_spec(shape):
    """Full-array block, constant index (loaded once); single-buffered if supported."""
    nd = len(shape)
    idx = lambda *_: (0,) * nd
    if hasattr(pl, "Buffered"):
        try:
            return pl.BlockSpec(shape, idx, pipeline_mode=pl.Buffered(1))
        except TypeError:
            pass
    return pl.BlockSpec(shape, idx)


def _layer_spec(shape):
    """Per-layer stacked weights: leading depth axis selected by the grid index."""
    nd = len(shape)
    return pl.BlockSpec((1,) + tuple(shape[1:]),
                        lambda l, _n=nd: (l,) + (0,) * (_n - 1))


# --------------------------------------------------------------------------------------
# host-side setup helpers
# --------------------------------------------------------------------------------------
def _build_dft_mats(h, w):
    """Exact real-matrix forms of rfft2 / irfft2 (norm='ortho') built from separable
    1-D cos/sin factors (no O(N^2) FFT identity probe)."""
    wf = w // 2 + 1
    scale = float(h * w) ** -0.5
    i = jnp.arange(h, dtype=jnp.float32)
    j = jnp.arange(w, dtype=jnp.float32)
    kh = jnp.arange(h, dtype=jnp.float32)
    kw = jnp.arange(wf, dtype=jnp.float32)
    ph = 2.0 * jnp.pi * jnp.outer(i, kh) / h            # (i, kh)
    pw = 2.0 * jnp.pi * jnp.outer(j, kw) / w            # (j, kw)
    chr_, chi_ = jnp.cos(ph), -jnp.sin(ph)
    cwr_, cwi_ = jnp.cos(pw), -jnp.sin(pw)
    # forward: X[kh,kw] = sum_{i,j} x[i,j] * (ch * cw) * scale  (complex product)
    fr = jnp.einsum("ik,jl->klij", chr_, cwr_) - jnp.einsum("ik,jl->klij", chi_, cwi_)
    fi = jnp.einsum("ik,jl->klij", chr_, cwi_) + jnp.einsum("ik,jl->klij", chi_, cwr_)
    Fr = (scale * fr).reshape(h * wf, h * w)
    Fi = (scale * fi).reshape(h * wf, h * w)
    # inverse: x[i,j] = sum m[kw]*(Zr cos(phi) - Zi sin(phi))*scale, phi=2pi(kh i/h+kw j/w)
    # m = 1 for kw in {0, w/2} (no Hermitian mirror), else 2.
    m = jnp.where((jnp.arange(wf) == 0) | (2 * jnp.arange(wf) == w), 1.0, 2.0)
    phi = (2.0 * jnp.pi) * (kh[:, None, None, None] * i[None, None, :, None] / h
                            + kw[None, :, None, None] * j[None, None, None, :] / w)
    Gr = (m[None, :, None, None] * jnp.cos(phi) * scale).reshape(h * wf, h * w).T
    Gi = (-m[None, :, None, None] * jnp.sin(phi) * scale).reshape(h * wf, h * w).T
    return Fr, Fi, Gr, Gi


def _block_diag(mats):
    rows = sum(m.shape[0] for m in mats)
    cols = sum(m.shape[1] for m in mats)
    out = jnp.zeros((rows, cols), jnp.float32)
    r = c = 0
    for m in mats:
        out = out.at[r:r + m.shape[0], c:c + m.shape[1]].set(m.astype(jnp.float32))
        r += m.shape[0]
        c += m.shape[1]
    return out


# --------------------------------------------------------------------------------------
# AFNONet forward (Pallas)
# --------------------------------------------------------------------------------------
def afnonet_forward(x, P, cfg):
    B = x.shape[0]
    C, (Hi, Wi), ps, D = cfg["in_chans"], cfg["img"], cfg["patch"], cfg["dim"]
    co = cfg["out_chans"]
    depth = cfg["depth"]
    h, w = Hi // ps, Wi // ps
    N = h * w
    BN = B * N
    nb = _NUM_BLOCKS
    Hd = int(D * cfg["mlp_ratio"])
    assert D % nb == 0 and Hd % D == 0 and BN % 8 == 0
    bf16 = jnp.bfloat16

    x = x.astype(jnp.float32)

    # ---- patch extraction (layout plumbing stays in the JAX wrapper) ----
    patches = (x.reshape(B, C, h, ps, w, ps).transpose(0, 2, 4, 1, 3, 5)
               .reshape(BN, C * ps * ps))
    wp = P["patch_w"].reshape(D, C * ps * ps).T.astype(bf16)
    posb = jnp.tile(P["pos"] + P["patch_b"][None, :], (B, 1))          # (BN, D)

    # ---- DFT matrices (separably built, spectral rows padded to a sublane multiple) ----
    Fr, Fi, Gr, Gi = _build_dft_mats(h, w)
    S = Fr.shape[0]
    Sp = ((S + 7) // 8) * 8
    Fr = jnp.pad(Fr, ((0, Sp - S), (0, 0))).astype(bf16)
    Fi = jnp.pad(Fi, ((0, Sp - S), (0, 0))).astype(bf16)
    Gr = jnp.pad(Gr, ((0, 0), (0, Sp - S))).astype(bf16)
    Gi = jnp.pad(Gi, ((0, 0), (0, Sp - S))).astype(bf16)

    # ---- per-layer weights stacked along a leading depth axis ----
    wmats = jnp.stack([
        jnp.stack([bp["Wb"].T,
                   _block_diag([bp["w1"][0, i] for i in range(nb)]),
                   _block_diag([bp["w1"][1, i] for i in range(nb)]),
                   _block_diag([bp["w2"][0, i] for i in range(nb)]),
                   _block_diag([bp["w2"][1, i] for i in range(nb)])], axis=0)
        for bp in P["blocks"]], axis=0).astype(bf16)                    # (depth, 5, D, D)
    wfc1 = jnp.stack([bp["fc1_w"].T for bp in P["blocks"]], 0).astype(bf16)  # (depth,D,Hd)
    vecs = jnp.stack([
        jnp.stack([bp["ln1_g"], bp["ln1_b"], bp["bb"],
                   bp["b1"][0].reshape(D), bp["b1"][1].reshape(D),
                   bp["b2"][0].reshape(D), bp["b2"][1].reshape(D),
                   bp["ln2_g"], bp["ln2_b"]], axis=0)
        for bp in P["blocks"]], axis=0)                                 # (depth, 9, D)
    bfc1 = jnp.stack([bp["fc1_b"] for bp in P["blocks"]], 0).reshape(depth, 1, Hd)

    tokens = pl.pallas_call(
        _blocks_kernel,
        out_shape=jax.ShapeDtypeStruct((BN, D), jnp.float32),
        grid=(depth,),
        in_specs=[_const_spec(patches.shape), _const_spec(wp.shape),
                  _const_spec(posb.shape),
                  _const_spec(Fr.shape), _const_spec(Fi.shape),
                  _const_spec(Gr.shape), _const_spec(Gi.shape),
                  _layer_spec(wmats.shape), _layer_spec(wfc1.shape),
                  _layer_spec(vecs.shape), _layer_spec(bfc1.shape)],
        out_specs=pl.BlockSpec((BN, D), lambda l: (0, 0)),
        compiler_params=pltpu.CompilerParams(dimension_semantics=("arbitrary",)),
    )(patches, wp, posb, Fr, Fi, Gr, Gi, wmats, wfc1, vecs, bfc1)

    # ---- fused decoder head (norm + 3x ConvT(k=2,s=2)) ----
    # 2x2 sub-pixel structure folded into block-diagonal matrices; output columns are
    # permuted so the single wrapper-side pixel shuffle is a rank-6 transpose.
    c1, c2 = co * 16, co * 4
    W1 = P["dec1_w"].transpose(0, 2, 3, 1).reshape(D, 4 * c1).astype(bf16)
    W2 = _block_diag([P["dec2_w"].transpose(0, 2, 3, 1).reshape(c1, 4 * c2)] * 4
                     ).astype(bf16)                                     # (4c1, 16c2)
    W3_raw = _block_diag([P["head_w"].transpose(0, 2, 3, 1).reshape(c2, 4 * co)] * 16)
    b1 = jnp.tile(P["dec1_b"], 4).reshape(1, 4 * c1)
    b2 = jnp.tile(P["dec2_b"], 16).reshape(1, 16 * c2)
    b3_raw = jnp.tile(P["head_b"], 64).reshape(1, 64 * co)

    # column permutation: (di1,dj1,di2,dj2,di3,dj3,c) -> (di1,di2,di3,dj1,dj2,dj3,c)
    perm = []
    for di1 in range(2):
        for di2 in range(2):
            for di3 in range(2):
                for dj1 in range(2):
                    for dj2 in range(2):
                        for dj3 in range(2):
                            for c in range(co):
                                old = ((((((di1 * 2 + dj1) * 2 + di2) * 2 + dj2) * 2
                                         + di3) * 2 + dj3) * co + c)
                                perm.append(old)
    perm = jnp.array(perm, dtype=jnp.int32)
    W3 = W3_raw[:, perm].astype(bf16)
    b3 = b3_raw[:, perm]
    ng = P["norm_g"].reshape(1, D)
    nrm_b = P["norm_b"].reshape(1, D)

    Wout = 64 * co
    TM = BN
    for cand in (512, 256, 128):
        if BN > cand and BN % cand == 0:
            TM = cand
            break
    y = pl.pallas_call(
        _decoder_kernel,
        out_shape=jax.ShapeDtypeStruct((BN, Wout), jnp.float32),
        grid=(BN // TM,),
        in_specs=[pl.BlockSpec((TM, D), lambda i: (i, 0)),
                  _const_spec(ng.shape), _const_spec(nrm_b.shape),
                  _const_spec(W1.shape), _const_spec(b1.shape),
                  _const_spec(W2.shape), _const_spec(b2.shape),
                  _const_spec(W3.shape), _const_spec(b3.shape)],
        out_specs=pl.BlockSpec((TM, Wout), lambda i: (i, 0)),
        compiler_params=pltpu.CompilerParams(dimension_semantics=("parallel",)),
    )(tokens, ng, nrm_b, W1, b1, W2, b2, W3, b3)

    # single pixel shuffle in the wrapper (pure JAX, tiny array)
    y = y.reshape(B, h, w, 8, 8, co)
    y = y.transpose(0, 5, 1, 3, 2, 4)
    return y.reshape(B, co, 8 * h, 8 * w)


# --------------------------------------------------------------------------------------
# pure-JAX reference (mirrors the PyTorch module, f32 / HIGHEST precision)
# --------------------------------------------------------------------------------------
def _ref_ln(x, g, b):
    mu = jnp.mean(x, axis=-1, keepdims=True)
    var = jnp.mean(jnp.square(x - mu), axis=-1, keepdims=True)
    return (x - mu) / jnp.sqrt(var + _LN_EPS) * g + b


def afnonet_reference(x, P, cfg):
    B = x.shape[0]
    C, (Hi, Wi), ps, D = cfg["in_chans"], cfg["img"], cfg["patch"], cfg["dim"]
    h, w = Hi // ps, Wi // ps
    N = h * w
    nb = _NUM_BLOCKS
    bs = D // nb
    Hd = int(D * cfg["mlp_ratio"])

    xr = x.astype(jnp.float32).reshape(B, C, h, ps, w, ps)
    t = jnp.einsum("bcipjq,dcpq->bijd", xr, P["patch_w"], precision=_HI).reshape(B, N, D)
    t = t + P["patch_b"] + P["pos"]

    for bp in P["blocks"]:
        res = t
        tn = _ref_ln(t, bp["ln1_g"], bp["ln1_b"])
        bias = jnp.einsum("bnc,dc->bnd", tn, bp["Wb"], precision=_HI) + bp["bb"]
        z = jnp.fft.rfft2(tn.reshape(B, h, w, D), axes=(1, 2), norm="ortho")
        z = z.reshape(B, h, w // 2 + 1, nb, bs)
        zr, zi = jnp.real(z), jnp.imag(z)
        mul = lambda a, wt: jnp.einsum("bhfnd,ndk->bhfnk", a, wt, precision=_HI)
        o1r = jax.nn.relu(mul(zr, bp["w1"][0]) - mul(zi, bp["w1"][1]) + bp["b1"][0])
        o1i = jax.nn.relu(mul(zr, bp["w1"][1]) + mul(zi, bp["w1"][0]) + bp["b1"][1])
        o2r = mul(o1r, bp["w2"][0]) - mul(o1i, bp["w2"][1]) + bp["b2"][0]
        o2i = mul(o2r, bp["w2"][1]) + mul(o1i, bp["w2"][0]) + bp["b2"][1]
        zc = (o2r + 1j * o2i).reshape(B, h, w // 2 + 1, D)
        sp = jnp.fft.irfft2(zc, s=(h, w), axes=(1, 2), norm="ortho").reshape(B, N, D)
        t = sp + bias + res
        res = t
        tn2 = _ref_ln(t, bp["ln2_g"], bp["ln2_b"])
        g = jnp.einsum("bnd,hd->bnh", tn2, bp["fc1_w"], precision=_HI) + bp["fc1_b"]
        g = 0.5 * g * (1.0 + jax.scipy.special.erf(g / jnp.sqrt(2.0)))
        pooled = jnp.mean(g.reshape(B, N, D, Hd // D), axis=-1)
        t = pooled + res

    t = _ref_ln(t, P["norm_g"], P["norm_b"])
    img = jnp.transpose(t, (0, 2, 1)).reshape(B, D, h, w)

    def conv_t(xim, W, bvec):
        y = jnp.einsum("bcij,cokl->boikjl", xim, W, precision=_HI)
        b_, co_, hh, _, ww, _ = y.shape
        return y.reshape(b_, co_, 2 * hh, 2 * ww) + bvec[None, :, None, None]

    y = jnp.tanh(conv_t(img, P["dec1_w"], P["dec1_b"]))
    y = jnp.tanh(conv_t(y, P["dec2_w"], P["dec2_b"]))
    return conv_t(y, P["head_w"], P["head_b"])


# --------------------------------------------------------------------------------------
# parameters
# --------------------------------------------------------------------------------------
def make_params(key, cfg):
    C, co, ps, D = cfg["in_chans"], cfg["out_chans"], cfg["patch"], cfg["dim"]
    Hi, Wi = cfg["img"]
    h, w = Hi // ps, Wi // ps
    N = h * w
    nb, bs = _NUM_BLOCKS, D // _NUM_BLOCKS
    Hd = int(D * cfg["mlp_ratio"])
    c1, c2 = co * 16, co * 4
    ks = iter(jax.random.split(key, 16 + 12 * cfg["depth"]))
    nrm = lambda shape, s: s * jax.random.normal(next(ks), shape, jnp.float32)
    P = {
        "patch_w": nrm((D, C, ps, ps), 0.05), "patch_b": nrm((D,), 0.05),
        "pos": nrm((N, D), 0.02),
        "norm_g": 1.0 + nrm((D,), 0.05), "norm_b": nrm((D,), 0.05),
        "dec1_w": nrm((D, c1, 2, 2), 0.1), "dec1_b": nrm((c1,), 0.1),
        "dec2_w": nrm((c1, c2, 2, 2), 0.1), "dec2_b": nrm((c2,), 0.1),
        "head_w": nrm((c2, co, 2, 2), 0.1), "head_b": nrm((co,), 0.1),
        "blocks": [],
    }
    for _ in range(cfg["depth"]):
        P["blocks"].append({
            "ln1_g": 1.0 + nrm((D,), 0.05), "ln1_b": nrm((D,), 0.05),
            "Wb": nrm((D, D), 0.05), "bb": nrm((D,), 0.05),
            "w1": nrm((2, nb, bs, bs), 0.1), "b1": nrm((2, nb, bs), 0.1),
            "w2": nrm((2, nb, bs, bs), 0.1), "b2": nrm((2, nb, bs), 0.1),
            "ln2_g": 1.0 + nrm((D,), 0.05), "ln2_b": nrm((D,), 0.05),
            "fc1_w": nrm((Hd, D), 0.1), "fc1_b": nrm((Hd,), 0.1),
        })
    return P


if __name__ == "__main__":
    cfg = dict(in_chans=3, out_chans=2, img=(32, 64), patch=8, dim=32,
               depth=2, mlp_ratio=4.0)
    key = jax.random.PRNGKey(0)
    kp, kx = jax.random.split(key)
    params = make_params(kp, cfg)
    x = jax.random.normal(kx, (2, cfg["in_chans"], cfg["img"][0], cfg["img"][1]),
                          jnp.float32)

    out = jax.block_until_ready(afnonet_forward(x, params, cfg))
    ref = jax.block_until_ready(afnonet_reference(x, params, cfg))

    assert out.shape == ref.shape == (2, cfg["out_chans"], 32, 64), out.shape
    err = float(jnp.max(jnp.abs(out - ref)))
    # Tolerance accounts for bf16 MXU operands (per the perf review) vs. the f32/HIGHEST
    # reference; expected max-abs error at these magnitudes is a few 1e-3.
    assert err < 2e-2, f"max abs err {err}"
    print("KERNEL_OK")
</pallas_src>

<mosaic_0001>
module attributes {stable_mosaic.version = 11 : i64} {
  func.func @_blocks_kernel(%arg0: i32, %arg1: memref<64x192xf32, #tpu.memory_space<vmem>>, %arg2: memref<192x32xbf16, #tpu.memory_space<vmem>>, %arg3: memref<64x32xf32, #tpu.memory_space<vmem>>, %arg4: memref<24x32xbf16, #tpu.memory_space<vmem>>, %arg5: memref<24x32xbf16, #tpu.memory_space<vmem>>, %arg6: memref<32x24xbf16, #tpu.memory_space<vmem>>, %arg7: memref<32x24xbf16, #tpu.memory_space<vmem>>, %arg8: memref<1x5x32x32xbf16, #tpu.memory_space<vmem>>, %arg9: memref<1x32x128xbf16, #tpu.memory_space<vmem>>, %arg10: memref<1x9x32xf32, #tpu.memory_space<vmem>>, %arg11: memref<1x1x128xf32, #tpu.memory_space<vmem>>, %arg12: memref<64x32xf32, #tpu.memory_space<vmem>>) attributes {dimension_semantics = [#tpu.dimension_semantics<arbitrary>], iteration_bounds = array<i64: 2>, scalar_prefetch = 0 : i64, scratch_operands = 0 : i64, tpu.core_type = #tpu.core_type<tc>, window_params = [{pipeline_mode = #tpu.pipeline_mode<synchronous>, transform_indices = @transform_0, window_bounds = array<i64: 64, 192>}, {pipeline_mode = #tpu.pipeline_mode<synchronous>, transform_indices = @transform_1, window_bounds = array<i64: 192, 32>}, {pipeline_mode = #tpu.pipeline_mode<synchronous>, transform_indices = @transform_2, window_bounds = array<i64: 64, 32>}, {pipeline_mode = #tpu.pipeline_mode<synchronous>, transform_indices = @transform_3, window_bounds = array<i64: 24, 32>}, {pipeline_mode = #tpu.pipeline_mode<synchronous>, transform_indices = @transform_4, window_bounds = array<i64: 24, 32>}, {pipeline_mode = #tpu.pipeline_mode<synchronous>, transform_indices = @transform_5, window_bounds = array<i64: 32, 24>}, {pipeline_mode = #tpu.pipeline_mode<synchronous>, transform_indices = @transform_6, window_bounds = array<i64: 32, 24>}, {transform_indices = @transform_7, window_bounds = array<i64: 1, 5, 32, 32>}, {transform_indices = @transform_8, window_bounds = array<i64: 1, 32, 128>}, {transform_indices = @transform_9, window_bounds = array<i64: 1, 9, 32>}, {transform_indices = @transform_10, window_bounds = array<i64: 1, 1, 128>}, {pipeline_mode = #tpu.pipeline_mode<synchronous>, transform_indices = @transform_11, window_bounds = array<i64: 64, 32>}]} {
    %c0_i32 = arith.constant 0 : i32
    %0 = arith.cmpi eq, %arg0, %c0_i32 : i32
    %1 = arith.extui %0 : i1 to i32
    %c0_i32_0 = arith.constant 0 : i32
    %2 = arith.cmpi ne, %1, %c0_i32_0 : i32
    scf.if %2 {
      %c0_70 = arith.constant 0 : index
      %c0_71 = arith.constant 0 : index
      %206 = vector.load %arg1[%c0_70, %c0_71] : memref<64x192xf32, #tpu.memory_space<vmem>>, vector<64x192xf32>
      %c0_72 = arith.constant 0 : index
      %c0_73 = arith.constant 0 : index
      %207 = vector.load %arg2[%c0_72, %c0_73] : memref<192x32xbf16, #tpu.memory_space<vmem>>, vector<192x32xbf16>
      %208 = arith.truncf %206 : vector<64x192xf32> to vector<64x192xbf16>
      %cst_74 = arith.constant dense<0.000000e+00> : vector<64x32xf32>
      %209 = tpu.matmul %208, %207, %cst_74 {dimension_numbers = #tpu.dot_dimension_numbers<[1], [0], [0], [1], [0, 0, 1, 1], [], []>} : vector<64x192xbf16>, vector<192x32xbf16>, vector<64x32xf32> -> vector<64x32xf32>
      %c0_75 = arith.constant 0 : index
      %c0_76 = arith.constant 0 : index
      %210 = vector.load %arg3[%c0_75, %c0_76] : memref<64x32xf32, #tpu.memory_space<vmem>>, vector<64x32xf32>
      %211 = arith.addf %209, %210 : vector<64x32xf32>
      %c0_77 = arith.constant 0 : index
      %c0_78 = arith.constant 0 : index
      %212 = vector.load %arg12[%c0_77, %c0_78] : memref<64x32xf32, #tpu.memory_space<vmem>>, vector<64x32xf32>
      tpu.vector_store %arg12[%c0_77, %c0_78], %211 {strides = array<i32>} : memref<64x32xf32, #tpu.memory_space<vmem>>, vector<64x32xf32>,
    } else {
    }
    %c0 = arith.constant 0 : index
    %c0_1 = arith.constant 0 : index
    %3 = vector.load %arg12[%c0, %c0_1] : memref<64x32xf32, #tpu.memory_space<vmem>>, vector<64x32xf32>
    %c0_2 = arith.constant 0 : index
    %c0_3 = arith.constant 0 : index
    %c0_4 = arith.constant 0 : index
    %c0_5 = arith.constant 0 : index
    %4 = vector.load %arg8[%c0_2, %c0_3, %c0_4, %c0_5] : memref<1x5x32x32xbf16, #tpu.memory_space<vmem>>, vector<1x5x32x32xbf16>
    %5 = vector.shape_cast %4 : vector<1x5x32x32xbf16> to vector<5x32x32xbf16>
    %6 = vector.extract_strided_slice %5 {offsets = [0, 0, 0], sizes = [1, 32, 32], strides = [1, 1, 1]} : vector<5x32x32xbf16> to vector<1x32x32xbf16>
    %7 = vector.shape_cast %6 : vector<1x32x32xbf16> to vector<32x32xbf16>
    %8 = vector.extract_strided_slice %5 {offsets = [1, 0, 0], sizes = [1, 32, 32], strides = [1, 1, 1]} : vector<5x32x32xbf16> to vector<1x32x32xbf16>
    %9 = vector.shape_cast %8 : vector<1x32x32xbf16> to vector<32x32xbf16>
    %10 = vector.extract_strided_slice %5 {offsets = [2, 0, 0], sizes = [1, 32, 32], strides = [1, 1, 1]} : vector<5x32x32xbf16> to vector<1x32x32xbf16>
    %11 = vector.shape_cast %10 : vector<1x32x32xbf16> to vector<32x32xbf16>
    %12 = vector.extract_strided_slice %5 {offsets = [3, 0, 0], sizes = [1, 32, 32], strides = [1, 1, 1]} : vector<5x32x32xbf16> to vector<1x32x32xbf16>
    %13 = vector.shape_cast %12 : vector<1x32x32xbf16> to vector<32x32xbf16>
    %14 = vector.extract_strided_slice %5 {offsets = [4, 0, 0], sizes = [1, 32, 32], strides = [1, 1, 1]} : vector<5x32x32xbf16> to vector<1x32x32xbf16>
    %15 = vector.shape_cast %14 : vector<1x32x32xbf16> to vector<32x32xbf16>
    %c0_6 = arith.constant 0 : index
    %c0_7 = arith.constant 0 : index
    %c0_8 = arith.constant 0 : index
    %16 = vector.load %arg10[%c0_6, %c0_7, %c0_8] : memref<1x9x32xf32, #tpu.memory_space<vmem>>, vector<1x9x32xf32>
    %17 = vector.shape_cast %16 : vector<1x9x32xf32> to vector<9x32xf32>
    %18 = vector.extract_strided_slice %17 {offsets = [0, 0], sizes = [1, 32], strides = [1, 1]} : vector<9x32xf32> to vector<1x32xf32>
    %19 = vector.extract_strided_slice %17 {offsets = [1, 0], sizes = [1, 32], strides = [1, 1]} : vector<9x32xf32> to vector<1x32xf32>
    %20 = vector.extract_strided_slice %17 {offsets = [2, 0], sizes = [1, 32], strides = [1, 1]} : vector<9x32xf32> to vector<1x32xf32>
    %21 = vector.extract_strided_slice %17 {offsets = [3, 0], sizes = [1, 32], strides = [1, 1]} : vector<9x32xf32> to vector<1x32xf32>
    %22 = vector.extract_strided_slice %17 {offsets = [4, 0], sizes = [1, 32], strides = [1, 1]} : vector<9x32xf32> to vector<1x32xf32>
    %23 = vector.extract_strided_slice %17 {offsets = [5, 0], sizes = [1, 32], strides = [1, 1]} : vector<9x32xf32> to vector<1x32xf32>
    %24 = vector.extract_strided_slice %17 {offsets = [6, 0], sizes = [1, 32], strides = [1, 1]} : vector<9x32xf32> to vector<1x32xf32>
    %25 = vector.extract_strided_slice %17 {offsets = [7, 0], sizes = [1, 32], strides = [1, 1]} : vector<9x32xf32> to vector<1x32xf32>
    %26 = vector.extract_strided_slice %17 {offsets = [8, 0], sizes = [1, 32], strides = [1, 1]} : vector<9x32xf32> to vector<1x32xf32>
    %cst = arith.constant dense<0.000000e+00> : vector<64xf32>
    %27 = vector.multi_reduction <add>, %3, %cst [1] : vector<64x32xf32> to vector<64xf32>
    %28 = vector.shape_cast %27 : vector<64xf32> to vector<64x1xf32>
    %cst_9 = arith.constant 3.200000e+01 : f32
    %29 = vector.broadcast %cst_9 : f32 to vector<64x1xf32>
    %30 = arith.divf %28, %29 : vector<64x1xf32>
    %31 = vector.broadcast %30 : vector<64x1xf32> to vector<64x32xf32>
    %32 = arith.subf %3, %31 : vector<64x32xf32>
    %33 = arith.mulf %32, %32 : vector<64x32xf32>
    %cst_10 = arith.constant dense<0.000000e+00> : vector<64xf32>
    %34 = vector.multi_reduction <add>, %33, %cst_10 [1] : vector<64x32xf32> to vector<64xf32>
    %35 = vector.shape_cast %34 : vector<64xf32> to vector<64x1xf32>
    %cst_11 = arith.constant 3.200000e+01 : f32
    %36 = vector.broadcast %cst_11 : f32 to vector<64x1xf32>
    %37 = arith.divf %35, %36 : vector<64x1xf32>
    %38 = vector.broadcast %30 : vector<64x1xf32> to vector<64x32xf32>
    %39 = arith.subf %3, %38 : vector<64x32xf32>
    %cst_12 = arith.constant 9.99999997E-7 : f32
    %40 = vector.broadcast %cst_12 : f32 to vector<64x1xf32>
    %41 = arith.addf %37, %40 : vector<64x1xf32>
    %42 = math.rsqrt %41 : vector<64x1xf32>
    %43 = vector.broadcast %42 : vector<64x1xf32> to vector<64x32xf32>
    %44 = arith.mulf %39, %43 : vector<64x32xf32>
    %45 = vector.broadcast %18 : vector<1x32xf32> to vector<64x32xf32>
    %46 = arith.mulf %44, %45 : vector<64x32xf32>
    %47 = vector.broadcast %19 : vector<1x32xf32> to vector<64x32xf32>
    %48 = arith.addf %46, %47 : vector<64x32xf32>
    %49 = arith.truncf %48 : vector<64x32xf32> to vector<64x32xbf16>
    %cst_13 = arith.constant dense<0.000000e+00> : vector<64x32xf32>
    %50 = tpu.matmul %49, %7, %cst_13 {dimension_numbers = #tpu.dot_dimension_numbers<[1], [0], [0], [1], [0, 0, 1, 1], [], []>} : vector<64x32xbf16>, vector<32x32xbf16>, vector<64x32xf32> -> vector<64x32xf32>
    %51 = vector.broadcast %20 : vector<1x32xf32> to vector<64x32xf32>
    %52 = arith.addf %50, %51 : vector<64x32xf32>
    %c0_14 = arith.constant 0 : index
    %c0_15 = arith.constant 0 : index
    %53 = vector.load %arg4[%c0_14, %c0_15] : memref<24x32xbf16, #tpu.memory_space<vmem>>, vector<24x32xbf16>
    %c0_16 = arith.constant 0 : index
    %c0_17 = arith.constant 0 : index
    %54 = vector.load %arg5[%c0_16, %c0_17] : memref<24x32xbf16, #tpu.memory_space<vmem>>, vector<24x32xbf16>
    %55 = vector.shape_cast %48 : vector<64x32xf32> to vector<2x32x32xf32>
    %56 = vector.extract_strided_slice %55 {offsets = [0, 0, 0], sizes = [1, 32, 32], strides = [1, 1, 1]} : vector<2x32x32xf32> to vector<1x32x32xf32>
    %57 = vector.shape_cast %56 : vector<1x32x32xf32> to vector<32x32xf32>
    %58 = arith.truncf %57 : vector<32x32xf32> to vector<32x32xbf16>
    %cst_18 = arith.constant dense<0.000000e+00> : vector<24x32xf32>
    %59 = tpu.matmul %53, %58, %cst_18 {dimension_numbers = #tpu.dot_dimension_numbers<[1], [0], [0], [1], [0, 0, 1, 1], [], []>} : vector<24x32xbf16>, vector<32x32xbf16>, vector<24x32xf32> -> vector<24x32xf32>
    %60 = vector.extract_strided_slice %55 {offsets = [1, 0, 0], sizes = [1, 32, 32], strides = [1, 1, 1]} : vector<2x32x32xf32> to vector<1x32x32xf32>
    %61 = vector.shape_cast %60 : vector<1x32x32xf32> to vector<32x32xf32>
    %62 = arith.truncf %61 : vector<32x32xf32> to vector<32x32xbf16>
    %cst_19 = arith.constant dense<0.000000e+00> : vector<24x32xf32>
    %63 = tpu.matmul %53, %62, %cst_19 {dimension_numbers = #tpu.dot_dimension_numbers<[1], [0], [0], [1], [0, 0, 1, 1], [], []>} : vector<24x32xbf16>, vector<32x32xbf16>, vector<24x32xf32> -> vector<24x32xf32>
    %64 = tpu.concatenate %59, %63 in 0 : vector<24x32xf32>, vector<24x32xf32> -> vector<48x32xf32>
    %65 = vector.extract_strided_slice %55 {offsets = [0, 0, 0], sizes = [1, 32, 32], strides = [1, 1, 1]} : vector<2x32x32xf32> to vector<1x32x32xf32>
    %66 = vector.shape_cast %65 : vector<1x32x32xf32> to vector<32x32xf32>
    %67 = arith.truncf %66 : vector<32x32xf32> to vector<32x32xbf16>
    %cst_20 = arith.constant dense<0.000000e+00> : vector<24x32xf32>
    %68 = tpu.matmul %54, %67, %cst_20 {dimension_numbers = #tpu.dot_dimension_numbers<[1], [0], [0], [1], [0, 0, 1, 1], [], []>} : vector<24x32xbf16>, vector<32x32xbf16>, vector<24x32xf32> -> vector<24x32xf32>
    %69 = vector.extract_strided_slice %55 {offsets = [1, 0, 0], sizes = [1, 32, 32], strides = [1, 1, 1]} : vector<2x32x32xf32> to vector<1x32x32xf32>
    %70 = vector.shape_cast %69 : vector<1x32x32xf32> to vector<32x32xf32>
    %71 = arith.truncf %70 : vector<32x32xf32> to vector<32x32xbf16>
    %cst_21 = arith.constant dense<0.000000e+00> : vector<24x32xf32>
    %72 = tpu.matmul %54, %71, %cst_21 {dimension_numbers = #tpu.dot_dimension_numbers<[1], [0], [0], [1], [0, 0, 1, 1], [], []>} : vector<24x32xbf16>, vector<32x32xbf16>, vector<24x32xf32> -> vector<24x32xf32>
    %73 = tpu.concatenate %68, %72 in 0 : vector<24x32xf32>, vector<24x32xf32> -> vector<48x32xf32>
    %74 = arith.truncf %64 : vector<48x32xf32> to vector<48x32xbf16>
    %cst_22 = arith.constant dense<0.000000e+00> : vector<48x32xf32>
    %75 = tpu.matmul %74, %9, %cst_22 {dimension_numbers = #tpu.dot_dimension_numbers<[1], [0], [0], [1], [0, 0, 1, 1], [], []>} : vector<48x32xbf16>, vector<32x32xbf16>, vector<48x32xf32> -> vector<48x32xf32>
    %76 = arith.truncf %73 : vector<48x32xf32> to vector<48x32xbf16>
    %cst_23 = arith.constant dense<0.000000e+00> : vector<48x32xf32>
    %77 = tpu.matmul %76, %11, %cst_23 {dimension_numbers = #tpu.dot_dimension_numbers<[1], [0], [0], [1], [0, 0, 1, 1], [], []>} : vector<48x32xbf16>, vector<32x32xbf16>, vector<48x32xf32> -> vector<48x32xf32>
    %78 = arith.subf %75, %77 : vector<48x32xf32>
    %79 = vector.broadcast %21 : vector<1x32xf32> to vector<48x32xf32>
    %80 = arith.addf %78, %79 : vector<48x32xf32>
    %cst_24 = arith.constant 0.000000e+00 : f32
    %81 = vector.broadcast %cst_24 : f32 to vector<48x32xf32>
    %82 = arith.maximumf %80, %81 : vector<48x32xf32>
    %83 = arith.truncf %64 : vector<48x32xf32> to vector<48x32xbf16>
    %cst_25 = arith.constant dense<0.000000e+00> : vector<48x32xf32>
    %84 = tpu.matmul %83, %11, %cst_25 {dimension_numbers = #tpu.dot_dimension_numbers<[1], [0], [0], [1], [0, 0, 1, 1], [], []>} : vector<48x32xbf16>, vector<32x32xbf16>, vector<48x32xf32> -> vector<48x32xf32>
    %85 = arith.truncf %73 : vector<48x32xf32> to vector<48x32xbf16>
    %cst_26 = arith.constant dense<0.000000e+00> : vector<48x32xf32>
    %86 = tpu.matmul %85, %9, %cst_26 {dimension_numbers = #tpu.dot_dimension_numbers<[1], [0], [0], [1], [0, 0, 1, 1], [], []>} : vector<48x32xbf16>, vector<32x32xbf16>, vector<48x32xf32> -> vector<48x32xf32>
    %87 = arith.addf %84, %86 : vector<48x32xf32>
    %88 = vector.broadcast %22 : vector<1x32xf32> to vector<48x32xf32>
    %89 = arith.addf %87, %88 : vector<48x32xf32>
    %cst_27 = arith.constant 0.000000e+00 : f32
    %90 = vector.broadcast %cst_27 : f32 to vector<48x32xf32>
    %91 = arith.maximumf %89, %90 : vector<48x32xf32>
    %92 = arith.truncf %82 : vector<48x32xf32> to vector<48x32xbf16>
    %cst_28 = arith.constant dense<0.000000e+00> : vector<48x32xf32>
    %93 = tpu.matmul %92, %13, %cst_28 {dimension_numbers = #tpu.dot_dimension_numbers<[1], [0], [0], [1], [0, 0, 1, 1], [], []>} : vector<48x32xbf16>, vector<32x32xbf16>, vector<48x32xf32> -> vector<48x32xf32>
    %94 = arith.truncf %91 : vector<48x32xf32> to vector<48x32xbf16>
    %cst_29 = arith.constant dense<0.000000e+00> : vector<48x32xf32>
    %95 = tpu.matmul %94, %15, %cst_29 {dimension_numbers = #tpu.dot_dimension_numbers<[1], [0], [0], [1], [0, 0, 1, 1], [], []>} : vector<48x32xbf16>, vector<32x32xbf16>, vector<48x32xf32> -> vector<48x32xf32>
    %96 = arith.subf %93, %95 : vector<48x32xf32>
    %97 = vector.broadcast %23 : vector<1x32xf32> to vector<48x32xf32>
    %98 = arith.addf %96, %97 : vector<48x32xf32>
    %99 = arith.truncf %98 : vector<48x32xf32> to vector<48x32xbf16>
    %cst_30 = arith.constant dense<0.000000e+00> : vector<48x32xf32>
    %100 = tpu.matmul %99, %15, %cst_30 {dimension_numbers = #tpu.dot_dimension_numbers<[1], [0], [0], [1], [0, 0, 1, 1], [], []>} : vector<48x32xbf16>, vector<32x32xbf16>, vector<48x32xf32> -> vector<48x32xf32>
    %101 = arith.truncf %91 : vector<48x32xf32> to vector<48x32xbf16>
    %cst_31 = arith.constant dense<0.000000e+00> : vector<48x32xf32>
    %102 = tpu.matmul %101, %13, %cst_31 {dimension_numbers = #tpu.dot_dimension_numbers<[1], [0], [0], [1], [0, 0, 1, 1], [], []>} : vector<48x32xbf16>, vector<32x32xbf16>, vector<48x32xf32> -> vector<48x32xf32>
    %103 = arith.addf %100, %102 : vector<48x32xf32>
    %104 = vector.broadcast %24 : vector<1x32xf32> to vector<48x32xf32>
    %105 = arith.addf %103, %104 : vector<48x32xf32>
    %c0_32 = arith.constant 0 : index
    %c0_33 = arith.constant 0 : index
    %106 = vector.load %arg6[%c0_32, %c0_33] : memref<32x24xbf16, #tpu.memory_space<vmem>>, vector<32x24xbf16>
    %c0_34 = arith.constant 0 : index
    %c0_35 = arith.constant 0 : index
    %107 = vector.load %arg7[%c0_34, %c0_35] : memref<32x24xbf16, #tpu.memory_space<vmem>>, vector<32x24xbf16>
    %108 = vector.shape_cast %98 : vector<48x32xf32> to vector<2x24x32xf32>
    %109 = vector.shape_cast %105 : vector<48x32xf32> to vector<2x24x32xf32>
    %110 = vector.extract_strided_slice %108 {offsets = [0, 0, 0], sizes = [1, 24, 32], strides = [1, 1, 1]} : vector<2x24x32xf32> to vector<1x24x32xf32>
    %111 = vector.shape_cast %110 : vector<1x24x32xf32> to vector<24x32xf32>
    %112 = arith.truncf %111 : vector<24x32xf32> to vector<24x32xbf16>
    %cst_36 = arith.constant dense<0.000000e+00> : vector<32x32xf32>
    %113 = tpu.matmul %106, %112, %cst_36 {dimension_numbers = #tpu.dot_dimension_numbers<[1], [0], [0], [1], [0, 0, 1, 1], [], []>} : vector<32x24xbf16>, vector<24x32xbf16>, vector<32x32xf32> -> vector<32x32xf32>
    %114 = vector.extract_strided_slice %109 {offsets = [0, 0, 0], sizes = [1, 24, 32], strides = [1, 1, 1]} : vector<2x24x32xf32> to vector<1x24x32xf32>
    %115 = vector.shape_cast %114 : vector<1x24x32xf32> to vector<24x32xf32>
    %116 = arith.truncf %115 : vector<24x32xf32> to vector<24x32xbf16>
    %cst_37 = arith.constant dense<0.000000e+00> : vector<32x32xf32>
    %117 = tpu.matmul %107, %116, %cst_37 {dimension_numbers = #tpu.dot_dimension_numbers<[1], [0], [0], [1], [0, 0, 1, 1], [], []>} : vector<32x24xbf16>, vector<24x32xbf16>, vector<32x32xf32> -> vector<32x32xf32>
    %118 = arith.addf %113, %117 : vector<32x32xf32>
    %119 = vector.extract_strided_slice %108 {offsets = [1, 0, 0], sizes = [1, 24, 32], strides = [1, 1, 1]} : vector<2x24x32xf32> to vector<1x24x32xf32>
    %120 = vector.shape_cast %119 : vector<1x24x32xf32> to vector<24x32xf32>
    %121 = arith.truncf %120 : vector<24x32xf32> to vector<24x32xbf16>
    %cst_38 = arith.constant dense<0.000000e+00> : vector<32x32xf32>
    %122 = tpu.matmul %106, %121, %cst_38 {dimension_numbers = #tpu.dot_dimension_numbers<[1], [0], [0], [1], [0, 0, 1, 1], [], []>} : vector<32x24xbf16>, vector<24x32xbf16>, vector<32x32xf32> -> vector<32x32xf32>
    %123 = vector.extract_strided_slice %109 {offsets = [1, 0, 0], sizes = [1, 24, 32], strides = [1, 1, 1]} : vector<2x24x32xf32> to vector<1x24x32xf32>
    %124 = vector.shape_cast %123 : vector<1x24x32xf32> to vector<24x32xf32>
    %125 = arith.truncf %124 : vector<24x32xf32> to vector<24x32xbf16>
    %cst_39 = arith.constant dense<0.000000e+00> : vector<32x32xf32>
    %126 = tpu.matmul %107, %125, %cst_39 {dimension_numbers = #tpu.dot_dimension_numbers<[1], [0], [0], [1], [0, 0, 1, 1], [], []>} : vector<32x24xbf16>, vector<24x32xbf16>, vector<32x32xf32> -> vector<32x32xf32>
    %127 = arith.addf %122, %126 : vector<32x32xf32>
    %128 = tpu.concatenate %118, %127 in 0 : vector<32x32xf32>, vector<32x32xf32> -> vector<64x32xf32>
    %129 = arith.addf %3, %128 : vector<64x32xf32>
    %130 = arith.addf %129, %52 : vector<64x32xf32>
    %cst_40 = arith.constant dense<0.000000e+00> : vector<64xf32>
    %131 = vector.multi_reduction <add>, %130, %cst_40 [1] : vector<64x32xf32> to vector<64xf32>
    %132 = vector.shape_cast %131 : vector<64xf32> to vector<64x1xf32>
    %cst_41 = arith.constant 3.200000e+01 : f32
    %133 = vector.broadcast %cst_41 : f32 to vector<64x1xf32>
    %134 = arith.divf %132, %133 : vector<64x1xf32>
    %135 = vector.broadcast %134 : vector<64x1xf32> to vector<64x32xf32>
    %136 = arith.subf %130, %135 : vector<64x32xf32>
    %137 = arith.mulf %136, %136 : vector<64x32xf32>
    %cst_42 = arith.constant dense<0.000000e+00> : vector<64xf32>
    %138 = vector.multi_reduction <add>, %137, %cst_42 [1] : vector<64x32xf32> to vector<64xf32>
    %139 = vector.shape_cast %138 : vector<64xf32> to vector<64x1xf32>
    %cst_43 = arith.constant 3.200000e+01 : f32
    %140 = vector.broadcast %cst_43 : f32 to vector<64x1xf32>
    %141 = arith.divf %139, %140 : vector<64x1xf32>
    %142 = vector.broadcast %134 : vector<64x1xf32> to vector<64x32xf32>
    %143 = arith.subf %130, %142 : vector<64x32xf32>
    %cst_44 = arith.constant 9.99999997E-7 : f32
    %144 = vector.broadcast %cst_44 : f32 to vector<64x1xf32>
    %145 = arith.addf %141, %144 : vector<64x1xf32>
    %146 = math.rsqrt %145 : vector<64x1xf32>
    %147 = vector.broadcast %146 : vector<64x1xf32> to vector<64x32xf32>
    %148 = arith.mulf %143, %147 : vector<64x32xf32>
    %149 = vector.broadcast %25 : vector<1x32xf32> to vector<64x32xf32>
    %150 = arith.mulf %148, %149 : vector<64x32xf32>
    %151 = vector.broadcast %26 : vector<1x32xf32> to vector<64x32xf32>
    %152 = arith.addf %150, %151 : vector<64x32xf32>
    %c0_45 = arith.constant 0 : index
    %c0_46 = arith.constant 0 : index
    %c0_47 = arith.constant 0 : index
    %153 = vector.load %arg9[%c0_45, %c0_46, %c0_47] : memref<1x32x128xbf16, #tpu.memory_space<vmem>>, vector<1x32x128xbf16>
    %154 = vector.shape_cast %153 : vector<1x32x128xbf16> to vector<32x128xbf16>
    %155 = arith.truncf %152 : vector<64x32xf32> to vector<64x32xbf16>
    %cst_48 = arith.constant dense<0.000000e+00> : vector<64x128xf32>
    %156 = tpu.matmul %155, %154, %cst_48 {dimension_numbers = #tpu.dot_dimension_numbers<[1], [0], [0], [1], [0, 0, 1, 1], [], []>} : vector<64x32xbf16>, vector<32x128xbf16>, vector<64x128xf32> -> vector<64x128xf32>
    %c0_49 = arith.constant 0 : index
    %c0_50 = arith.constant 0 : index
    %c0_51 = arith.constant 0 : index
    %157 = vector.load %arg11[%c0_49, %c0_50, %c0_51] : memref<1x1x128xf32, #tpu.memory_space<vmem>>, vector<1x1x128xf32>
    %158 = vector.shape_cast %157 : vector<1x1x128xf32> to vector<1x128xf32>
    %159 = vector.broadcast %158 : vector<1x128xf32> to vector<64x128xf32>
    %160 = arith.addf %156, %159 : vector<64x128xf32>
    %cst_52 = arith.constant 0.707106769 : f32
    %161 = vector.broadcast %cst_52 : f32 to vector<64x128xf32>
    %162 = arith.mulf %160, %161 : vector<64x128xf32>
    %163 = math.absf %162 : vector<64x128xf32>
    %cst_53 = arith.constant 0.327591091 : f32
    %164 = vector.broadcast %cst_53 : f32 to vector<64x128xf32>
    %165 = arith.mulf %164, %163 : vector<64x128xf32>
    %cst_54 = arith.constant 1.000000e+00 : f32
    %166 = vector.broadcast %cst_54 : f32 to vector<64x128xf32>
    %167 = arith.addf %166, %165 : vector<64x128xf32>
    %168 = tpu.reciprocal %167 {approx = true} : vector<64x128xf32> -> vector<64x128xf32>
    %cst_55 = arith.constant 1.06140542 : f32
    %169 = vector.broadcast %cst_55 : f32 to vector<64x128xf32>
    %170 = arith.mulf %169, %168 : vector<64x128xf32>
    %cst_56 = arith.constant 1.45315206 : f32
    %171 = vector.broadcast %cst_56 : f32 to vector<64x128xf32>
    %172 = arith.subf %170, %171 : vector<64x128xf32>
    %173 = arith.mulf %172, %168 : vector<64x128xf32>
    %cst_57 = arith.constant 1.42141378 : f32
    %174 = vector.broadcast %cst_57 : f32 to vector<64x128xf32>
    %175 = arith.addf %173, %174 : vector<64x128xf32>
    %176 = arith.mulf %175, %168 : vector<64x128xf32>
    %cst_58 = arith.constant 0.284496725 : f32
    %177 = vector.broadcast %cst_58 : f32 to vector<64x128xf32>
    %178 = arith.subf %176, %177 : vector<64x128xf32>
    %179 = arith.mulf %178, %168 : vector<64x128xf32>
    %cst_59 = arith.constant 0.254829586 : f32
    %180 = vector.broadcast %cst_59 : f32 to vector<64x128xf32>
    %181 = arith.addf %179, %180 : vector<64x128xf32>
    %182 = arith.mulf %181, %168 : vector<64x128xf32>
    %cst_60 = arith.constant 0.000000e+00 : f32
    %183 = vector.broadcast %cst_60 : f32 to vector<64x128xf32>
    %184 = arith.subf %183, %163 : vector<64x128xf32>
    %185 = arith.mulf %184, %163 : vector<64x128xf32>
    %186 = math.exp %185 : vector<64x128xf32>
    %187 = arith.mulf %182, %186 : vector<64x128xf32>
    %cst_61 = arith.constant 1.000000e+00 : f32
    %188 = vector.broadcast %cst_61 : f32 to vector<64x128xf32>
    %189 = arith.subf %188, %187 : vector<64x128xf32>
    %cst_62 = arith.constant 0.000000e+00 : f32
    %190 = vector.broadcast %cst_62 : f32 to vector<64x128xf32>
    %191 = arith.cmpf oge, %162, %190 : vector<64x128xf32>
    %cst_63 = arith.constant 0.000000e+00 : f32
    %192 = vector.broadcast %cst_63 : f32 to vector<64x128xf32>
    %193 = arith.subf %192, %189 : vector<64x128xf32>
    %194 = arith.select %191, %189, %193 : vector<64x128xi1>, vector<64x128xf32>
    %cst_64 = arith.constant 5.000000e-01 : f32
    %195 = vector.broadcast %cst_64 : f32 to vector<64x128xf32>
    %196 = arith.mulf %195, %160 : vector<64x128xf32>
    %cst_65 = arith.constant 1.000000e+00 : f32
    %197 = vector.broadcast %cst_65 : f32 to vector<64x128xf32>
    %198 = arith.addf %197, %194 : vector<64x128xf32>
    %199 = arith.mulf %196, %198 : vector<64x128xf32>
    %200 = vector.shape_cast %199 : vector<64x128xf32> to vector<64x32x4xf32>
    %cst_66 = arith.constant dense<0.000000e+00> : vector<64x32xf32>
    %201 = vector.multi_reduction <add>, %200, %cst_66 [2] : vector<64x32x4xf32> to vector<64x32xf32>
    %cst_67 = arith.constant 4.000000e+00 : f32
    %202 = vector.broadcast %cst_67 : f32 to vector<64x32xf32>
    %203 = arith.divf %201, %202 : vector<64x32xf32>
    %204 = arith.addf %130, %203 : vector<64x32xf32>
    %c0_68 = arith.constant 0 : index
    %c0_69 = arith.constant 0 : index
    %205 = vector.load %arg12[%c0_68, %c0_69] : memref<64x32xf32, #tpu.memory_space<vmem>>, vector<64x32xf32>
    tpu.vector_store %arg12[%c0_68, %c0_69], %204 {strides = array<i32>} : memref<64x32xf32, #tpu.memory_space<vmem>>, vector<64x32xf32>,
    return
  }
  func.func @transform_0(%arg0: i32) -> (i32, i32) {
    %c0_i32 = arith.constant 0 : i32
    %c0_i32_0 = arith.constant 0 : i32
    %c0_i32_1 = arith.constant 0 : i32
    return %c0_i32, %c0_i32_0 : i32, i32
  }
  func.func @transform_1(%arg0: i32) -> (i32, i32) {
    %c0_i32 = arith.constant 0 : i32
    %c0_i32_0 = arith.constant 0 : i32
    %c0_i32_1 = arith.constant 0 : i32
    return %c0_i32, %c0_i32_0 : i32, i32
  }
  func.func @transform_2(%arg0: i32) -> (i32, i32) {
    %c0_i32 = arith.constant 0 : i32
    %c0_i32_0 = arith.constant 0 : i32
    %c0_i32_1 = arith.constant 0 : i32
    return %c0_i32, %c0_i32_0 : i32, i32
  }
  func.func @transform_3(%arg0: i32) -> (i32, i32) {
    %c0_i32 = arith.constant 0 : i32
    %c0_i32_0 = arith.constant 0 : i32
    %c0_i32_1 = arith.constant 0 : i32
    return %c0_i32, %c0_i32_0 : i32, i32
  }
  func.func @transform_4(%arg0: i32) -> (i32, i32) {
    %c0_i32 = arith.constant 0 : i32
    %c0_i32_0 = arith.constant 0 : i32
    %c0_i32_1 = arith.constant 0 : i32
    return %c0_i32, %c0_i32_0 : i32, i32
  }
  func.func @transform_5(%arg0: i32) -> (i32, i32) {
    %c0_i32 = arith.constant 0 : i32
    %c0_i32_0 = arith.constant 0 : i32
    %c0_i32_1 = arith.constant 0 : i32
    return %c0_i32, %c0_i32_0 : i32, i32
  }
  func.func @transform_6(%arg0: i32) -> (i32, i32) {
    %c0_i32 = arith.constant 0 : i32
    %c0_i32_0 = arith.constant 0 : i32
    %c0_i32_1 = arith.constant 0 : i32
    return %c0_i32, %c0_i32_0 : i32, i32
  }
  func.func @transform_7(%arg0: i32) -> (i32, i32, i32, i32) {
    %c0_i32 = arith.constant 0 : i32
    %c0_i32_0 = arith.constant 0 : i32
    %c0_i32_1 = arith.constant 0 : i32
    %c0_i32_2 = arith.constant 0 : i32
    return %arg0, %c0_i32, %c0_i32_0, %c0_i32_1 : i32, i32, i32, i32
  }
  func.func @transform_8(%arg0: i32) -> (i32, i32, i32) {
    %c0_i32 = arith.constant 0 : i32
    %c0_i32_0 = arith.constant 0 : i32
    %c0_i32_1 = arith.constant 0 : i32
    return %arg0, %c0_i32, %c0_i32_0 : i32, i32, i32
  }
  func.func @transform_9(%arg0: i32) -> (i32, i32, i32) {
    %c0_i32 = arith.constant 0 : i32
    %c0_i32_0 = arith.constant 0 : i32
    %c0_i32_1 = arith.constant 0 : i32
    return %arg0, %c0_i32, %c0_i32_0 : i32, i32, i32
  }
  func.func @transform_10(%arg0: i32) -> (i32, i32, i32) {
    %c0_i32 = arith.constant 0 : i32
    %c0_i32_0 = arith.constant 0 : i32
    %c0_i32_1 = arith.constant 0 : i32
    return %arg0, %c0_i32, %c0_i32_0 : i32, i32, i32
  }
  func.func @transform_11(%arg0: i32) -> (i32, i32) {
    %c0_i32 = arith.constant 0 : i32
    %c0_i32_0 = arith.constant 0 : i32
    %c0_i32_1 = arith.constant 0 : i32
    return %c0_i32, %c0_i32_0 : i32, i32
  }
}

</mosaic_0001>

<llo_original>
// kernel: tpu_custom_call.1
$region0: #{tpu_custom_call.1}
  #allocation0 [shape = 'u32[]', space=smem, size = 0x4, offset = 0x4, fixed_abs, tag = 'smem constant byte address 0x4 - core index']
  #allocation1 [shape = 'u32[144,128]{1,0:T(1,128)}', space=vmem, size = 0x12000, scoped, tag = 'internal scratch']
  %s0 = inlined_call_operand.vmem [shape: f32[64,192], index: 0, kind: input, shape index: {}]
  %s1 = inlined_call_operand.vmem [shape: bf16[192,32], index: 1, kind: input, shape index: {}]
  %s2 = inlined_call_operand.vmem [shape: f32[64,32], index: 2, kind: input, shape index: {}]
  %s3 = inlined_call_operand.hbm [shape: bf16[24,32], index: 3, kind: input, shape index: {}]
  %s4 = inlined_call_operand.hbm [shape: bf16[24,32], index: 4, kind: input, shape index: {}]
  %s5 = inlined_call_operand.vmem [shape: bf16[32,24], index: 5, kind: input, shape index: {}]
  %s6 = inlined_call_operand.vmem [shape: bf16[32,24], index: 6, kind: input, shape index: {}]
  %s7 = inlined_call_operand.vmem [shape: bf16[2,5,32,32], index: 7, kind: input, shape index: {}]
  %s8 = inlined_call_operand.hbm [shape: bf16[2,32,128], index: 8, kind: input, shape index: {}]
  %s9 = inlined_call_operand.vmem [shape: f32[2,9,32], index: 9, kind: input, shape index: {}]
  %s10 = inlined_call_operand.vmem [shape: f32[2,1,128], index: 10, kind: input, shape index: {}]
  %s11 = inlined_call_operand.vmem [shape: f32[64,32], index: 11, kind: output, shape index: {}]
  %s12 = sld [smem:[#allocation0]]
  $region93: #{tpu_custom_call.1} parent=0
    _
  %s14 = ssub.s32 1, %s12
  %s15 = scalar_select 0, %s14, %s12
  $region1: #{tpu_custom_call.1} parent=0
    #allocation2 [shape = 'u8[6144]{0}', space=vmem, size = 0x1800, scoped, tag = 'input window, operand 3, single buffered']
    #allocation3 [shape = 's32[2]{0}', space=sflag, size = 0x8, scoped, tag = 'scoped memory for tpu_custom_call.1']
    #allocation4 [shape = 'u8[6144]{0}', space=vmem, size = 0x1800, scoped, tag = 'input window, operand 4, single buffered']
    #allocation5 [shape = 's32[1]{0}', space=sflag, size = 0x4, scoped, tag = 'scoped memory for tpu_custom_call.1']
    #allocation6 [shape = 'u8[16384]{0}', space=vmem, size = 0x4000, scoped, tag = 'input window, operand 8']
    %16 = vsyncpa [#allocation3], 0
    %17 = vsyncpa [#allocation5], 0
    loop: start=0, step=1, limit=4
    $region2: #{tpu_custom_call.1} parent=1 // loop_pre_header
      _
    $region3: #{tpu_custom_call.1} parent=1 // loop_header
      %s19 = sphi 0, %s23
      %p20 = scmp.ge.s32.totalorder %s19, 4
      %s27 = sphi 0, %s27
      %s29 = sphi 0, %s27
      %s30 = sphi 0, %s29
      %s44 = sphi 0, %s30
      %s48 = sphi 0, %s48
      %s50 = sphi 0, %s48
      %s51 = sphi 0, %s50
      %s65 = sphi 0, %s51
      %s69 = sphi 0, %s69
      %s71 = sphi 0, %s69
      %s72 = sphi 0, %s71
      %s86 = sphi 0, %s72
      %s90 = sphi 0, %s90
      %s92 = sphi 0, %s90
      %s93 = sphi 0, %s92
      %s107 = sphi 0, %s93
      %s111 = sphi 0, %s111
      %s113 = sphi 0, %s111
      %s114 = sphi 0, %s113
      %s128 = sphi 0, %s114
      %s132 = sphi 0, %s132
      %s134 = sphi 0, %s132
      %s135 = sphi 0, %s134
      %s149 = sphi 0, %s135
      %s153 = sphi 0, %s153
      %s155 = sphi 0, %s153
      %s156 = sphi 0, %s155
      %s170 = sphi 0, %s156
      %s176 = sphi 0, %s178
      %s179 = sphi 0, %s176
      %s180 = sphi 0, %s179
      %s196 = sphi 0, %s180
      %s202 = sphi 0, %s204
      %s205 = sphi 0, %s202
      %s206 = sphi 0, %s205
      %s222 = sphi 0, %s206
      %s228 = sphi 0, %s230
      %s231 = sphi 0, %s228
      %s232 = sphi 0, %s231
      %s248 = sphi 0, %s232
      %s254 = sphi 0, %s256
      %s257 = sphi 0, %s254
      %s258 = sphi 0, %s257
      %s274 = sphi 0, %s258
      %s278 = sphi 0, %s278
      %s280 = sphi 0, %s278
      %s281 = sphi 0, %s280
      %s295 = sphi 0, %s281
    $region4: #{tpu_custom_call.1} parent=1 // loop_header_branch
      %22 = sbr.rel (%p20) target = $region8
    $region5: #{tpu_custom_call.1} parent=1 // loop_body
      %s24 = ssub.s32 %s19, 1
      %s25 = ssub.s32 %s19, 2
      %s26 = sadd.s32 %s19, 1
      %s28 = sadd.s32 %s27, 1
      %p31 = scmp.eq.s32.totalorder %s19, 1
      %p32 = scmp.ne.s32.totalorder %s27, %s29
      %p33 = scmp.eq.s32.totalorder %s19, 0
      %p34 = por %p32, %p33
      %p35 = scmp.ne.s32.totalorder %s27, %s29
      %p36 = scmp.eq.s32.totalorder %s24, 1
      %p37 = por %p35, %p36
      %p38 = scmp.ne.s32.totalorder %s29, %s30
      %p39 = scmp.eq.s32.totalorder %s24, 0
      %p40 = por %p38, %p39
      %p41 = scmp.ne.s32.totalorder %s29, %s30
      %p42 = scmp.eq.s32.totalorder %s25, 1
      %p43 = por %p41, %p42
      %p45 = scmp.ne.s32.totalorder %s30, %s44
      %p46 = scmp.eq.s32.totalorder %s25, 0
      %p47 = por %p45, %p46
      %s49 = sadd.s32 %s48, 1
      %p52 = scmp.eq.s32.totalorder %s19, 1
      %p53 = scmp.ne.s32.totalorder %s48, %s50
      %p54 = scmp.eq.s32.totalorder %s19, 0
      %p55 = por %p53, %p54
      %p56 = scmp.ne.s32.totalorder %s48, %s50
      %p57 = scmp.eq.s32.totalorder %s24, 1
      %p58 = por %p56, %p57
      %p59 = scmp.ne.s32.totalorder %s50, %s51
      %p60 = scmp.eq.s32.totalorder %s24, 0
      %p61 = por %p59, %p60
      %p62 = scmp.ne.s32.totalorder %s50, %s51
      %p63 = scmp.eq.s32.totalorder %s25, 1
      %p64 = por %p62, %p63
      %p66 = scmp.ne.s32.totalorder %s51, %s65
      %p67 = scmp.eq.s32.totalorder %s25, 0
      %p68 = por %p66, %p67
      %s70 = sadd.s32 %s69, 1
      %p73 = scmp.eq.s32.totalorder %s19, 1
      %p74 = scmp.ne.s32.totalorder %s69, %s71
      %p75 = scmp.eq.s32.totalorder %s19, 0
      %p76 = por %p74, %p75
      %p77 = scmp.ne.s32.totalorder %s69, %s71
      %p78 = scmp.eq.s32.totalorder %s24, 1
      %p79 = por %p77, %p78
      %p80 = scmp.ne.s32.totalorder %s71, %s72
      %p81 = scmp.eq.s32.totalorder %s24, 0
      %p82 = por %p80, %p81
      %p83 = scmp.ne.s32.totalorder %s71, %s72
      %p84 = scmp.eq.s32.totalorder %s25, 1
      %p85 = por %p83, %p84
      %p87 = scmp.ne.s32.totalorder %s72, %s86
      %p88 = scmp.eq.s32.totalorder %s25, 0
      %p89 = por %p87, %p88
      %s91 = sadd.s32 %s90, 1
      %p94 = scmp.eq.s32.totalorder %s19, 1
      %p95 = scmp.ne.s32.totalorder %s90, %s92
      %p96 = scmp.eq.s32.totalorder %s19, 0
      %p97 = por %p95, %p96
      %p98 = scmp.ne.s32.totalorder %s90, %s92
      %p99 = scmp.eq.s32.totalorder %s24, 1
      %p100 = por %p98, %p99
      %p101 = scmp.ne.s32.totalorder %s92, %s93
      %p102 = scmp.eq.s32.totalorder %s24, 0
      %p103 = por %p101, %p102
      %p104 = scmp.ne.s32.totalorder %s92, %s93
      %p105 = scmp.eq.s32.totalorder %s25, 1
      %p106 = por %p104, %p105
      %p108 = scmp.ne.s32.totalorder %s93, %s107
      %p109 = scmp.eq.s32.totalorder %s25, 0
      %p110 = por %p108, %p109
      %s112 = sadd.s32 %s111, 1
      %p115 = scmp.eq.s32.totalorder %s19, 1
      %p116 = scmp.ne.s32.totalorder %s111, %s113
      %p117 = scmp.eq.s32.totalorder %s19, 0
      %p118 = por %p116, %p117
      %p119 = scmp.ne.s32.totalorder %s111, %s113
      %p120 = scmp.eq.s32.totalorder %s24, 1
      %p121 = por %p119, %p120
      %p122 = scmp.ne.s32.totalorder %s113, %s114
      %p123 = scmp.eq.s32.totalorder %s24, 0
      %p124 = por %p122, %p123
      %p125 = scmp.ne.s32.totalorder %s113, %s114
      %p126 = scmp.eq.s32.totalorder %s25, 1
      %p127 = por %p125, %p126
      %p129 = scmp.ne.s32.totalorder %s114, %s128
      %p130 = scmp.eq.s32.totalorder %s25, 0
      %p131 = por %p129, %p130
      %s133 = sadd.s32 %s132, 1
      %p136 = scmp.eq.s32.totalorder %s19, 1
      %p137 = scmp.ne.s32.totalorder %s132, %s134
      %p138 = scmp.eq.s32.totalorder %s19, 0
      %p139 = por %p137, %p138
      %p140 = scmp.ne.s32.totalorder %s132, %s134
      %p141 = scmp.eq.s32.totalorder %s24, 1
      %p142 = por %p140, %p141
      %p143 = scmp.ne.s32.totalorder %s134, %s135
      %p144 = scmp.eq.s32.totalorder %s24, 0
      %p145 = por %p143, %p144
      %p146 = scmp.ne.s32.totalorder %s134, %s135
      %p147 = scmp.eq.s32.totalorder %s25, 1
      %p148 = por %p146, %p147
      %p150 = scmp.ne.s32.totalorder %s135, %s149
      %p151 = scmp.eq.s32.totalorder %s25, 0
      %p152 = por %p150, %p151
      %s154 = sadd.s32 %s153, 1
      %p157 = scmp.eq.s32.totalorder %s19, 1
      %p158 = scmp.ne.s32.totalorder %s153, %s155
      %p159 = scmp.eq.s32.totalorder %s19, 0
      %p160 = por %p158, %p159
      %p161 = scmp.ne.s32.totalorder %s153, %s155
      %p162 = scmp.eq.s32.totalorder %s24, 1
      %p163 = por %p161, %p162
      %p164 = scmp.ne.s32.totalorder %s155, %s156
      %p165 = scmp.eq.s32.totalorder %s24, 0
      %p166 = por %p164, %p165
      %p167 = scmp.ne.s32.totalorder %s155, %s156
      %p168 = scmp.eq.s32.totalorder %s25, 1
      %p169 = por %p167, %p168
      %p171 = scmp.ne.s32.totalorder %s156, %s170
      %p172 = scmp.eq.s32.totalorder %s25, 0
      %p173 = por %p171, %p172
      %s174 = ssub.s32 %s19, %s26
      %p175 = scmp.eq.s32.totalorder %s174, 0
      %s177 = sadd.s32 %s176, 1
      %s178 = scalar_select %p175, %s176, %s177
      %p181 = pneg %p175
      %p182 = scmp.eq.s32.totalorder %s19, 1
      %p183 = por %p181, %p182
      %p184 = scmp.ne.s32.totalorder %s176, %s179
      %p185 = scmp.eq.s32.totalorder %s19, 0
      %p186 = por %p184, %p185
      %p187 = scmp.ne.s32.totalorder %s176, %s179
      %p188 = scmp.eq.s32.totalorder %s24, 1
      %p189 = por %p187, %p188
      %p190 = scmp.ne.s32.totalorder %s179, %s180
      %p191 = scmp.eq.s32.totalorder %s24, 0
      %p192 = por %p190, %p191
      %p193 = scmp.ne.s32.totalorder %s179, %s180
      %p194 = scmp.eq.s32.totalorder %s25, 1
      %p195 = por %p193, %p194
      %p197 = scmp.ne.s32.totalorder %s180, %s196
      %p198 = scmp.eq.s32.totalorder %s25, 0
      %p199 = por %p197, %p198
      %s200 = ssub.s32 %s19, %s26
      %p201 = scmp.eq.s32.totalorder %s200, 0
      %s203 = sadd.s32 %s202, 1
      %s204 = scalar_select %p201, %s202, %s203
      %p207 = pneg %p201
      %p208 = scmp.eq.s32.totalorder %s19, 1
      %p209 = por %p207, %p208
      %p210 = scmp.ne.s32.totalorder %s202, %s205
      %p211 = scmp.eq.s32.totalorder %s19, 0
      %p212 = por %p210, %p211
      %p213 = scmp.ne.s32.totalorder %s202, %s205
      %p214 = scmp.eq.s32.totalorder %s24, 1
      %p215 = por %p213, %p214
      %p216 = scmp.ne.s32.totalorder %s205, %s206
      %p217 = scmp.eq.s32.totalorder %s24, 0
      %p218 = por %p216, %p217
      %p219 = scmp.ne.s32.totalorder %s205, %s206
      %p220 = scmp.eq.s32.totalorder %s25, 1
      %p221 = por %p219, %p220
      %p223 = scmp.ne.s32.totalorder %s206, %s222
      %p224 = scmp.eq.s32.totalorder %s25, 0
      %p225 = por %p223, %p224
      %s226 = ssub.s32 %s19, %s26
      %p227 = scmp.eq.s32.totalorder %s226, 0
      %s229 = sadd.s32 %s228, 1
      %s230 = scalar_select %p227, %s228, %s229
      %p233 = pneg %p227
      %p234 = scmp.eq.s32.totalorder %s19, 1
      %p235 = por %p233, %p234
      %p236 = scmp.ne.s32.totalorder %s228, %s231
      %p237 = scmp.eq.s32.totalorder %s19, 0
      %p238 = por %p236, %p237
      %p239 = scmp.ne.s32.totalorder %s228, %s231
      %p240 = scmp.eq.s32.totalorder %s24, 1
      %p241 = por %p239, %p240
      %p242 = scmp.ne.s32.totalorder %s231, %s232
      %p243 = scmp.eq.s32.totalorder %s24, 0
      %p244 = por %p242, %p243
      %p245 = scmp.ne.s32.totalorder %s231, %s232
      %p246 = scmp.eq.s32.totalorder %s25, 1
      %p247 = por %p245, %p246
      %p249 = scmp.ne.s32.totalorder %s232, %s248
      %p250 = scmp.eq.s32.totalorder %s25, 0
      %p251 = por %p249, %p250
      %s252 = ssub.s32 %s19, %s26
      %p253 = scmp.eq.s32.totalorder %s252, 0
      %s255 = sadd.s32 %s254, 1
      %s256 = scalar_select %p253, %s254, %s255
      %p259 = pneg %p253
      %p260 = scmp.eq.s32.totalorder %s19, 1
      %p261 = por %p259, %p260
      %p262 = scmp.ne.s32.totalorder %s254, %s257
      %p263 = scmp.eq.s32.totalorder %s19, 0
      %p264 = por %p262, %p263
      %p265 = scmp.ne.s32.totalorder %s254, %s257
      %p266 = scmp.eq.s32.totalorder %s24, 1
      %p267 = por %p265, %p266
      %p268 = scmp.ne.s32.totalorder %s257, %s258
      %p269 = scmp.eq.s32.totalorder %s24, 0
      %p270 = por %p268, %p269
      %p271 = scmp.ne.s32.totalorder %s257, %s258
      %p272 = scmp.eq.s32.totalorder %s25, 1
      %p273 = por %p271, %p272
      %p275 = scmp.ne.s32.totalorder %s258, %s274
      %p276 = scmp.eq.s32.totalorder %s25, 0
      %p277 = por %p275, %p276
      %s279 = sadd.s32 %s278, 1
      %p282 = scmp.eq.s32.totalorder %s19, 1
      %p283 = scmp.ne.s32.totalorder %s278, %s280
      %p284 = scmp.eq.s32.totalorder %s19, 0
      %p285 = por %p283, %p284
      %p286 = scmp.ne.s32.totalorder %s278, %s280
      %p287 = scmp.eq.s32.totalorder %s24, 1
      %p288 = por %p286, %p287
      %p289 = scmp.ne.s32.totalorder %s280, %s281
      %p290 = scmp.eq.s32.totalorder %s24, 0
      %p291 = por %p289, %p290
      %p292 = scmp.ne.s32.totalorder %s280, %s281
      %p293 = scmp.eq.s32.totalorder %s25, 1
      %p294 = por %p292, %p293
      %p296 = scmp.ne.s32.totalorder %s281, %s295
      %p297 = scmp.eq.s32.totalorder %s25, 0
      %p298 = por %p296, %p297
      %p299 = scmp.le.s32.totalorder 1, %s19
      %p300 = scmp.lt.s32.totalorder %s19, 3
      %p301 = pnand %p299, %p300
      %p302 = pneg %p301
      // Predicated region
      $region9: #{tpu_custom_call.1} parent=5 // pred_check
        _
      $region10: #{tpu_custom_call.1} parent=5 // pred_check_branch
        %304 = sbr.rel (%p301) target = $region12
      $region11: #{tpu_custom_call.1} parent=5 // pred_region
        %s305 = ssub.s32 %s19, 1
        // Predicated region
        $region13: #{tpu_custom_call.1} parent=11 // pred_check
          %p306 = pneg %p40
        $region14: #{tpu_custom_call.1} parent=11 // pred_check_branch
          %308 = sbr.rel (%p306) target = $region16
        $region15: #{tpu_custom_call.1} parent=11 // pred_region
          _
        $region16: #{tpu_custom_call.1} parent=11 // pred_fallthru
          _
        // Predicated region
        $region17: #{tpu_custom_call.1} parent=11 // pred_check
          %p309 = pneg %p61
        $region18: #{tpu_custom_call.1} parent=11 // pred_check_branch
          %311 = sbr.rel (%p309) target = $region20
        $region19: #{tpu_custom_call.1} parent=11 // pred_region
          _
        $region20: #{tpu_custom_call.1} parent=11 // pred_fallthru
          _
        // Predicated region
        $region21: #{tpu_custom_call.1} parent=11 // pred_check
          %p312 = pneg %p82
        $region22: #{tpu_custom_call.1} parent=11 // pred_check_branch
          %314 = sbr.rel (%p312) target = $region24
        $region23: #{tpu_custom_call.1} parent=11 // pred_region
          _
        $region24: #{tpu_custom_call.1} parent=11 // pred_fallthru
          _
        // Predicated region
        $region25: #{tpu_custom_call.1} parent=11 // pred_check
          %p315 = pneg %p103
        $region26: #{tpu_custom_call.1} parent=11 // pred_check_branch
          %317 = sbr.rel (%p315) target = $region28
        $region27: #{tpu_custom_call.1} parent=11 // pred_region
          %s319 = ssub.s32 192, 192
          %320 = vsyncadd [#allocation3], %s319
          %s321 = sshll.u32 [#allocation2], 4
          %s322 = int_to_ptr.vmem [resolvable:$true] %s321
          %327 = dma.hbm_to_vmem [thread:$0]  %s3, 192, %s322, [#allocation3], 64, 64, 4
        $region28: #{tpu_custom_call.1} parent=11 // pred_fallthru
          _
        // Predicated region
        $region29: #{tpu_custom_call.1} parent=11 // pred_check
          %p328 = pneg %p124
        $region30: #{tpu_custom_call.1} parent=11 // pred_check_branch
          %330 = sbr.rel (%p328) target = $region32
        $region31: #{tpu_custom_call.1} parent=11 // pred_region
          %s332 = ssub.s32 192, 192
          %333 = vsyncadd [#allocation5], %s332
          %s334 = sshll.u32 [#allocation4], 4
          %s335 = int_to_ptr.vmem [resolvable:$true] %s334
          %340 = dma.hbm_to_vmem [thread:$0]  %s4, 192, %s335, [#allocation5], 64, 64, 4
        $region32: #{tpu_custom_call.1} parent=11 // pred_fallthru
          _
        // Predicated region
        $region33: #{tpu_custom_call.1} parent=11 // pred_check
          %p341 = pneg %p145
        $region34: #{tpu_custom_call.1} parent=11 // pred_check_branch
          %343 = sbr.rel (%p341) target = $region36
        $region35: #{tpu_custom_call.1} parent=11 // pred_region
          _
        $region36: #{tpu_custom_call.1} parent=11 // pred_fallthru
          _
        // Predicated region
        $region37: #{tpu_custom_call.1} parent=11 // pred_check
          %p344 = pneg %p166
        $region38: #{tpu_custom_call.1} parent=11 // pred_check_branch
          %346 = sbr.rel (%p344) target = $region40
        $region39: #{tpu_custom_call.1} parent=11 // pred_region
          _
        $region40: #{tpu_custom_call.1} parent=11 // pred_fallthru
          _
      $region12: #{tpu_custom_call.1} parent=5 // pred_fallthru
        _
      %p347 = scmp.lt.s32.totalorder %s19, 2
      // Predicated region
      $region41: #{tpu_custom_call.1} parent=5 // pred_check
        %p348 = pneg %p347
      $region42: #{tpu_custom_call.1} parent=5 // pred_check_branch
        %350 = sbr.rel (%p348) target = $region44
      $region43: #{tpu_custom_call.1} parent=5 // pred_region
        // Predicated region
        $region45: #{tpu_custom_call.1} parent=43 // pred_check
          %p351 = pneg %p186
        $region46: #{tpu_custom_call.1} parent=43 // pred_check_branch
          %353 = sbr.rel (%p351) target = $region48
        $region47: #{tpu_custom_call.1} parent=43 // pred_region
          %p354 = scmp.lt.s32.totalorder %s19, 1
          %s355 = scalar_select %p354, %s19, 1
          %s356 = smul.addr %s355, 20
          %s357 = smul.addr %s356, 4
          %s358 = scalar_lea.vmem %s7, %s357
        $region48: #{tpu_custom_call.1} parent=43 // pred_fallthru
          _
        // Predicated region
        $region49: #{tpu_custom_call.1} parent=43 // pred_check
          %p359 = pneg %p212
        $region50: #{tpu_custom_call.1} parent=43 // pred_check_branch
          %361 = sbr.rel (%p359) target = $region52
        $region51: #{tpu_custom_call.1} parent=43 // pred_region
          %s362 = sand.u32 %s19, 1
          %s363 = scalar_lea.sflag [#allocation3], %s362
          %s364 = sand.u32 %s202, 1
          %s365 = smul.addr %s364, 16
          %s366 = scalar_lea.vmem [#allocation6], %s365
          %s368 = ssub.s32 256, 256
          %369 = vsyncadd %s363, %s368
          %s370 = smul.addr %s19, 4
          %s371 = smul.addr %s370, 64
          %s372 = scalar_lea.hbm %s8, %s371
          %s373 = sshll.u32 %s366, 4
          %s374 = int_to_ptr.vmem [resolvable:$true] %s373
          %379 = dma.hbm_to_vmem [thread:$0]  %s372, 256, %s374, %s363, 64, 64, 4
        $region52: #{tpu_custom_call.1} parent=43 // pred_fallthru
          _
        // Predicated region
        $region53: #{tpu_custom_call.1} parent=43 // pred_check
          %p380 = pneg %p238
        $region54: #{tpu_custom_call.1} parent=43 // pred_check_branch
          %382 = sbr.rel (%p380) target = $region56
        $region55: #{tpu_custom_call.1} parent=43 // pred_region
          %p383 = scmp.lt.s32.totalorder %s19, 1
          %s384 = scalar_select %p383, %s19, 1
          %s385 = smul.addr %s384, 2
          %s386 = smul.addr %s385, 8
          %s387 = scalar_lea.vmem %s9, %s386
        $region56: #{tpu_custom_call.1} parent=43 // pred_fallthru
          _
        // Predicated region
        $region57: #{tpu_custom_call.1} parent=43 // pred_check
          %p388 = pneg %p264
        $region58: #{tpu_custom_call.1} parent=43 // pred_check_branch
          %390 = sbr.rel (%p388) target = $region60
        $region59: #{tpu_custom_call.1} parent=43 // pred_region
          %p391 = scmp.lt.s32.totalorder %s19, 1
          %s392 = scalar_select %p391, %s19, 1
          %s393 = scalar_lea.vmem %s10, %s392
        $region60: #{tpu_custom_call.1} parent=43 // pred_fallthru
          _
      $region44: #{tpu_custom_call.1} parent=5 // pred_fallthru
        _
      %p394 = scmp.le.s32.totalorder 1, %s19
      %p395 = scmp.lt.s32.totalorder %s19, 3
      %p396 = pnand %p394, %p395
      %p397 = pneg %p396
      // Predicated region
      $region61: #{tpu_custom_call.1} parent=5 // pred_check
        _
      $region62: #{tpu_custom_call.1} parent=5 // pred_check_branch
        %399 = sbr.rel (%p396) target = $region64
      $region63: #{tpu_custom_call.1} parent=5 // pred_region
        %s400 = ssub.s32 %s19, 1
        // Predicated region
        $region65: #{tpu_custom_call.1} parent=63 // pred_check
          %p401 = pneg %p103
        $region66: #{tpu_custom_call.1} parent=63 // pred_check_branch
          %403 = sbr.rel (%p401) target = $region68
        $region67: #{tpu_custom_call.1} parent=63 // pred_region
          %404 = dma.done [#allocation3], 192
        $region68: #{tpu_custom_call.1} parent=63 // pred_fallthru
          _
        // Predicated region
        $region69: #{tpu_custom_call.1} parent=63 // pred_check
          %p405 = pneg %p124
        $region70: #{tpu_custom_call.1} parent=63 // pred_check_branch
          %407 = sbr.rel (%p405) target = $region72
        $region71: #{tpu_custom_call.1} parent=63 // pred_region
          %408 = dma.done [#allocation5], 192
        $region72: #{tpu_custom_call.1} parent=63 // pred_fallthru
          _
        %s409 = sand.u32 %s24, 1
        %s410 = scalar_lea.sflag [#allocation3], %s409
        %s411 = sand.u32 %s205, 1
        %s412 = smul.addr %s411, 16
        %s413 = scalar_lea.vmem [#allocation6], %s412
        // Predicated region
        $region73: #{tpu_custom_call.1} parent=63 // pred_check
          %p414 = pneg %p218
        $region74: #{tpu_custom_call.1} parent=63 // pred_check_branch
          %416 = sbr.rel (%p414) target = $region76
        $region75: #{tpu_custom_call.1} parent=63 // pred_region
          %417 = dma.done %s410, 256
        $region76: #{tpu_custom_call.1} parent=63 // pred_fallthru
          _
        %p418 = pneg %p40
        %p419 = pneg %p37
        %p420 = pneg %p61
        %p421 = pneg %p58
        %p422 = pneg %p82
        %p423 = pneg %p79
        %p424 = pneg %p103
        %p425 = pneg %p100
        %p426 = pneg %p124
        %p427 = pneg %p121
        %p428 = pneg %p145
        %p429 = pneg %p142
        %p430 = pneg %p166
        %p431 = pneg %p163
        %p432 = scmp.lt.s32.totalorder %s24, 1
        %s433 = scalar_select %p432, %s24, 1
        %s434 = smul.addr %s433, 20
        %s435 = smul.addr %s434, 4
        %s436 = scalar_lea.vmem %s7, %s435
        %p437 = pneg %p192
        %p438 = pneg %p189
        %s439 = sand.u32 %s24, 1
        %s440 = scalar_lea.sflag [#allocation3], %s439
        %s441 = sand.u32 %s205, 1
        %s442 = smul.addr %s441, 16
        %s443 = scalar_lea.vmem [#allocation6], %s442
        %p444 = pneg %p218
        %p445 = pneg %p215
        %p446 = scmp.lt.s32.totalorder %s24, 1
        %s447 = scalar_select %p446, %s24, 1
        %s448 = smul.addr %s447, 2
        %s449 = smul.addr %s448, 8
        %s450 = scalar_lea.vmem %s9, %s449
        %p451 = pneg %p244
        %p452 = pneg %p241
        %p453 = scmp.lt.s32.totalorder %s24, 1
        %s454 = scalar_select %p453, %s24, 1
        %s455 = scalar_lea.vmem %s10, %s454
        %p456 = pneg %p270
        %p457 = pneg %p267
        %p458 = pneg %p291
        %p459 = pneg %p288
        %p460 = scmp.lt.s32.totalorder %s24, 1
        %s461 = scalar_select %p460, %s24, 1
        %s462 = smul.addr %s461, 20
        %s463 = smul.addr %s462, 4
        %s464 = scalar_lea.vmem %s7, %s463
        %p465 = scmp.lt.s32.totalorder %s24, 1
        %s466 = scalar_select %p465, %s24, 1
        %s467 = smul.addr %s466, 2
        %s468 = smul.addr %s467, 8
        %s469 = scalar_lea.vmem %s9, %s468
        %p470 = scmp.lt.s32.totalorder %s24, 1
        %s471 = scalar_select %p470, %s24, 1
        %s472 = scalar_lea.vmem %s10, %s471
        %p474 = scmp.eq.s32.totalorder %s24, 0
        // Predicated region
        $region77: #{tpu_custom_call.1} parent=63 // pred_check
          %p475 = pneg %p474
        $region78: #{tpu_custom_call.1} parent=63 // pred_check_branch
          %477 = sbr.rel (%p475) target = $region80
        $region79: #{tpu_custom_call.1} parent=63 // pred_region
          %v478 = vld [vmem:[%s0] sm:$0xff]
          %v479 = vld [vmem:[%s0 + $0x8] sm:$0xff]
          %v480 = vld [vmem:[%s0 + $0x10] sm:$0xff]
          %v481 = vld [vmem:[%s0 + $0x18] sm:$0xff]
          %v482 = vld [vmem:[%s0 + $0x20] sm:$0xff]
          %v483 = vld [vmem:[%s0 + $0x28] sm:$0xff]
          %v484 = vld [vmem:[%s0 + $0x30] sm:$0xff]
          %v485 = vld [vmem:[%s0 + $0x38] sm:$0xff]
          %v486 = vld [vmem:[%s0 + $0x40] sm:$0xff]
          %v487 = vld [vmem:[%s0 + $0x48] sm:$0xff]
          %v488 = vld [vmem:[%s0 + $0x50] sm:$0xff]
          %v489 = vld [vmem:[%s0 + $0x58] sm:$0xff]
          %v490 = vld [vmem:[%s0 + $0x60] sm:$0xff]
          %v491 = vld [vmem:[%s0 + $0x68] sm:$0xff]
          %v492 = vld [vmem:[%s0 + $0x70] sm:$0xff]
          %v493 = vld [vmem:[%s0 + $0x78] sm:$0xff]
          %v494 = vld [vmem:[%s1] sm:$0xf]
          %v495 = vld [vmem:[%s1 + $0x4] sm:$0xf]
          %v496 = vld [vmem:[%s1 + $0x8] sm:$0xf]
          %v497 = vld [vmem:[%s1 + $0xc] sm:$0xf]
          %v498 = vld [vmem:[%s1 + $0x10] sm:$0xf]
          %v499 = vld [vmem:[%s1 + $0x14] sm:$0xf]
          %v500 = vld [vmem:[%s1 + $0x18] sm:$0xf]
          %v501 = vld [vmem:[%s1 + $0x1c] sm:$0xf]
          %v502 = vld [vmem:[%s1 + $0x20] sm:$0xf]
          %v503 = vld [vmem:[%s1 + $0x24] sm:$0xf]
          %v504 = vld [vmem:[%s1 + $0x28] sm:$0xf]
          %v505 = vld [vmem:[%s1 + $0x2c] sm:$0xf]
          %v506 = vld [vmem:[%s1 + $0x30] sm:$0xf]
          %v507 = vld [vmem:[%s1 + $0x34] sm:$0xf]
          %v508 = vld [vmem:[%s1 + $0x38] sm:$0xf]
          %v509 = vld [vmem:[%s1 + $0x3c] sm:$0xf]
          %v510 = vld [vmem:[%s1 + $0x40] sm:$0xf]
          %v511 = vld [vmem:[%s1 + $0x44] sm:$0xf]
          %v512 = vld [vmem:[%s1 + $0x48] sm:$0xf]
          %v513 = vld [vmem:[%s1 + $0x4c] sm:$0xf]
          %v514 = vld [vmem:[%s1 + $0x50] sm:$0xf]
          %v515 = vld [vmem:[%s1 + $0x54] sm:$0xf]
          %v516 = vld [vmem:[%s1 + $0x58] sm:$0xf]
          %v517 = vld [vmem:[%s1 + $0x5c] sm:$0xf]
          %v518 = vpack.c.bf16 %v480, %v478
          %v519 = vpack.c.bf16 %v481, %v479
          %v520 = vpack.c.bf16 %v484, %v482
          %v521 = vpack.c.bf16 %v485, %v483
          %v522 = vpack.c.bf16 %v488, %v486
          %v523 = vpack.c.bf16 %v489, %v487
          %v524 = vpack.c.bf16 %v492, %v490
          %v525 = vpack.c.bf16 %v493, %v491
          %v526 = vld [vmem:[%s2] sm:$0xff]
          %v527 = vld [vmem:[%s2 + $0x8] sm:$0xff]
          %v528 = vld [vmem:[%s2 + $0x10] sm:$0xff]
          %v529 = vld [vmem:[%s2 + $0x18] sm:$0xff]
          %v530 = vld [vmem:[%s2 + $0x20] sm:$0xff]
          %v531 = vld [vmem:[%s2 + $0x28] sm:$0xff]
          %v532 = vld [vmem:[%s2 + $0x30] sm:$0xff]
          %v533 = vld [vmem:[%s2 + $0x38] sm:$0xff]
          %v558 = vunpack.c.l.b16 %v494
          %v559 = vunpack.c.l.b16 %v495
          %v560 = vunpack.c.l.b16 %v496
          %v561 = vunpack.c.l.b16 %v497
          %v562 = vunpack.c.l.b16 %v498
          %v563 = vunpack.c.l.b16 %v499
          %v564 = vunpack.c.l.b16 %v500
          %v565 = vunpack.c.l.b16 %v501
          %v566 = vunpack.c.l.b16 %v502
          %v567 = vunpack.c.l.b16 %v503
          %v568 = vunpack.c.l.b16 %v504
          %v569 = vunpack.c.l.b16 %v505
          %v570 = vunpack.c.l.b16 %v506
          %v571 = vunpack.c.l.b16 %v507
          %v572 = vunpack.c.l.b16 %v508
          %v573 = vunpack.c.l.b16 %v509
          %v574 = vunpack.c.l.b16 %v510
          %v575 = vunpack.c.l.b16 %v511
          %v576 = vunpack.c.l.b16 %v512
          %v577 = vunpack.c.l.b16 %v513
          %v578 = vunpack.c.l.b16 %v514
          %v579 = vunpack.c.l.b16 %v515
          %v580 = vunpack.c.l.b16 %v516
          %v581 = vunpack.c.l.b16 %v517
          %v582 = vpack.c.b16 %v559, %v558
          %v583 = vpack.c.b16 %v561, %v560
          %v584 = vpack.c.b16 %v563, %v562
          %v585 = vpack.c.b16 %v565, %v564
          %v586 = vpack.c.b16 %v567, %v566
          %v587 = vpack.c.b16 %v569, %v568
          %v588 = vpack.c.b16 %v571, %v570
          %v589 = vpack.c.b16 %v573, %v572
          %v590 = vpack.c.b16 %v575, %v574
          %v591 = vpack.c.b16 %v577, %v576
          %v592 = vpack.c.b16 %v579, %v578
          %v593 = vpack.c.b16 %v581, %v580
          %vm606 = vcmask 523264
          %v608 = vsel %vm606, %v519, 0
          %v611 = vsel %vm606, %v521, 0
          %v614 = vsel %vm606, %v523, 0
          %v617 = vsel %vm606, %v525, 0
          %619 = vmatprep.subr.bf16.mxu0 0
          %620 = vmatpush1.bf16.msra.mxu0 %v589
          %621 = vmatprep.subr.bf16.mxu0 0
          %622 = vmatpush1.bf16.msra.mxu0 %v588
          %623 = vmatprep.subr.bf16.mxu0 0
          %624 = vmatpush1.bf16.msra.mxu0 %v587
          %625 = vmatprep.subr.bf16.mxu0 0
          %626 = vmatpush1.bf16.msra.mxu0 %v586
          %627 = vmatprep.subr.bf16.mxu0 0
          %628 = vmatpush1.bf16.msra.mxu0 %v585
          %629 = vmatprep.subr.bf16.mxu0 0
          %630 = vmatpush1.bf16.msra.mxu0 %v584
          %631 = vmatprep.subr.bf16.mxu0 0
          %632 = vmatpush1.bf16.msra.mxu0 %v583
          %633 = vmatprep.subr.bf16.mxu0 0
          %634 = vmatpush1.bf16.msra.mxu0 %v582
          %635 = vmatprep.subr.bf16.mxu0 0
          %636 = vmatpush2.bf16.msra.mxu0 0
          %637 = vmatprep.subr.bf16.mxu0 0
          %638 = vmatpush2.bf16.msra.mxu0 0
          %639 = vmatprep.subr.bf16.mxu0 0
          %640 = vmatpush2.bf16.msra.mxu0 0
          %641 = vmatprep.subr.bf16.mxu0 0
          %642 = vmatpush2.bf16.msra.mxu0 0
          %643 = vmatprep.subr.bf16.mxu0 0
          %644 = vmatpush2.bf16.msra.mxu0 %v593
          %645 = vmatprep.subr.bf16.mxu0 0
          %646 = vmatpush2.bf16.msra.mxu0 %v592
          %647 = vmatprep.subr.bf16.mxu0 0
          %648 = vmatpush2.bf16.msra.mxu0 %v591
          %649 = vmatprep.subr.bf16.mxu0 0
          %650 = vmatpush2.bf16.msra.mxu0 %v590
          %651 = vmatprep.mubr.bf16.mxu0 %v608
          %652 = vmatmul.mubr.bf16.gmra.mxu0 %v518
          %v653 = vpop.f32.mrf.mxu0
          %v654 = vadd.f32 %v526, %v653
          %v655 = vpop.f32.mrf.mxu0
          %v656 = vpop.f32.mrf.mxu0
          %v657 = vadd.f32 %v527, %v656
          %v658 = vpop.f32.mrf.mxu0
          %659 = vmatprep.mubr.bf16.mxu0 %v611
          %660 = vmatmul.mubr.bf16.gmra.mxu0 %v520
          %v661 = vpop.f32.mrf.mxu0
          %v662 = vadd.f32 %v528, %v661
          %v663 = vpop.f32.mrf.mxu0
          %v664 = vpop.f32.mrf.mxu0
          %v665 = vadd.f32 %v529, %v664
          %v666 = vpop.f32.mrf.mxu0
          %667 = vmatprep.mubr.bf16.mxu0 %v614
          %668 = vmatmul.mubr.bf16.gmra.mxu0 %v522
          %v669 = vpop.f32.mrf.mxu0
          %v670 = vadd.f32 %v530, %v669
          %v671 = vpop.f32.mrf.mxu0
          %v672 = vpop.f32.mrf.mxu0
          %v673 = vadd.f32 %v531, %v672
          %v674 = vpop.f32.mrf.mxu0
          %675 = vmatprep.mubr.bf16.mxu0 %v617
          %676 = vmatmul.mubr.bf16.gmra.mxu0 %v524
          %v677 = vpop.f32.mrf.mxu0
          %v678 = vadd.f32 %v532, %v677
          %v679 = vpop.f32.mrf.mxu0
          %v680 = vpop.f32.mrf.mxu0
          %v681 = vadd.f32 %v533, %v680
          %v682 = vpop.f32.mrf.mxu0
          %683 = vdwg.mxu0
          %vm684 = vcmask 261120
          %685 = vst.msk [vmem:[%s11] sm:$0xff] %vm684, %v654
          %686 = vst.msk [vmem:[%s11 + $0x8] sm:$0xff] %vm684, %v657
          %687 = vst.msk [vmem:[%s11 + $0x10] sm:$0xff] %vm684, %v662
          %688 = vst.msk [vmem:[%s11 + $0x18] sm:$0xff] %vm684, %v665
          %689 = vst.msk [vmem:[%s11 + $0x20] sm:$0xff] %vm684, %v670
          %690 = vst.msk [vmem:[%s11 + $0x28] sm:$0xff] %vm684, %v673
          %691 = vst.msk [vmem:[%s11 + $0x30] sm:$0xff] %vm684, %v678
          %692 = vst.msk [vmem:[%s11 + $0x38] sm:$0xff] %vm684, %v681
        $region80: #{tpu_custom_call.1} parent=63 // pred_fallthru
          _
        %v693 = vld [vmem:[%s11] sm:$0xff]
        %v694 = vld [vmem:[%s11 + $0x8] sm:$0xff]
        %v695 = vld [vmem:[%s11 + $0x10] sm:$0xff]
        %v696 = vld [vmem:[%s11 + $0x18] sm:$0xff]
        %v697 = vld [vmem:[%s11 + $0x20] sm:$0xff]
        %v698 = vld [vmem:[%s11 + $0x28] sm:$0xff]
        %v699 = vld [vmem:[%s11 + $0x30] sm:$0xff]
        %v700 = vld [vmem:[%s11 + $0x38] sm:$0xff]
        %v701 = vld [vmem:[%s464] sm:$0xf]
        %v702 = vld [vmem:[%s464 + $0x4] sm:$0xf]
        %v703 = vld [vmem:[%s464 + $0x8] sm:$0xf]
        %v704 = vld [vmem:[%s464 + $0xc] sm:$0xf]
        %v705 = vld [vmem:[%s464 + $0x10] sm:$0xf]
        %v706 = vld [vmem:[%s464 + $0x14] sm:$0xf]
        %v707 = vld [vmem:[%s464 + $0x18] sm:$0xf]
        %v708 = vld [vmem:[%s464 + $0x1c] sm:$0xf]
        %v709 = vld [vmem:[%s464 + $0x20] sm:$0xf]
        %v710 = vld [vmem:[%s464 + $0x24] sm:$0xf]
        %v711 = vld [vmem:[%s464 + $0x28] sm:$0xf]
        %v712 = vld [vmem:[%s464 + $0x2c] sm:$0xf]
        %v713 = vld [vmem:[%s464 + $0x30] sm:$0xf]
        %v714 = vld [vmem:[%s464 + $0x34] sm:$0xf]
        %v715 = vld [vmem:[%s464 + $0x38] sm:$0xf]
        %v716 = vld [vmem:[%s464 + $0x3c] sm:$0xf]
        %v717 = vld [vmem:[%s464 + $0x40] sm:$0xf]
        %v718 = vld [vmem:[%s464 + $0x44] sm:$0xf]
        %v719 = vld [vmem:[%s464 + $0x48] sm:$0xf]
        %v720 = vld [vmem:[%s464 + $0x4c] sm:$0xf]
        %v721 = vld [vmem:[%s469] sm:$0xff]
        %v722 = vld [vmem:[%s469 + $0x8] sm:$0x1]
        %vm723 = vcmask 261120
        %v724 = vsel %vm723, %v693, 0.0
        %725 = vadd.xlane.f32.xlu0 %v724
        %v726 = vpop.xlane.xlu0 %725
        %v727 = vsel %vm723, %v694, 0.0
        %728 = vadd.xlane.f32.xlu0 %v727
        %v729 = vpop.xlane.xlu0 %728
        %v730 = vsel %vm723, %v695, 0.0
        %731 = vadd.xlane.f32.xlu0 %v730
        %v732 = vpop.xlane.xlu0 %731
        %v733 = vsel %vm723, %v696, 0.0
        %734 = vadd.xlane.f32.xlu0 %v733
        %v735 = vpop.xlane.xlu0 %734
        %v736 = vsel %vm723, %v697, 0.0
        %737 = vadd.xlane.f32.xlu0 %v736
        %v738 = vpop.xlane.xlu0 %737
        %v739 = vsel %vm723, %v698, 0.0
        %740 = vadd.xlane.f32.xlu0 %v739
        %v741 = vpop.xlane.xlu0 %740
        %v742 = vsel %vm723, %v699, 0.0
        %743 = vadd.xlane.f32.xlu0 %v742
        %v744 = vpop.xlane.xlu0 %743
        %v745 = vsel %vm723, %v700, 0.0
        %746 = vadd.xlane.f32.xlu0 %v745
        %v747 = vpop.xlane.xlu0 %746
        %v748 = vrcp.pop 32.0
        %v749 = vmul.f32 %v726, %v748
        %v750 = vmul.f32 %v729, %v748
        %v751 = vmul.f32 %v732, %v748
        %v752 = vmul.f32 %v735, %v748
        %v753 = vmul.f32 %v738, %v748
        %v754 = vmul.f32 %v741, %v748
        %v755 = vmul.f32 %v744, %v748
        %v756 = vmul.f32 %v747, %v748
        %v757 = vsub.f32 %v693, %v749
        %v758 = vsub.f32 %v694, %v750
        %v759 = vsub.f32 %v695, %v751
        %v760 = vsub.f32 %v696, %v752
        %v761 = vsub.f32 %v697, %v753
        %v762 = vsub.f32 %v698, %v754
        %v763 = vsub.f32 %v699, %v755
        %v764 = vsub.f32 %v700, %v756
        %v765 = vmul.f32 %v757, %v757
        %v766 = vmul.f32 %v758, %v758
        %v767 = vmul.f32 %v759, %v759
        %v768 = vmul.f32 %v760, %v760
        %v769 = vmul.f32 %v761, %v761
        %v770 = vmul.f32 %v762, %v762
        %v771 = vmul.f32 %v763, %v763
        %v772 = vmul.f32 %v764, %v764
        %v773 = vsel %vm723, %v765, 0.0
        %774 = vadd.xlane.f32.xlu0 %v773
        %v775 = vpop.xlane.xlu0 %774
        %v776 = vsel %vm723, %v766, 0.0
        %777 = vadd.xlane.f32.xlu0 %v776
        %v778 = vpop.xlane.xlu0 %777
        %v779 = vsel %vm723, %v767, 0.0
        %780 = vadd.xlane.f32.xlu0 %v779
        %v781 = vpop.xlane.xlu0 %780
        %v782 = vsel %vm723, %v768, 0.0
        %783 = vadd.xlane.f32.xlu0 %v782
        %v784 = vpop.xlane.xlu0 %783
        %v785 = vsel %vm723, %v769, 0.0
        %786 = vadd.xlane.f32.xlu0 %v785
        %v787 = vpop.xlane.xlu0 %786
        %v788 = vsel %vm723, %v770, 0.0
        %789 = vadd.xlane.f32.xlu0 %v788
        %v790 = vpop.xlane.xlu0 %789
        %v791 = vsel %vm723, %v771, 0.0
        %792 = vadd.xlane.f32.xlu0 %v791
        %v793 = vpop.xlane.xlu0 %792
        %v794 = vsel %vm723, %v772, 0.0
        %795 = vadd.xlane.f32.xlu0 %v794
        %v796 = vpop.xlane.xlu0 %795
        %v797 = vmul.f32 %v775, %v748
        %v798 = vmul.f32 %v778, %v748
        %v799 = vmul.f32 %v781, %v748
        %v800 = vmul.f32 %v784, %v748
        %v801 = vmul.f32 %v787, %v748
        %v802 = vmul.f32 %v790, %v748
        %v803 = vmul.f32 %v793, %v748
        %v804 = vmul.f32 %v796, %v748
        %v805 = vadd.f32 %v797, 1e-06
        %v806 = vadd.f32 %v798, 1e-06
        %v807 = vadd.f32 %v799, 1e-06
        %v808 = vadd.f32 %v800, 1e-06
        %v809 = vadd.f32 %v801, 1e-06
        %v810 = vadd.f32 %v802, 1e-06
        %v811 = vadd.f32 %v803, 1e-06
        %v812 = vadd.f32 %v804, 1e-06
        %v813 = vrsqrt.pop %v805
        %v814 = vrsqrt.pop %v806
        %v815 = vrsqrt.pop %v807
        %v816 = vrsqrt.pop %v808
        %v817 = vrsqrt.pop %v809
        %v818 = vrsqrt.pop %v810
        %v819 = vrsqrt.pop %v811
        %v820 = vrsqrt.pop %v812
        %v821 = vmul.f32 %v757, %v813
        %v822 = vmul.f32 %v758, %v814
        %v823 = vmul.f32 %v759, %v815
        %v824 = vmul.f32 %v760, %v816
        %v825 = vmul.f32 %v761, %v817
        %v826 = vmul.f32 %v762, %v818
        %v827 = vmul.f32 %v763, %v819
        %v828 = vmul.f32 %v764, %v820
        %v829 = vlaneseq
        %v830 = vshrl.u32 %v829, 7
        %v831 = vsub.s32 0, %v830
        %v832 = vrot.slane %v721, %v831
        %v833 = vmul.f32 %v821, %v832
        %v834 = vmul.f32 %v822, %v832
        %v835 = vmul.f32 %v823, %v832
        %v836 = vmul.f32 %v824, %v832
        %v837 = vmul.f32 %v825, %v832
        %v838 = vmul.f32 %v826, %v832
        %v839 = vmul.f32 %v827, %v832
        %v840 = vmul.f32 %v828, %v832
        %v841 = vlaneseq
        %v842 = vshrl.u32 %v841, 7
        %v843 = vsub.s32 1, %v842
        %v844 = vrot.slane %v721, %v843
        %v845 = vadd.f32 %v833, %v844
        %v846 = vadd.f32 %v834, %v844
        %v847 = vadd.f32 %v835, %v844
        %v848 = vadd.f32 %v836, %v844
        %v849 = vadd.f32 %v837, %v844
        %v850 = vadd.f32 %v838, %v844
        %v851 = vadd.f32 %v839, %v844
        %v852 = vadd.f32 %v840, %v844
        %v853 = vpack.c.bf16 %v846, %v845
        %v854 = vpack.c.bf16 %v848, %v847
        %v855 = vpack.c.bf16 %v850, %v849
        %v856 = vpack.c.bf16 %v852, %v851
        %v857 = vlaneseq
        %v858 = vshrl.u32 %v857, 7
        %v859 = vsub.s32 2, %v858
        %v860 = vrot.slane %v721, %v859
        %v865 = vunpack.c.l.b16 %v701
        %v866 = vunpack.c.l.b16 %v702
        %v867 = vunpack.c.l.b16 %v703
        %v868 = vunpack.c.l.b16 %v704
        %v869 = vpack.c.b16 %v866, %v865
        %v870 = vpack.c.b16 %v868, %v867
        %v874 = vsel %vm723, %v853, 0
        %v877 = vsel %vm723, %v854, 0
        %v880 = vsel %vm723, %v855, 0
        %v883 = vsel %vm723, %v856, 0
        %885 = vmatprep.subr.bf16.mxu0 0
        %886 = vmatpush1.bf16.msra.mxu0 0
        %887 = vmatprep.subr.bf16.mxu0 0
        %888 = vmatpush1.bf16.msra.mxu0 0
        %889 = vmatprep.subr.bf16.mxu0 0
        %890 = vmatpush1.bf16.msra.mxu0 0
        %891 = vmatprep.subr.bf16.mxu0 0
        %892 = vmatpush1.bf16.msra.mxu0 0
        %893 = vmatprep.subr.bf16.mxu0 0
        %894 = vmatpush1.bf16.msra.mxu0 0
        %895 = vmatprep.subr.bf16.mxu0 0
        %896 = vmatpush1.bf16.msra.mxu0 0
        %897 = vmatprep.subr.bf16.mxu0 0
        %898 = vmatpush1.bf16.msra.mxu0 %v870
        %899 = vmatprep.subr.bf16.mxu0 0
        %900 = vmatpush1.bf16.msra.mxu0 %v869
        %901 = vmatprep.subr.bf16.mxu0 0
        %902 = vmatpush2.bf16.msra.mxu0 0
        %903 = vmatprep.subr.bf16.mxu0 0
        %904 = vmatpush2.bf16.msra.mxu0 0
        %905 = vmatprep.subr.bf16.mxu0 0
        %906 = vmatpush2.bf16.msra.mxu0 0
        %907 = vmatprep.subr.bf16.mxu0 0
        %908 = vmatpush2.bf16.msra.mxu0 0
        %909 = vmatprep.subr.bf16.mxu0 0
        %910 = vmatpush2.bf16.msra.mxu0 0
        %911 = vmatprep.subr.bf16.mxu0 0
        %912 = vmatpush2.bf16.msra.mxu0 0
        %913 = vmatprep.subr.bf16.mxu0 0
        %914 = vmatpush2.bf16.msra.mxu0 0
        %915 = vmatprep.subr.bf16.mxu0 0
        %916 = vmatpush2.bf16.msra.mxu0 0
        %917 = vmatprep.mubr.bf16.mxu0 0
        %918 = vmatmul.mubr.bf16.gmra.mxu0 %v874
        %v919 = vpop.f32.mrf.mxu0
        %v920 = vadd.f32 %v860, %v919
        %v921 = vpop.f32.mrf.mxu0
        %v922 = vpop.f32.mrf.mxu0
        %v923 = vadd.f32 %v860, %v922
        %v924 = vpop.f32.mrf.mxu0
        %925 = vmatprep.mubr.bf16.mxu0 0
        %926 = vmatmul.mubr.bf16.gmra.mxu0 %v877
        %v927 = vpop.f32.mrf.mxu0
        %v928 = vadd.f32 %v860, %v927
        %v929 = vpop.f32.mrf.mxu0
        %v930 = vpop.f32.mrf.mxu0
        %v931 = vadd.f32 %v860, %v930
        %v932 = vpop.f32.mrf.mxu0
        %933 = vmatprep.mubr.bf16.mxu0 0
        %934 = vmatmul.mubr.bf16.gmra.mxu0 %v880
        %v935 = vpop.f32.mrf.mxu0
        %v936 = vadd.f32 %v860, %v935
        %v937 = vpop.f32.mrf.mxu0
        %v938 = vpop.f32.mrf.mxu0
        %v939 = vadd.f32 %v860, %v938
        %v940 = vpop.f32.mrf.mxu0
        %941 = vmatprep.mubr.bf16.mxu0 0
        %942 = vmatmul.mubr.bf16.gmra.mxu0 %v883
        %v943 = vpop.f32.mrf.mxu0
        %v944 = vadd.f32 %v860, %v943
        %v945 = vpop.f32.mrf.mxu0
        %v946 = vpop.f32.mrf.mxu0
        %v947 = vadd.f32 %v860, %v946
        %v948 = vpop.f32.mrf.mxu0
        %949 = vdwg.mxu0
        %v950 = vld [vmem:[#allocation2] sm:$0xf]
        %v951 = vld [vmem:[#allocation2 + $0x4] sm:$0xf]
        %v952 = vld [vmem:[#allocation2 + $0x8] sm:$0xf]
        %v953 = vld [vmem:[#allocation4] sm:$0xf]
        %v954 = vld [vmem:[#allocation4 + $0x4] sm:$0xf]
        %v955 = vld [vmem:[#allocation4 + $0x8] sm:$0xf]
        %v959 = vunpack.c.l.b16 %v950
        %v960 = vunpack.c.l.b16 %v951
        %v961 = vunpack.c.l.b16 %v952
        %v962 = vpack.c.b16 %v960, %v959
        %v963 = vpack.c.b16 %v961, %v961
        %v965 = vsel %vm723, %v962, 0
        %v968 = vsel %vm723, %v963, 0
        %970 = vmatprep.subr.bf16.mxu0 0
        %971 = vmatpush1.bf16.msra.mxu0 0
        %972 = vmatprep.subr.bf16.mxu0 0
        %973 = vmatpush1.bf16.msra.mxu0 0
        %974 = vmatprep.subr.bf16.mxu0 0
        %975 = vmatpush1.bf16.msra.mxu0 0
        %976 = vmatprep.subr.bf16.mxu0 0
        %977 = vmatpush1.bf16.msra.mxu0 0
        %978 = vmatprep.subr.bf16.mxu0 0
        %979 = vmatpush1.bf16.msra.mxu0 0
        %980 = vmatprep.subr.bf16.mxu0 0
        %981 = vmatpush1.bf16.msra.mxu0 0
        %982 = vmatprep.subr.bf16.mxu0 0
        %983 = vmatpush1.bf16.msra.mxu0 %v854
        %984 = vmatprep.subr.bf16.mxu0 0
        %985 = vmatpush1.bf16.msra.mxu0 %v853
        %986 = vmatprep.subr.bf16.mxu0 0
        %987 = vmatpush2.bf16.msra.mxu0 0
        %988 = vmatprep.subr.bf16.mxu0 0
        %989 = vmatpush2.bf16.msra.mxu0 0
        %990 = vmatprep.subr.bf16.mxu0 0
        %991 = vmatpush2.bf16.msra.mxu0 0
        %992 = vmatprep.subr.bf16.mxu0 0
        %993 = vmatpush2.bf16.msra.mxu0 0
        %994 = vmatprep.subr.bf16.mxu0 0
        %995 = vmatpush2.bf16.msra.mxu0 0
        %996 = vmatprep.subr.bf16.mxu0 0
        %997 = vmatpush2.bf16.msra.mxu0 0
        %998 = vmatprep.subr.bf16.mxu0 0
        %999 = vmatpush2.bf16.msra.mxu0 0
        %1000 = vmatprep.subr.bf16.mxu0 0
        %1001 = vmatpush2.bf16.msra.mxu0 0
        %1002 = vmatprep.mubr.bf16.mxu0 0
        %1003 = vmatmul.mubr.bf16.gmra.mxu0 %v965
        %v1004 = vpop.f32.mrf.mxu0
        %v1005 = vadd.f32 0.0, %v1004
        %v1006 = vpop.f32.mrf.mxu0
        %v1007 = vpop.f32.mrf.mxu0
        %v1008 = vadd.f32 0.0, %v1007
        %v1009 = vpop.f32.mrf.mxu0
        %1010 = vmatprep.mubr.bf16.mxu0 0
        %1011 = vmatmul.mubr.bf16.gmra.mxu0 %v968
        %v1012 = vpop.f32.mrf.mxu0
        %v1013 = vadd.f32 0.0, %v1012
        %v1014 = vpop.f32.mrf.mxu0
        %v1015 = vpop.f32.mrf.mxu0
        %v1016 = vpop.f32.mrf.mxu0
        %1017 = vdwg.mxu0
        %1018 = vmatprep.subr.bf16.mxu0 0
        %1019 = vmatpush1.bf16.msra.mxu0 0
        %1020 = vmatprep.subr.bf16.mxu0 0
        %1021 = vmatpush1.bf16.msra.mxu0 0
        %1022 = vmatprep.subr.bf16.mxu0 0
        %1023 = vmatpush1.bf16.msra.mxu0 0
        %1024 = vmatprep.subr.bf16.mxu0 0
        %1025 = vmatpush1.bf16.msra.mxu0 0
        %1026 = vmatprep.subr.bf16.mxu0 0
        %1027 = vmatpush1.bf16.msra.mxu0 0
        %1028 = vmatprep.subr.bf16.mxu0 0
        %1029 = vmatpush1.bf16.msra.mxu0 0
        %1030 = vmatprep.subr.bf16.mxu0 0
        %1031 = vmatpush1.bf16.msra.mxu0 %v856
        %1032 = vmatprep.subr.bf16.mxu0 0
        %1033 = vmatpush1.bf16.msra.mxu0 %v855
        %1034 = vmatprep.subr.bf16.mxu0 0
        %1035 = vmatpush2.bf16.msra.mxu0 0
        %1036 = vmatprep.subr.bf16.mxu0 0
        %1037 = vmatpush2.bf16.msra.mxu0 0
        %1038 = vmatprep.subr.bf16.mxu0 0
        %1039 = vmatpush2.bf16.msra.mxu0 0
        %1040 = vmatprep.subr.bf16.mxu0 0
        %1041 = vmatpush2.bf16.msra.mxu0 0
        %1042 = vmatprep.subr.bf16.mxu0 0
        %1043 = vmatpush2.bf16.msra.mxu0 0
        %1044 = vmatprep.subr.bf16.mxu0 0
        %1045 = vmatpush2.bf16.msra.mxu0 0
        %1046 = vmatprep.subr.bf16.mxu0 0
        %1047 = vmatpush2.bf16.msra.mxu0 0
        %1048 = vmatprep.subr.bf16.mxu0 0
        %1049 = vmatpush2.bf16.msra.mxu0 0
        %1050 = vmatprep.mubr.bf16.mxu0 0
        %1051 = vmatmul.mubr.bf16.gmra.mxu0 %v965
        %v1052 = vpop.f32.mrf.mxu0
        %v1053 = vadd.f32 0.0, %v1052
        %v1054 = vpop.f32.mrf.mxu0
        %v1055 = vpop.f32.mrf.mxu0
        %v1056 = vadd.f32 0.0, %v1055
        %v1057 = vpop.f32.mrf.mxu0
        %1058 = vmatprep.mubr.bf16.mxu0 0
        %1059 = vmatmul.mubr.bf16.gmra.mxu0 %v968
        %v1060 = vpop.f32.mrf.mxu0
        %v1061 = vadd.f32 0.0, %v1060
        %v1062 = vpop.f32.mrf.mxu0
        %v1063 = vpop.f32.mrf.mxu0
        %v1064 = vpop.f32.mrf.mxu0
        %1065 = vdwg.mxu0
        %v1069 = vunpack.c.l.b16 %v953
        %v1070 = vunpack.c.l.b16 %v954
        %v1071 = vunpack.c.l.b16 %v955
        %v1072 = vpack.c.b16 %v1070, %v1069
        %v1073 = vpack.c.b16 %v1071, %v1071
        %v1075 = vsel %vm723, %v1072, 0
        %v1078 = vsel %vm723, %v1073, 0
        %1080 = vmatprep.subr.bf16.mxu0 0
        %1081 = vmatpush1.bf16.msra.mxu0 0
        %1082 = vmatprep.subr.bf16.mxu0 0
        %1083 = vmatpush1.bf16.msra.mxu0 0
        %1084 = vmatprep.subr.bf16.mxu0 0
        %1085 = vmatpush1.bf16.msra.mxu0 0
        %1086 = vmatprep.subr.bf16.mxu0 0
        %1087 = vmatpush1.bf16.msra.mxu0 0
        %1088 = vmatprep.subr.bf16.mxu0 0
        %1089 = vmatpush1.bf16.msra.mxu0 0
        %1090 = vmatprep.subr.bf16.mxu0 0
        %1091 = vmatpush1.bf16.msra.mxu0 0
        %1092 = vmatprep.subr.bf16.mxu0 0
        %1093 = vmatpush1.bf16.msra.mxu0 %v854
        %1094 = vmatprep.subr.bf16.mxu0 0
        %1095 = vmatpush1.bf16.msra.mxu0 %v853
        %1096 = vmatprep.subr.bf16.mxu0 0
        %1097 = vmatpush2.bf16.msra.mxu0 0
        %1098 = vmatprep.subr.bf16.mxu0 0
        %1099 = vmatpush2.bf16.msra.mxu0 0
        %1100 = vmatprep.subr.bf16.mxu0 0
        %1101 = vmatpush2.bf16.msra.mxu0 0
        %1102 = vmatprep.subr.bf16.mxu0 0
        %1103 = vmatpush2.bf16.msra.mxu0 0
        %1104 = vmatprep.subr.bf16.mxu0 0
        %1105 = vmatpush2.bf16.msra.mxu0 0
        %1106 = vmatprep.subr.bf16.mxu0 0
        %1107 = vmatpush2.bf16.msra.mxu0 0
        %1108 = vmatprep.subr.bf16.mxu0 0
        %1109 = vmatpush2.bf16.msra.mxu0 0
        %1110 = vmatprep.subr.bf16.mxu0 0
        %1111 = vmatpush2.bf16.msra.mxu0 0
        %1112 = vmatprep.mubr.bf16.mxu0 0
        %1113 = vmatmul.mubr.bf16.gmra.mxu0 %v1075
        %v1114 = vpop.f32.mrf.mxu0
        %v1115 = vadd.f32 0.0, %v1114
        %v1116 = vpop.f32.mrf.mxu0
        %v1117 = vpop.f32.mrf.mxu0
        %v1118 = vadd.f32 0.0, %v1117
        %v1119 = vpop.f32.mrf.mxu0
        %1120 = vmatprep.mubr.bf16.mxu0 0
        %1121 = vmatmul.mubr.bf16.gmra.mxu0 %v1078
        %v1122 = vpop.f32.mrf.mxu0
        %v1123 = vadd.f32 0.0, %v1122
        %v1124 = vpop.f32.mrf.mxu0
        %v1125 = vpop.f32.mrf.mxu0
        %v1126 = vpop.f32.mrf.mxu0
        %1127 = vdwg.mxu0
        %1128 = vmatprep.subr.bf16.mxu0 0
        %1129 = vmatpush1.bf16.msra.mxu0 0
        %1130 = vmatprep.subr.bf16.mxu0 0
        %1131 = vmatpush1.bf16.msra.mxu0 0
        %1132 = vmatprep.subr.bf16.mxu0 0
        %1133 = vmatpush1.bf16.msra.mxu0 0
        %1134 = vmatprep.subr.bf16.mxu0 0
        %1135 = vmatpush1.bf16.msra.mxu0 0
        %1136 = vmatprep.subr.bf16.mxu0 0
        %1137 = vmatpush1.bf16.msra.mxu0 0
        %1138 = vmatprep.subr.bf16.mxu0 0
        %1139 = vmatpush1.bf16.msra.mxu0 0
        %1140 = vmatprep.subr.bf16.mxu0 0
        %1141 = vmatpush1.bf16.msra.mxu0 %v856
        %1142 = vmatprep.subr.bf16.mxu0 0
        %1143 = vmatpush1.bf16.msra.mxu0 %v855
        %1144 = vmatprep.subr.bf16.mxu0 0
        %1145 = vmatpush2.bf16.msra.mxu0 0
        %1146 = vmatprep.subr.bf16.mxu0 0
        %1147 = vmatpush2.bf16.msra.mxu0 0
        %1148 = vmatprep.subr.bf16.mxu0 0
        %1149 = vmatpush2.bf16.msra.mxu0 0
        %1150 = vmatprep.subr.bf16.mxu0 0
        %1151 = vmatpush2.bf16.msra.mxu0 0
        %1152 = vmatprep.subr.bf16.mxu0 0
        %1153 = vmatpush2.bf16.msra.mxu0 0
        %1154 = vmatprep.subr.bf16.mxu0 0
        %1155 = vmatpush2.bf16.msra.mxu0 0
        %1156 = vmatprep.subr.bf16.mxu0 0
        %1157 = vmatpush2.bf16.msra.mxu0 0
        %1158 = vmatprep.subr.bf16.mxu0 0
        %1159 = vmatpush2.bf16.msra.mxu0 0
        %1160 = vmatprep.mubr.bf16.mxu0 0
        %1161 = vmatmul.mubr.bf16.gmra.mxu0 %v1075
        %v1162 = vpop.f32.mrf.mxu0
        %v1163 = vadd.f32 0.0, %v1162
        %v1164 = vpop.f32.mrf.mxu0
        %v1165 = vpop.f32.mrf.mxu0
        %v1166 = vadd.f32 0.0, %v1165
        %v1167 = vpop.f32.mrf.mxu0
        %1168 = vmatprep.mubr.bf16.mxu0 0
        %1169 = vmatmul.mubr.bf16.gmra.mxu0 %v1078
        %v1170 = vpop.f32.mrf.mxu0
        %v1171 = vadd.f32 0.0, %v1170
        %v1172 = vpop.f32.mrf.mxu0
        %v1173 = vpop.f32.mrf.mxu0
        %v1174 = vpop.f32.mrf.mxu0
        %1175 = vdwg.mxu0
        %v1176 = vpack.c.bf16 %v1008, %v1005
        %v1177 = vpack.c.bf16 %v1053, %v1013
        %v1178 = vpack.c.bf16 %v1061, %v1056
        %v1183 = vunpack.c.l.b16 %v705
        %v1184 = vunpack.c.l.b16 %v706
        %v1185 = vunpack.c.l.b16 %v707
        %v1186 = vunpack.c.l.b16 %v708
        %v1187 = vpack.c.b16 %v1184, %v1183
        %v1188 = vpack.c.b16 %v1186, %v1185
        %v1192 = vsel %vm723, %v1176, 0
        %v1195 = vsel %vm723, %v1177, 0
        %v1198 = vsel %vm723, %v1178, 0
        %1200 = vmatprep.subr.bf16.mxu0 0
        %1201 = vmatpush1.bf16.msra.mxu0 0
        %1202 = vmatprep.subr.bf16.mxu0 0
        %1203 = vmatpush1.bf16.msra.mxu0 0
        %1204 = vmatprep.subr.bf16.mxu0 0
        %1205 = vmatpush1.bf16.msra.mxu0 0
        %1206 = vmatprep.subr.bf16.mxu0 0
        %1207 = vmatpush1.bf16.msra.mxu0 0
        %1208 = vmatprep.subr.bf16.mxu0 0
        %1209 = vmatpush1.bf16.msra.mxu0 0
        %1210 = vmatprep.subr.bf16.mxu0 0
        %1211 = vmatpush1.bf16.msra.mxu0 0
        %1212 = vmatprep.subr.bf16.mxu0 0
        %1213 = vmatpush1.bf16.msra.mxu0 %v1188
        %1214 = vmatprep.subr.bf16.mxu0 0
        %1215 = vmatpush1.bf16.msra.mxu0 %v1187
        %1216 = vmatprep.subr.bf16.mxu0 0
        %1217 = vmatpush2.bf16.msra.mxu0 0
        %1218 = vmatprep.subr.bf16.mxu0 0
        %1219 = vmatpush2.bf16.msra.mxu0 0
        %1220 = vmatprep.subr.bf16.mxu0 0
        %1221 = vmatpush2.bf16.msra.mxu0 0
        %1222 = vmatprep.subr.bf16.mxu0 0
        %1223 = vmatpush2.bf16.msra.mxu0 0
        %1224 = vmatprep.subr.bf16.mxu0 0
        %1225 = vmatpush2.bf16.msra.mxu0 0
        %1226 = vmatprep.subr.bf16.mxu0 0
        %1227 = vmatpush2.bf16.msra.mxu0 0
        %1228 = vmatprep.subr.bf16.mxu0 0
        %1229 = vmatpush2.bf16.msra.mxu0 0
        %1230 = vmatprep.subr.bf16.mxu0 0
        %1231 = vmatpush2.bf16.msra.mxu0 0
        %1232 = vmatprep.mubr.bf16.mxu0 0
        %1233 = vmatmul.mubr.bf16.gmra.mxu0 %v1192
        %v1234 = vpop.f32.mrf.mxu0
        %v1235 = vadd.f32 0.0, %v1234
        %v1236 = vpop.f32.mrf.mxu0
        %v1237 = vpop.f32.mrf.mxu0
        %v1238 = vadd.f32 0.0, %v1237
        %v1239 = vpop.f32.mrf.mxu0
        %1240 = vmatprep.mubr.bf16.mxu0 0
        %1241 = vmatmul.mubr.bf16.gmra.mxu0 %v1195
        %v1242 = vpop.f32.mrf.mxu0
        %v1243 = vadd.f32 0.0, %v1242
        %v1244 = vpop.f32.mrf.mxu0
        %v1245 = vpop.f32.mrf.mxu0
        %v1246 = vadd.f32 0.0, %v1245
        %v1247 = vpop.f32.mrf.mxu0
        %1248 = vmatprep.mubr.bf16.mxu0 0
        %1249 = vmatmul.mubr.bf16.gmra.mxu0 %v1198
        %v1250 = vpop.f32.mrf.mxu0
        %v1251 = vadd.f32 0.0, %v1250
        %v1252 = vpop.f32.mrf.mxu0
        %v1253 = vpop.f32.mrf.mxu0
        %v1254 = vadd.f32 0.0, %v1253
        %v1255 = vpop.f32.mrf.mxu0
        %1256 = vdwg.mxu0
        %v1257 = vpack.c.bf16 %v1118, %v1115
        %v1258 = vpack.c.bf16 %v1163, %v1123
        %v1259 = vpack.c.bf16 %v1171, %v1166
        %v1264 = vunpack.c.l.b16 %v709
        %v1265 = vunpack.c.l.b16 %v710
        %v1266 = vunpack.c.l.b16 %v711
        %v1267 = vunpack.c.l.b16 %v712
        %v1268 = vpack.c.b16 %v1265, %v1264
        %v1269 = vpack.c.b16 %v1267, %v1266
        %v1273 = vsel %vm723, %v1257, 0
        %v1276 = vsel %vm723, %v1258, 0
        %v1279 = vsel %vm723, %v1259, 0
        %1281 = vmatprep.subr.bf16.mxu0 0
        %1282 = vmatpush1.bf16.msra.mxu0 0
        %1283 = vmatprep.subr.bf16.mxu0 0
        %1284 = vmatpush1.bf16.msra.mxu0 0
        %1285 = vmatprep.subr.bf16.mxu0 0
        %1286 = vmatpush1.bf16.msra.mxu0 0
        %1287 = vmatprep.subr.bf16.mxu0 0
        %1288 = vmatpush1.bf16.msra.mxu0 0
        %1289 = vmatprep.subr.bf16.mxu0 0
        %1290 = vmatpush1.bf16.msra.mxu0 0
        %1291 = vmatprep.subr.bf16.mxu0 0
        %1292 = vmatpush1.bf16.msra.mxu0 0
        %1293 = vmatprep.subr.bf16.mxu0 0
        %1294 = vmatpush1.bf16.msra.mxu0 %v1269
        %1295 = vmatprep.subr.bf16.mxu0 0
        %1296 = vmatpush1.bf16.msra.mxu0 %v1268
        %1297 = vmatprep.subr.bf16.mxu0 0
        %1298 = vmatpush2.bf16.msra.mxu0 0
        %1299 = vmatprep.subr.bf16.mxu0 0
        %1300 = vmatpush2.bf16.msra.mxu0 0
        %1301 = vmatprep.subr.bf16.mxu0 0
        %1302 = vmatpush2.bf16.msra.mxu0 0
        %1303 = vmatprep.subr.bf16.mxu0 0
        %1304 = vmatpush2.bf16.msra.mxu0 0
        %1305 = vmatprep.subr.bf16.mxu0 0
        %1306 = vmatpush2.bf16.msra.mxu0 0
        %1307 = vmatprep.subr.bf16.mxu0 0
        %1308 = vmatpush2.bf16.msra.mxu0 0
        %1309 = vmatprep.subr.bf16.mxu0 0
        %1310 = vmatpush2.bf16.msra.mxu0 0
        %1311 = vmatprep.subr.bf16.mxu0 0
        %1312 = vmatpush2.bf16.msra.mxu0 0
        %1313 = vmatprep.mubr.bf16.mxu0 0
        %1314 = vmatmul.mubr.bf16.gmra.mxu0 %v1273
        %v1315 = vpop.f32.mrf.mxu0
        %v1316 = vadd.f32 0.0, %v1315
        %v1317 = vpop.f32.mrf.mxu0
        %v1318 = vpop.f32.mrf.mxu0
        %v1319 = vadd.f32 0.0, %v1318
        %v1320 = vpop.f32.mrf.mxu0
        %1321 = vmatprep.mubr.bf16.mxu0 0
        %1322 = vmatmul.mubr.bf16.gmra.mxu0 %v1276
        %v1323 = vpop.f32.mrf.mxu0
        %v1324 = vadd.f32 0.0, %v1323
        %v1325 = vpop.f32.mrf.mxu0
        %v1326 = vpop.f32.mrf.mxu0
        %v1327 = vadd.f32 0.0, %v1326
        %v1328 = vpop.f32.mrf.mxu0
        %1329 = vmatprep.mubr.bf16.mxu0 0
        %1330 = vmatmul.mubr.bf16.gmra.mxu0 %v1279
        %v1331 = vpop.f32.mrf.mxu0
        %v1332 = vadd.f32 0.0, %v1331
        %v1333 = vpop.f32.mrf.mxu0
        %v1334 = vpop.f32.mrf.mxu0
        %v1335 = vadd.f32 0.0, %v1334
        %v1336 = vpop.f32.mrf.mxu0
        %1337 = vdwg.mxu0
        %v1338 = vsub.f32 %v1235, %v1316
        %v1339 = vsub.f32 %v1238, %v1319
        %v1340 = vsub.f32 %v1243, %v1324
        %v1341 = vsub.f32 %v1246, %v1327
        %v1342 = vsub.f32 %v1251, %v1332
        %v1343 = vsub.f32 %v1254, %v1335
        %v1344 = vlaneseq
        %v1345 = vshrl.u32 %v1344, 7
        %v1346 = vsub.s32 3, %v1345
        %v1347 = vrot.slane %v721, %v1346
        %v1348 = vadd.f32 %v1338, %v1347
        %v1349 = vadd.f32 %v1339, %v1347
        %v1350 = vadd.f32 %v1340, %v1347
        %v1351 = vadd.f32 %v1341, %v1347
        %v1352 = vadd.f32 %v1342, %v1347
        %v1353 = vadd.f32 %v1343, %v1347
        %v1354 = vmax.f32 %v1348, 0.0
        %v1355 = vmax.f32 %v1349, 0.0
        %v1356 = vmax.f32 %v1350, 0.0
        %v1357 = vmax.f32 %v1351, 0.0
        %v1358 = vmax.f32 %v1352, 0.0
        %v1359 = vmax.f32 %v1353, 0.0
        %1360 = vmatprep.subr.bf16.mxu0 0
        %1361 = vmatpush1.bf16.msra.mxu0 0
        %1362 = vmatprep.subr.bf16.mxu0 0
        %1363 = vmatpush1.bf16.msra.mxu0 0
        %1364 = vmatprep.subr.bf16.mxu0 0
        %1365 = vmatpush1.bf16.msra.mxu0 0
        %1366 = vmatprep.subr.bf16.mxu0 0
        %1367 = vmatpush1.bf16.msra.mxu0 0
        %1368 = vmatprep.subr.bf16.mxu0 0
        %1369 = vmatpush1.bf16.msra.mxu0 0
        %1370 = vmatprep.subr.bf16.mxu0 0
        %1371 = vmatpush1.bf16.msra.mxu0 0
        %1372 = vmatprep.subr.bf16.mxu0 0
        %1373 = vmatpush1.bf16.msra.mxu0 %v1188
        %1374 = vmatprep.subr.bf16.mxu0 0
        %1375 = vmatpush1.bf16.msra.mxu0 %v1187
        %1376 = vmatprep.subr.bf16.mxu0 0
        %1377 = vmatpush2.bf16.msra.mxu0 0
        %1378 = vmatprep.subr.bf16.mxu0 0
        %1379 = vmatpush2.bf16.msra.mxu0 0
        %1380 = vmatprep.subr.bf16.mxu0 0
        %1381 = vmatpush2.bf16.msra.mxu0 0
        %1382 = vmatprep.subr.bf16.mxu0 0
        %1383 = vmatpush2.bf16.msra.mxu0 0
        %1384 = vmatprep.subr.bf16.mxu0 0
        %1385 = vmatpush2.bf16.msra.mxu0 0
        %1386 = vmatprep.subr.bf16.mxu0 0
        %1387 = vmatpush2.bf16.msra.mxu0 0
        %1388 = vmatprep.subr.bf16.mxu0 0
        %1389 = vmatpush2.bf16.msra.mxu0 0
        %1390 = vmatprep.subr.bf16.mxu0 0
        %1391 = vmatpush2.bf16.msra.mxu0 0
        %1392 = vmatprep.mubr.bf16.mxu0 0
        %1393 = vmatmul.mubr.bf16.gmra.mxu0 %v1273
        %v1394 = vpop.f32.mrf.mxu0
        %v1395 = vadd.f32 0.0, %v1394
        %v1396 = vpop.f32.mrf.mxu0
        %v1397 = vpop.f32.mrf.mxu0
        %v1398 = vadd.f32 0.0, %v1397
        %v1399 = vpop.f32.mrf.mxu0
        %1400 = vmatprep.mubr.bf16.mxu0 0
        %1401 = vmatmul.mubr.bf16.gmra.mxu0 %v1276
        %v1402 = vpop.f32.mrf.mxu0
        %v1403 = vadd.f32 0.0, %v1402
        %v1404 = vpop.f32.mrf.mxu0
        %v1405 = vpop.f32.mrf.mxu0
        %v1406 = vadd.f32 0.0, %v1405
        %v1407 = vpop.f32.mrf.mxu0
        %1408 = vmatprep.mubr.bf16.mxu0 0
        %1409 = vmatmul.mubr.bf16.gmra.mxu0 %v1279
        %v1410 = vpop.f32.mrf.mxu0
        %v1411 = vadd.f32 0.0, %v1410
        %v1412 = vpop.f32.mrf.mxu0
        %v1413 = vpop.f32.mrf.mxu0
        %v1414 = vadd.f32 0.0, %v1413
        %v1415 = vpop.f32.mrf.mxu0
        %1416 = vdwg.mxu0
        %1417 = vmatprep.subr.bf16.mxu0 0
        %1418 = vmatpush1.bf16.msra.mxu0 0
        %1419 = vmatprep.subr.bf16.mxu0 0
        %1420 = vmatpush1.bf16.msra.mxu0 0
        %1421 = vmatprep.subr.bf16.mxu0 0
        %1422 = vmatpush1.bf16.msra.mxu0 0
        %1423 = vmatprep.subr.bf16.mxu0 0
        %1424 = vmatpush1.bf16.msra.mxu0 0
        %1425 = vmatprep.subr.bf16.mxu0 0
        %1426 = vmatpush1.bf16.msra.mxu0 0
        %1427 = vmatprep.subr.bf16.mxu0 0
        %1428 = vmatpush1.bf16.msra.mxu0 0
        %1429 = vmatprep.subr.bf16.mxu0 0
        %1430 = vmatpush1.bf16.msra.mxu0 %v1269
        %1431 = vmatprep.subr.bf16.mxu0 0
        %1432 = vmatpush1.bf16.msra.mxu0 %v1268
        %1433 = vmatprep.subr.bf16.mxu0 0
        %1434 = vmatpush2.bf16.msra.mxu0 0
        %1435 = vmatprep.subr.bf16.mxu0 0
        %1436 = vmatpush2.bf16.msra.mxu0 0
        %1437 = vmatprep.subr.bf16.mxu0 0
        %1438 = vmatpush2.bf16.msra.mxu0 0
        %1439 = vmatprep.subr.bf16.mxu0 0
        %1440 = vmatpush2.bf16.msra.mxu0 0
        %1441 = vmatprep.subr.bf16.mxu0 0
        %1442 = vmatpush2.bf16.msra.mxu0 0
        %1443 = vmatprep.subr.bf16.mxu0 0
        %1444 = vmatpush2.bf16.msra.mxu0 0
        %1445 = vmatprep.subr.bf16.mxu0 0
        %1446 = vmatpush2.bf16.msra.mxu0 0
        %1447 = vmatprep.subr.bf16.mxu0 0
        %1448 = vmatpush2.bf16.msra.mxu0 0
        %1449 = vmatprep.mubr.bf16.mxu0 0
        %1450 = vmatmul.mubr.bf16.gmra.mxu0 %v1192
        %v1451 = vpop.f32.mrf.mxu0
        %v1452 = vadd.f32 %v1395, %v1451
        %v1453 = vpop.f32.mrf.mxu0
        %v1454 = vpop.f32.mrf.mxu0
        %v1455 = vadd.f32 %v1398, %v1454
        %v1456 = vpop.f32.mrf.mxu0
        %1457 = vmatprep.mubr.bf16.mxu0 0
        %1458 = vmatmul.mubr.bf16.gmra.mxu0 %v1195
        %v1459 = vpop.f32.mrf.mxu0
        %v1460 = vadd.f32 %v1403, %v1459
        %v1461 = vpop.f32.mrf.mxu0
        %v1462 = vpop.f32.mrf.mxu0
        %v1463 = vadd.f32 %v1406, %v1462
        %v1464 = vpop.f32.mrf.mxu0
        %1465 = vmatprep.mubr.bf16.mxu0 0
        %1466 = vmatmul.mubr.bf16.gmra.mxu0 %v1198
        %v1467 = vpop.f32.mrf.mxu0
        %v1468 = vadd.f32 %v1411, %v1467
        %v1469 = vpop.f32.mrf.mxu0
        %v1470 = vpop.f32.mrf.mxu0
        %v1471 = vadd.f32 %v1414, %v1470
        %v1472 = vpop.f32.mrf.mxu0
        %1473 = vdwg.mxu0
        %v1474 = vlaneseq
        %v1475 = vshrl.u32 %v1474, 7
        %v1476 = vsub.s32 4, %v1475
        %v1477 = vrot.slane %v721, %v1476
        %v1478 = vadd.f32 %v1452, %v1477
        %v1479 = vadd.f32 %v1455, %v1477
        %v1480 = vadd.f32 %v1460, %v1477
        %v1481 = vadd.f32 %v1463, %v1477
        %v1482 = vadd.f32 %v1468, %v1477
        %v1483 = vadd.f32 %v1471, %v1477
        %v1484 = vmax.f32 %v1478, 0.0
        %v1485 = vmax.f32 %v1479, 0.0
        %v1486 = vmax.f32 %v1480, 0.0
        %v1487 = vmax.f32 %v1481, 0.0
        %v1488 = vmax.f32 %v1482, 0.0
        %v1489 = vmax.f32 %v1483, 0.0
        %v1490 = vpack.c.bf16 %v1355, %v1354
        %v1491 = vpack.c.bf16 %v1357, %v1356
        %v1492 = vpack.c.bf16 %v1359, %v1358
        %v1497 = vunpack.c.l.b16 %v713
        %v1498 = vunpack.c.l.b16 %v714
        %v1499 = vunpack.c.l.b16 %v715
        %v1500 = vunpack.c.l.b16 %v716
        %v1501 = vpack.c.b16 %v1498, %v1497
        %v1502 = vpack.c.b16 %v1500, %v1499
        %v1506 = vsel %vm723, %v1490, 0
        %v1509 = vsel %vm723, %v1491, 0
        %v1512 = vsel %vm723, %v1492, 0
        %1514 = vmatprep.subr.bf16.mxu0 0
        %1515 = vmatpush1.bf16.msra.mxu0 0
        %1516 = vmatprep.subr.bf16.mxu0 0
        %1517 = vmatpush1.bf16.msra.mxu0 0
        %1518 = vmatprep.subr.bf16.mxu0 0
        %1519 = vmatpush1.bf16.msra.mxu0 0
        %1520 = vmatprep.subr.bf16.mxu0 0
        %1521 = vmatpush1.bf16.msra.mxu0 0
        %1522 = vmatprep.subr.bf16.mxu0 0
        %1523 = vmatpush1.bf16.msra.mxu0 0
        %1524 = vmatprep.subr.bf16.mxu0 0
        %1525 = vmatpush1.bf16.msra.mxu0 0
        %1526 = vmatprep.subr.bf16.mxu0 0
        %1527 = vmatpush1.bf16.msra.mxu0 %v1502
        %1528 = vmatprep.subr.bf16.mxu0 0
        %1529 = vmatpush1.bf16.msra.mxu0 %v1501
        %1530 = vmatprep.subr.bf16.mxu0 0
        %1531 = vmatpush2.bf16.msra.mxu0 0
        %1532 = vmatprep.subr.bf16.mxu0 0
        %1533 = vmatpush2.bf16.msra.mxu0 0
        %1534 = vmatprep.subr.bf16.mxu0 0
        %1535 = vmatpush2.bf16.msra.mxu0 0
        %1536 = vmatprep.subr.bf16.mxu0 0
        %1537 = vmatpush2.bf16.msra.mxu0 0
        %1538 = vmatprep.subr.bf16.mxu0 0
        %1539 = vmatpush2.bf16.msra.mxu0 0
        %1540 = vmatprep.subr.bf16.mxu0 0
        %1541 = vmatpush2.bf16.msra.mxu0 0
        %1542 = vmatprep.subr.bf16.mxu0 0
        %1543 = vmatpush2.bf16.msra.mxu0 0
        %1544 = vmatprep.subr.bf16.mxu0 0
        %1545 = vmatpush2.bf16.msra.mxu0 0
        %1546 = vmatprep.mubr.bf16.mxu0 0
        %1547 = vmatmul.mubr.bf16.gmra.mxu0 %v1506
        %v1548 = vpop.f32.mrf.mxu0
        %v1549 = vadd.f32 0.0, %v1548
        %v1550 = vpop.f32.mrf.mxu0
        %v1551 = vpop.f32.mrf.mxu0
        %v1552 = vadd.f32 0.0, %v1551
        %v1553 = vpop.f32.mrf.mxu0
        %1554 = vmatprep.mubr.bf16.mxu0 0
        %1555 = vmatmul.mubr.bf16.gmra.mxu0 %v1509
        %v1556 = vpop.f32.mrf.mxu0
        %v1557 = vadd.f32 0.0, %v1556
        %v1558 = vpop.f32.mrf.mxu0
        %v1559 = vpop.f32.mrf.mxu0
        %v1560 = vadd.f32 0.0, %v1559
        %v1561 = vpop.f32.mrf.mxu0
        %1562 = vmatprep.mubr.bf16.mxu0 0
        %1563 = vmatmul.mubr.bf16.gmra.mxu0 %v1512
        %v1564 = vpop.f32.mrf.mxu0
        %v1565 = vadd.f32 0.0, %v1564
        %v1566 = vpop.f32.mrf.mxu0
        %v1567 = vpop.f32.mrf.mxu0
        %v1568 = vadd.f32 0.0, %v1567
        %v1569 = vpop.f32.mrf.mxu0
        %1570 = vdwg.mxu0
        %v1571 = vpack.c.bf16 %v1485, %v1484
        %v1572 = vpack.c.bf16 %v1487, %v1486
        %v1573 = vpack.c.bf16 %v1489, %v1488
        %v1578 = vunpack.c.l.b16 %v717
        %v1579 = vunpack.c.l.b16 %v718
        %v1580 = vunpack.c.l.b16 %v719
        %v1581 = vunpack.c.l.b16 %v720
        %v1582 = vpack.c.b16 %v1579, %v1578
        %v1583 = vpack.c.b16 %v1581, %v1580
        %v1587 = vsel %vm723, %v1571, 0
        %v1590 = vsel %vm723, %v1572, 0
        %v1593 = vsel %vm723, %v1573, 0
        %1595 = vmatprep.subr.bf16.mxu0 0
        %1596 = vmatpush1.bf16.msra.mxu0 0
        %1597 = vmatprep.subr.bf16.mxu0 0
        %1598 = vmatpush1.bf16.msra.mxu0 0
        %1599 = vmatprep.subr.bf16.mxu0 0
        %1600 = vmatpush1.bf16.msra.mxu0 0
        %1601 = vmatprep.subr.bf16.mxu0 0
        %1602 = vmatpush1.bf16.msra.mxu0 0
        %1603 = vmatprep.subr.bf16.mxu0 0
        %1604 = vmatpush1.bf16.msra.mxu0 0
        %1605 = vmatprep.subr.bf16.mxu0 0
        %1606 = vmatpush1.bf16.msra.mxu0 0
        %1607 = vmatprep.subr.bf16.mxu0 0
        %1608 = vmatpush1.bf16.msra.mxu0 %v1583
        %1609 = vmatprep.subr.bf16.mxu0 0
        %1610 = vmatpush1.bf16.msra.mxu0 %v1582
        %1611 = vmatprep.subr.bf16.mxu0 0
        %1612 = vmatpush2.bf16.msra.mxu0 0
        %1613 = vmatprep.subr.bf16.mxu0 0
        %1614 = vmatpush2.bf16.msra.mxu0 0
        %1615 = vmatprep.subr.bf16.mxu0 0
        %1616 = vmatpush2.bf16.msra.mxu0 0
        %1617 = vmatprep.subr.bf16.mxu0 0
        %1618 = vmatpush2.bf16.msra.mxu0 0
        %1619 = vmatprep.subr.bf16.mxu0 0
        %1620 = vmatpush2.bf16.msra.mxu0 0
        %1621 = vmatprep.subr.bf16.mxu0 0
        %1622 = vmatpush2.bf16.msra.mxu0 0
        %1623 = vmatprep.subr.bf16.mxu0 0
        %1624 = vmatpush2.bf16.msra.mxu0 0
        %1625 = vmatprep.subr.bf16.mxu0 0
        %1626 = vmatpush2.bf16.msra.mxu0 0
        %1627 = vmatprep.mubr.bf16.mxu0 0
        %1628 = vmatmul.mubr.bf16.gmra.mxu0 %v1587
        %v1629 = vpop.f32.mrf.mxu0
        %v1630 = vadd.f32 0.0, %v1629
        %v1631 = vpop.f32.mrf.mxu0
        %v1632 = vpop.f32.mrf.mxu0
        %v1633 = vadd.f32 0.0, %v1632
        %v1634 = vpop.f32.mrf.mxu0
        %1635 = vmatprep.mubr.bf16.mxu0 0
        %1636 = vmatmul.mubr.bf16.gmra.mxu0 %v1590
        %v1637 = vpop.f32.mrf.mxu0
        %v1638 = vadd.f32 0.0, %v1637
        %v1639 = vpop.f32.mrf.mxu0
        %v1640 = vpop.f32.mrf.mxu0
        %v1641 = vadd.f32 0.0, %v1640
        %v1642 = vpop.f32.mrf.mxu0
        %1643 = vmatprep.mubr.bf16.mxu0 0
        %1644 = vmatmul.mubr.bf16.gmra.mxu0 %v1593
        %v1645 = vpop.f32.mrf.mxu0
        %v1646 = vadd.f32 0.0, %v1645
        %v1647 = vpop.f32.mrf.mxu0
        %v1648 = vpop.f32.mrf.mxu0
        %v1649 = vadd.f32 0.0, %v1648
        %v1650 = vpop.f32.mrf.mxu0
        %1651 = vdwg.mxu0
        %v1652 = vsub.f32 %v1549, %v1630
        %v1653 = vsub.f32 %v1552, %v1633
        %v1654 = vsub.f32 %v1557, %v1638
        %v1655 = vsub.f32 %v1560, %v1641
        %v1656 = vsub.f32 %v1565, %v1646
        %v1657 = vsub.f32 %v1568, %v1649
        %v1658 = vlaneseq
        %v1659 = vshrl.u32 %v1658, 7
        %v1660 = vsub.s32 5, %v1659
        %v1661 = vrot.slane %v721, %v1660
        %v1662 = vadd.f32 %v1652, %v1661
        %v1663 = vadd.f32 %v1653, %v1661
        %v1664 = vadd.f32 %v1654, %v1661
        %v1665 = vadd.f32 %v1655, %v1661
        %v1666 = vadd.f32 %v1656, %v1661
        %v1667 = vadd.f32 %v1657, %v1661
        %v1668 = vpack.c.bf16 %v1663, %v1662
        %v1669 = vpack.c.bf16 %v1665, %v1664
        %v1670 = vpack.c.bf16 %v1667, %v1666
        %1671 = vmatprep.subr.bf16.mxu0 0
        %1672 = vmatpush1.bf16.msra.mxu0 0
        %1673 = vmatprep.subr.bf16.mxu0 0
        %1674 = vmatpush1.bf16.msra.mxu0 0
        %1675 = vmatprep.subr.bf16.mxu0 0
        %1676 = vmatpush1.bf16.msra.mxu0 0
        %1677 = vmatprep.subr.bf16.mxu0 0
        %1678 = vmatpush1.bf16.msra.mxu0 0
        %1679 = vmatprep.subr.bf16.mxu0 0
        %1680 = vmatpush1.bf16.msra.mxu0 0
        %1681 = vmatprep.subr.bf16.mxu0 0
        %1682 = vmatpush1.bf16.msra.mxu0 0
        %1683 = vmatprep.subr.bf16.mxu0 0
        %1684 = vmatpush1.bf16.msra.mxu0 %v1502
        %1685 = vmatprep.subr.bf16.mxu0 0
        %1686 = vmatpush1.bf16.msra.mxu0 %v1501
        %1687 = vmatprep.subr.bf16.mxu0 0
        %1688 = vmatpush2.bf16.msra.mxu0 0
        %1689 = vmatprep.subr.bf16.mxu0 0
        %1690 = vmatpush2.bf16.msra.mxu0 0
        %1691 = vmatprep.subr.bf16.mxu0 0
        %1692 = vmatpush2.bf16.msra.mxu0 0
        %1693 = vmatprep.subr.bf16.mxu0 0
        %1694 = vmatpush2.bf16.msra.mxu0 0
        %1695 = vmatprep.subr.bf16.mxu0 0
        %1696 = vmatpush2.bf16.msra.mxu0 0
        %1697 = vmatprep.subr.bf16.mxu0 0
        %1698 = vmatpush2.bf16.msra.mxu0 0
        %1699 = vmatprep.subr.bf16.mxu0 0
        %1700 = vmatpush2.bf16.msra.mxu0 0
        %1701 = vmatprep.subr.bf16.mxu0 0
        %1702 = vmatpush2.bf16.msra.mxu0 0
        %1703 = vmatprep.mubr.bf16.mxu0 0
        %1704 = vmatmul.mubr.bf16.gmra.mxu0 %v1587
        %v1705 = vpop.f32.mrf.mxu0
        %v1706 = vadd.f32 0.0, %v1705
        %v1707 = vpop.f32.mrf.mxu0
        %v1708 = vpop.f32.mrf.mxu0
        %v1709 = vadd.f32 0.0, %v1708
        %v1710 = vpop.f32.mrf.mxu0
        %1711 = vmatprep.mubr.bf16.mxu0 0
        %1712 = vmatmul.mubr.bf16.gmra.mxu0 %v1590
        %v1713 = vpop.f32.mrf.mxu0
        %v1714 = vadd.f32 0.0, %v1713
        %v1715 = vpop.f32.mrf.mxu0
        %v1716 = vpop.f32.mrf.mxu0
        %v1717 = vadd.f32 0.0, %v1716
        %v1718 = vpop.f32.mrf.mxu0
        %1719 = vmatprep.mubr.bf16.mxu0 0
        %1720 = vmatmul.mubr.bf16.gmra.mxu0 %v1593
        %v1721 = vpop.f32.mrf.mxu0
        %v1722 = vadd.f32 0.0, %v1721
        %v1723 = vpop.f32.mrf.mxu0
        %v1724 = vpop.f32.mrf.mxu0
        %v1725 = vadd.f32 0.0, %v1724
        %v1726 = vpop.f32.mrf.mxu0
        %1727 = vdwg.mxu0
        %v1729 = vsel %vm723, %v1668, 0
        %v1732 = vsel %vm723, %v1669, 0
        %v1735 = vsel %vm723, %v1670, 0
        %1737 = vmatprep.subr.bf16.mxu0 0
        %1738 = vmatpush1.bf16.msra.mxu0 0
        %1739 = vmatprep.subr.bf16.mxu0 0
        %1740 = vmatpush1.bf16.msra.mxu0 0
        %1741 = vmatprep.subr.bf16.mxu0 0
        %1742 = vmatpush1.bf16.msra.mxu0 0
        %1743 = vmatprep.subr.bf16.mxu0 0
        %1744 = vmatpush1.bf16.msra.mxu0 0
        %1745 = vmatprep.subr.bf16.mxu0 0
        %1746 = vmatpush1.bf16.msra.mxu0 0
        %1747 = vmatprep.subr.bf16.mxu0 0
        %1748 = vmatpush1.bf16.msra.mxu0 0
        %1749 = vmatprep.subr.bf16.mxu0 0
        %1750 = vmatpush1.bf16.msra.mxu0 %v1583
        %1751 = vmatprep.subr.bf16.mxu0 0
        %1752 = vmatpush1.bf16.msra.mxu0 %v1582
        %1753 = vmatprep.subr.bf16.mxu0 0
        %1754 = vmatpush2.bf16.msra.mxu0 0
        %1755 = vmatprep.subr.bf16.mxu0 0
        %1756 = vmatpush2.bf16.msra.mxu0 0
        %1757 = vmatprep.subr.bf16.mxu0 0
        %1758 = vmatpush2.bf16.msra.mxu0 0
        %1759 = vmatprep.subr.bf16.mxu0 0
        %1760 = vmatpush2.bf16.msra.mxu0 0
        %1761 = vmatprep.subr.bf16.mxu0 0
        %1762 = vmatpush2.bf16.msra.mxu0 0
        %1763 = vmatprep.subr.bf16.mxu0 0
        %1764 = vmatpush2.bf16.msra.mxu0 0
        %1765 = vmatprep.subr.bf16.mxu0 0
        %1766 = vmatpush2.bf16.msra.mxu0 0
        %1767 = vmatprep.subr.bf16.mxu0 0
        %1768 = vmatpush2.bf16.msra.mxu0 0
        %1769 = vmatprep.mubr.bf16.mxu0 0
        %1770 = vmatmul.mubr.bf16.gmra.mxu0 %v1729
        %v1771 = vpop.f32.mrf.mxu0
        %v1772 = vadd.f32 %v1706, %v1771
        %v1773 = vpop.f32.mrf.mxu0
        %v1774 = vpop.f32.mrf.mxu0
        %v1775 = vadd.f32 %v1709, %v1774
        %v1776 = vpop.f32.mrf.mxu0
        %1777 = vmatprep.mubr.bf16.mxu0 0
        %1778 = vmatmul.mubr.bf16.gmra.mxu0 %v1732
        %v1779 = vpop.f32.mrf.mxu0
        %v1780 = vadd.f32 %v1714, %v1779
        %v1781 = vpop.f32.mrf.mxu0
        %v1782 = vpop.f32.mrf.mxu0
        %v1783 = vadd.f32 %v1717, %v1782
        %v1784 = vpop.f32.mrf.mxu0
        %1785 = vmatprep.mubr.bf16.mxu0 0
        %1786 = vmatmul.mubr.bf16.gmra.mxu0 %v1735
        %v1787 = vpop.f32.mrf.mxu0
        %v1788 = vadd.f32 %v1722, %v1787
        %v1789 = vpop.f32.mrf.mxu0
        %v1790 = vpop.f32.mrf.mxu0
        %v1791 = vadd.f32 %v1725, %v1790
        %v1792 = vpop.f32.mrf.mxu0
        %1793 = vdwg.mxu0
        %v1794 = vlaneseq
        %v1795 = vshrl.u32 %v1794, 7
        %v1796 = vsub.s32 6, %v1795
        %v1797 = vrot.slane %v721, %v1796
        %v1798 = vadd.f32 %v1772, %v1797
        %v1799 = vadd.f32 %v1775, %v1797
        %v1800 = vadd.f32 %v1780, %v1797
        %v1801 = vadd.f32 %v1783, %v1797
        %v1802 = vadd.f32 %v1788, %v1797
        %v1803 = vadd.f32 %v1791, %v1797
        %v1804 = vld [vmem:[%s5] sm:$0xf]
        %v1805 = vld [vmem:[%s5 + $0x4] sm:$0xf]
        %v1806 = vld [vmem:[%s5 + $0x8] sm:$0xf]
        %v1807 = vld [vmem:[%s5 + $0xc] sm:$0xf]
        %v1808 = vld [vmem:[%s6] sm:$0xf]
        %v1809 = vld [vmem:[%s6 + $0x4] sm:$0xf]
        %v1810 = vld [vmem:[%s6 + $0x8] sm:$0xf]
        %v1811 = vld [vmem:[%s6 + $0xc] sm:$0xf]
        %v1812 = vpack.c.bf16 %v1664, %v1664
        %v1813 = vpack.c.bf16 %v1799, %v1798
        %v1814 = vpack.c.bf16 %v1800, %v1800
        %v1819 = vunpack.c.l.b16 %v1808
        %v1820 = vunpack.c.l.b16 %v1809
        %v1821 = vunpack.c.l.b16 %v1810
        %v1822 = vunpack.c.l.b16 %v1811
        %v1823 = vpack.c.b16 %v1820, %v1819
        %v1824 = vpack.c.b16 %v1822, %v1821
        %vm1825 = vcmask 195584
        %v1827 = vsel %vm1825, %v1823, 0
        %v1830 = vsel %vm1825, %v1824, 0
        %vm1832 = vcmask 1043456
        %v1834 = vsel %vm1832, %v1814, 0
        %1836 = vmatprep.subr.bf16.mxu0 0
        %1837 = vmatpush1.bf16.msra.mxu0 0
        %1838 = vmatprep.subr.bf16.mxu0 0
        %1839 = vmatpush1.bf16.msra.mxu0 0
        %1840 = vmatprep.subr.bf16.mxu0 0
        %1841 = vmatpush1.bf16.msra.mxu0 0
        %1842 = vmatprep.subr.bf16.mxu0 0
        %1843 = vmatpush1.bf16.msra.mxu0 0
        %1844 = vmatprep.subr.bf16.mxu0 0
        %1845 = vmatpush1.bf16.msra.mxu0 0
        %1846 = vmatprep.subr.bf16.mxu0 0
        %1847 = vmatpush1.bf16.msra.mxu0 0
        %1848 = vmatprep.subr.bf16.mxu0 0
        %1849 = vmatpush1.bf16.msra.mxu0 %v1834
        %1850 = vmatprep.subr.bf16.mxu0 0
        %1851 = vmatpush1.bf16.msra.mxu0 %v1813
        %1852 = vmatprep.subr.bf16.mxu0 0
        %1853 = vmatpush2.bf16.msra.mxu0 0
        %1854 = vmatprep.subr.bf16.mxu0 0
        %1855 = vmatpush2.bf16.msra.mxu0 0
        %1856 = vmatprep.subr.bf16.mxu0 0
        %1857 = vmatpush2.bf16.msra.mxu0 0
        %1858 = vmatprep.subr.bf16.mxu0 0
        %1859 = vmatpush2.bf16.msra.mxu0 0
        %1860 = vmatprep.subr.bf16.mxu0 0
        %1861 = vmatpush2.bf16.msra.mxu0 0
        %1862 = vmatprep.subr.bf16.mxu0 0
        %1863 = vmatpush2.bf16.msra.mxu0 0
        %1864 = vmatprep.subr.bf16.mxu0 0
        %1865 = vmatpush2.bf16.msra.mxu0 0
        %1866 = vmatprep.subr.bf16.mxu0 0
        %1867 = vmatpush2.bf16.msra.mxu0 0
        %1868 = vmatprep.mubr.bf16.mxu0 0
        %1869 = vmatmul.mubr.bf16.gmra.mxu0 %v1827
        %v1870 = vpop.f32.mrf.mxu0
        %v1871 = vadd.f32 0.0, %v1870
        %v1872 = vpop.f32.mrf.mxu0
        %v1873 = vpop.f32.mrf.mxu0
        %v1874 = vadd.f32 0.0, %v1873
        %v1875 = vpop.f32.mrf.mxu0
        %1876 = vmatprep.mubr.bf16.mxu0 0
        %1877 = vmatmul.mubr.bf16.gmra.mxu0 %v1830
        %v1878 = vpop.f32.mrf.mxu0
        %v1879 = vadd.f32 0.0, %v1878
        %v1880 = vpop.f32.mrf.mxu0
        %v1881 = vpop.f32.mrf.mxu0
        %v1882 = vadd.f32 0.0, %v1881
        %v1883 = vpop.f32.mrf.mxu0
        %1884 = vdwg.mxu0
        %v1889 = vunpack.c.l.b16 %v1804
        %v1890 = vunpack.c.l.b16 %v1805
        %v1891 = vunpack.c.l.b16 %v1806
        %v1892 = vunpack.c.l.b16 %v1807
        %v1893 = vpack.c.b16 %v1890, %v1889
        %v1894 = vpack.c.b16 %v1892, %v1891
        %v1896 = vsel %vm1825, %v1893, 0
        %v1899 = vsel %vm1825, %v1894, 0
        %v1902 = vsel %vm1832, %v1812, 0
        %1904 = vmatprep.subr.bf16.mxu0 0
        %1905 = vmatpush1.bf16.msra.mxu0 0
        %1906 = vmatprep.subr.bf16.mxu0 0
        %1907 = vmatpush1.bf16.msra.mxu0 0
        %1908 = vmatprep.subr.bf16.mxu0 0
        %1909 = vmatpush1.bf16.msra.mxu0 0
        %1910 = vmatprep.subr.bf16.mxu0 0
        %1911 = vmatpush1.bf16.msra.mxu0 0
        %1912 = vmatprep.subr.bf16.mxu0 0
        %1913 = vmatpush1.bf16.msra.mxu0 0
        %1914 = vmatprep.subr.bf16.mxu0 0
        %1915 = vmatpush1.bf16.msra.mxu0 0
        %1916 = vmatprep.subr.bf16.mxu0 0
        %1917 = vmatpush1.bf16.msra.mxu0 %v1902
        %1918 = vmatprep.subr.bf16.mxu0 0
        %1919 = vmatpush1.bf16.msra.mxu0 %v1668
        %1920 = vmatprep.subr.bf16.mxu0 0
        %1921 = vmatpush2.bf16.msra.mxu0 0
        %1922 = vmatprep.subr.bf16.mxu0 0
        %1923 = vmatpush2.bf16.msra.mxu0 0
        %1924 = vmatprep.subr.bf16.mxu0 0
        %1925 = vmatpush2.bf16.msra.mxu0 0
        %1926 = vmatprep.subr.bf16.mxu0 0
        %1927 = vmatpush2.bf16.msra.mxu0 0
        %1928 = vmatprep.subr.bf16.mxu0 0
        %1929 = vmatpush2.bf16.msra.mxu0 0
        %1930 = vmatprep.subr.bf16.mxu0 0
        %1931 = vmatpush2.bf16.msra.mxu0 0
        %1932 = vmatprep.subr.bf16.mxu0 0
        %1933 = vmatpush2.bf16.msra.mxu0 0
        %1934 = vmatprep.subr.bf16.mxu0 0
        %1935 = vmatpush2.bf16.msra.mxu0 0
        %1936 = vmatprep.mubr.bf16.mxu0 0
        %1937 = vmatmul.mubr.bf16.gmra.mxu0 %v1896
        %v1938 = vpop.f32.mrf.mxu0
        %v1939 = vadd.f32 %v1871, %v1938
        %v1940 = vpop.f32.mrf.mxu0
        %v1941 = vpop.f32.mrf.mxu0
        %v1942 = vadd.f32 %v1874, %v1941
        %v1943 = vpop.f32.mrf.mxu0
        %1944 = vmatprep.mubr.bf16.mxu0 0
        %1945 = vmatmul.mubr.bf16.gmra.mxu0 %v1899
        %v1946 = vpop.f32.mrf.mxu0
        %v1947 = vadd.f32 %v1879, %v1946
        %v1948 = vpop.f32.mrf.mxu0
        %v1949 = vpop.f32.mrf.mxu0
        %v1950 = vadd.f32 %v1882, %v1949
        %v1951 = vpop.f32.mrf.mxu0
        %1952 = vdwg.mxu0
        %v1953 = vpack.c.bf16 %v1666, %v1665
        %v1954 = vpack.c.bf16 %v1667, %v1667
        %v1955 = vpack.c.bf16 %v1802, %v1801
        %v1956 = vpack.c.bf16 %v1803, %v1803
        %v1958 = vsel %vm1832, %v1956, 0
        %1960 = vmatprep.subr.bf16.mxu0 0
        %1961 = vmatpush1.bf16.msra.mxu0 0
        %1962 = vmatprep.subr.bf16.mxu0 0
        %1963 = vmatpush1.bf16.msra.mxu0 0
        %1964 = vmatprep.subr.bf16.mxu0 0
        %1965 = vmatpush1.bf16.msra.mxu0 0
        %1966 = vmatprep.subr.bf16.mxu0 0
        %1967 = vmatpush1.bf16.msra.mxu0 0
        %1968 = vmatprep.subr.bf16.mxu0 0
        %1969 = vmatpush1.bf16.msra.mxu0 0
        %1970 = vmatprep.subr.bf16.mxu0 0
        %1971 = vmatpush1.bf16.msra.mxu0 0
        %1972 = vmatprep.subr.bf16.mxu0 0
        %1973 = vmatpush1.bf16.msra.mxu0 %v1958
        %1974 = vmatprep.subr.bf16.mxu0 0
        %1975 = vmatpush1.bf16.msra.mxu0 %v1955
        %1976 = vmatprep.subr.bf16.mxu0 0
        %1977 = vmatpush2.bf16.msra.mxu0 0
        %1978 = vmatprep.subr.bf16.mxu0 0
        %1979 = vmatpush2.bf16.msra.mxu0 0
        %1980 = vmatprep.subr.bf16.mxu0 0
        %1981 = vmatpush2.bf16.msra.mxu0 0
        %1982 = vmatprep.subr.bf16.mxu0 0
        %1983 = vmatpush2.bf16.msra.mxu0 0
        %1984 = vmatprep.subr.bf16.mxu0 0
        %1985 = vmatpush2.bf16.msra.mxu0 0
        %1986 = vmatprep.subr.bf16.mxu0 0
        %1987 = vmatpush2.bf16.msra.mxu0 0
        %1988 = vmatprep.subr.bf16.mxu0 0
        %1989 = vmatpush2.bf16.msra.mxu0 0
        %1990 = vmatprep.subr.bf16.mxu0 0
        %1991 = vmatpush2.bf16.msra.mxu0 0
        %1992 = vmatprep.mubr.bf16.mxu0 0
        %1993 = vmatmul.mubr.bf16.gmra.mxu0 %v1827
        %v1994 = vpop.f32.mrf.mxu0
        %v1995 = vadd.f32 0.0, %v1994
        %v1996 = vpop.f32.mrf.mxu0
        %v1997 = vpop.f32.mrf.mxu0
        %v1998 = vadd.f32 0.0, %v1997
        %v1999 = vpop.f32.mrf.mxu0
        %2000 = vmatprep.mubr.bf16.mxu0 0
        %2001 = vmatmul.mubr.bf16.gmra.mxu0 %v1830
        %v2002 = vpop.f32.mrf.mxu0
        %v2003 = vadd.f32 0.0, %v2002
        %v2004 = vpop.f32.mrf.mxu0
        %v2005 = vpop.f32.mrf.mxu0
        %v2006 = vadd.f32 0.0, %v2005
        %v2007 = vpop.f32.mrf.mxu0
        %2008 = vdwg.mxu0
        %v2010 = vsel %vm1832, %v1954, 0
        %2012 = vmatprep.subr.bf16.mxu0 0
        %2013 = vmatpush1.bf16.msra.mxu0 0
        %2014 = vmatprep.subr.bf16.mxu0 0
        %2015 = vmatpush1.bf16.msra.mxu0 0
        %2016 = vmatprep.subr.bf16.mxu0 0
        %2017 = vmatpush1.bf16.msra.mxu0 0
        %2018 = vmatprep.subr.bf16.mxu0 0
        %2019 = vmatpush1.bf16.msra.mxu0 0
        %2020 = vmatprep.subr.bf16.mxu0 0
        %2021 = vmatpush1.bf16.msra.mxu0 0
        %2022 = vmatprep.subr.bf16.mxu0 0
        %2023 = vmatpush1.bf16.msra.mxu0 0
        %2024 = vmatprep.subr.bf16.mxu0 0
        %2025 = vmatpush1.bf16.msra.mxu0 %v2010
        %2026 = vmatprep.subr.bf16.mxu0 0
        %2027 = vmatpush1.bf16.msra.mxu0 %v1953
        %2028 = vmatprep.subr.bf16.mxu0 0
        %2029 = vmatpush2.bf16.msra.mxu0 0
        %2030 = vmatprep.subr.bf16.mxu0 0
        %2031 = vmatpush2.bf16.msra.mxu0 0
        %2032 = vmatprep.subr.bf16.mxu0 0
        %2033 = vmatpush2.bf16.msra.mxu0 0
        %2034 = vmatprep.subr.bf16.mxu0 0
        %2035 = vmatpush2.bf16.msra.mxu0 0
        %2036 = vmatprep.subr.bf16.mxu0 0
        %2037 = vmatpush2.bf16.msra.mxu0 0
        %2038 = vmatprep.subr.bf16.mxu0 0
        %2039 = vmatpush2.bf16.msra.mxu0 0
        %2040 = vmatprep.subr.bf16.mxu0 0
        %2041 = vmatpush2.bf16.msra.mxu0 0
        %2042 = vmatprep.subr.bf16.mxu0 0
        %2043 = vmatpush2.bf16.msra.mxu0 0
        %2044 = vmatprep.mubr.bf16.mxu0 0
        %2045 = vmatmul.mubr.bf16.gmra.mxu0 %v1896
        %v2046 = vpop.f32.mrf.mxu0
        %v2047 = vadd.f32 %v1995, %v2046
        %v2048 = vpop.f32.mrf.mxu0
        %v2049 = vpop.f32.mrf.mxu0
        %v2050 = vadd.f32 %v1998, %v2049
        %v2051 = vpop.f32.mrf.mxu0
        %2052 = vmatprep.mubr.bf16.mxu0 0
        %2053 = vmatmul.mubr.bf16.gmra.mxu0 %v1899
        %v2054 = vpop.f32.mrf.mxu0
        %v2055 = vadd.f32 %v2003, %v2054
        %v2056 = vpop.f32.mrf.mxu0
        %v2057 = vpop.f32.mrf.mxu0
        %v2058 = vadd.f32 %v2006, %v2057
        %v2059 = vpop.f32.mrf.mxu0
        %2060 = vdwg.mxu0
        %v2061 = vadd.f32 %v693, %v1939
        %v2062 = vadd.f32 %v694, %v1942
        %v2063 = vadd.f32 %v695, %v1947
        %v2064 = vadd.f32 %v696, %v1950
        %v2065 = vadd.f32 %v697, %v2047
        %v2066 = vadd.f32 %v698, %v2050
        %v2067 = vadd.f32 %v699, %v2055
        %v2068 = vadd.f32 %v700, %v2058
        %v2069 = vadd.f32 %v2061, %v920
        %v2070 = vadd.f32 %v2062, %v923
        %v2071 = vadd.f32 %v2063, %v928
        %v2072 = vadd.f32 %v2064, %v931
        %v2073 = vadd.f32 %v2065, %v936
        %v2074 = vadd.f32 %v2066, %v939
        %v2075 = vadd.f32 %v2067, %v944
        %v2076 = vadd.f32 %v2068, %v947
        %v2077 = vsel %vm723, %v2069, 0.0
        %2078 = vadd.xlane.f32.xlu0 %v2077
        %v2079 = vpop.xlane.xlu0 %2078
        %v2080 = vsel %vm723, %v2070, 0.0
        %2081 = vadd.xlane.f32.xlu0 %v2080
        %v2082 = vpop.xlane.xlu0 %2081
        %v2083 = vsel %vm723, %v2071, 0.0
        %2084 = vadd.xlane.f32.xlu0 %v2083
        %v2085 = vpop.xlane.xlu0 %2084
        %v2086 = vsel %vm723, %v2072, 0.0
        %2087 = vadd.xlane.f32.xlu0 %v2086
        %v2088 = vpop.xlane.xlu0 %2087
        %v2089 = vsel %vm723, %v2073, 0.0
        %2090 = vadd.xlane.f32.xlu0 %v2089
        %v2091 = vpop.xlane.xlu0 %2090
        %v2092 = vsel %vm723, %v2074, 0.0
        %2093 = vadd.xlane.f32.xlu0 %v2092
        %v2094 = vpop.xlane.xlu0 %2093
        %v2095 = vsel %vm723, %v2075, 0.0
        %2096 = vadd.xlane.f32.xlu0 %v2095
        %v2097 = vpop.xlane.xlu0 %2096
        %v2098 = vsel %vm723, %v2076, 0.0
        %2099 = vadd.xlane.f32.xlu0 %v2098
        %v2100 = vpop.xlane.xlu0 %2099
        %v2101 = vmul.f32 %v2079, %v748
        %v2102 = vmul.f32 %v2082, %v748
        %v2103 = vmul.f32 %v2085, %v748
        %v2104 = vmul.f32 %v2088, %v748
        %v2105 = vmul.f32 %v2091, %v748
        %v2106 = vmul.f32 %v2094, %v748
        %v2107 = vmul.f32 %v2097, %v748
        %v2108 = vmul.f32 %v2100, %v748
        %v2109 = vsub.f32 %v2069, %v2101
        %v2110 = vsub.f32 %v2070, %v2102
        %v2111 = vsub.f32 %v2071, %v2103
        %v2112 = vsub.f32 %v2072, %v2104
        %v2113 = vsub.f32 %v2073, %v2105
        %v2114 = vsub.f32 %v2074, %v2106
        %v2115 = vsub.f32 %v2075, %v2107
        %v2116 = vsub.f32 %v2076, %v2108
        %v2117 = vmul.f32 %v2109, %v2109
        %v2118 = vmul.f32 %v2110, %v2110
        %v2119 = vmul.f32 %v2111, %v2111
        %v2120 = vmul.f32 %v2112, %v2112
        %v2121 = vmul.f32 %v2113, %v2113
        %v2122 = vmul.f32 %v2114, %v2114
        %v2123 = vmul.f32 %v2115, %v2115
        %v2124 = vmul.f32 %v2116, %v2116
        %v2125 = vsel %vm723, %v2117, 0.0
        %2126 = vadd.xlane.f32.xlu0 %v2125
        %v2127 = vpop.xlane.xlu0 %2126
        %v2128 = vsel %vm723, %v2118, 0.0
        %2129 = vadd.xlane.f32.xlu0 %v2128
        %v2130 = vpop.xlane.xlu0 %2129
        %v2131 = vsel %vm723, %v2119, 0.0
        %2132 = vadd.xlane.f32.xlu0 %v2131
        %v2133 = vpop.xlane.xlu0 %2132
        %v2134 = vsel %vm723, %v2120, 0.0
        %2135 = vadd.xlane.f32.xlu0 %v2134
        %v2136 = vpop.xlane.xlu0 %2135
        %v2137 = vsel %vm723, %v2121, 0.0
        %2138 = vadd.xlane.f32.xlu0 %v2137
        %v2139 = vpop.xlane.xlu0 %2138
        %v2140 = vsel %vm723, %v2122, 0.0
        %2141 = vadd.xlane.f32.xlu0 %v2140
        %v2142 = vpop.xlane.xlu0 %2141
        %v2143 = vsel %vm723, %v2123, 0.0
        %2144 = vadd.xlane.f32.xlu0 %v2143
        %v2145 = vpop.xlane.xlu0 %2144
        %v2146 = vsel %vm723, %v2124, 0.0
        %2147 = vadd.xlane.f32.xlu0 %v2146
        %v2148 = vpop.xlane.xlu0 %2147
        %v2149 = vmul.f32 %v2127, %v748
        %v2150 = vmul.f32 %v2130, %v748
        %v2151 = vmul.f32 %v2133, %v748
        %v2152 = vmul.f32 %v2136, %v748
        %v2153 = vmul.f32 %v2139, %v748
        %v2154 = vmul.f32 %v2142, %v748
        %v2155 = vmul.f32 %v2145, %v748
        %v2156 = vmul.f32 %v2148, %v748
        %v2157 = vadd.f32 %v2149, 1e-06
        %v2158 = vadd.f32 %v2150, 1e-06
        %v2159 = vadd.f32 %v2151, 1e-06
        %v2160 = vadd.f32 %v2152, 1e-06
        %v2161 = vadd.f32 %v2153, 1e-06
        %v2162 = vadd.f32 %v2154, 1e-06
        %v2163 = vadd.f32 %v2155, 1e-06
        %v2164 = vadd.f32 %v2156, 1e-06
        %v2165 = vrsqrt.pop %v2157
        %v2166 = vrsqrt.pop %v2158
        %v2167 = vrsqrt.pop %v2159
        %v2168 = vrsqrt.pop %v2160
        %v2169 = vrsqrt.pop %v2161
        %v2170 = vrsqrt.pop %v2162
        %v2171 = vrsqrt.pop %v2163
        %v2172 = vrsqrt.pop %v2164
        %v2173 = vmul.f32 %v2109, %v2165
        %v2174 = vmul.f32 %v2110, %v2166
        %v2175 = vmul.f32 %v2111, %v2167
        %v2176 = vmul.f32 %v2112, %v2168
        %v2177 = vmul.f32 %v2113, %v2169
        %v2178 = vmul.f32 %v2114, %v2170
        %v2179 = vmul.f32 %v2115, %v2171
        %v2180 = vmul.f32 %v2116, %v2172
        %v2181 = vlaneseq
        %v2182 = vshrl.u32 %v2181, 7
        %v2183 = vsub.s32 7, %v2182
        %v2184 = vrot.slane %v721, %v2183
        %v2185 = vmul.f32 %v2173, %v2184
        %v2186 = vmul.f32 %v2174, %v2184
        %v2187 = vmul.f32 %v2175, %v2184
        %v2188 = vmul.f32 %v2176, %v2184
        %v2189 = vmul.f32 %v2177, %v2184
        %v2190 = vmul.f32 %v2178, %v2184
        %v2191 = vmul.f32 %v2179, %v2184
        %v2192 = vmul.f32 %v2180, %v2184
        %v2193 = vlaneseq
        %v2194 = vshrl.u32 %v2193, 7
        %v2195 = vsub.s32 0, %v2194
        %v2196 = vrot.slane %v722, %v2195
        %v2197 = vadd.f32 %v2185, %v2196
        %v2198 = vadd.f32 %v2186, %v2196
        %v2199 = vadd.f32 %v2187, %v2196
        %v2200 = vadd.f32 %v2188, %v2196
        %v2201 = vadd.f32 %v2189, %v2196
        %v2202 = vadd.f32 %v2190, %v2196
        %v2203 = vadd.f32 %v2191, %v2196
        %v2204 = vadd.f32 %v2192, %v2196
        %v2205 = vld [vmem:[%s413] sm:$0xf]
        %v2206 = vld [vmem:[%s413 + $0x4] sm:$0xf]
        %v2207 = vld [vmem:[%s413 + $0x8] sm:$0xf]
        %v2208 = vld [vmem:[%s413 + $0xc] sm:$0xf]
        %v2209 = vpack.c.bf16 %v2198, %v2197
        %v2210 = vpack.c.bf16 %v2200, %v2199
        %v2211 = vpack.c.bf16 %v2202, %v2201
        %v2212 = vpack.c.bf16 %v2204, %v2203
        %v2213 = vld [vmem:[%s472] sm:$0x1]
        %v2215 = vlaneseq
        %v2216 = vshrl.u32 %v2215, 7
        %v2217 = vsub.s32 0, %v2216
        %v2218 = vrot.slane %v2213, %v2217
        %v2224 = vunpack.c.l.b16 %v2205
        %v2225 = vunpack.c.l.b16 %v2206
        %v2226 = vunpack.c.l.b16 %v2207
        %v2227 = vunpack.c.l.b16 %v2208
        %v2228 = vpack.c.b16 %v2225, %v2224
        %v2229 = vpack.c.b16 %v2227, %v2226
        %v2233 = vsel %vm723, %v2209, 0
        %v2236 = vsel %vm723, %v2210, 0
        %v2239 = vsel %vm723, %v2211, 0
        %v2242 = vsel %vm723, %v2212, 0
        %2244 = vmatprep.subr.bf16.mxu0 0
        %2245 = vmatpush1.bf16.msra.mxu0 0
        %2246 = vmatprep.subr.bf16.mxu0 0
        %2247 = vmatpush1.bf16.msra.mxu0 0
        %2248 = vmatprep.subr.bf16.mxu0 0
        %2249 = vmatpush1.bf16.msra.mxu0 0
        %2250 = vmatprep.subr.bf16.mxu0 0
        %2251 = vmatpush1.bf16.msra.mxu0 0
        %2252 = vmatprep.subr.bf16.mxu0 0
        %2253 = vmatpush1.bf16.msra.mxu0 0
        %2254 = vmatprep.subr.bf16.mxu0 0
        %2255 = vmatpush1.bf16.msra.mxu0 0
        %2256 = vmatprep.subr.bf16.mxu0 0
        %2257 = vmatpush1.bf16.msra.mxu0 %v2229
        %2258 = vmatprep.subr.bf16.mxu0 0
        %2259 = vmatpush1.bf16.msra.mxu0 %v2228
        %2260 = vmatprep.subr.bf16.mxu0 0
        %2261 = vmatpush2.bf16.msra.mxu0 0
        %2262 = vmatprep.subr.bf16.mxu0 0
        %2263 = vmatpush2.bf16.msra.mxu0 0
        %2264 = vmatprep.subr.bf16.mxu0 0
        %2265 = vmatpush2.bf16.msra.mxu0 0
        %2266 = vmatprep.subr.bf16.mxu0 0
        %2267 = vmatpush2.bf16.msra.mxu0 0
        %2268 = vmatprep.subr.bf16.mxu0 0
        %2269 = vmatpush2.bf16.msra.mxu0 0
        %2270 = vmatprep.subr.bf16.mxu0 0
        %2271 = vmatpush2.bf16.msra.mxu0 0
        %2272 = vmatprep.subr.bf16.mxu0 0
        %2273 = vmatpush2.bf16.msra.mxu0 0
        %2274 = vmatprep.subr.bf16.mxu0 0
        %2275 = vmatpush2.bf16.msra.mxu0 0
        %2276 = vmatprep.mubr.bf16.mxu0 0
        %2277 = vmatmul.mubr.bf16.gmra.mxu0 %v2233
        %v2278 = vpop.f32.mrf.mxu0
        %v2279 = vadd.f32 %v2218, %v2278
        %v2280 = vpop.f32.mrf.mxu0
        %v2281 = vpop.f32.mrf.mxu0
        %v2282 = vadd.f32 %v2218, %v2281
        %v2283 = vpop.f32.mrf.mxu0
        %2284 = vmatprep.mubr.bf16.mxu0 0
        %2285 = vmatmul.mubr.bf16.gmra.mxu0 %v2236
        %v2286 = vpop.f32.mrf.mxu0
        %v2287 = vadd.f32 %v2218, %v2286
        %v2288 = vpop.f32.mrf.mxu0
        %v2289 = vpop.f32.mrf.mxu0
        %v2290 = vadd.f32 %v2218, %v2289
        %v2291 = vpop.f32.mrf.mxu0
        %2292 = vmatprep.mubr.bf16.mxu0 0
        %2293 = vmatmul.mubr.bf16.gmra.mxu0 %v2239
        %v2294 = vpop.f32.mrf.mxu0
        %v2295 = vadd.f32 %v2218, %v2294
        %v2296 = vpop.f32.mrf.mxu0
        %v2297 = vpop.f32.mrf.mxu0
        %v2298 = vadd.f32 %v2218, %v2297
        %v2299 = vpop.f32.mrf.mxu0
        %2300 = vmatprep.mubr.bf16.mxu0 0
        %2301 = vmatmul.mubr.bf16.gmra.mxu0 %v2242
        %v2302 = vpop.f32.mrf.mxu0
        %v2303 = vadd.f32 %v2218, %v2302
        %v2304 = vpop.f32.mrf.mxu0
        %v2305 = vpop.f32.mrf.mxu0
        %v2306 = vadd.f32 %v2218, %v2305
        %v2307 = vpop.f32.mrf.mxu0
        %2308 = vdwg.mxu0
        %v2309 = vmul.f32 %v2279, 0.70710677
        %v2310 = vmul.f32 %v2282, 0.70710677
        %v2311 = vmul.f32 %v2287, 0.70710677
        %v2312 = vmul.f32 %v2290, 0.70710677
        %v2313 = vmul.f32 %v2295, 0.70710677
        %v2314 = vmul.f32 %v2298, 0.70710677
        %v2315 = vmul.f32 %v2303, 0.70710677
        %v2316 = vmul.f32 %v2306, 0.70710677
        %v2317 = vand.u32 2147483647, %v2309
        %v2318 = vand.u32 2147483647, %v2310
        %v2319 = vand.u32 2147483647, %v2311
        %v2320 = vand.u32 2147483647, %v2312
        %v2321 = vand.u32 2147483647, %v2313
        %v2322 = vand.u32 2147483647, %v2314
        %v2323 = vand.u32 2147483647, %v2315
        %v2324 = vand.u32 2147483647, %v2316
        %v2325 = vmul.f32 %v2317, 0.3275911
        %v2326 = vmul.f32 %v2318, 0.3275911
        %v2327 = vmul.f32 %v2319, 0.3275911
        %v2328 = vmul.f32 %v2320, 0.3275911
        %v2329 = vmul.f32 %v2321, 0.3275911
        %v2330 = vmul.f32 %v2322, 0.3275911
        %v2331 = vmul.f32 %v2323, 0.3275911
        %v2332 = vmul.f32 %v2324, 0.3275911
        %v2333 = vadd.f32 %v2325, 1.0
        %v2334 = vadd.f32 %v2326, 1.0
        %v2335 = vadd.f32 %v2327, 1.0
        %v2336 = vadd.f32 %v2328, 1.0
        %v2337 = vadd.f32 %v2329, 1.0
        %v2338 = vadd.f32 %v2330, 1.0
        %v2339 = vadd.f32 %v2331, 1.0
        %v2340 = vadd.f32 %v2332, 1.0
        %v2341 = vrcp.pop %v2333
        %v2342 = vrcp.pop %v2334
        %v2343 = vrcp.pop %v2335
        %v2344 = vrcp.pop %v2336
        %v2345 = vrcp.pop %v2337
        %v2346 = vrcp.pop %v2338
        %v2347 = vrcp.pop %v2339
        %v2348 = vrcp.pop %v2340
        %v2349 = vmul.f32 %v2341, 1.0614054
        %v2350 = vmul.f32 %v2342, 1.0614054
        %v2351 = vmul.f32 %v2343, 1.0614054
        %v2352 = vmul.f32 %v2344, 1.0614054
        %v2353 = vmul.f32 %v2345, 1.0614054
        %v2354 = vmul.f32 %v2346, 1.0614054
        %v2355 = vmul.f32 %v2347, 1.0614054
        %v2356 = vmul.f32 %v2348, 1.0614054
        %v2357 = vsub.f32 %v2349, 1.4531521
        %v2358 = vsub.f32 %v2350, 1.4531521
        %v2359 = vsub.f32 %v2351, 1.4531521
        %v2360 = vsub.f32 %v2352, 1.4531521
        %v2361 = vsub.f32 %v2353, 1.4531521
        %v2362 = vsub.f32 %v2354, 1.4531521
        %v2363 = vsub.f32 %v2355, 1.4531521
        %v2364 = vsub.f32 %v2356, 1.4531521
        %v2365 = vmul.f32 %v2357, %v2341
        %v2366 = vmul.f32 %v2358, %v2342
        %v2367 = vmul.f32 %v2359, %v2343
        %v2368 = vmul.f32 %v2360, %v2344
        %v2369 = vmul.f32 %v2361, %v2345
        %v2370 = vmul.f32 %v2362, %v2346
        %v2371 = vmul.f32 %v2363, %v2347
        %v2372 = vmul.f32 %v2364, %v2348
        %v2373 = vadd.f32 %v2365, 1.4214138
        %v2374 = vadd.f32 %v2366, 1.4214138
        %v2375 = vadd.f32 %v2367, 1.4214138
        %v2376 = vadd.f32 %v2368, 1.4214138
        %v2377 = vadd.f32 %v2369, 1.4214138
        %v2378 = vadd.f32 %v2370, 1.4214138
        %v2379 = vadd.f32 %v2371, 1.4214138
        %v2380 = vadd.f32 %v2372, 1.4214138
        %v2381 = vmul.f32 %v2373, %v2341
        %v2382 = vmul.f32 %v2374, %v2342
        %v2383 = vmul.f32 %v2375, %v2343
        %v2384 = vmul.f32 %v2376, %v2344
        %v2385 = vmul.f32 %v2377, %v2345
        %v2386 = vmul.f32 %v2378, %v2346
        %v2387 = vmul.f32 %v2379, %v2347
        %v2388 = vmul.f32 %v2380, %v2348
        %v2389 = vsub.f32 %v2381, 0.28449672
        %v2390 = vsub.f32 %v2382, 0.28449672
        %v2391 = vsub.f32 %v2383, 0.28449672
        %v2392 = vsub.f32 %v2384, 0.28449672
        %v2393 = vsub.f32 %v2385, 0.28449672
        %v2394 = vsub.f32 %v2386, 0.28449672
        %v2395 = vsub.f32 %v2387, 0.28449672
        %v2396 = vsub.f32 %v2388, 0.28449672
        %v2397 = vmul.f32 %v2389, %v2341
        %v2398 = vmul.f32 %v2390, %v2342
        %v2399 = vmul.f32 %v2391, %v2343
        %v2400 = vmul.f32 %v2392, %v2344
        %v2401 = vmul.f32 %v2393, %v2345
        %v2402 = vmul.f32 %v2394, %v2346
        %v2403 = vmul.f32 %v2395, %v2347
        %v2404 = vmul.f32 %v2396, %v2348
        %v2405 = vadd.f32 %v2397, 0.2548296
        %v2406 = vadd.f32 %v2398, 0.2548296
        %v2407 = vadd.f32 %v2399, 0.2548296
        %v2408 = vadd.f32 %v2400, 0.2548296
        %v2409 = vadd.f32 %v2401, 0.2548296
        %v2410 = vadd.f32 %v2402, 0.2548296
        %v2411 = vadd.f32 %v2403, 0.2548296
        %v2412 = vadd.f32 %v2404, 0.2548296
        %v2413 = vmul.f32 %v2405, %v2341
        %v2414 = vmul.f32 %v2406, %v2342
        %v2415 = vmul.f32 %v2407, %v2343
        %v2416 = vmul.f32 %v2408, %v2344
        %v2417 = vmul.f32 %v2409, %v2345
        %v2418 = vmul.f32 %v2410, %v2346
        %v2419 = vmul.f32 %v2411, %v2347
        %v2420 = vmul.f32 %v2412, %v2348
        %v2421 = vsub.f32 0.0, %v2317
        %v2422 = vsub.f32 0.0, %v2318
        %v2423 = vsub.f32 0.0, %v2319
        %v2424 = vsub.f32 0.0, %v2320
        %v2425 = vsub.f32 0.0, %v2321
        %v2426 = vsub.f32 0.0, %v2322
        %v2427 = vsub.f32 0.0, %v2323
        %v2428 = vsub.f32 0.0, %v2324
        %v2429 = vmul.f32 %v2421, %v2317
        %v2430 = vmul.f32 %v2422, %v2318
        %v2431 = vmul.f32 %v2423, %v2319
        %v2432 = vmul.f32 %v2424, %v2320
        %v2433 = vmul.f32 %v2425, %v2321
        %v2434 = vmul.f32 %v2426, %v2322
        %v2435 = vmul.f32 %v2427, %v2323
        %v2436 = vmul.f32 %v2428, %v2324
        %v2437 = vmul.f32 %v2429, 1.442695
        %v2438 = vpow.pop %v2437
        %v2439 = vmul.f32 %v2430, 1.442695
        %v2440 = vpow.pop %v2439
        %v2441 = vmul.f32 %v2431, 1.442695
        %v2442 = vpow.pop %v2441
        %v2443 = vmul.f32 %v2432, 1.442695
        %v2444 = vpow.pop %v2443
        %v2445 = vmul.f32 %v2433, 1.442695
        %v2446 = vpow.pop %v2445
        %v2447 = vmul.f32 %v2434, 1.442695
        %v2448 = vpow.pop %v2447
        %v2449 = vmul.f32 %v2435, 1.442695
        %v2450 = vpow.pop %v2449
        %v2451 = vmul.f32 %v2436, 1.442695
        %v2452 = vpow.pop %v2451
        %v2453 = vmul.f32 %v2413, %v2438
        %v2454 = vmul.f32 %v2414, %v2440
        %v2455 = vmul.f32 %v2415, %v2442
        %v2456 = vmul.f32 %v2416, %v2444
        %v2457 = vmul.f32 %v2417, %v2446
        %v2458 = vmul.f32 %v2418, %v2448
        %v2459 = vmul.f32 %v2419, %v2450
        %v2460 = vmul.f32 %v2420, %v2452
        %v2461 = vsub.f32 1.0, %v2453
        %v2462 = vsub.f32 1.0, %v2454
        %v2463 = vsub.f32 1.0, %v2455
        %v2464 = vsub.f32 1.0, %v2456
        %v2465 = vsub.f32 1.0, %v2457
        %v2466 = vsub.f32 1.0, %v2458
        %v2467 = vsub.f32 1.0, %v2459
        %v2468 = vsub.f32 1.0, %v2460
        %vm2469 = vcmp.ge.f32.partialorder %v2309, 0.0
        %vm2470 = vcmp.ge.f32.partialorder %v2310, 0.0
        %vm2471 = vcmp.ge.f32.partialorder %v2311, 0.0
        %vm2472 = vcmp.ge.f32.partialorder %v2312, 0.0
        %vm2473 = vcmp.ge.f32.partialorder %v2313, 0.0
        %vm2474 = vcmp.ge.f32.partialorder %v2314, 0.0
        %vm2475 = vcmp.ge.f32.partialorder %v2315, 0.0
        %vm2476 = vcmp.ge.f32.partialorder %v2316, 0.0
        %v2477 = vsub.f32 0.0, %v2461
        %v2478 = vsub.f32 0.0, %v2462
        %v2479 = vsub.f32 0.0, %v2463
        %v2480 = vsub.f32 0.0, %v2464
        %v2481 = vsub.f32 0.0, %v2465
        %v2482 = vsub.f32 0.0, %v2466
        %v2483 = vsub.f32 0.0, %v2467
        %v2484 = vsub.f32 0.0, %v2468
        %v2485 = vsel %vm2469, %v2461, %v2477
        %v2486 = vsel %vm2470, %v2462, %v2478
        %v2487 = vsel %vm2471, %v2463, %v2479
        %v2488 = vsel %vm2472, %v2464, %v2480
        %v2489 = vsel %vm2473, %v2465, %v2481
        %v2490 = vsel %vm2474, %v2466, %v2482
        %v2491 = vsel %vm2475, %v2467, %v2483
        %v2492 = vsel %vm2476, %v2468, %v2484
        %v2493 = vmul.f32 %v2279, 0.5
        %v2494 = vmul.f32 %v2282, 0.5
        %v2495 = vmul.f32 %v2287, 0.5
        %v2496 = vmul.f32 %v2290, 0.5
        %v2497 = vmul.f32 %v2295, 0.5
        %v2498 = vmul.f32 %v2298, 0.5
        %v2499 = vmul.f32 %v2303, 0.5
        %v2500 = vmul.f32 %v2306, 0.5
        %v2501 = vadd.f32 %v2485, 1.0
        %v2502 = vadd.f32 %v2486, 1.0
        %v2503 = vadd.f32 %v2487, 1.0
        %v2504 = vadd.f32 %v2488, 1.0
        %v2505 = vadd.f32 %v2489, 1.0
        %v2506 = vadd.f32 %v2490, 1.0
        %v2507 = vadd.f32 %v2491, 1.0
        %v2508 = vadd.f32 %v2492, 1.0
        %v2509 = vmul.f32 %v2493, %v2501
        %v2510 = vmul.f32 %v2494, %v2502
        %v2511 = vmul.f32 %v2495, %v2503
        %v2512 = vmul.f32 %v2496, %v2504
        %v2513 = vmul.f32 %v2497, %v2505
        %v2514 = vmul.f32 %v2498, %v2506
        %v2515 = vmul.f32 %v2499, %v2507
        %v2516 = vmul.f32 %v2500, %v2508
        %2525 = vrot.lane.b32.xlu0 %v2509, 124
        %v2526 = vpop.permute.xlu0 %2525
        %2527 = vrot.lane.b32.xlu0 %v2510, 124
        %v2528 = vpop.permute.xlu0 %2527
        %2529 = vrot.lane.b32.xlu0 %v2511, 124
        %v2530 = vpop.permute.xlu0 %2529
        %2531 = vrot.lane.b32.xlu0 %v2512, 124
        %v2532 = vpop.permute.xlu0 %2531
        %2533 = vrot.lane.b32.xlu0 %v2513, 124
        %v2534 = vpop.permute.xlu0 %2533
        %2535 = vrot.lane.b32.xlu0 %v2514, 124
        %v2536 = vpop.permute.xlu0 %2535
        %2537 = vrot.lane.b32.xlu0 %v2515, 124
        %v2538 = vpop.permute.xlu0 %2537
        %2539 = vrot.lane.b32.xlu0 %v2516, 124
        %v2540 = vpop.permute.xlu0 %2539
        %2549 = vrot.lane.b32.xlu0 %v2509, 120
        %v2550 = vpop.permute.xlu0 %2549
        %2551 = vrot.lane.b32.xlu0 %v2510, 120
        %v2552 = vpop.permute.xlu0 %2551
        %2553 = vrot.lane.b32.xlu0 %v2511, 120
        %v2554 = vpop.permute.xlu0 %2553
        %2555 = vrot.lane.b32.xlu0 %v2512, 120
        %v2556 = vpop.permute.xlu0 %2555
        %2557 = vrot.lane.b32.xlu0 %v2513, 120
        %v2558 = vpop.permute.xlu0 %2557
        %2559 = vrot.lane.b32.xlu0 %v2514, 120
        %v2560 = vpop.permute.xlu0 %2559
        %2561 = vrot.lane.b32.xlu0 %v2515, 120
        %v2562 = vpop.permute.xlu0 %2561
        %2563 = vrot.lane.b32.xlu0 %v2516, 120
        %v2564 = vpop.permute.xlu0 %2563
        %2573 = vrot.lane.b32.xlu0 %v2509, 116
        %v2574 = vpop.permute.xlu0 %2573
        %2575 = vrot.lane.b32.xlu0 %v2510, 116
        %v2576 = vpop.permute.xlu0 %2575
        %2577 = vrot.lane.b32.xlu0 %v2511, 116
        %v2578 = vpop.permute.xlu0 %2577
        %2579 = vrot.lane.b32.xlu0 %v2512, 116
        %v2580 = vpop.permute.xlu0 %2579
        %2581 = vrot.lane.b32.xlu0 %v2513, 116
        %v2582 = vpop.permute.xlu0 %2581
        %2583 = vrot.lane.b32.xlu0 %v2514, 116
        %v2584 = vpop.permute.xlu0 %2583
        %2585 = vrot.lane.b32.xlu0 %v2515, 116
        %v2586 = vpop.permute.xlu0 %2585
        %2587 = vrot.lane.b32.xlu0 %v2516, 116
        %v2588 = vpop.permute.xlu0 %2587
        %2597 = vrot.lane.b32.xlu0 %v2509, 112
        %v2598 = vpop.permute.xlu0 %2597
        %2599 = vrot.lane.b32.xlu0 %v2510, 112
        %v2600 = vpop.permute.xlu0 %2599
        %2601 = vrot.lane.b32.xlu0 %v2511, 112
        %v2602 = vpop.permute.xlu0 %2601
        %2603 = vrot.lane.b32.xlu0 %v2512, 112
        %v2604 = vpop.permute.xlu0 %2603
        %2605 = vrot.lane.b32.xlu0 %v2513, 112
        %v2606 = vpop.permute.xlu0 %2605
        %2607 = vrot.lane.b32.xlu0 %v2514, 112
        %v2608 = vpop.permute.xlu0 %2607
        %2609 = vrot.lane.b32.xlu0 %v2515, 112
        %v2610 = vpop.permute.xlu0 %2609
        %2611 = vrot.lane.b32.xlu0 %v2516, 112
        %v2612 = vpop.permute.xlu0 %2611
        %2621 = vrot.lane.b32.xlu0 %v2509, 108
        %v2622 = vpop.permute.xlu0 %2621
        %2623 = vrot.lane.b32.xlu0 %v2510, 108
        %v2624 = vpop.permute.xlu0 %2623
        %2625 = vrot.lane.b32.xlu0 %v2511, 108
        %v2626 = vpop.permute.xlu0 %2625
        %2627 = vrot.lane.b32.xlu0 %v2512, 108
        %v2628 = vpop.permute.xlu0 %2627
        %2629 = vrot.lane.b32.xlu0 %v2513, 108
        %v2630 = vpop.permute.xlu0 %2629
        %2631 = vrot.lane.b32.xlu0 %v2514, 108
        %v2632 = vpop.permute.xlu0 %2631
        %2633 = vrot.lane.b32.xlu0 %v2515, 108
        %v2634 = vpop.permute.xlu0 %2633
        %2635 = vrot.lane.b32.xlu0 %v2516, 108
        %v2636 = vpop.permute.xlu0 %2635
        %2645 = vrot.lane.b32.xlu0 %v2509, 104
        %v2646 = vpop.permute.xlu0 %2645
        %2647 = vrot.lane.b32.xlu0 %v2510, 104
        %v2648 = vpop.permute.xlu0 %2647
        %2649 = vrot.lane.b32.xlu0 %v2511, 104
        %v2650 = vpop.permute.xlu0 %2649
        %2651 = vrot.lane.b32.xlu0 %v2512, 104
        %v2652 = vpop.permute.xlu0 %2651
        %2653 = vrot.lane.b32.xlu0 %v2513, 104
        %v2654 = vpop.permute.xlu0 %2653
        %2655 = vrot.lane.b32.xlu0 %v2514, 104
        %v2656 = vpop.permute.xlu0 %2655
        %2657 = vrot.lane.b32.xlu0 %v2515, 104
        %v2658 = vpop.permute.xlu0 %2657
        %2659 = vrot.lane.b32.xlu0 %v2516, 104
        %v2660 = vpop.permute.xlu0 %2659
        %2669 = vrot.lane.b32.xlu0 %v2509, 100
        %v2670 = vpop.permute.xlu0 %2669
        %2671 = vrot.lane.b32.xlu0 %v2510, 100
        %v2672 = vpop.permute.xlu0 %2671
        %2673 = vrot.lane.b32.xlu0 %v2511, 100
        %v2674 = vpop.permute.xlu0 %2673
        %2675 = vrot.lane.b32.xlu0 %v2512, 100
        %v2676 = vpop.permute.xlu0 %2675
        %2677 = vrot.lane.b32.xlu0 %v2513, 100
        %v2678 = vpop.permute.xlu0 %2677
        %2679 = vrot.lane.b32.xlu0 %v2514, 100
        %v2680 = vpop.permute.xlu0 %2679
        %2681 = vrot.lane.b32.xlu0 %v2515, 100
        %v2682 = vpop.permute.xlu0 %2681
        %2683 = vrot.lane.b32.xlu0 %v2516, 100
        %v2684 = vpop.permute.xlu0 %2683
        %2693 = vrot.lane.b32.xlu0 %v2509, 96
        %v2694 = vpop.permute.xlu0 %2693
        %2695 = vrot.lane.b32.xlu0 %v2510, 96
        %v2696 = vpop.permute.xlu0 %2695
        %2697 = vrot.lane.b32.xlu0 %v2511, 96
        %v2698 = vpop.permute.xlu0 %2697
        %2699 = vrot.lane.b32.xlu0 %v2512, 96
        %v2700 = vpop.permute.xlu0 %2699
        %2701 = vrot.lane.b32.xlu0 %v2513, 96
        %v2702 = vpop.permute.xlu0 %2701
        %2703 = vrot.lane.b32.xlu0 %v2514, 96
        %v2704 = vpop.permute.xlu0 %2703
        %2705 = vrot.lane.b32.xlu0 %v2515, 96
        %v2706 = vpop.permute.xlu0 %2705
        %2707 = vrot.lane.b32.xlu0 %v2516, 96
        %v2708 = vpop.permute.xlu0 %2707
        %2717 = vrot.lane.b32.xlu0 %v2509, 92
        %v2718 = vpop.permute.xlu0 %2717
        %2719 = vrot.lane.b32.xlu0 %v2510, 92
        %v2720 = vpop.permute.xlu0 %2719
        %2721 = vrot.lane.b32.xlu0 %v2511, 92
        %v2722 = vpop.permute.xlu0 %2721
        %2723 = vrot.lane.b32.xlu0 %v2512, 92
        %v2724 = vpop.permute.xlu0 %2723
        %2725 = vrot.lane.b32.xlu0 %v2513, 92
        %v2726 = vpop.permute.xlu0 %2725
        %2727 = vrot.lane.b32.xlu0 %v2514, 92
        %v2728 = vpop.permute.xlu0 %2727
        %2729 = vrot.lane.b32.xlu0 %v2515, 92
        %v2730 = vpop.permute.xlu0 %2729
        %2731 = vrot.lane.b32.xlu0 %v2516, 92
        %v2732 = vpop.permute.xlu0 %2731
        %2741 = vrot.lane.b32.xlu0 %v2509, 88
        %v2742 = vpop.permute.xlu0 %2741
        %2743 = vrot.lane.b32.xlu0 %v2510, 88
        %v2744 = vpop.permute.xlu0 %2743
        %2745 = vrot.lane.b32.xlu0 %v2511, 88
        %v2746 = vpop.permute.xlu0 %2745
        %2747 = vrot.lane.b32.xlu0 %v2512, 88
        %v2748 = vpop.permute.xlu0 %2747
        %2749 = vrot.lane.b32.xlu0 %v2513, 88
        %v2750 = vpop.permute.xlu0 %2749
        %2751 = vrot.lane.b32.xlu0 %v2514, 88
        %v2752 = vpop.permute.xlu0 %2751
        %2753 = vrot.lane.b32.xlu0 %v2515, 88
        %v2754 = vpop.permute.xlu0 %2753
        %2755 = vrot.lane.b32.xlu0 %v2516, 88
        %v2756 = vpop.permute.xlu0 %2755
        %2765 = vrot.lane.b32.xlu0 %v2509, 84
        %v2766 = vpop.permute.xlu0 %2765
        %2767 = vrot.lane.b32.xlu0 %v2510, 84
        %v2768 = vpop.permute.xlu0 %2767
        %2769 = vrot.lane.b32.xlu0 %v2511, 84
        %v2770 = vpop.permute.xlu0 %2769
        %2771 = vrot.lane.b32.xlu0 %v2512, 84
        %v2772 = vpop.permute.xlu0 %2771
        %2773 = vrot.lane.b32.xlu0 %v2513, 84
        %v2774 = vpop.permute.xlu0 %2773
        %2775 = vrot.lane.b32.xlu0 %v2514, 84
        %v2776 = vpop.permute.xlu0 %2775
        %2777 = vrot.lane.b32.xlu0 %v2515, 84
        %v2778 = vpop.permute.xlu0 %2777
        %2779 = vrot.lane.b32.xlu0 %v2516, 84
        %v2780 = vpop.permute.xlu0 %2779
        %2789 = vrot.lane.b32.xlu0 %v2509, 80
        %v2790 = vpop.permute.xlu0 %2789
        %2791 = vrot.lane.b32.xlu0 %v2510, 80
        %v2792 = vpop.permute.xlu0 %2791
        %2793 = vrot.lane.b32.xlu0 %v2511, 80
        %v2794 = vpop.permute.xlu0 %2793
        %2795 = vrot.lane.b32.xlu0 %v2512, 80
        %v2796 = vpop.permute.xlu0 %2795
        %2797 = vrot.lane.b32.xlu0 %v2513, 80
        %v2798 = vpop.permute.xlu0 %2797
        %2799 = vrot.lane.b32.xlu0 %v2514, 80
        %v2800 = vpop.permute.xlu0 %2799
        %2801 = vrot.lane.b32.xlu0 %v2515, 80
        %v2802 = vpop.permute.xlu0 %2801
        %2803 = vrot.lane.b32.xlu0 %v2516, 80
        %v2804 = vpop.permute.xlu0 %2803
        %2813 = vrot.lane.b32.xlu0 %v2509, 76
        %v2814 = vpop.permute.xlu0 %2813
        %2815 = vrot.lane.b32.xlu0 %v2510, 76
        %v2816 = vpop.permute.xlu0 %2815
        %2817 = vrot.lane.b32.xlu0 %v2511, 76
        %v2818 = vpop.permute.xlu0 %2817
        %2819 = vrot.lane.b32.xlu0 %v2512, 76
        %v2820 = vpop.permute.xlu0 %2819
        %2821 = vrot.lane.b32.xlu0 %v2513, 76
        %v2822 = vpop.permute.xlu0 %2821
        %2823 = vrot.lane.b32.xlu0 %v2514, 76
        %v2824 = vpop.permute.xlu0 %2823
        %2825 = vrot.lane.b32.xlu0 %v2515, 76
        %v2826 = vpop.permute.xlu0 %2825
        %2827 = vrot.lane.b32.xlu0 %v2516, 76
        %v2828 = vpop.permute.xlu0 %2827
        %2837 = vrot.lane.b32.xlu0 %v2509, 72
        %v2838 = vpop.permute.xlu0 %2837
        %2839 = vrot.lane.b32.xlu0 %v2510, 72
        %v2840 = vpop.permute.xlu0 %2839
        %2841 = vrot.lane.b32.xlu0 %v2511, 72
        %v2842 = vpop.permute.xlu0 %2841
        %2843 = vrot.lane.b32.xlu0 %v2512, 72
        %v2844 = vpop.permute.xlu0 %2843
        %2845 = vrot.lane.b32.xlu0 %v2513, 72
        %v2846 = vpop.permute.xlu0 %2845
        %2847 = vrot.lane.b32.xlu0 %v2514, 72
        %v2848 = vpop.permute.xlu0 %2847
        %2849 = vrot.lane.b32.xlu0 %v2515, 72
        %v2850 = vpop.permute.xlu0 %2849
        %2851 = vrot.lane.b32.xlu0 %v2516, 72
        %v2852 = vpop.permute.xlu0 %2851
        %2861 = vrot.lane.b32.xlu0 %v2509, 68
        %v2862 = vpop.permute.xlu0 %2861
        %2863 = vrot.lane.b32.xlu0 %v2510, 68
        %v2864 = vpop.permute.xlu0 %2863
        %2865 = vrot.lane.b32.xlu0 %v2511, 68
        %v2866 = vpop.permute.xlu0 %2865
        %2867 = vrot.lane.b32.xlu0 %v2512, 68
        %v2868 = vpop.permute.xlu0 %2867
        %2869 = vrot.lane.b32.xlu0 %v2513, 68
        %v2870 = vpop.permute.xlu0 %2869
        %2871 = vrot.lane.b32.xlu0 %v2514, 68
        %v2872 = vpop.permute.xlu0 %2871
        %2873 = vrot.lane.b32.xlu0 %v2515, 68
        %v2874 = vpop.permute.xlu0 %2873
        %2875 = vrot.lane.b32.xlu0 %v2516, 68
        %v2876 = vpop.permute.xlu0 %2875
        %2885 = vrot.lane.b32.xlu0 %v2509, 64
        %v2886 = vpop.permute.xlu0 %2885
        %2887 = vrot.lane.b32.xlu0 %v2510, 64
        %v2888 = vpop.permute.xlu0 %2887
        %2889 = vrot.lane.b32.xlu0 %v2511, 64
        %v2890 = vpop.permute.xlu0 %2889
        %2891 = vrot.lane.b32.xlu0 %v2512, 64
        %v2892 = vpop.permute.xlu0 %2891
        %2893 = vrot.lane.b32.xlu0 %v2513, 64
        %v2894 = vpop.permute.xlu0 %2893
        %2895 = vrot.lane.b32.xlu0 %v2514, 64
        %v2896 = vpop.permute.xlu0 %2895
        %2897 = vrot.lane.b32.xlu0 %v2515, 64
        %v2898 = vpop.permute.xlu0 %2897
        %2899 = vrot.lane.b32.xlu0 %v2516, 64
        %v2900 = vpop.permute.xlu0 %2899
        %2909 = vrot.lane.b32.xlu0 %v2509, 60
        %v2910 = vpop.permute.xlu0 %2909
        %2911 = vrot.lane.b32.xlu0 %v2510, 60
        %v2912 = vpop.permute.xlu0 %2911
        %2913 = vrot.lane.b32.xlu0 %v2511, 60
        %v2914 = vpop.permute.xlu0 %2913
        %2915 = vrot.lane.b32.xlu0 %v2512, 60
        %v2916 = vpop.permute.xlu0 %2915
        %2917 = vrot.lane.b32.xlu0 %v2513, 60
        %v2918 = vpop.permute.xlu0 %2917
        %2919 = vrot.lane.b32.xlu0 %v2514, 60
        %v2920 = vpop.permute.xlu0 %2919
        %2921 = vrot.lane.b32.xlu0 %v2515, 60
        %v2922 = vpop.permute.xlu0 %2921
        %2923 = vrot.lane.b32.xlu0 %v2516, 60
        %v2924 = vpop.permute.xlu0 %2923
        %2933 = vrot.lane.b32.xlu0 %v2509, 56
        %v2934 = vpop.permute.xlu0 %2933
        %2935 = vrot.lane.b32.xlu0 %v2510, 56
        %v2936 = vpop.permute.xlu0 %2935
        %2937 = vrot.lane.b32.xlu0 %v2511, 56
        %v2938 = vpop.permute.xlu0 %2937
        %2939 = vrot.lane.b32.xlu0 %v2512, 56
        %v2940 = vpop.permute.xlu0 %2939
        %2941 = vrot.lane.b32.xlu0 %v2513, 56
        %v2942 = vpop.permute.xlu0 %2941
        %2943 = vrot.lane.b32.xlu0 %v2514, 56
        %v2944 = vpop.permute.xlu0 %2943
        %2945 = vrot.lane.b32.xlu0 %v2515, 56
        %v2946 = vpop.permute.xlu0 %2945
        %2947 = vrot.lane.b32.xlu0 %v2516, 56
        %v2948 = vpop.permute.xlu0 %2947
        %2957 = vrot.lane.b32.xlu0 %v2509, 52
        %v2958 = vpop.permute.xlu0 %2957
        %2959 = vrot.lane.b32.xlu0 %v2510, 52
        %v2960 = vpop.permute.xlu0 %2959
        %2961 = vrot.lane.b32.xlu0 %v2511, 52
        %v2962 = vpop.permute.xlu0 %2961
        %2963 = vrot.lane.b32.xlu0 %v2512, 52
        %v2964 = vpop.permute.xlu0 %2963
        %2965 = vrot.lane.b32.xlu0 %v2513, 52
        %v2966 = vpop.permute.xlu0 %2965
        %2967 = vrot.lane.b32.xlu0 %v2514, 52
        %v2968 = vpop.permute.xlu0 %2967
        %2969 = vrot.lane.b32.xlu0 %v2515, 52
        %v2970 = vpop.permute.xlu0 %2969
        %2971 = vrot.lane.b32.xlu0 %v2516, 52
        %v2972 = vpop.permute.xlu0 %2971
        %2981 = vrot.lane.b32.xlu0 %v2509, 48
        %v2982 = vpop.permute.xlu0 %2981
        %2983 = vrot.lane.b32.xlu0 %v2510, 48
        %v2984 = vpop.permute.xlu0 %2983
        %2985 = vrot.lane.b32.xlu0 %v2511, 48
        %v2986 = vpop.permute.xlu0 %2985
        %2987 = vrot.lane.b32.xlu0 %v2512, 48
        %v2988 = vpop.permute.xlu0 %2987
        %2989 = vrot.lane.b32.xlu0 %v2513, 48
        %v2990 = vpop.permute.xlu0 %2989
        %2991 = vrot.lane.b32.xlu0 %v2514, 48
        %v2992 = vpop.permute.xlu0 %2991
        %2993 = vrot.lane.b32.xlu0 %v2515, 48
        %v2994 = vpop.permute.xlu0 %2993
        %2995 = vrot.lane.b32.xlu0 %v2516, 48
        %v2996 = vpop.permute.xlu0 %2995
        %3005 = vrot.lane.b32.xlu0 %v2509, 44
        %v3006 = vpop.permute.xlu0 %3005
        %3007 = vrot.lane.b32.xlu0 %v2510, 44
        %v3008 = vpop.permute.xlu0 %3007
        %3009 = vrot.lane.b32.xlu0 %v2511, 44
        %v3010 = vpop.permute.xlu0 %3009
        %3011 = vrot.lane.b32.xlu0 %v2512, 44
        %v3012 = vpop.permute.xlu0 %3011
        %3013 = vrot.lane.b32.xlu0 %v2513, 44
        %v3014 = vpop.permute.xlu0 %3013
        %3015 = vrot.lane.b32.xlu0 %v2514, 44
        %v3016 = vpop.permute.xlu0 %3015
        %3017 = vrot.lane.b32.xlu0 %v2515, 44
        %v3018 = vpop.permute.xlu0 %3017
        %3019 = vrot.lane.b32.xlu0 %v2516, 44
        %v3020 = vpop.permute.xlu0 %3019
        %3029 = vrot.lane.b32.xlu0 %v2509, 40
        %v3030 = vpop.permute.xlu0 %3029
        %3031 = vrot.lane.b32.xlu0 %v2510, 40
        %v3032 = vpop.permute.xlu0 %3031
        %3033 = vrot.lane.b32.xlu0 %v2511, 40
        %v3034 = vpop.permute.xlu0 %3033
        %3035 = vrot.lane.b32.xlu0 %v2512, 40
        %v3036 = vpop.permute.xlu0 %3035
        %3037 = vrot.lane.b32.xlu0 %v2513, 40
        %v3038 = vpop.permute.xlu0 %3037
        %3039 = vrot.lane.b32.xlu0 %v2514, 40
        %v3040 = vpop.permute.xlu0 %3039
        %3041 = vrot.lane.b32.xlu0 %v2515, 40
        %v3042 = vpop.permute.xlu0 %3041
        %3043 = vrot.lane.b32.xlu0 %v2516, 40
        %v3044 = vpop.permute.xlu0 %3043
        %3053 = vrot.lane.b32.xlu0 %v2509, 36
        %v3054 = vpop.permute.xlu0 %3053
        %3055 = vrot.lane.b32.xlu0 %v2510, 36
        %v3056 = vpop.permute.xlu0 %3055
        %3057 = vrot.lane.b32.xlu0 %v2511, 36
        %v3058 = vpop.permute.xlu0 %3057
        %3059 = vrot.lane.b32.xlu0 %v2512, 36
        %v3060 = vpop.permute.xlu0 %3059
        %3061 = vrot.lane.b32.xlu0 %v2513, 36
        %v3062 = vpop.permute.xlu0 %3061
        %3063 = vrot.lane.b32.xlu0 %v2514, 36
        %v3064 = vpop.permute.xlu0 %3063
        %3065 = vrot.lane.b32.xlu0 %v2515, 36
        %v3066 = vpop.permute.xlu0 %3065
        %3067 = vrot.lane.b32.xlu0 %v2516, 36
        %v3068 = vpop.permute.xlu0 %3067
        %3077 = vrot.lane.b32.xlu0 %v2509, 32
        %v3078 = vpop.permute.xlu0 %3077
        %3079 = vrot.lane.b32.xlu0 %v2510, 32
        %v3080 = vpop.permute.xlu0 %3079
        %3081 = vrot.lane.b32.xlu0 %v2511, 32
        %v3082 = vpop.permute.xlu0 %3081
        %3083 = vrot.lane.b32.xlu0 %v2512, 32
        %v3084 = vpop.permute.xlu0 %3083
        %3085 = vrot.lane.b32.xlu0 %v2513, 32
        %v3086 = vpop.permute.xlu0 %3085
        %3087 = vrot.lane.b32.xlu0 %v2514, 32
        %v3088 = vpop.permute.xlu0 %3087
        %3089 = vrot.lane.b32.xlu0 %v2515, 32
        %v3090 = vpop.permute.xlu0 %3089
        %3091 = vrot.lane.b32.xlu0 %v2516, 32
        %v3092 = vpop.permute.xlu0 %3091
        %3101 = vrot.lane.b32.xlu0 %v2509, 28
        %v3102 = vpop.permute.xlu0 %3101
        %3103 = vrot.lane.b32.xlu0 %v2510, 28
        %v3104 = vpop.permute.xlu0 %3103
        %3105 = vrot.lane.b32.xlu0 %v2511, 28
        %v3106 = vpop.permute.xlu0 %3105
        %3107 = vrot.lane.b32.xlu0 %v2512, 28
        %v3108 = vpop.permute.xlu0 %3107
        %3109 = vrot.lane.b32.xlu0 %v2513, 28
        %v3110 = vpop.permute.xlu0 %3109
        %3111 = vrot.lane.b32.xlu0 %v2514, 28
        %v3112 = vpop.permute.xlu0 %3111
        %3113 = vrot.lane.b32.xlu0 %v2515, 28
        %v3114 = vpop.permute.xlu0 %3113
        %3115 = vrot.lane.b32.xlu0 %v2516, 28
        %v3116 = vpop.permute.xlu0 %3115
        %3125 = vrot.lane.b32.xlu0 %v2509, 24
        %v3126 = vpop.permute.xlu0 %3125
        %3127 = vrot.lane.b32.xlu0 %v2510, 24
        %v3128 = vpop.permute.xlu0 %3127
        %3129 = vrot.lane.b32.xlu0 %v2511, 24
        %v3130 = vpop.permute.xlu0 %3129
        %3131 = vrot.lane.b32.xlu0 %v2512, 24
        %v3132 = vpop.permute.xlu0 %3131
        %3133 = vrot.lane.b32.xlu0 %v2513, 24
        %v3134 = vpop.permute.xlu0 %3133
        %3135 = vrot.lane.b32.xlu0 %v2514, 24
        %v3136 = vpop.permute.xlu0 %3135
        %3137 = vrot.lane.b32.xlu0 %v2515, 24
        %v3138 = vpop.permute.xlu0 %3137
        %3139 = vrot.lane.b32.xlu0 %v2516, 24
        %v3140 = vpop.permute.xlu0 %3139
        %3149 = vrot.lane.b32.xlu0 %v2509, 20
        %v3150 = vpop.permute.xlu0 %3149
        %3151 = vrot.lane.b32.xlu0 %v2510, 20
        %v3152 = vpop.permute.xlu0 %3151
        %3153 = vrot.lane.b32.xlu0 %v2511, 20
        %v3154 = vpop.permute.xlu0 %3153
        %3155 = vrot.lane.b32.xlu0 %v2512, 20
        %v3156 = vpop.permute.xlu0 %3155
        %3157 = vrot.lane.b32.xlu0 %v2513, 20
        %v3158 = vpop.permute.xlu0 %3157
        %3159 = vrot.lane.b32.xlu0 %v2514, 20
        %v3160 = vpop.permute.xlu0 %3159
        %3161 = vrot.lane.b32.xlu0 %v2515, 20
        %v3162 = vpop.permute.xlu0 %3161
        %3163 = vrot.lane.b32.xlu0 %v2516, 20
        %v3164 = vpop.permute.xlu0 %3163
        %3173 = vrot.lane.b32.xlu0 %v2509, 16
        %v3174 = vpop.permute.xlu0 %3173
        %3175 = vrot.lane.b32.xlu0 %v2510, 16
        %v3176 = vpop.permute.xlu0 %3175
        %3177 = vrot.lane.b32.xlu0 %v2511, 16
        %v3178 = vpop.permute.xlu0 %3177
        %3179 = vrot.lane.b32.xlu0 %v2512, 16
        %v3180 = vpop.permute.xlu0 %3179
        %3181 = vrot.lane.b32.xlu0 %v2513, 16
        %v3182 = vpop.permute.xlu0 %3181
        %3183 = vrot.lane.b32.xlu0 %v2514, 16
        %v3184 = vpop.permute.xlu0 %3183
        %3185 = vrot.lane.b32.xlu0 %v2515, 16
        %v3186 = vpop.permute.xlu0 %3185
        %3187 = vrot.lane.b32.xlu0 %v2516, 16
        %v3188 = vpop.permute.xlu0 %3187
        %3197 = vrot.lane.b32.xlu0 %v2509, 12
        %v3198 = vpop.permute.xlu0 %3197
        %3199 = vrot.lane.b32.xlu0 %v2510, 12
        %v3200 = vpop.permute.xlu0 %3199
        %3201 = vrot.lane.b32.xlu0 %v2511, 12
        %v3202 = vpop.permute.xlu0 %3201
        %3203 = vrot.lane.b32.xlu0 %v2512, 12
        %v3204 = vpop.permute.xlu0 %3203
        %3205 = vrot.lane.b32.xlu0 %v2513, 12
        %v3206 = vpop.permute.xlu0 %3205
        %3207 = vrot.lane.b32.xlu0 %v2514, 12
        %v3208 = vpop.permute.xlu0 %3207
        %3209 = vrot.lane.b32.xlu0 %v2515, 12
        %v3210 = vpop.permute.xlu0 %3209
        %3211 = vrot.lane.b32.xlu0 %v2516, 12
        %v3212 = vpop.permute.xlu0 %3211
        %3221 = vrot.lane.b32.xlu0 %v2509, 8
        %v3222 = vpop.permute.xlu0 %3221
        %3223 = vrot.lane.b32.xlu0 %v2510, 8
        %v3224 = vpop.permute.xlu0 %3223
        %3225 = vrot.lane.b32.xlu0 %v2511, 8
        %v3226 = vpop.permute.xlu0 %3225
        %3227 = vrot.lane.b32.xlu0 %v2512, 8
        %v3228 = vpop.permute.xlu0 %3227
        %3229 = vrot.lane.b32.xlu0 %v2513, 8
        %v3230 = vpop.permute.xlu0 %3229
        %3231 = vrot.lane.b32.xlu0 %v2514, 8
        %v3232 = vpop.permute.xlu0 %3231
        %3233 = vrot.lane.b32.xlu0 %v2515, 8
        %v3234 = vpop.permute.xlu0 %3233
        %3235 = vrot.lane.b32.xlu0 %v2516, 8
        %v3236 = vpop.permute.xlu0 %3235
        %3245 = vrot.lane.b32.xlu0 %v2509, 4
        %v3246 = vpop.permute.xlu0 %3245
        %3247 = vrot.lane.b32.xlu0 %v2510, 4
        %v3248 = vpop.permute.xlu0 %3247
        %3249 = vrot.lane.b32.xlu0 %v2511, 4
        %v3250 = vpop.permute.xlu0 %3249
        %3251 = vrot.lane.b32.xlu0 %v2512, 4
        %v3252 = vpop.permute.xlu0 %3251
        %3253 = vrot.lane.b32.xlu0 %v2513, 4
        %v3254 = vpop.permute.xlu0 %3253
        %3255 = vrot.lane.b32.xlu0 %v2514, 4
        %v3256 = vpop.permute.xlu0 %3255
        %3257 = vrot.lane.b32.xlu0 %v2515, 4
        %v3258 = vpop.permute.xlu0 %3257
        %3259 = vrot.lane.b32.xlu0 %v2516, 4
        %v3260 = vpop.permute.xlu0 %3259
        %v3269 = vcombine.low %v2509, %v2550
        %v3270 = vcombine.high %v2509, %v2550
        %v3272 = vunpack.c.l.s4 1983009808
        %v3273 = vunpack.c.0.s8 %v3272
        %v3274 = vlaneseq
        %v3275 = vshrl.u32 %v3274, 7
        %v3276 = vsub.s32 %v3273, %v3275
        %v3277 = vrot.slane %v3269, %v3276
        %v3279 = vunpack.c.l.s4 1983009808
        %v3280 = vunpack.c.0.s8 %v3279
        %v3281 = vlaneseq
        %v3282 = vshrl.u32 %v3281, 7
        %v3283 = vsub.s32 %v3280, %v3282
        %v3284 = vrot.slane %v3270, %v3283
        %v3285 = vcombine.low %v2526, %v2574
        %v3286 = vcombine.high %v2526, %v2574
        %v3288 = vunpack.c.l.s4 1983009808
        %v3289 = vunpack.c.0.s8 %v3288
        %v3290 = vlaneseq
        %v3291 = vshrl.u32 %v3290, 7
        %v3292 = vsub.s32 %v3289, %v3291
        %v3293 = vrot.slane %v3285, %v3292
        %v3295 = vunpack.c.l.s4 1983009808
        %v3296 = vunpack.c.0.s8 %v3295
        %v3297 = vlaneseq
        %v3298 = vshrl.u32 %v3297, 7
        %v3299 = vsub.s32 %v3296, %v3298
        %v3300 = vrot.slane %v3286, %v3299
        %v3301 = vcombine.low %v2598, %v2646
        %v3302 = vcombine.high %v2598, %v2646
        %v3304 = vunpack.c.l.s4 1983009808
        %v3305 = vunpack.c.0.s8 %v3304
        %v3306 = vlaneseq
        %v3307 = vshrl.u32 %v3306, 7
        %v3308 = vsub.s32 %v3305, %v3307
        %v3309 = vrot.slane %v3301, %v3308
        %v3311 = vunpack.c.l.s4 1983009808
        %v3312 = vunpack.c.0.s8 %v3311
        %v3313 = vlaneseq
        %v3314 = vshrl.u32 %v3313, 7
        %v3315 = vsub.s32 %v3312, %v3314
        %v3316 = vrot.slane %v3302, %v3315
        %v3317 = vcombine.low %v2622, %v2670
        %v3318 = vcombine.high %v2622, %v2670
        %v3320 = vunpack.c.l.s4 1983009808
        %v3321 = vunpack.c.0.s8 %v3320
        %v3322 = vlaneseq
        %v3323 = vshrl.u32 %v3322, 7
        %v3324 = vsub.s32 %v3321, %v3323
        %v3325 = vrot.slane %v3317, %v3324
        %v3327 = vunpack.c.l.s4 1983009808
        %v3328 = vunpack.c.0.s8 %v3327
        %v3329 = vlaneseq
        %v3330 = vshrl.u32 %v3329, 7
        %v3331 = vsub.s32 %v3328, %v3330
        %v3332 = vrot.slane %v3318, %v3331
        %v3333 = vcombine.low %v3277, %v3293
        %v3334 = vcombine.high %v3277, %v3293
        %v3336 = vunpack.c.l.s4 1934713408
        %v3337 = vunpack.c.0.s8 %v3336
        %v3338 = vlaneseq
        %v3339 = vshrl.u32 %v3338, 7
        %v3340 = vsub.s32 %v3337, %v3339
        %v3341 = vrot.slane %v3333, %v3340
        %v3343 = vunpack.c.l.s4 1934713408
        %v3344 = vunpack.c.0.s8 %v3343
        %v3345 = vlaneseq
        %v3346 = vshrl.u32 %v3345, 7
        %v3347 = vsub.s32 %v3344, %v3346
        %v3348 = vrot.slane %v3334, %v3347
        %v3349 = vcombine.low %v3284, %v3300
        %v3350 = vcombine.high %v3284, %v3300
        %v3352 = vunpack.c.l.s4 1934713408
        %v3353 = vunpack.c.0.s8 %v3352
        %v3354 = vlaneseq
        %v3355 = vshrl.u32 %v3354, 7
        %v3356 = vsub.s32 %v3353, %v3355
        %v3357 = vrot.slane %v3349, %v3356
        %v3359 = vunpack.c.l.s4 1934713408
        %v3360 = vunpack.c.0.s8 %v3359
        %v3361 = vlaneseq
        %v3362 = vshrl.u32 %v3361, 7
        %v3363 = vsub.s32 %v3360, %v3362
        %v3364 = vrot.slane %v3350, %v3363
        %v3365 = vcombine.low %v3309, %v3325
        %v3366 = vcombine.high %v3309, %v3325
        %v3368 = vunpack.c.l.s4 1934713408
        %v3369 = vunpack.c.0.s8 %v3368
        %v3370 = vlaneseq
        %v3371 = vshrl.u32 %v3370, 7
        %v3372 = vsub.s32 %v3369, %v3371
        %v3373 = vrot.slane %v3365, %v3372
        %v3375 = vunpack.c.l.s4 1934713408
        %v3376 = vunpack.c.0.s8 %v3375
        %v3377 = vlaneseq
        %v3378 = vshrl.u32 %v3377, 7
        %v3379 = vsub.s32 %v3376, %v3378
        %v3380 = vrot.slane %v3366, %v3379
        %v3381 = vcombine.low %v3316, %v3332
        %v3382 = vcombine.high %v3316, %v3332
        %v3384 = vunpack.c.l.s4 1934713408
        %v3385 = vunpack.c.0.s8 %v3384
        %v3386 = vlaneseq
        %v3387 = vshrl.u32 %v3386, 7
        %v3388 = vsub.s32 %v3385, %v3387
        %v3389 = vrot.slane %v3381, %v3388
        %v3391 = vunpack.c.l.s4 1934713408
        %v3392 = vunpack.c.0.s8 %v3391
        %v3393 = vlaneseq
        %v3394 = vshrl.u32 %v3393, 7
        %v3395 = vsub.s32 %v3392, %v3394
        %v3396 = vrot.slane %v3382, %v3395
        %v3397 = vcombine.low %v3341, %v3373
        %v3398 = vcombine.high %v3341, %v3373
        %v3399 = vcombine.low %v3348, %v3380
        %v3400 = vcombine.high %v3348, %v3380
        %v3401 = vcombine.low %v3357, %v3389
        %v3402 = vcombine.high %v3357, %v3389
        %v3403 = vcombine.low %v3364, %v3396
        %v3404 = vcombine.high %v3364, %v3396
        %v3405 = vcombine.low %v2694, %v2742
        %v3406 = vcombine.high %v2694, %v2742
        %v3408 = vunpack.c.l.s4 1983009808
        %v3409 = vunpack.c.0.s8 %v3408
        %v3410 = vlaneseq
        %v3411 = vshrl.u32 %v3410, 7
        %v3412 = vsub.s32 %v3409, %v3411
        %v3413 = vrot.slane %v3405, %v3412
        %v3415 = vunpack.c.l.s4 1983009808
        %v3416 = vunpack.c.0.s8 %v3415
        %v3417 = vlaneseq
        %v3418 = vshrl.u32 %v3417, 7
        %v3419 = vsub.s32 %v3416, %v3418
        %v3420 = vrot.slane %v3406, %v3419
        %v3421 = vcombine.low %v2718, %v2766
        %v3422 = vcombine.high %v2718, %v2766
        %v3424 = vunpack.c.l.s4 1983009808
        %v3425 = vunpack.c.0.s8 %v3424
        %v3426 = vlaneseq
        %v3427 = vshrl.u32 %v3426, 7
        %v3428 = vsub.s32 %v3425, %v3427
        %v3429 = vrot.slane %v3421, %v3428
        %v3431 = vunpack.c.l.s4 1983009808
        %v3432 = vunpack.c.0.s8 %v3431
        %v3433 = vlaneseq
        %v3434 = vshrl.u32 %v3433, 7
        %v3435 = vsub.s32 %v3432, %v3434
        %v3436 = vrot.slane %v3422, %v3435
        %v3437 = vcombine.low %v2790, %v2838
        %v3438 = vcombine.high %v2790, %v2838
        %v3440 = vunpack.c.l.s4 1983009808
        %v3441 = vunpack.c.0.s8 %v3440
        %v3442 = vlaneseq
        %v3443 = vshrl.u32 %v3442, 7
        %v3444 = vsub.s32 %v3441, %v3443
        %v3445 = vrot.slane %v3437, %v3444
        %v3447 = vunpack.c.l.s4 1983009808
        %v3448 = vunpack.c.0.s8 %v3447
        %v3449 = vlaneseq
        %v3450 = vshrl.u32 %v3449, 7
        %v3451 = vsub.s32 %v3448, %v3450
        %v3452 = vrot.slane %v3438, %v3451
        %v3453 = vcombine.low %v2814, %v2862
        %v3454 = vcombine.high %v2814, %v2862
        %v3456 = vunpack.c.l.s4 1983009808
        %v3457 = vunpack.c.0.s8 %v3456
        %v3458 = vlaneseq
        %v3459 = vshrl.u32 %v3458, 7
        %v3460 = vsub.s32 %v3457, %v3459
        %v3461 = vrot.slane %v3453, %v3460
        %v3463 = vunpack.c.l.s4 1983009808
        %v3464 = vunpack.c.0.s8 %v3463
        %v3465 = vlaneseq
        %v3466 = vshrl.u32 %v3465, 7
        %v3467 = vsub.s32 %v3464, %v3466
        %v3468 = vrot.slane %v3454, %v3467
        %v3469 = vcombine.low %v3413, %v3429
        %v3470 = vcombine.high %v3413, %v3429
        %v3472 = vunpack.c.l.s4 1934713408
        %v3473 = vunpack.c.0.s8 %v3472
        %v3474 = vlaneseq
        %v3475 = vshrl.u32 %v3474, 7
        %v3476 = vsub.s32 %v3473, %v3475
        %v3477 = vrot.slane %v3469, %v3476
        %v3479 = vunpack.c.l.s4 1934713408
        %v3480 = vunpack.c.0.s8 %v3479
        %v3481 = vlaneseq
        %v3482 = vshrl.u32 %v3481, 7
        %v3483 = vsub.s32 %v3480, %v3482
        %v3484 = vrot.slane %v3470, %v3483
        %v3485 = vcombine.low %v3420, %v3436
        %v3486 = vcombine.high %v3420, %v3436
        %v3488 = vunpack.c.l.s4 1934713408
        %v3489 = vunpack.c.0.s8 %v3488
        %v3490 = vlaneseq
        %v3491 = vshrl.u32 %v3490, 7
        %v3492 = vsub.s32 %v3489, %v3491
        %v3493 = vrot.slane %v3485, %v3492
        %v3495 = vunpack.c.l.s4 1934713408
        %v3496 = vunpack.c.0.s8 %v3495
        %v3497 = vlaneseq
        %v3498 = vshrl.u32 %v3497, 7
        %v3499 = vsub.s32 %v3496, %v3498
        %v3500 = vrot.slane %v3486, %v3499
        %v3501 = vcombine.low %v3445, %v3461
        %v3502 = vcombine.high %v3445, %v3461
        %v3504 = vunpack.c.l.s4 1934713408
        %v3505 = vunpack.c.0.s8 %v3504
        %v3506 = vlaneseq
        %v3507 = vshrl.u32 %v3506, 7
        %v3508 = vsub.s32 %v3505, %v3507
        %v3509 = vrot.slane %v3501, %v3508
        %v3511 = vunpack.c.l.s4 1934713408
        %v3512 = vunpack.c.0.s8 %v3511
        %v3513 = vlaneseq
        %v3514 = vshrl.u32 %v3513, 7
        %v3515 = vsub.s32 %v3512, %v3514
        %v3516 = vrot.slane %v3502, %v3515
        %v3517 = vcombine.low %v3452, %v3468
        %v3518 = vcombine.high %v3452, %v3468
        %v3520 = vunpack.c.l.s4 1934713408
        %v3521 = vunpack.c.0.s8 %v3520
        %v3522 = vlaneseq
        %v3523 = vshrl.u32 %v3522, 7
        %v3524 = vsub.s32 %v3521, %v3523
        %v3525 = vrot.slane %v3517, %v3524
        %v3527 = vunpack.c.l.s4 1934713408
        %v3528 = vunpack.c.0.s8 %v3527
        %v3529 = vlaneseq
        %v3530 = vshrl.u32 %v3529, 7
        %v3531 = vsub.s32 %v3528, %v3530
        %v3532 = vrot.slane %v3518, %v3531
        %v3533 = vcombine.low %v3477, %v3509
        %v3534 = vcombine.high %v3477, %v3509
        %v3535 = vcombine.low %v3484, %v3516
        %v3536 = vcombine.high %v3484, %v3516
        %v3537 = vcombine.low %v3493, %v3525
        %v3538 = vcombine.high %v3493, %v3525
        %v3539 = vcombine.low %v3500, %v3532
        %v3540 = vcombine.high %v3500, %v3532
        %v3541 = vcombine.low %v2886, %v2934
        %v3542 = vcombine.high %v2886, %v2934
        %v3544 = vunpack.c.l.s4 1983009808
        %v3545 = vunpack.c.0.s8 %v3544
        %v3546 = vlaneseq
        %v3547 = vshrl.u32 %v3546, 7
        %v3548 = vsub.s32 %v3545, %v3547
        %v3549 = vrot.slane %v3541, %v3548
        %v3551 = vunpack.c.l.s4 1983009808
        %v3552 = vunpack.c.0.s8 %v3551
        %v3553 = vlaneseq
        %v3554 = vshrl.u32 %v3553, 7
        %v3555 = vsub.s32 %v3552, %v3554
        %v3556 = vrot.slane %v3542, %v3555
        %v3557 = vcombine.low %v2910, %v2958
        %v3558 = vcombine.high %v2910, %v2958
        %v3560 = vunpack.c.l.s4 1983009808
        %v3561 = vunpack.c.0.s8 %v3560
        %v3562 = vlaneseq
        %v3563 = vshrl.u32 %v3562, 7
        %v3564 = vsub.s32 %v3561, %v3563
        %v3565 = vrot.slane %v3557, %v3564
        %v3567 = vunpack.c.l.s4 1983009808
        %v3568 = vunpack.c.0.s8 %v3567
        %v3569 = vlaneseq
        %v3570 = vshrl.u32 %v3569, 7
        %v3571 = vsub.s32 %v3568, %v3570
        %v3572 = vrot.slane %v3558, %v3571
        %v3573 = vcombine.low %v2982, %v3030
        %v3574 = vcombine.high %v2982, %v3030
        %v3576 = vunpack.c.l.s4 1983009808
        %v3577 = vunpack.c.0.s8 %v3576
        %v3578 = vlaneseq
        %v3579 = vshrl.u32 %v3578, 7
        %v3580 = vsub.s32 %v3577, %v3579
        %v3581 = vrot.slane %v3573, %v3580
        %v3583 = vunpack.c.l.s4 1983009808
        %v3584 = vunpack.c.0.s8 %v3583
        %v3585 = vlaneseq
        %v3586 = vshrl.u32 %v3585, 7
        %v3587 = vsub.s32 %v3584, %v3586
        %v3588 = vrot.slane %v3574, %v3587
        %v3589 = vcombine.low %v3006, %v3054
        %v3590 = vcombine.high %v3006, %v3054
        %v3592 = vunpack.c.l.s4 1983009808
        %v3593 = vunpack.c.0.s8 %v3592
        %v3594 = vlaneseq
        %v3595 = vshrl.u32 %v3594, 7
        %v3596 = vsub.s32 %v3593, %v3595
        %v3597 = vrot.slane %v3589, %v3596
        %v3599 = vunpack.c.l.s4 1983009808
        %v3600 = vunpack.c.0.s8 %v3599
        %v3601 = vlaneseq
        %v3602 = vshrl.u32 %v3601, 7
        %v3603 = vsub.s32 %v3600, %v3602
        %v3604 = vrot.slane %v3590, %v3603
        %v3605 = vcombine.low %v3549, %v3565
        %v3606 = vcombine.high %v3549, %v3565
        %v3608 = vunpack.c.l.s4 1934713408
        %v3609 = vunpack.c.0.s8 %v3608
        %v3610 = vlaneseq
        %v3611 = vshrl.u32 %v3610, 7
        %v3612 = vsub.s32 %v3609, %v3611
        %v3613 = vrot.slane %v3605, %v3612
        %v3615 = vunpack.c.l.s4 1934713408
        %v3616 = vunpack.c.0.s8 %v3615
        %v3617 = vlaneseq
        %v3618 = vshrl.u32 %v3617, 7
        %v3619 = vsub.s32 %v3616, %v3618
        %v3620 = vrot.slane %v3606, %v3619
        %v3621 = vcombine.low %v3556, %v3572
        %v3622 = vcombine.high %v3556, %v3572
        %v3624 = vunpack.c.l.s4 1934713408
        %v3625 = vunpack.c.0.s8 %v3624
        %v3626 = vlaneseq
        %v3627 = vshrl.u32 %v3626, 7
        %v3628 = vsub.s32 %v3625, %v3627
        %v3629 = vrot.slane %v3621, %v3628
        %v3631 = vunpack.c.l.s4 1934713408
        %v3632 = vunpack.c.0.s8 %v3631
        %v3633 = vlaneseq
        %v3634 = vshrl.u32 %v3633, 7
        %v3635 = vsub.s32 %v3632, %v3634
        %v3636 = vrot.slane %v3622, %v3635
        %v3637 = vcombine.low %v3581, %v3597
        %v3638 = vcombine.high %v3581, %v3597
        %v3640 = vunpack.c.l.s4 1934713408
        %v3641 = vunpack.c.0.s8 %v3640
        %v3642 = vlaneseq
        %v3643 = vshrl.u32 %v3642, 7
        %v3644 = vsub.s32 %v3641, %v3643
        %v3645 = vrot.slane %v3637, %v3644
        %v3647 = vunpack.c.l.s4 1934713408
        %v3648 = vunpack.c.0.s8 %v3647
        %v3649 = vlaneseq
        %v3650 = vshrl.u32 %v3649, 7
        %v3651 = vsub.s32 %v3648, %v3650
        %v3652 = vrot.slane %v3638, %v3651
        %v3653 = vcombine.low %v3588, %v3604
        %v3654 = vcombine.high %v3588, %v3604
        %v3656 = vunpack.c.l.s4 1934713408
        %v3657 = vunpack.c.0.s8 %v3656
        %v3658 = vlaneseq
        %v3659 = vshrl.u32 %v3658, 7
        %v3660 = vsub.s32 %v3657, %v3659
        %v3661 = vrot.slane %v3653, %v3660
        %v3663 = vunpack.c.l.s4 1934713408
        %v3664 = vunpack.c.0.s8 %v3663
        %v3665 = vlaneseq
        %v3666 = vshrl.u32 %v3665, 7
        %v3667 = vsub.s32 %v3664, %v3666
        %v3668 = vrot.slane %v3654, %v3667
        %v3669 = vcombine.low %v3613, %v3645
        %v3670 = vcombine.high %v3613, %v3645
        %v3671 = vcombine.low %v3620, %v3652
        %v3672 = vcombine.high %v3620, %v3652
        %v3673 = vcombine.low %v3629, %v3661
        %v3674 = vcombine.high %v3629, %v3661
        %v3675 = vcombine.low %v3636, %v3668
        %v3676 = vcombine.high %v3636, %v3668
        %v3677 = vcombine.low %v3078, %v3126
        %v3678 = vcombine.high %v3078, %v3126
        %v3680 = vunpack.c.l.s4 1983009808
        %v3681 = vunpack.c.0.s8 %v3680
        %v3682 = vlaneseq
        %v3683 = vshrl.u32 %v3682, 7
        %v3684 = vsub.s32 %v3681, %v3683
        %v3685 = vrot.slane %v3677, %v3684
        %v3687 = vunpack.c.l.s4 1983009808
        %v3688 = vunpack.c.0.s8 %v3687
        %v3689 = vlaneseq
        %v3690 = vshrl.u32 %v3689, 7
        %v3691 = vsub.s32 %v3688, %v3690
        %v3692 = vrot.slane %v3678, %v3691
        %v3693 = vcombine.low %v3102, %v3150
        %v3694 = vcombine.high %v3102, %v3150
        %v3696 = vunpack.c.l.s4 1983009808
        %v3697 = vunpack.c.0.s8 %v3696
        %v3698 = vlaneseq
        %v3699 = vshrl.u32 %v3698, 7
        %v3700 = vsub.s32 %v3697, %v3699
        %v3701 = vrot.slane %v3693, %v3700
        %v3703 = vunpack.c.l.s4 1983009808
        %v3704 = vunpack.c.0.s8 %v3703
        %v3705 = vlaneseq
        %v3706 = vshrl.u32 %v3705, 7
        %v3707 = vsub.s32 %v3704, %v3706
        %v3708 = vrot.slane %v3694, %v3707
        %v3709 = vcombine.low %v3174, %v3222
        %v3710 = vcombine.high %v3174, %v3222
        %v3712 = vunpack.c.l.s4 1983009808
        %v3713 = vunpack.c.0.s8 %v3712
        %v3714 = vlaneseq
        %v3715 = vshrl.u32 %v3714, 7
        %v3716 = vsub.s32 %v3713, %v3715
        %v3717 = vrot.slane %v3709, %v3716
        %v3719 = vunpack.c.l.s4 1983009808
        %v3720 = vunpack.c.0.s8 %v3719
        %v3721 = vlaneseq
        %v3722 = vshrl.u32 %v3721, 7
        %v3723 = vsub.s32 %v3720, %v3722
        %v3724 = vrot.slane %v3710, %v3723
        %v3725 = vcombine.low %v3198, %v3246
        %v3726 = vcombine.high %v3198, %v3246
        %v3728 = vunpack.c.l.s4 1983009808
        %v3729 = vunpack.c.0.s8 %v3728
        %v3730 = vlaneseq
        %v3731 = vshrl.u32 %v3730, 7
        %v3732 = vsub.s32 %v3729, %v3731
        %v3733 = vrot.slane %v3725, %v3732
        %v3735 = vunpack.c.l.s4 1983009808
        %v3736 = vunpack.c.0.s8 %v3735
        %v3737 = vlaneseq
        %v3738 = vshrl.u32 %v3737, 7
        %v3739 = vsub.s32 %v3736, %v3738
        %v3740 = vrot.slane %v3726, %v3739
        %v3741 = vcombine.low %v3685, %v3701
        %v3742 = vcombine.high %v3685, %v3701
        %v3744 = vunpack.c.l.s4 1934713408
        %v3745 = vunpack.c.0.s8 %v3744
        %v3746 = vlaneseq
        %v3747 = vshrl.u32 %v3746, 7
        %v3748 = vsub.s32 %v3745, %v3747
        %v3749 = vrot.slane %v3741, %v3748
        %v3751 = vunpack.c.l.s4 1934713408
        %v3752 = vunpack.c.0.s8 %v3751
        %v3753 = vlaneseq
        %v3754 = vshrl.u32 %v3753, 7
        %v3755 = vsub.s32 %v3752, %v3754
        %v3756 = vrot.slane %v3742, %v3755
        %v3757 = vcombine.low %v3692, %v3708
        %v3758 = vcombine.high %v3692, %v3708
        %v3760 = vunpack.c.l.s4 1934713408
        %v3761 = vunpack.c.0.s8 %v3760
        %v3762 = vlaneseq
        %v3763 = vshrl.u32 %v3762, 7
        %v3764 = vsub.s32 %v3761, %v3763
        %v3765 = vrot.slane %v3757, %v3764
        %v3767 = vunpack.c.l.s4 1934713408
        %v3768 = vunpack.c.0.s8 %v3767
        %v3769 = vlaneseq
        %v3770 = vshrl.u32 %v3769, 7
        %v3771 = vsub.s32 %v3768, %v3770
        %v3772 = vrot.slane %v3758, %v3771
        %v3773 = vcombine.low %v3717, %v3733
        %v3774 = vcombine.high %v3717, %v3733
        %v3776 = vunpack.c.l.s4 1934713408
        %v3777 = vunpack.c.0.s8 %v3776
        %v3778 = vlaneseq
        %v3779 = vshrl.u32 %v3778, 7
        %v3780 = vsub.s32 %v3777, %v3779
        %v3781 = vrot.slane %v3773, %v3780
        %v3783 = vunpack.c.l.s4 1934713408
        %v3784 = vunpack.c.0.s8 %v3783
        %v3785 = vlaneseq
        %v3786 = vshrl.u32 %v3785, 7
        %v3787 = vsub.s32 %v3784, %v3786
        %v3788 = vrot.slane %v3774, %v3787
        %v3789 = vcombine.low %v3724, %v3740
        %v3790 = vcombine.high %v3724, %v3740
        %v3792 = vunpack.c.l.s4 1934713408
        %v3793 = vunpack.c.0.s8 %v3792
        %v3794 = vlaneseq
        %v3795 = vshrl.u32 %v3794, 7
        %v3796 = vsub.s32 %v3793, %v3795
        %v3797 = vrot.slane %v3789, %v3796
        %v3799 = vunpack.c.l.s4 1934713408
        %v3800 = vunpack.c.0.s8 %v3799
        %v3801 = vlaneseq
        %v3802 = vshrl.u32 %v3801, 7
        %v3803 = vsub.s32 %v3800, %v3802
        %v3804 = vrot.slane %v3790, %v3803
        %v3805 = vcombine.low %v3749, %v3781
        %v3806 = vcombine.high %v3749, %v3781
        %v3807 = vcombine.low %v3756, %v3788
        %v3808 = vcombine.high %v3756, %v3788
        %v3809 = vcombine.low %v3765, %v3797
        %v3810 = vcombine.high %v3765, %v3797
        %v3811 = vcombine.low %v3772, %v3804
        %v3812 = vcombine.high %v3772, %v3804
        %v3813 = vcombine.low %v2510, %v2552
        %v3814 = vcombine.high %v2510, %v2552
        %v3816 = vunpack.c.l.s4 1983009808
        %v3817 = vunpack.c.0.s8 %v3816
        %v3818 = vlaneseq
        %v3819 = vshrl.u32 %v3818, 7
        %v3820 = vsub.s32 %v3817, %v3819
        %v3821 = vrot.slane %v3813, %v3820
        %v3823 = vunpack.c.l.s4 1983009808
        %v3824 = vunpack.c.0.s8 %v3823
        %v3825 = vlaneseq
        %v3826 = vshrl.u32 %v3825, 7
        %v3827 = vsub.s32 %v3824, %v3826
        %v3828 = vrot.slane %v3814, %v3827
        %v3829 = vcombine.low %v2528, %v2576
        %v3830 = vcombine.high %v2528, %v2576
        %v3832 = vunpack.c.l.s4 1983009808
        %v3833 = vunpack.c.0.s8 %v3832
        %v3834 = vlaneseq
        %v3835 = vshrl.u32 %v3834, 7
        %v3836 = vsub.s32 %v3833, %v3835
        %v3837 = vrot.slane %v3829, %v3836
        %v3839 = vunpack.c.l.s4 1983009808
        %v3840 = vunpack.c.0.s8 %v3839
        %v3841 = vlaneseq
        %v3842 = vshrl.u32 %v3841, 7
        %v3843 = vsub.s32 %v3840, %v3842
        %v3844 = vrot.slane %v3830, %v3843
        %v3845 = vcombine.low %v2600, %v2648
        %v3846 = vcombine.high %v2600, %v2648
        %v3848 = vunpack.c.l.s4 1983009808
        %v3849 = vunpack.c.0.s8 %v3848
        %v3850 = vlaneseq
        %v3851 = vshrl.u32 %v3850, 7
        %v3852 = vsub.s32 %v3849, %v3851
        %v3853 = vrot.slane %v3845, %v3852
        %v3855 = vunpack.c.l.s4 1983009808
        %v3856 = vunpack.c.0.s8 %v3855
        %v3857 = vlaneseq
        %v3858 = vshrl.u32 %v3857, 7
        %v3859 = vsub.s32 %v3856, %v3858
        %v3860 = vrot.slane %v3846, %v3859
        %v3861 = vcombine.low %v2624, %v2672
        %v3862 = vcombine.high %v2624, %v2672
        %v3864 = vunpack.c.l.s4 1983009808
        %v3865 = vunpack.c.0.s8 %v3864
        %v3866 = vlaneseq
        %v3867 = vshrl.u32 %v3866, 7
        %v3868 = vsub.s32 %v3865, %v3867
        %v3869 = vrot.slane %v3861, %v3868
        %v3871 = vunpack.c.l.s4 1983009808
        %v3872 = vunpack.c.0.s8 %v3871
        %v3873 = vlaneseq
        %v3874 = vshrl.u32 %v3873, 7
        %v3875 = vsub.s32 %v3872, %v3874
        %v3876 = vrot.slane %v3862, %v3875
        %v3877 = vcombine.low %v3821, %v3837
        %v3878 = vcombine.high %v3821, %v3837
        %v3880 = vunpack.c.l.s4 1934713408
        %v3881 = vunpack.c.0.s8 %v3880
        %v3882 = vlaneseq
        %v3883 = vshrl.u32 %v3882, 7
        %v3884 = vsub.s32 %v3881, %v3883
        %v3885 = vrot.slane %v3877, %v3884
        %v3887 = vunpack.c.l.s4 1934713408
        %v3888 = vunpack.c.0.s8 %v3887
        %v3889 = vlaneseq
        %v3890 = vshrl.u32 %v3889, 7
        %v3891 = vsub.s32 %v3888, %v3890
        %v3892 = vrot.slane %v3878, %v3891
        %v3893 = vcombine.low %v3828, %v3844
        %v3894 = vcombine.high %v3828, %v3844
        %v3896 = vunpack.c.l.s4 1934713408
        %v3897 = vunpack.c.0.s8 %v3896
        %v3898 = vlaneseq
        %v3899 = vshrl.u32 %v3898, 7
        %v3900 = vsub.s32 %v3897, %v3899
        %v3901 = vrot.slane %v3893, %v3900
        %v3903 = vunpack.c.l.s4 1934713408
        %v3904 = vunpack.c.0.s8 %v3903
        %v3905 = vlaneseq
        %v3906 = vshrl.u32 %v3905, 7
        %v3907 = vsub.s32 %v3904, %v3906
        %v3908 = vrot.slane %v3894, %v3907
        %v3909 = vcombine.low %v3853, %v3869
        %v3910 = vcombine.high %v3853, %v3869
        %v3912 = vunpack.c.l.s4 1934713408
        %v3913 = vunpack.c.0.s8 %v3912
        %v3914 = vlaneseq
        %v3915 = vshrl.u32 %v3914, 7
        %v3916 = vsub.s32 %v3913, %v3915
        %v3917 = vrot.slane %v3909, %v3916
        %v3919 = vunpack.c.l.s4 1934713408
        %v3920 = vunpack.c.0.s8 %v3919
        %v3921 = vlaneseq
        %v3922 = vshrl.u32 %v3921, 7
        %v3923 = vsub.s32 %v3920, %v3922
        %v3924 = vrot.slane %v3910, %v3923
        %v3925 = vcombine.low %v3860, %v3876
        %v3926 = vcombine.high %v3860, %v3876
        %v3928 = vunpack.c.l.s4 1934713408
        %v3929 = vunpack.c.0.s8 %v3928
        %v3930 = vlaneseq
        %v3931 = vshrl.u32 %v3930, 7
        %v3932 = vsub.s32 %v3929, %v3931
        %v3933 = vrot.slane %v3925, %v3932
        %v3935 = vunpack.c.l.s4 1934713408
        %v3936 = vunpack.c.0.s8 %v3935
        %v3937 = vlaneseq
        %v3938 = vshrl.u32 %v3937, 7
        %v3939 = vsub.s32 %v3936, %v3938
        %v3940 = vrot.slane %v3926, %v3939
        %v3941 = vcombine.low %v3885, %v3917
        %v3942 = vcombine.high %v3885, %v3917
        %v3943 = vcombine.low %v3892, %v3924
        %v3944 = vcombine.high %v3892, %v3924
        %v3945 = vcombine.low %v3901, %v3933
        %v3946 = vcombine.high %v3901, %v3933
        %v3947 = vcombine.low %v3908, %v3940
        %v3948 = vcombine.high %v3908, %v3940
        %v3949 = vcombine.low %v2696, %v2744
        %v3950 = vcombine.high %v2696, %v2744
        %v3952 = vunpack.c.l.s4 1983009808
        %v3953 = vunpack.c.0.s8 %v3952
        %v3954 = vlaneseq
        %v3955 = vshrl.u32 %v3954, 7
        %v3956 = vsub.s32 %v3953, %v3955
        %v3957 = vrot.slane %v3949, %v3956
        %v3959 = vunpack.c.l.s4 1983009808
        %v3960 = vunpack.c.0.s8 %v3959
        %v3961 = vlaneseq
        %v3962 = vshrl.u32 %v3961, 7
        %v3963 = vsub.s32 %v3960, %v3962
        %v3964 = vrot.slane %v3950, %v3963
        %v3965 = vcombine.low %v2720, %v2768
        %v3966 = vcombine.high %v2720, %v2768
        %v3968 = vunpack.c.l.s4 1983009808
        %v3969 = vunpack.c.0.s8 %v3968
        %v3970 = vlaneseq
        %v3971 = vshrl.u32 %v3970, 7
        %v3972 = vsub.s32 %v3969, %v3971
        %v3973 = vrot.slane %v3965, %v3972
        %v3975 = vunpack.c.l.s4 1983009808
        %v3976 = vunpack.c.0.s8 %v3975
        %v3977 = vlaneseq
        %v3978 = vshrl.u32 %v3977, 7
        %v3979 = vsub.s32 %v3976, %v3978
        %v3980 = vrot.slane %v3966, %v3979
        %v3981 = vcombine.low %v2792, %v2840
        %v3982 = vcombine.high %v2792, %v2840
        %v3984 = vunpack.c.l.s4 1983009808
        %v3985 = vunpack.c.0.s8 %v3984
        %v3986 = vlaneseq
        %v3987 = vshrl.u32 %v3986, 7
        %v3988 = vsub.s32 %v3985, %v3987
        %v3989 = vrot.slane %v3981, %v3988
        %v3991 = vunpack.c.l.s4 1983009808
        %v3992 = vunpack.c.0.s8 %v3991
        %v3993 = vlaneseq
        %v3994 = vshrl.u32 %v3993, 7
        %v3995 = vsub.s32 %v3992, %v3994
        %v3996 = vrot.slane %v3982, %v3995
        %v3997 = vcombine.low %v2816, %v2864
        %v3998 = vcombine.high %v2816, %v2864
        %v4000 = vunpack.c.l.s4 1983009808
        %v4001 = vunpack.c.0.s8 %v4000
        %v4002 = vlaneseq
        %v4003 = vshrl.u32 %v4002, 7
        %v4004 = vsub.s32 %v4001, %v4003
        %v4005 = vrot.slane %v3997, %v4004
        %v4007 = vunpack.c.l.s4 1983009808
        %v4008 = vunpack.c.0.s8 %v4007
        %v4009 = vlaneseq
        %v4010 = vshrl.u32 %v4009, 7
        %v4011 = vsub.s32 %v4008, %v4010
        %v4012 = vrot.slane %v3998, %v4011
        %v4013 = vcombine.low %v3957, %v3973
        %v4014 = vcombine.high %v3957, %v3973
        %v4016 = vunpack.c.l.s4 1934713408
        %v4017 = vunpack.c.0.s8 %v4016
        %v4018 = vlaneseq
        %v4019 = vshrl.u32 %v4018, 7
        %v4020 = vsub.s32 %v4017, %v4019
        %v4021 = vrot.slane %v4013, %v4020
        %v4023 = vunpack.c.l.s4 1934713408
        %v4024 = vunpack.c.0.s8 %v4023
        %v4025 = vlaneseq
        %v4026 = vshrl.u32 %v4025, 7
        %v4027 = vsub.s32 %v4024, %v4026
        %v4028 = vrot.slane %v4014, %v4027
        %v4029 = vcombine.low %v3964, %v3980
        %v4030 = vcombine.high %v3964, %v3980
        %v4032 = vunpack.c.l.s4 1934713408
        %v4033 = vunpack.c.0.s8 %v4032
        %v4034 = vlaneseq
        %v4035 = vshrl.u32 %v4034, 7
        %v4036 = vsub.s32 %v4033, %v4035
        %v4037 = vrot.slane %v4029, %v4036
        %v4039 = vunpack.c.l.s4 1934713408
        %v4040 = vunpack.c.0.s8 %v4039
        %v4041 = vlaneseq
        %v4042 = vshrl.u32 %v4041, 7
        %v4043 = vsub.s32 %v4040, %v4042
        %v4044 = vrot.slane %v4030, %v4043
        %v4045 = vcombine.low %v3989, %v4005
        %v4046 = vcombine.high %v3989, %v4005
        %v4048 = vunpack.c.l.s4 1934713408
        %v4049 = vunpack.c.0.s8 %v4048
        %v4050 = vlaneseq
        %v4051 = vshrl.u32 %v4050, 7
        %v4052 = vsub.s32 %v4049, %v4051
        %v4053 = vrot.slane %v4045, %v4052
        %v4055 = vunpack.c.l.s4 1934713408
        %v4056 = vunpack.c.0.s8 %v4055
        %v4057 = vlaneseq
        %v4058 = vshrl.u32 %v4057, 7
        %v4059 = vsub.s32 %v4056, %v4058
        %v4060 = vrot.slane %v4046, %v4059
        %v4061 = vcombine.low %v3996, %v4012
        %v4062 = vcombine.high %v3996, %v4012
        %v4064 = vunpack.c.l.s4 1934713408
        %v4065 = vunpack.c.0.s8 %v4064
        %v4066 = vlaneseq
        %v4067 = vshrl.u32 %v4066, 7
        %v4068 = vsub.s32 %v4065, %v4067
        %v4069 = vrot.slane %v4061, %v4068
        %v4071 = vunpack.c.l.s4 1934713408
        %v4072 = vunpack.c.0.s8 %v4071
        %v4073 = vlaneseq
        %v4074 = vshrl.u32 %v4073, 7
        %v4075 = vsub.s32 %v4072, %v4074
        %v4076 = vrot.slane %v4062, %v4075
        %v4077 = vcombine.low %v4021, %v4053
        %v4078 = vcombine.high %v4021, %v4053
        %v4079 = vcombine.low %v4028, %v4060
        %v4080 = vcombine.high %v4028, %v4060
        %v4081 = vcombine.low %v4037, %v4069
        %v4082 = vcombine.high %v4037, %v4069
        %v4083 = vcombine.low %v4044, %v4076
        %v4084 = vcombine.high %v4044, %v4076
        %v4085 = vcombine.low %v2888, %v2936
        %v4086 = vcombine.high %v2888, %v2936
        %v4088 = vunpack.c.l.s4 1983009808
        %v4089 = vunpack.c.0.s8 %v4088
        %v4090 = vlaneseq
        %v4091 = vshrl.u32 %v4090, 7
        %v4092 = vsub.s32 %v4089, %v4091
        %v4093 = vrot.slane %v4085, %v4092
        %v4095 = vunpack.c.l.s4 1983009808
        %v4096 = vunpack.c.0.s8 %v4095
        %v4097 = vlaneseq
        %v4098 = vshrl.u32 %v4097, 7
        %v4099 = vsub.s32 %v4096, %v4098
        %v4100 = vrot.slane %v4086, %v4099
        %v4101 = vcombine.low %v2912, %v2960
        %v4102 = vcombine.high %v2912, %v2960
        %v4104 = vunpack.c.l.s4 1983009808
        %v4105 = vunpack.c.0.s8 %v4104
        %v4106 = vlaneseq
        %v4107 = vshrl.u32 %v4106, 7
        %v4108 = vsub.s32 %v4105, %v4107
        %v4109 = vrot.slane %v4101, %v4108
        %v4111 = vunpack.c.l.s4 1983009808
        %v4112 = vunpack.c.0.s8 %v4111
        %v4113 = vlaneseq
        %v4114 = vshrl.u32 %v4113, 7
        %v4115 = vsub.s32 %v4112, %v4114
        %v4116 = vrot.slane %v4102, %v4115
        %v4117 = vcombine.low %v2984, %v3032
        %v4118 = vcombine.high %v2984, %v3032
        %v4120 = vunpack.c.l.s4 1983009808
        %v4121 = vunpack.c.0.s8 %v4120
        %v4122 = vlaneseq
        %v4123 = vshrl.u32 %v4122, 7
        %v4124 = vsub.s32 %v4121, %v4123
        %v4125 = vrot.slane %v4117, %v4124
        %v4127 = vunpack.c.l.s4 1983009808
        %v4128 = vunpack.c.0.s8 %v4127
        %v4129 = vlaneseq
        %v4130 = vshrl.u32 %v4129, 7
        %v4131 = vsub.s32 %v4128, %v4130
        %v4132 = vrot.slane %v4118, %v4131
        %v4133 = vcombine.low %v3008, %v3056
        %v4134 = vcombine.high %v3008, %v3056
        %v4136 = vunpack.c.l.s4 1983009808
        %v4137 = vunpack.c.0.s8 %v4136
        %v4138 = vlaneseq
        %v4139 = vshrl.u32 %v4138, 7
        %v4140 = vsub.s32 %v4137, %v4139
        %v4141 = vrot.slane %v4133, %v4140
        %v4143 = vunpack.c.l.s4 1983009808
        %v4144 = vunpack.c.0.s8 %v4143
        %v4145 = vlaneseq
        %v4146 = vshrl.u32 %v4145, 7
        %v4147 = vsub.s32 %v4144, %v4146
        %v4148 = vrot.slane %v4134, %v4147
        %v4149 = vcombine.low %v4093, %v4109
        %v4150 = vcombine.high %v4093, %v4109
        %v4152 = vunpack.c.l.s4 1934713408
        %v4153 = vunpack.c.0.s8 %v4152
        %v4154 = vlaneseq
        %v4155 = vshrl.u32 %v4154, 7
        %v4156 = vsub.s32 %v4153, %v4155
        %v4157 = vrot.slane %v4149, %v4156
        %v4159 = vunpack.c.l.s4 1934713408
        %v4160 = vunpack.c.0.s8 %v4159
        %v4161 = vlaneseq
        %v4162 = vshrl.u32 %v4161, 7
        %v4163 = vsub.s32 %v4160, %v4162
        %v4164 = vrot.slane %v4150, %v4163
        %v4165 = vcombine.low %v4100, %v4116
        %v4166 = vcombine.high %v4100, %v4116
        %v4168 = vunpack.c.l.s4 1934713408
        %v4169 = vunpack.c.0.s8 %v4168
        %v4170 = vlaneseq
        %v4171 = vshrl.u32 %v4170, 7
        %v4172 = vsub.s32 %v4169, %v4171
        %v4173 = vrot.slane %v4165, %v4172
        %v4175 = vunpack.c.l.s4 1934713408
        %v4176 = vunpack.c.0.s8 %v4175
        %v4177 = vlaneseq
        %v4178 = vshrl.u32 %v4177, 7
        %v4179 = vsub.s32 %v4176, %v4178
        %v4180 = vrot.slane %v4166, %v4179
        %v4181 = vcombine.low %v4125, %v4141
        %v4182 = vcombine.high %v4125, %v4141
        %v4184 = vunpack.c.l.s4 1934713408
        %v4185 = vunpack.c.0.s8 %v4184
        %v4186 = vlaneseq
        %v4187 = vshrl.u32 %v4186, 7
        %v4188 = vsub.s32 %v4185, %v4187
        %v4189 = vrot.slane %v4181, %v4188
        %v4191 = vunpack.c.l.s4 1934713408
        %v4192 = vunpack.c.0.s8 %v4191
        %v4193 = vlaneseq
        %v4194 = vshrl.u32 %v4193, 7
        %v4195 = vsub.s32 %v4192, %v4194
        %v4196 = vrot.slane %v4182, %v4195
        %v4197 = vcombine.low %v4132, %v4148
        %v4198 = vcombine.high %v4132, %v4148
        %v4200 = vunpack.c.l.s4 1934713408
        %v4201 = vunpack.c.0.s8 %v4200
        %v4202 = vlaneseq
        %v4203 = vshrl.u32 %v4202, 7
        %v4204 = vsub.s32 %v4201, %v4203
        %v4205 = vrot.slane %v4197, %v4204
        %v4207 = vunpack.c.l.s4 1934713408
        %v4208 = vunpack.c.0.s8 %v4207
        %v4209 = vlaneseq
        %v4210 = vshrl.u32 %v4209, 7
        %v4211 = vsub.s32 %v4208, %v4210
        %v4212 = vrot.slane %v4198, %v4211
        %v4213 = vcombine.low %v4157, %v4189
        %v4214 = vcombine.high %v4157, %v4189
        %v4215 = vcombine.low %v4164, %v4196
        %v4216 = vcombine.high %v4164, %v4196
        %v4217 = vcombine.low %v4173, %v4205
        %v4218 = vcombine.high %v4173, %v4205
        %v4219 = vcombine.low %v4180, %v4212
        %v4220 = vcombine.high %v4180, %v4212
        %v4221 = vcombine.low %v3080, %v3128
        %v4222 = vcombine.high %v3080, %v3128
        %v4224 = vunpack.c.l.s4 1983009808
        %v4225 = vunpack.c.0.s8 %v4224
        %v4226 = vlaneseq
        %v4227 = vshrl.u32 %v4226, 7
        %v4228 = vsub.s32 %v4225, %v4227
        %v4229 = vrot.slane %v4221, %v4228
        %v4231 = vunpack.c.l.s4 1983009808
        %v4232 = vunpack.c.0.s8 %v4231
        %v4233 = vlaneseq
        %v4234 = vshrl.u32 %v4233, 7
        %v4235 = vsub.s32 %v4232, %v4234
        %v4236 = vrot.slane %v4222, %v4235
        %v4237 = vcombine.low %v3104, %v3152
        %v4238 = vcombine.high %v3104, %v3152
        %v4240 = vunpack.c.l.s4 1983009808
        %v4241 = vunpack.c.0.s8 %v4240
        %v4242 = vlaneseq
        %v4243 = vshrl.u32 %v4242, 7
        %v4244 = vsub.s32 %v4241, %v4243
        %v4245 = vrot.slane %v4237, %v4244
        %v4247 = vunpack.c.l.s4 1983009808
        %v4248 = vunpack.c.0.s8 %v4247
        %v4249 = vlaneseq
        %v4250 = vshrl.u32 %v4249, 7
        %v4251 = vsub.s32 %v4248, %v4250
        %v4252 = vrot.slane %v4238, %v4251
        %v4253 = vcombine.low %v3176, %v3224
        %v4254 = vcombine.high %v3176, %v3224
        %v4256 = vunpack.c.l.s4 1983009808
        %v4257 = vunpack.c.0.s8 %v4256
        %v4258 = vlaneseq
        %v4259 = vshrl.u32 %v4258, 7
        %v4260 = vsub.s32 %v4257, %v4259
        %v4261 = vrot.slane %v4253, %v4260
        %v4263 = vunpack.c.l.s4 1983009808
        %v4264 = vunpack.c.0.s8 %v4263
        %v4265 = vlaneseq
        %v4266 = vshrl.u32 %v4265, 7
        %v4267 = vsub.s32 %v4264, %v4266
        %v4268 = vrot.slane %v4254, %v4267
        %v4269 = vcombine.low %v3200, %v3248
        %v4270 = vcombine.high %v3200, %v3248
        %v4272 = vunpack.c.l.s4 1983009808
        %v4273 = vunpack.c.0.s8 %v4272
        %v4274 = vlaneseq
        %v4275 = vshrl.u32 %v4274, 7
        %v4276 = vsub.s32 %v4273, %v4275
        %v4277 = vrot.slane %v4269, %v4276
        %v4279 = vunpack.c.l.s4 1983009808
        %v4280 = vunpack.c.0.s8 %v4279
        %v4281 = vlaneseq
        %v4282 = vshrl.u32 %v4281, 7
        %v4283 = vsub.s32 %v4280, %v4282
        %v4284 = vrot.slane %v4270, %v4283
        %v4285 = vcombine.low %v4229, %v4245
        %v4286 = vcombine.high %v4229, %v4245
        %v4288 = vunpack.c.l.s4 1934713408
        %v4289 = vunpack.c.0.s8 %v4288
        %v4290 = vlaneseq
        %v4291 = vshrl.u32 %v4290, 7
        %v4292 = vsub.s32 %v4289, %v4291
        %v4293 = vrot.slane %v4285, %v4292
        %v4295 = vunpack.c.l.s4 1934713408
        %v4296 = vunpack.c.0.s8 %v4295
        %v4297 = vlaneseq
        %v4298 = vshrl.u32 %v4297, 7
        %v4299 = vsub.s32 %v4296, %v4298
        %v4300 = vrot.slane %v4286, %v4299
        %v4301 = vcombine.low %v4236, %v4252
        %v4302 = vcombine.high %v4236, %v4252
        %v4304 = vunpack.c.l.s4 1934713408
        %v4305 = vunpack.c.0.s8 %v4304
        %v4306 = vlaneseq
        %v4307 = vshrl.u32 %v4306, 7
        %v4308 = vsub.s32 %v4305, %v4307
        %v4309 = vrot.slane %v4301, %v4308
        %v4311 = vunpack.c.l.s4 1934713408
        %v4312 = vunpack.c.0.s8 %v4311
        %v4313 = vlaneseq
        %v4314 = vshrl.u32 %v4313, 7
        %v4315 = vsub.s32 %v4312, %v4314
        %v4316 = vrot.slane %v4302, %v4315
        %v4317 = vcombine.low %v4261, %v4277
        %v4318 = vcombine.high %v4261, %v4277
        %v4320 = vunpack.c.l.s4 1934713408
        %v4321 = vunpack.c.0.s8 %v4320
        %v4322 = vlaneseq
        %v4323 = vshrl.u32 %v4322, 7
        %v4324 = vsub.s32 %v4321, %v4323
        %v4325 = vrot.slane %v4317, %v4324
        %v4327 = vunpack.c.l.s4 1934713408
        %v4328 = vunpack.c.0.s8 %v4327
        %v4329 = vlaneseq
        %v4330 = vshrl.u32 %v4329, 7
        %v4331 = vsub.s32 %v4328, %v4330
        %v4332 = vrot.slane %v4318, %v4331
        %v4333 = vcombine.low %v4268, %v4284
        %v4334 = vcombine.high %v4268, %v4284
        %v4336 = vunpack.c.l.s4 1934713408
        %v4337 = vunpack.c.0.s8 %v4336
        %v4338 = vlaneseq
        %v4339 = vshrl.u32 %v4338, 7
        %v4340 = vsub.s32 %v4337, %v4339
        %v4341 = vrot.slane %v4333, %v4340
        %v4343 = vunpack.c.l.s4 1934713408
        %v4344 = vunpack.c.0.s8 %v4343
        %v4345 = vlaneseq
        %v4346 = vshrl.u32 %v4345, 7
        %v4347 = vsub.s32 %v4344, %v4346
        %v4348 = vrot.slane %v4334, %v4347
        %v4349 = vcombine.low %v4293, %v4325
        %v4350 = vcombine.high %v4293, %v4325
        %v4351 = vcombine.low %v4300, %v4332
        %v4352 = vcombine.high %v4300, %v4332
        %v4353 = vcombine.low %v4309, %v4341
        %v4354 = vcombine.high %v4309, %v4341
        %v4355 = vcombine.low %v4316, %v4348
        %v4356 = vcombine.high %v4316, %v4348
        %v4357 = vcombine.low %v2511, %v2554
        %v4358 = vcombine.high %v2511, %v2554
        %v4360 = vunpack.c.l.s4 1983009808
        %v4361 = vunpack.c.0.s8 %v4360
        %v4362 = vlaneseq
        %v4363 = vshrl.u32 %v4362, 7
        %v4364 = vsub.s32 %v4361, %v4363
        %v4365 = vrot.slane %v4357, %v4364
        %v4367 = vunpack.c.l.s4 1983009808
        %v4368 = vunpack.c.0.s8 %v4367
        %v4369 = vlaneseq
        %v4370 = vshrl.u32 %v4369, 7
        %v4371 = vsub.s32 %v4368, %v4370
        %v4372 = vrot.slane %v4358, %v4371
        %v4373 = vcombine.low %v2530, %v2578
        %v4374 = vcombine.high %v2530, %v2578
        %v4376 = vunpack.c.l.s4 1983009808
        %v4377 = vunpack.c.0.s8 %v4376
        %v4378 = vlaneseq
        %v4379 = vshrl.u32 %v4378, 7
        %v4380 = vsub.s32 %v4377, %v4379
        %v4381 = vrot.slane %v4373, %v4380
        %v4383 = vunpack.c.l.s4 1983009808
        %v4384 = vunpack.c.0.s8 %v4383
        %v4385 = vlaneseq
        %v4386 = vshrl.u32 %v4385, 7
        %v4387 = vsub.s32 %v4384, %v4386
        %v4388 = vrot.slane %v4374, %v4387
        %v4389 = vcombine.low %v2602, %v2650
        %v4390 = vcombine.high %v2602, %v2650
        %v4392 = vunpack.c.l.s4 1983009808
        %v4393 = vunpack.c.0.s8 %v4392
        %v4394 = vlaneseq
        %v4395 = vshrl.u32 %v4394, 7
        %v4396 = vsub.s32 %v4393, %v4395
        %v4397 = vrot.slane %v4389, %v4396
        %v4399 = vunpack.c.l.s4 1983009808
        %v4400 = vunpack.c.0.s8 %v4399
        %v4401 = vlaneseq
        %v4402 = vshrl.u32 %v4401, 7
        %v4403 = vsub.s32 %v4400, %v4402
        %v4404 = vrot.slane %v4390, %v4403
        %v4405 = vcombine.low %v2626, %v2674
        %v4406 = vcombine.high %v2626, %v2674
        %v4408 = vunpack.c.l.s4 1983009808
        %v4409 = vunpack.c.0.s8 %v4408
        %v4410 = vlaneseq
        %v4411 = vshrl.u32 %v4410, 7
        %v4412 = vsub.s32 %v4409, %v4411
        %v4413 = vrot.slane %v4405, %v4412
        %v4415 = vunpack.c.l.s4 1983009808
        %v4416 = vunpack.c.0.s8 %v4415
        %v4417 = vlaneseq
        %v4418 = vshrl.u32 %v4417, 7
        %v4419 = vsub.s32 %v4416, %v4418
        %v4420 = vrot.slane %v4406, %v4419
        %v4421 = vcombine.low %v4365, %v4381
        %v4422 = vcombine.high %v4365, %v4381
        %v4424 = vunpack.c.l.s4 1934713408
        %v4425 = vunpack.c.0.s8 %v4424
        %v4426 = vlaneseq
        %v4427 = vshrl.u32 %v4426, 7
        %v4428 = vsub.s32 %v4425, %v4427
        %v4429 = vrot.slane %v4421, %v4428
        %v4431 = vunpack.c.l.s4 1934713408
        %v4432 = vunpack.c.0.s8 %v4431
        %v4433 = vlaneseq
        %v4434 = vshrl.u32 %v4433, 7
        %v4435 = vsub.s32 %v4432, %v4434
        %v4436 = vrot.slane %v4422, %v4435
        %v4437 = vcombine.low %v4372, %v4388
        %v4438 = vcombine.high %v4372, %v4388
        %v4440 = vunpack.c.l.s4 1934713408
        %v4441 = vunpack.c.0.s8 %v4440
        %v4442 = vlaneseq
        %v4443 = vshrl.u32 %v4442, 7
        %v4444 = vsub.s32 %v4441, %v4443
        %v4445 = vrot.slane %v4437, %v4444
        %v4447 = vunpack.c.l.s4 1934713408
        %v4448 = vunpack.c.0.s8 %v4447
        %v4449 = vlaneseq
        %v4450 = vshrl.u32 %v4449, 7
        %v4451 = vsub.s32 %v4448, %v4450
        %v4452 = vrot.slane %v4438, %v4451
        %v4453 = vcombine.low %v4397, %v4413
        %v4454 = vcombine.high %v4397, %v4413
        %v4456 = vunpack.c.l.s4 1934713408
        %v4457 = vunpack.c.0.s8 %v4456
        %v4458 = vlaneseq
        %v4459 = vshrl.u32 %v4458, 7
        %v4460 = vsub.s32 %v4457, %v4459
        %v4461 = vrot.slane %v4453, %v4460
        %v4463 = vunpack.c.l.s4 1934713408
        %v4464 = vunpack.c.0.s8 %v4463
        %v4465 = vlaneseq
        %v4466 = vshrl.u32 %v4465, 7
        %v4467 = vsub.s32 %v4464, %v4466
        %v4468 = vrot.slane %v4454, %v4467
        %v4469 = vcombine.low %v4404, %v4420
        %v4470 = vcombine.high %v4404, %v4420
        %v4472 = vunpack.c.l.s4 1934713408
        %v4473 = vunpack.c.0.s8 %v4472
        %v4474 = vlaneseq
        %v4475 = vshrl.u32 %v4474, 7
        %v4476 = vsub.s32 %v4473, %v4475
        %v4477 = vrot.slane %v4469, %v4476
        %v4479 = vunpack.c.l.s4 1934713408
        %v4480 = vunpack.c.0.s8 %v4479
        %v4481 = vlaneseq
        %v4482 = vshrl.u32 %v4481, 7
        %v4483 = vsub.s32 %v4480, %v4482
        %v4484 = vrot.slane %v4470, %v4483
        %v4485 = vcombine.low %v4429, %v4461
        %v4486 = vcombine.high %v4429, %v4461
        %v4487 = vcombine.low %v4436, %v4468
        %v4488 = vcombine.high %v4436, %v4468
        %v4489 = vcombine.low %v4445, %v4477
        %v4490 = vcombine.high %v4445, %v4477
        %v4491 = vcombine.low %v4452, %v4484
        %v4492 = vcombine.high %v4452, %v4484
        %v4493 = vcombine.low %v2698, %v2746
        %v4494 = vcombine.high %v2698, %v2746
        %v4496 = vunpack.c.l.s4 1983009808
        %v4497 = vunpack.c.0.s8 %v4496
        %v4498 = vlaneseq
        %v4499 = vshrl.u32 %v4498, 7
        %v4500 = vsub.s32 %v4497, %v4499
        %v4501 = vrot.slane %v4493, %v4500
        %v4503 = vunpack.c.l.s4 1983009808
        %v4504 = vunpack.c.0.s8 %v4503
        %v4505 = vlaneseq
        %v4506 = vshrl.u32 %v4505, 7
        %v4507 = vsub.s32 %v4504, %v4506
        %v4508 = vrot.slane %v4494, %v4507
        %v4509 = vcombine.low %v2722, %v2770
        %v4510 = vcombine.high %v2722, %v2770
        %v4512 = vunpack.c.l.s4 1983009808
        %v4513 = vunpack.c.0.s8 %v4512
        %v4514 = vlaneseq
        %v4515 = vshrl.u32 %v4514, 7
        %v4516 = vsub.s32 %v4513, %v4515
        %v4517 = vrot.slane %v4509, %v4516
        %v4519 = vunpack.c.l.s4 1983009808
        %v4520 = vunpack.c.0.s8 %v4519
        %v4521 = vlaneseq
        %v4522 = vshrl.u32 %v4521, 7
        %v4523 = vsub.s32 %v4520, %v4522
        %v4524 = vrot.slane %v4510, %v4523
        %v4525 = vcombine.low %v2794, %v2842
        %v4526 = vcombine.high %v2794, %v2842
        %v4528 = vunpack.c.l.s4 1983009808
        %v4529 = vunpack.c.0.s8 %v4528
        %v4530 = vlaneseq
        %v4531 = vshrl.u32 %v4530, 7
        %v4532 = vsub.s32 %v4529, %v4531
        %v4533 = vrot.slane %v4525, %v4532
        %v4535 = vunpack.c.l.s4 1983009808
        %v4536 = vunpack.c.0.s8 %v4535
        %v4537 = vlaneseq
        %v4538 = vshrl.u32 %v4537, 7
        %v4539 = vsub.s32 %v4536, %v4538
        %v4540 = vrot.slane %v4526, %v4539
        %v4541 = vcombine.low %v2818, %v2866
        %v4542 = vcombine.high %v2818, %v2866
        %v4544 = vunpack.c.l.s4 1983009808
        %v4545 = vunpack.c.0.s8 %v4544
        %v4546 = vlaneseq
        %v4547 = vshrl.u32 %v4546, 7
        %v4548 = vsub.s32 %v4545, %v4547
        %v4549 = vrot.slane %v4541, %v4548
        %v4551 = vunpack.c.l.s4 1983009808
        %v4552 = vunpack.c.0.s8 %v4551
        %v4553 = vlaneseq
        %v4554 = vshrl.u32 %v4553, 7
        %v4555 = vsub.s32 %v4552, %v4554
        %v4556 = vrot.slane %v4542, %v4555
        %v4557 = vcombine.low %v4501, %v4517
        %v4558 = vcombine.high %v4501, %v4517
        %v4560 = vunpack.c.l.s4 1934713408
        %v4561 = vunpack.c.0.s8 %v4560
        %v4562 = vlaneseq
        %v4563 = vshrl.u32 %v4562, 7
        %v4564 = vsub.s32 %v4561, %v4563
        %v4565 = vrot.slane %v4557, %v4564
        %v4567 = vunpack.c.l.s4 1934713408
        %v4568 = vunpack.c.0.s8 %v4567
        %v4569 = vlaneseq
        %v4570 = vshrl.u32 %v4569, 7
        %v4571 = vsub.s32 %v4568, %v4570
        %v4572 = vrot.slane %v4558, %v4571
        %v4573 = vcombine.low %v4508, %v4524
        %v4574 = vcombine.high %v4508, %v4524
        %v4576 = vunpack.c.l.s4 1934713408
        %v4577 = vunpack.c.0.s8 %v4576
        %v4578 = vlaneseq
        %v4579 = vshrl.u32 %v4578, 7
        %v4580 = vsub.s32 %v4577, %v4579
        %v4581 = vrot.slane %v4573, %v4580
        %v4583 = vunpack.c.l.s4 1934713408
        %v4584 = vunpack.c.0.s8 %v4583
        %v4585 = vlaneseq
        %v4586 = vshrl.u32 %v4585, 7
        %v4587 = vsub.s32 %v4584, %v4586
        %v4588 = vrot.slane %v4574, %v4587
        %v4589 = vcombine.low %v4533, %v4549
        %v4590 = vcombine.high %v4533, %v4549
        %v4592 = vunpack.c.l.s4 1934713408
        %v4593 = vunpack.c.0.s8 %v4592
        %v4594 = vlaneseq
        %v4595 = vshrl.u32 %v4594, 7
        %v4596 = vsub.s32 %v4593, %v4595
        %v4597 = vrot.slane %v4589, %v4596
        %v4599 = vunpack.c.l.s4 1934713408
        %v4600 = vunpack.c.0.s8 %v4599
        %v4601 = vlaneseq
        %v4602 = vshrl.u32 %v4601, 7
        %v4603 = vsub.s32 %v4600, %v4602
        %v4604 = vrot.slane %v4590, %v4603
        %v4605 = vcombine.low %v4540, %v4556
        %v4606 = vcombine.high %v4540, %v4556
        %v4608 = vunpack.c.l.s4 1934713408
        %v4609 = vunpack.c.0.s8 %v4608
        %v4610 = vlaneseq
        %v4611 = vshrl.u32 %v4610, 7
        %v4612 = vsub.s32 %v4609, %v4611
        %v4613 = vrot.slane %v4605, %v4612
        %v4615 = vunpack.c.l.s4 1934713408
        %v4616 = vunpack.c.0.s8 %v4615
        %v4617 = vlaneseq
        %v4618 = vshrl.u32 %v4617, 7
        %v4619 = vsub.s32 %v4616, %v4618
        %v4620 = vrot.slane %v4606, %v4619
        %v4621 = vcombine.low %v4565, %v4597
        %v4622 = vcombine.high %v4565, %v4597
        %v4623 = vcombine.low %v4572, %v4604
        %v4624 = vcombine.high %v4572, %v4604
        %v4625 = vcombine.low %v4581, %v4613
        %v4626 = vcombine.high %v4581, %v4613
        %v4627 = vcombine.low %v4588, %v4620
        %v4628 = vcombine.high %v4588, %v4620
        %v4629 = vcombine.low %v2890, %v2938
        %v4630 = vcombine.high %v2890, %v2938
        %v4632 = vunpack.c.l.s4 1983009808
        %v4633 = vunpack.c.0.s8 %v4632
        %v4634 = vlaneseq
        %v4635 = vshrl.u32 %v4634, 7
        %v4636 = vsub.s32 %v4633, %v4635
        %v4637 = vrot.slane %v4629, %v4636
        %v4639 = vunpack.c.l.s4 1983009808
        %v4640 = vunpack.c.0.s8 %v4639
        %v4641 = vlaneseq
        %v4642 = vshrl.u32 %v4641, 7
        %v4643 = vsub.s32 %v4640, %v4642
        %v4644 = vrot.slane %v4630, %v4643
        %v4645 = vcombine.low %v2914, %v2962
        %v4646 = vcombine.high %v2914, %v2962
        %v4648 = vunpack.c.l.s4 1983009808
        %v4649 = vunpack.c.0.s8 %v4648
        %v4650 = vlaneseq
        %v4651 = vshrl.u32 %v4650, 7
        %v4652 = vsub.s32 %v4649, %v4651
        %v4653 = vrot.slane %v4645, %v4652
        %v4655 = vunpack.c.l.s4 1983009808
        %v4656 = vunpack.c.0.s8 %v4655
        %v4657 = vlaneseq
        %v4658 = vshrl.u32 %v4657, 7
        %v4659 = vsub.s32 %v4656, %v4658
        %v4660 = vrot.slane %v4646, %v4659
        %v4661 = vcombine.low %v2986, %v3034
        %v4662 = vcombine.high %v2986, %v3034
        %v4664 = vunpack.c.l.s4 1983009808
        %v4665 = vunpack.c.0.s8 %v4664
        %v4666 = vlaneseq
        %v4667 = vshrl.u32 %v4666, 7
        %v4668 = vsub.s32 %v4665, %v4667
        %v4669 = vrot.slane %v4661, %v4668
        %v4671 = vunpack.c.l.s4 1983009808
        %v4672 = vunpack.c.0.s8 %v4671
        %v4673 = vlaneseq
        %v4674 = vshrl.u32 %v4673, 7
        %v4675 = vsub.s32 %v4672, %v4674
        %v4676 = vrot.slane %v4662, %v4675
        %v4677 = vcombine.low %v3010, %v3058
        %v4678 = vcombine.high %v3010, %v3058
        %v4680 = vunpack.c.l.s4 1983009808
        %v4681 = vunpack.c.0.s8 %v4680
        %v4682 = vlaneseq
        %v4683 = vshrl.u32 %v4682, 7
        %v4684 = vsub.s32 %v4681, %v4683
        %v4685 = vrot.slane %v4677, %v4684
        %v4687 = vunpack.c.l.s4 1983009808
        %v4688 = vunpack.c.0.s8 %v4687
        %v4689 = vlaneseq
        %v4690 = vshrl.u32 %v4689, 7
        %v4691 = vsub.s32 %v4688, %v4690
        %v4692 = vrot.slane %v4678, %v4691
        %v4693 = vcombine.low %v4637, %v4653
        %v4694 = vcombine.high %v4637, %v4653
        %v4696 = vunpack.c.l.s4 1934713408
        %v4697 = vunpack.c.0.s8 %v4696
        %v4698 = vlaneseq
        %v4699 = vshrl.u32 %v4698, 7
        %v4700 = vsub.s32 %v4697, %v4699
        %v4701 = vrot.slane %v4693, %v4700
        %v4703 = vunpack.c.l.s4 1934713408
        %v4704 = vunpack.c.0.s8 %v4703
        %v4705 = vlaneseq
        %v4706 = vshrl.u32 %v4705, 7
        %v4707 = vsub.s32 %v4704, %v4706
        %v4708 = vrot.slane %v4694, %v4707
        %v4709 = vcombine.low %v4644, %v4660
        %v4710 = vcombine.high %v4644, %v4660
        %v4712 = vunpack.c.l.s4 1934713408
        %v4713 = vunpack.c.0.s8 %v4712
        %v4714 = vlaneseq
        %v4715 = vshrl.u32 %v4714, 7
        %v4716 = vsub.s32 %v4713, %v4715
        %v4717 = vrot.slane %v4709, %v4716
        %v4719 = vunpack.c.l.s4 1934713408
        %v4720 = vunpack.c.0.s8 %v4719
        %v4721 = vlaneseq
        %v4722 = vshrl.u32 %v4721, 7
        %v4723 = vsub.s32 %v4720, %v4722
        %v4724 = vrot.slane %v4710, %v4723
        %v4725 = vcombine.low %v4669, %v4685
        %v4726 = vcombine.high %v4669, %v4685
        %v4728 = vunpack.c.l.s4 1934713408
        %v4729 = vunpack.c.0.s8 %v4728
        %v4730 = vlaneseq
        %v4731 = vshrl.u32 %v4730, 7
        %v4732 = vsub.s32 %v4729, %v4731
        %v4733 = vrot.slane %v4725, %v4732
        %v4735 = vunpack.c.l.s4 1934713408
        %v4736 = vunpack.c.0.s8 %v4735
        %v4737 = vlaneseq
        %v4738 = vshrl.u32 %v4737, 7
        %v4739 = vsub.s32 %v4736, %v4738
        %v4740 = vrot.slane %v4726, %v4739
        %v4741 = vcombine.low %v4676, %v4692
        %v4742 = vcombine.high %v4676, %v4692
        %v4744 = vunpack.c.l.s4 1934713408
        %v4745 = vunpack.c.0.s8 %v4744
        %v4746 = vlaneseq
        %v4747 = vshrl.u32 %v4746, 7
        %v4748 = vsub.s32 %v4745, %v4747
        %v4749 = vrot.slane %v4741, %v4748
        %v4751 = vunpack.c.l.s4 1934713408
        %v4752 = vunpack.c.0.s8 %v4751
        %v4753 = vlaneseq
        %v4754 = vshrl.u32 %v4753, 7
        %v4755 = vsub.s32 %v4752, %v4754
        %v4756 = vrot.slane %v4742, %v4755
        %v4757 = vcombine.low %v4701, %v4733
        %v4758 = vcombine.high %v4701, %v4733
        %v4759 = vcombine.low %v4708, %v4740
        %v4760 = vcombine.high %v4708, %v4740
        %v4761 = vcombine.low %v4717, %v4749
        %v4762 = vcombine.high %v4717, %v4749
        %v4763 = vcombine.low %v4724, %v4756
        %v4764 = vcombine.high %v4724, %v4756
        %v4765 = vcombine.low %v3082, %v3130
        %v4766 = vcombine.high %v3082, %v3130
        %v4768 = vunpack.c.l.s4 1983009808
        %v4769 = vunpack.c.0.s8 %v4768
        %v4770 = vlaneseq
        %v4771 = vshrl.u32 %v4770, 7
        %v4772 = vsub.s32 %v4769, %v4771
        %v4773 = vrot.slane %v4765, %v4772
        %v4775 = vunpack.c.l.s4 1983009808
        %v4776 = vunpack.c.0.s8 %v4775
        %v4777 = vlaneseq
        %v4778 = vshrl.u32 %v4777, 7
        %v4779 = vsub.s32 %v4776, %v4778
        %v4780 = vrot.slane %v4766, %v4779
        %v4781 = vcombine.low %v3106, %v3154
        %v4782 = vcombine.high %v3106, %v3154
        %v4784 = vunpack.c.l.s4 1983009808
        %v4785 = vunpack.c.0.s8 %v4784
        %v4786 = vlaneseq
        %v4787 = vshrl.u32 %v4786, 7
        %v4788 = vsub.s32 %v4785, %v4787
        %v4789 = vrot.slane %v4781, %v4788
        %v4791 = vunpack.c.l.s4 1983009808
        %v4792 = vunpack.c.0.s8 %v4791
        %v4793 = vlaneseq
        %v4794 = vshrl.u32 %v4793, 7
        %v4795 = vsub.s32 %v4792, %v4794
        %v4796 = vrot.slane %v4782, %v4795
        %v4797 = vcombine.low %v3178, %v3226
        %v4798 = vcombine.high %v3178, %v3226
        %v4800 = vunpack.c.l.s4 1983009808
        %v4801 = vunpack.c.0.s8 %v4800
        %v4802 = vlaneseq
        %v4803 = vshrl.u32 %v4802, 7
        %v4804 = vsub.s32 %v4801, %v4803
        %v4805 = vrot.slane %v4797, %v4804
        %v4807 = vunpack.c.l.s4 1983009808
        %v4808 = vunpack.c.0.s8 %v4807
        %v4809 = vlaneseq
        %v4810 = vshrl.u32 %v4809, 7
        %v4811 = vsub.s32 %v4808, %v4810
        %v4812 = vrot.slane %v4798, %v4811
        %v4813 = vcombine.low %v3202, %v3250
        %v4814 = vcombine.high %v3202, %v3250
        %v4816 = vunpack.c.l.s4 1983009808
        %v4817 = vunpack.c.0.s8 %v4816
        %v4818 = vlaneseq
        %v4819 = vshrl.u32 %v4818, 7
        %v4820 = vsub.s32 %v4817, %v4819
        %v4821 = vrot.slane %v4813, %v4820
        %v4823 = vunpack.c.l.s4 1983009808
        %v4824 = vunpack.c.0.s8 %v4823
        %v4825 = vlaneseq
        %v4826 = vshrl.u32 %v4825, 7
        %v4827 = vsub.s32 %v4824, %v4826
        %v4828 = vrot.slane %v4814, %v4827
        %v4829 = vcombine.low %v4773, %v4789
        %v4830 = vcombine.high %v4773, %v4789
        %v4832 = vunpack.c.l.s4 1934713408
        %v4833 = vunpack.c.0.s8 %v4832
        %v4834 = vlaneseq
        %v4835 = vshrl.u32 %v4834, 7
        %v4836 = vsub.s32 %v4833, %v4835
        %v4837 = vrot.slane %v4829, %v4836
        %v4839 = vunpack.c.l.s4 1934713408
        %v4840 = vunpack.c.0.s8 %v4839
        %v4841 = vlaneseq
        %v4842 = vshrl.u32 %v4841, 7
        %v4843 = vsub.s32 %v4840, %v4842
        %v4844 = vrot.slane %v4830, %v4843
        %v4845 = vcombine.low %v4780, %v4796
        %v4846 = vcombine.high %v4780, %v4796
        %v4848 = vunpack.c.l.s4 1934713408
        %v4849 = vunpack.c.0.s8 %v4848
        %v4850 = vlaneseq
        %v4851 = vshrl.u32 %v4850, 7
        %v4852 = vsub.s32 %v4849, %v4851
        %v4853 = vrot.slane %v4845, %v4852
        %v4855 = vunpack.c.l.s4 1934713408
        %v4856 = vunpack.c.0.s8 %v4855
        %v4857 = vlaneseq
        %v4858 = vshrl.u32 %v4857, 7
        %v4859 = vsub.s32 %v4856, %v4858
        %v4860 = vrot.slane %v4846, %v4859
        %v4861 = vcombine.low %v4805, %v4821
        %v4862 = vcombine.high %v4805, %v4821
        %v4864 = vunpack.c.l.s4 1934713408
        %v4865 = vunpack.c.0.s8 %v4864
        %v4866 = vlaneseq
        %v4867 = vshrl.u32 %v4866, 7
        %v4868 = vsub.s32 %v4865, %v4867
        %v4869 = vrot.slane %v4861, %v4868
        %v4871 = vunpack.c.l.s4 1934713408
        %v4872 = vunpack.c.0.s8 %v4871
        %v4873 = vlaneseq
        %v4874 = vshrl.u32 %v4873, 7
        %v4875 = vsub.s32 %v4872, %v4874
        %v4876 = vrot.slane %v4862, %v4875
        %v4877 = vcombine.low %v4812, %v4828
        %v4878 = vcombine.high %v4812, %v4828
        %v4880 = vunpack.c.l.s4 1934713408
        %v4881 = vunpack.c.0.s8 %v4880
        %v4882 = vlaneseq
        %v4883 = vshrl.u32 %v4882, 7
        %v4884 = vsub.s32 %v4881, %v4883
        %v4885 = vrot.slane %v4877, %v4884
        %v4887 = vunpack.c.l.s4 1934713408
        %v4888 = vunpack.c.0.s8 %v4887
        %v4889 = vlaneseq
        %v4890 = vshrl.u32 %v4889, 7
        %v4891 = vsub.s32 %v4888, %v4890
        %v4892 = vrot.slane %v4878, %v4891
        %v4893 = vcombine.low %v4837, %v4869
        %v4894 = vcombine.high %v4837, %v4869
        %v4895 = vcombine.low %v4844, %v4876
        %v4896 = vcombine.high %v4844, %v4876
        %v4897 = vcombine.low %v4853, %v4885
        %v4898 = vcombine.high %v4853, %v4885
        %v4899 = vcombine.low %v4860, %v4892
        %v4900 = vcombine.high %v4860, %v4892
        %v4901 = vcombine.low %v2512, %v2556
        %v4902 = vcombine.high %v2512, %v2556
        %v4904 = vunpack.c.l.s4 1983009808
        %v4905 = vunpack.c.0.s8 %v4904
        %v4906 = vlaneseq
        %v4907 = vshrl.u32 %v4906, 7
        %v4908 = vsub.s32 %v4905, %v4907
        %v4909 = vrot.slane %v4901, %v4908
        %v4911 = vunpack.c.l.s4 1983009808
        %v4912 = vunpack.c.0.s8 %v4911
        %v4913 = vlaneseq
        %v4914 = vshrl.u32 %v4913, 7
        %v4915 = vsub.s32 %v4912, %v4914
        %v4916 = vrot.slane %v4902, %v4915
        %v4917 = vcombine.low %v2532, %v2580
        %v4918 = vcombine.high %v2532, %v2580
        %v4920 = vunpack.c.l.s4 1983009808
        %v4921 = vunpack.c.0.s8 %v4920
        %v4922 = vlaneseq
        %v4923 = vshrl.u32 %v4922, 7
        %v4924 = vsub.s32 %v4921, %v4923
        %v4925 = vrot.slane %v4917, %v4924
        %v4927 = vunpack.c.l.s4 1983009808
        %v4928 = vunpack.c.0.s8 %v4927
        %v4929 = vlaneseq
        %v4930 = vshrl.u32 %v4929, 7
        %v4931 = vsub.s32 %v4928, %v4930
        %v4932 = vrot.slane %v4918, %v4931
        %v4933 = vcombine.low %v2604, %v2652
        %v4934 = vcombine.high %v2604, %v2652
        %v4936 = vunpack.c.l.s4 1983009808
        %v4937 = vunpack.c.0.s8 %v4936
        %v4938 = vlaneseq
        %v4939 = vshrl.u32 %v4938, 7
        %v4940 = vsub.s32 %v4937, %v4939
        %v4941 = vrot.slane %v4933, %v4940
        %v4943 = vunpack.c.l.s4 1983009808
        %v4944 = vunpack.c.0.s8 %v4943
        %v4945 = vlaneseq
        %v4946 = vshrl.u32 %v4945, 7
        %v4947 = vsub.s32 %v4944, %v4946
        %v4948 = vrot.slane %v4934, %v4947
        %v4949 = vcombine.low %v2628, %v2676
        %v4950 = vcombine.high %v2628, %v2676
        %v4952 = vunpack.c.l.s4 1983009808
        %v4953 = vunpack.c.0.s8 %v4952
        %v4954 = vlaneseq
        %v4955 = vshrl.u32 %v4954, 7
        %v4956 = vsub.s32 %v4953, %v4955
        %v4957 = vrot.slane %v4949, %v4956
        %v4959 = vunpack.c.l.s4 1983009808
        %v4960 = vunpack.c.0.s8 %v4959
        %v4961 = vlaneseq
        %v4962 = vshrl.u32 %v4961, 7
        %v4963 = vsub.s32 %v4960, %v4962
        %v4964 = vrot.slane %v4950, %v4963
        %v4965 = vcombine.low %v4909, %v4925
        %v4966 = vcombine.high %v4909, %v4925
        %v4968 = vunpack.c.l.s4 1934713408
        %v4969 = vunpack.c.0.s8 %v4968
        %v4970 = vlaneseq
        %v4971 = vshrl.u32 %v4970, 7
        %v4972 = vsub.s32 %v4969, %v4971
        %v4973 = vrot.slane %v4965, %v4972
        %v4975 = vunpack.c.l.s4 1934713408
        %v4976 = vunpack.c.0.s8 %v4975
        %v4977 = vlaneseq
        %v4978 = vshrl.u32 %v4977, 7
        %v4979 = vsub.s32 %v4976, %v4978
        %v4980 = vrot.slane %v4966, %v4979
        %v4981 = vcombine.low %v4916, %v4932
        %v4982 = vcombine.high %v4916, %v4932
        %v4984 = vunpack.c.l.s4 1934713408
        %v4985 = vunpack.c.0.s8 %v4984
        %v4986 = vlaneseq
        %v4987 = vshrl.u32 %v4986, 7
        %v4988 = vsub.s32 %v4985, %v4987
        %v4989 = vrot.slane %v4981, %v4988
        %v4991 = vunpack.c.l.s4 1934713408
        %v4992 = vunpack.c.0.s8 %v4991
        %v4993 = vlaneseq
        %v4994 = vshrl.u32 %v4993, 7
        %v4995 = vsub.s32 %v4992, %v4994
        %v4996 = vrot.slane %v4982, %v4995
        %v4997 = vcombine.low %v4941, %v4957
        %v4998 = vcombine.high %v4941, %v4957
        %v5000 = vunpack.c.l.s4 1934713408
        %v5001 = vunpack.c.0.s8 %v5000
        %v5002 = vlaneseq
        %v5003 = vshrl.u32 %v5002, 7
        %v5004 = vsub.s32 %v5001, %v5003
        %v5005 = vrot.slane %v4997, %v5004
        %v5007 = vunpack.c.l.s4 1934713408
        %v5008 = vunpack.c.0.s8 %v5007
        %v5009 = vlaneseq
        %v5010 = vshrl.u32 %v5009, 7
        %v5011 = vsub.s32 %v5008, %v5010
        %v5012 = vrot.slane %v4998, %v5011
        %v5013 = vcombine.low %v4948, %v4964
        %v5014 = vcombine.high %v4948, %v4964
        %v5016 = vunpack.c.l.s4 1934713408
        %v5017 = vunpack.c.0.s8 %v5016
        %v5018 = vlaneseq
        %v5019 = vshrl.u32 %v5018, 7
        %v5020 = vsub.s32 %v5017, %v5019
        %v5021 = vrot.slane %v5013, %v5020
        %v5023 = vunpack.c.l.s4 1934713408
        %v5024 = vunpack.c.0.s8 %v5023
        %v5025 = vlaneseq
        %v5026 = vshrl.u32 %v5025, 7
        %v5027 = vsub.s32 %v5024, %v5026
        %v5028 = vrot.slane %v5014, %v5027
        %v5029 = vcombine.low %v4973, %v5005
        %v5030 = vcombine.high %v4973, %v5005
        %v5031 = vcombine.low %v4980, %v5012
        %v5032 = vcombine.high %v4980, %v5012
        %v5033 = vcombine.low %v4989, %v5021
        %v5034 = vcombine.high %v4989, %v5021
        %v5035 = vcombine.low %v4996, %v5028
        %v5036 = vcombine.high %v4996, %v5028
        %v5037 = vcombine.low %v2700, %v2748
        %v5038 = vcombine.high %v2700, %v2748
        %v5040 = vunpack.c.l.s4 1983009808
        %v5041 = vunpack.c.0.s8 %v5040
        %v5042 = vlaneseq
        %v5043 = vshrl.u32 %v5042, 7
        %v5044 = vsub.s32 %v5041, %v5043
        %v5045 = vrot.slane %v5037, %v5044
        %v5047 = vunpack.c.l.s4 1983009808
        %v5048 = vunpack.c.0.s8 %v5047
        %v5049 = vlaneseq
        %v5050 = vshrl.u32 %v5049, 7
        %v5051 = vsub.s32 %v5048, %v5050
        %v5052 = vrot.slane %v5038, %v5051
        %v5053 = vcombine.low %v2724, %v2772
        %v5054 = vcombine.high %v2724, %v2772
        %v5056 = vunpack.c.l.s4 1983009808
        %v5057 = vunpack.c.0.s8 %v5056
        %v5058 = vlaneseq
        %v5059 = vshrl.u32 %v5058, 7
        %v5060 = vsub.s32 %v5057, %v5059
        %v5061 = vrot.slane %v5053, %v5060
        %v5063 = vunpack.c.l.s4 1983009808
        %v5064 = vunpack.c.0.s8 %v5063
        %v5065 = vlaneseq
        %v5066 = vshrl.u32 %v5065, 7
        %v5067 = vsub.s32 %v5064, %v5066
        %v5068 = vrot.slane %v5054, %v5067
        %v5069 = vcombine.low %v2796, %v2844
        %v5070 = vcombine.high %v2796, %v2844
        %v5072 = vunpack.c.l.s4 1983009808
        %v5073 = vunpack.c.0.s8 %v5072
        %v5074 = vlaneseq
        %v5075 = vshrl.u32 %v5074, 7
        %v5076 = vsub.s32 %v5073, %v5075
        %v5077 = vrot.slane %v5069, %v5076
        %v5079 = vunpack.c.l.s4 1983009808
        %v5080 = vunpack.c.0.s8 %v5079
        %v5081 = vlaneseq
        %v5082 = vshrl.u32 %v5081, 7
        %v5083 = vsub.s32 %v5080, %v5082
        %v5084 = vrot.slane %v5070, %v5083
        %v5085 = vcombine.low %v2820, %v2868
        %v5086 = vcombine.high %v2820, %v2868
        %v5088 = vunpack.c.l.s4 1983009808
        %v5089 = vunpack.c.0.s8 %v5088
        %v5090 = vlaneseq
        %v5091 = vshrl.u32 %v5090, 7
        %v5092 = vsub.s32 %v5089, %v5091
        %v5093 = vrot.slane %v5085, %v5092
        %v5095 = vunpack.c.l.s4 1983009808
        %v5096 = vunpack.c.0.s8 %v5095
        %v5097 = vlaneseq
        %v5098 = vshrl.u32 %v5097, 7
        %v5099 = vsub.s32 %v5096, %v5098
        %v5100 = vrot.slane %v5086, %v5099
        %v5101 = vcombine.low %v5045, %v5061
        %v5102 = vcombine.high %v5045, %v5061
        %v5104 = vunpack.c.l.s4 1934713408
        %v5105 = vunpack.c.0.s8 %v5104
        %v5106 = vlaneseq
        %v5107 = vshrl.u32 %v5106, 7
        %v5108 = vsub.s32 %v5105, %v5107
        %v5109 = vrot.slane %v5101, %v5108
        %v5111 = vunpack.c.l.s4 1934713408
        %v5112 = vunpack.c.0.s8 %v5111
        %v5113 = vlaneseq
        %v5114 = vshrl.u32 %v5113, 7
        %v5115 = vsub.s32 %v5112, %v5114
        %v5116 = vrot.slane %v5102, %v5115
        %v5117 = vcombine.low %v5052, %v5068
        %v5118 = vcombine.high %v5052, %v5068
        %v5120 = vunpack.c.l.s4 1934713408
        %v5121 = vunpack.c.0.s8 %v5120
        %v5122 = vlaneseq
        %v5123 = vshrl.u32 %v5122, 7
        %v5124 = vsub.s32 %v5121, %v5123
        %v5125 = vrot.slane %v5117, %v5124
        %v5127 = vunpack.c.l.s4 1934713408
        %v5128 = vunpack.c.0.s8 %v5127
        %v5129 = vlaneseq
        %v5130 = vshrl.u32 %v5129, 7
        %v5131 = vsub.s32 %v5128, %v5130
        %v5132 = vrot.slane %v5118, %v5131
        %v5133 = vcombine.low %v5077, %v5093
        %v5134 = vcombine.high %v5077, %v5093
        %v5136 = vunpack.c.l.s4 1934713408
        %v5137 = vunpack.c.0.s8 %v5136
        %v5138 = vlaneseq
        %v5139 = vshrl.u32 %v5138, 7
        %v5140 = vsub.s32 %v5137, %v5139
        %v5141 = vrot.slane %v5133, %v5140
        %v5143 = vunpack.c.l.s4 1934713408
        %v5144 = vunpack.c.0.s8 %v5143
        %v5145 = vlaneseq
        %v5146 = vshrl.u32 %v5145, 7
        %v5147 = vsub.s32 %v5144, %v5146
        %v5148 = vrot.slane %v5134, %v5147
        %v5149 = vcombine.low %v5084, %v5100
        %v5150 = vcombine.high %v5084, %v5100
        %v5152 = vunpack.c.l.s4 1934713408
        %v5153 = vunpack.c.0.s8 %v5152
        %v5154 = vlaneseq
        %v5155 = vshrl.u32 %v5154, 7
        %v5156 = vsub.s32 %v5153, %v5155
        %v5157 = vrot.slane %v5149, %v5156
        %v5159 = vunpack.c.l.s4 1934713408
        %v5160 = vunpack.c.0.s8 %v5159
        %v5161 = vlaneseq
        %v5162 = vshrl.u32 %v5161, 7
        %v5163 = vsub.s32 %v5160, %v5162
        %v5164 = vrot.slane %v5150, %v5163
        %v5165 = vcombine.low %v5109, %v5141
        %v5166 = vcombine.high %v5109, %v5141
        %v5167 = vcombine.low %v5116, %v5148
        %v5168 = vcombine.high %v5116, %v5148
        %v5169 = vcombine.low %v5125, %v5157
        %v5170 = vcombine.high %v5125, %v5157
        %v5171 = vcombine.low %v5132, %v5164
        %v5172 = vcombine.high %v5132, %v5164
        %v5173 = vcombine.low %v2892, %v2940
        %v5174 = vcombine.high %v2892, %v2940
        %v5176 = vunpack.c.l.s4 1983009808
        %v5177 = vunpack.c.0.s8 %v5176
        %v5178 = vlaneseq
        %v5179 = vshrl.u32 %v5178, 7
        %v5180 = vsub.s32 %v5177, %v5179
        %v5181 = vrot.slane %v5173, %v5180
        %v5183 = vunpack.c.l.s4 1983009808
        %v5184 = vunpack.c.0.s8 %v5183
        %v5185 = vlaneseq
        %v5186 = vshrl.u32 %v5185, 7
        %v5187 = vsub.s32 %v5184, %v5186
        %v5188 = vrot.slane %v5174, %v5187
        %v5189 = vcombine.low %v2916, %v2964
        %v5190 = vcombine.high %v2916, %v2964
        %v5192 = vunpack.c.l.s4 1983009808
        %v5193 = vunpack.c.0.s8 %v5192
        %v5194 = vlaneseq
        %v5195 = vshrl.u32 %v5194, 7
        %v5196 = vsub.s32 %v5193, %v5195
        %v5197 = vrot.slane %v5189, %v5196
        %v5199 = vunpack.c.l.s4 1983009808
        %v5200 = vunpack.c.0.s8 %v5199
        %v5201 = vlaneseq
        %v5202 = vshrl.u32 %v5201, 7
        %v5203 = vsub.s32 %v5200, %v5202
        %v5204 = vrot.slane %v5190, %v5203
        %v5205 = vcombine.low %v2988, %v3036
        %v5206 = vcombine.high %v2988, %v3036
        %v5208 = vunpack.c.l.s4 1983009808
        %v5209 = vunpack.c.0.s8 %v5208
        %v5210 = vlaneseq
        %v5211 = vshrl.u32 %v5210, 7
        %v5212 = vsub.s32 %v5209, %v5211
        %v5213 = vrot.slane %v5205, %v5212
        %v5215 = vunpack.c.l.s4 1983009808
        %v5216 = vunpack.c.0.s8 %v5215
        %v5217 = vlaneseq
        %v5218 = vshrl.u32 %v5217, 7
        %v5219 = vsub.s32 %v5216, %v5218
        %v5220 = vrot.slane %v5206, %v5219
        %v5221 = vcombine.low %v3012, %v3060
        %v5222 = vcombine.high %v3012, %v3060
        %v5224 = vunpack.c.l.s4 1983009808
        %v5225 = vunpack.c.0.s8 %v5224
        %v5226 = vlaneseq
        %v5227 = vshrl.u32 %v5226, 7
        %v5228 = vsub.s32 %v5225, %v5227
        %v5229 = vrot.slane %v5221, %v5228
        %v5231 = vunpack.c.l.s4 1983009808
        %v5232 = vunpack.c.0.s8 %v5231
        %v5233 = vlaneseq
        %v5234 = vshrl.u32 %v5233, 7
        %v5235 = vsub.s32 %v5232, %v5234
        %v5236 = vrot.slane %v5222, %v5235
        %v5237 = vcombine.low %v5181, %v5197
        %v5238 = vcombine.high %v5181, %v5197
        %v5240 = vunpack.c.l.s4 1934713408
        %v5241 = vunpack.c.0.s8 %v5240
        %v5242 = vlaneseq
        %v5243 = vshrl.u32 %v5242, 7
        %v5244 = vsub.s32 %v5241, %v5243
        %v5245 = vrot.slane %v5237, %v5244
        %v5247 = vunpack.c.l.s4 1934713408
        %v5248 = vunpack.c.0.s8 %v5247
        %v5249 = vlaneseq
        %v5250 = vshrl.u32 %v5249, 7
        %v5251 = vsub.s32 %v5248, %v5250
        %v5252 = vrot.slane %v5238, %v5251
        %v5253 = vcombine.low %v5188, %v5204
        %v5254 = vcombine.high %v5188, %v5204
        %v5256 = vunpack.c.l.s4 1934713408
        %v5257 = vunpack.c.0.s8 %v5256
        %v5258 = vlaneseq
        %v5259 = vshrl.u32 %v5258, 7
        %v5260 = vsub.s32 %v5257, %v5259
        %v5261 = vrot.slane %v5253, %v5260
        %v5263 = vunpack.c.l.s4 1934713408
        %v5264 = vunpack.c.0.s8 %v5263
        %v5265 = vlaneseq
        %v5266 = vshrl.u32 %v5265, 7
        %v5267 = vsub.s32 %v5264, %v5266
        %v5268 = vrot.slane %v5254, %v5267
        %v5269 = vcombine.low %v5213, %v5229
        %v5270 = vcombine.high %v5213, %v5229
        %v5272 = vunpack.c.l.s4 1934713408
        %v5273 = vunpack.c.0.s8 %v5272
        %v5274 = vlaneseq
        %v5275 = vshrl.u32 %v5274, 7
        %v5276 = vsub.s32 %v5273, %v5275
        %v5277 = vrot.slane %v5269, %v5276
        %v5279 = vunpack.c.l.s4 1934713408
        %v5280 = vunpack.c.0.s8 %v5279
        %v5281 = vlaneseq
        %v5282 = vshrl.u32 %v5281, 7
        %v5283 = vsub.s32 %v5280, %v5282
        %v5284 = vrot.slane %v5270, %v5283
        %v5285 = vcombine.low %v5220, %v5236
        %v5286 = vcombine.high %v5220, %v5236
        %v5288 = vunpack.c.l.s4 1934713408
        %v5289 = vunpack.c.0.s8 %v5288
        %v5290 = vlaneseq
        %v5291 = vshrl.u32 %v5290, 7
        %v5292 = vsub.s32 %v5289, %v5291
        %v5293 = vrot.slane %v5285, %v5292
        %v5295 = vunpack.c.l.s4 1934713408
        %v5296 = vunpack.c.0.s8 %v5295
        %v5297 = vlaneseq
        %v5298 = vshrl.u32 %v5297, 7
        %v5299 = vsub.s32 %v5296, %v5298
        %v5300 = vrot.slane %v5286, %v5299
        %v5301 = vcombine.low %v5245, %v5277
        %v5302 = vcombine.high %v5245, %v5277
        %v5303 = vcombine.low %v5252, %v5284
        %v5304 = vcombine.high %v5252, %v5284
        %v5305 = vcombine.low %v5261, %v5293
        %v5306 = vcombine.high %v5261, %v5293
        %v5307 = vcombine.low %v5268, %v5300
        %v5308 = vcombine.high %v5268, %v5300
        %v5309 = vcombine.low %v3084, %v3132
        %v5310 = vcombine.high %v3084, %v3132
        %v5312 = vunpack.c.l.s4 1983009808
        %v5313 = vunpack.c.0.s8 %v5312
        %v5314 = vlaneseq
        %v5315 = vshrl.u32 %v5314, 7
        %v5316 = vsub.s32 %v5313, %v5315
        %v5317 = vrot.slane %v5309, %v5316
        %v5319 = vunpack.c.l.s4 1983009808
        %v5320 = vunpack.c.0.s8 %v5319
        %v5321 = vlaneseq
        %v5322 = vshrl.u32 %v5321, 7
        %v5323 = vsub.s32 %v5320, %v5322
        %v5324 = vrot.slane %v5310, %v5323
        %v5325 = vcombine.low %v3108, %v3156
        %v5326 = vcombine.high %v3108, %v3156
        %v5328 = vunpack.c.l.s4 1983009808
        %v5329 = vunpack.c.0.s8 %v5328
        %v5330 = vlaneseq
        %v5331 = vshrl.u32 %v5330, 7
        %v5332 = vsub.s32 %v5329, %v5331
        %v5333 = vrot.slane %v5325, %v5332
        %v5335 = vunpack.c.l.s4 1983009808
        %v5336 = vunpack.c.0.s8 %v5335
        %v5337 = vlaneseq
        %v5338 = vshrl.u32 %v5337, 7
        %v5339 = vsub.s32 %v5336, %v5338
        %v5340 = vrot.slane %v5326, %v5339
        %v5341 = vcombine.low %v3180, %v3228
        %v5342 = vcombine.high %v3180, %v3228
        %v5344 = vunpack.c.l.s4 1983009808
        %v5345 = vunpack.c.0.s8 %v5344
        %v5346 = vlaneseq
        %v5347 = vshrl.u32 %v5346, 7
        %v5348 = vsub.s32 %v5345, %v5347
        %v5349 = vrot.slane %v5341, %v5348
        %v5351 = vunpack.c.l.s4 1983009808
        %v5352 = vunpack.c.0.s8 %v5351
        %v5353 = vlaneseq
        %v5354 = vshrl.u32 %v5353, 7
        %v5355 = vsub.s32 %v5352, %v5354
        %v5356 = vrot.slane %v5342, %v5355
        %v5357 = vcombine.low %v3204, %v3252
        %v5358 = vcombine.high %v3204, %v3252
        %v5360 = vunpack.c.l.s4 1983009808
        %v5361 = vunpack.c.0.s8 %v5360
        %v5362 = vlaneseq
        %v5363 = vshrl.u32 %v5362, 7
        %v5364 = vsub.s32 %v5361, %v5363
        %v5365 = vrot.slane %v5357, %v5364
        %v5367 = vunpack.c.l.s4 1983009808
        %v5368 = vunpack.c.0.s8 %v5367
        %v5369 = vlaneseq
        %v5370 = vshrl.u32 %v5369, 7
        %v5371 = vsub.s32 %v5368, %v5370
        %v5372 = vrot.slane %v5358, %v5371
        %v5373 = vcombine.low %v5317, %v5333
        %v5374 = vcombine.high %v5317, %v5333
        %v5376 = vunpack.c.l.s4 1934713408
        %v5377 = vunpack.c.0.s8 %v5376
        %v5378 = vlaneseq
        %v5379 = vshrl.u32 %v5378, 7
        %v5380 = vsub.s32 %v5377, %v5379
        %v5381 = vrot.slane %v5373, %v5380
        %v5383 = vunpack.c.l.s4 1934713408
        %v5384 = vunpack.c.0.s8 %v5383
        %v5385 = vlaneseq
        %v5386 = vshrl.u32 %v5385, 7
        %v5387 = vsub.s32 %v5384, %v5386
        %v5388 = vrot.slane %v5374, %v5387
        %v5389 = vcombine.low %v5324, %v5340
        %v5390 = vcombine.high %v5324, %v5340
        %v5392 = vunpack.c.l.s4 1934713408
        %v5393 = vunpack.c.0.s8 %v5392
        %v5394 = vlaneseq
        %v5395 = vshrl.u32 %v5394, 7
        %v5396 = vsub.s32 %v5393, %v5395
        %v5397 = vrot.slane %v5389, %v5396
        %v5399 = vunpack.c.l.s4 1934713408
        %v5400 = vunpack.c.0.s8 %v5399
        %v5401 = vlaneseq
        %v5402 = vshrl.u32 %v5401, 7
        %v5403 = vsub.s32 %v5400, %v5402
        %v5404 = vrot.slane %v5390, %v5403
        %v5405 = vcombine.low %v5349, %v5365
        %v5406 = vcombine.high %v5349, %v5365
        %v5408 = vunpack.c.l.s4 1934713408
        %v5409 = vunpack.c.0.s8 %v5408
        %v5410 = vlaneseq
        %v5411 = vshrl.u32 %v5410, 7
        %v5412 = vsub.s32 %v5409, %v5411
        %v5413 = vrot.slane %v5405, %v5412
        %v5415 = vunpack.c.l.s4 1934713408
        %v5416 = vunpack.c.0.s8 %v5415
        %v5417 = vlaneseq
        %v5418 = vshrl.u32 %v5417, 7
        %v5419 = vsub.s32 %v5416, %v5418
        %v5420 = vrot.slane %v5406, %v5419
        %v5421 = vcombine.low %v5356, %v5372
        %v5422 = vcombine.high %v5356, %v5372
        %v5424 = vunpack.c.l.s4 1934713408
        %v5425 = vunpack.c.0.s8 %v5424
        %v5426 = vlaneseq
        %v5427 = vshrl.u32 %v5426, 7
        %v5428 = vsub.s32 %v5425, %v5427
        %v5429 = vrot.slane %v5421, %v5428
        %v5431 = vunpack.c.l.s4 1934713408
        %v5432 = vunpack.c.0.s8 %v5431
        %v5433 = vlaneseq
        %v5434 = vshrl.u32 %v5433, 7
        %v5435 = vsub.s32 %v5432, %v5434
        %v5436 = vrot.slane %v5422, %v5435
        %v5437 = vcombine.low %v5381, %v5413
        %v5438 = vcombine.high %v5381, %v5413
        %v5439 = vcombine.low %v5388, %v5420
        %v5440 = vcombine.high %v5388, %v5420
        %v5441 = vcombine.low %v5397, %v5429
        %v5442 = vcombine.high %v5397, %v5429
        %v5443 = vcombine.low %v5404, %v5436
        %v5444 = vcombine.high %v5404, %v5436
        %v5445 = vcombine.low %v2513, %v2558
        %v5446 = vcombine.high %v2513, %v2558
        %v5448 = vunpack.c.l.s4 1983009808
        %v5449 = vunpack.c.0.s8 %v5448
        %v5450 = vlaneseq
        %v5451 = vshrl.u32 %v5450, 7
        %v5452 = vsub.s32 %v5449, %v5451
        %v5453 = vrot.slane %v5445, %v5452
        %v5455 = vunpack.c.l.s4 1983009808
        %v5456 = vunpack.c.0.s8 %v5455
        %v5457 = vlaneseq
        %v5458 = vshrl.u32 %v5457, 7
        %v5459 = vsub.s32 %v5456, %v5458
        %v5460 = vrot.slane %v5446, %v5459
        %v5461 = vcombine.low %v2534, %v2582
        %v5462 = vcombine.high %v2534, %v2582
        %v5464 = vunpack.c.l.s4 1983009808
        %v5465 = vunpack.c.0.s8 %v5464
        %v5466 = vlaneseq
        %v5467 = vshrl.u32 %v5466, 7
        %v5468 = vsub.s32 %v5465, %v5467
        %v5469 = vrot.slane %v5461, %v5468
        %v5471 = vunpack.c.l.s4 1983009808
        %v5472 = vunpack.c.0.s8 %v5471
        %v5473 = vlaneseq
        %v5474 = vshrl.u32 %v5473, 7
        %v5475 = vsub.s32 %v5472, %v5474
        %v5476 = vrot.slane %v5462, %v5475
        %v5477 = vcombine.low %v2606, %v2654
        %v5478 = vcombine.high %v2606, %v2654
        %v5480 = vunpack.c.l.s4 1983009808
        %v5481 = vunpack.c.0.s8 %v5480
        %v5482 = vlaneseq
        %v5483 = vshrl.u32 %v5482, 7
        %v5484 = vsub.s32 %v5481, %v5483
        %v5485 = vrot.slane %v5477, %v5484
        %v5487 = vunpack.c.l.s4 1983009808
        %v5488 = vunpack.c.0.s8 %v5487
        %v5489 = vlaneseq
        %v5490 = vshrl.u32 %v5489, 7
        %v5491 = vsub.s32 %v5488, %v5490
        %v5492 = vrot.slane %v5478, %v5491
        %v5493 = vcombine.low %v2630, %v2678
        %v5494 = vcombine.high %v2630, %v2678
        %v5496 = vunpack.c.l.s4 1983009808
        %v5497 = vunpack.c.0.s8 %v5496
        %v5498 = vlaneseq
        %v5499 = vshrl.u32 %v5498, 7
        %v5500 = vsub.s32 %v5497, %v5499
        %v5501 = vrot.slane %v5493, %v5500
        %v5503 = vunpack.c.l.s4 1983009808
        %v5504 = vunpack.c.0.s8 %v5503
        %v5505 = vlaneseq
        %v5506 = vshrl.u32 %v5505, 7
        %v5507 = vsub.s32 %v5504, %v5506
        %v5508 = vrot.slane %v5494, %v5507
        %v5509 = vcombine.low %v5453, %v5469
        %v5510 = vcombine.high %v5453, %v5469
        %v5512 = vunpack.c.l.s4 1934713408
        %v5513 = vunpack.c.0.s8 %v5512
        %v5514 = vlaneseq
        %v5515 = vshrl.u32 %v5514, 7
        %v5516 = vsub.s32 %v5513, %v5515
        %v5517 = vrot.slane %v5509, %v5516
        %v5519 = vunpack.c.l.s4 1934713408
        %v5520 = vunpack.c.0.s8 %v5519
        %v5521 = vlaneseq
        %v5522 = vshrl.u32 %v5521, 7
        %v5523 = vsub.s32 %v5520, %v5522
        %v5524 = vrot.slane %v5510, %v5523
        %v5525 = vcombine.low %v5460, %v5476
        %v5526 = vcombine.high %v5460, %v5476
        %v5528 = vunpack.c.l.s4 1934713408
        %v5529 = vunpack.c.0.s8 %v5528
        %v5530 = vlaneseq
        %v5531 = vshrl.u32 %v5530, 7
        %v5532 = vsub.s32 %v5529, %v5531
        %v5533 = vrot.slane %v5525, %v5532
        %v5535 = vunpack.c.l.s4 1934713408
        %v5536 = vunpack.c.0.s8 %v5535
        %v5537 = vlaneseq
        %v5538 = vshrl.u32 %v5537, 7
        %v5539 = vsub.s32 %v5536, %v5538
        %v5540 = vrot.slane %v5526, %v5539
        %v5541 = vcombine.low %v5485, %v5501
        %v5542 = vcombine.high %v5485, %v5501
        %v5544 = vunpack.c.l.s4 1934713408
        %v5545 = vunpack.c.0.s8 %v5544
        %v5546 = vlaneseq
        %v5547 = vshrl.u32 %v5546, 7
        %v5548 = vsub.s32 %v5545, %v5547
        %v5549 = vrot.slane %v5541, %v5548
        %v5551 = vunpack.c.l.s4 1934713408
        %v5552 = vunpack.c.0.s8 %v5551
        %v5553 = vlaneseq
        %v5554 = vshrl.u32 %v5553, 7
        %v5555 = vsub.s32 %v5552, %v5554
        %v5556 = vrot.slane %v5542, %v5555
        %v5557 = vcombine.low %v5492, %v5508
        %v5558 = vcombine.high %v5492, %v5508
        %v5560 = vunpack.c.l.s4 1934713408
        %v5561 = vunpack.c.0.s8 %v5560
        %v5562 = vlaneseq
        %v5563 = vshrl.u32 %v5562, 7
        %v5564 = vsub.s32 %v5561, %v5563
        %v5565 = vrot.slane %v5557, %v5564
        %v5567 = vunpack.c.l.s4 1934713408
        %v5568 = vunpack.c.0.s8 %v5567
        %v5569 = vlaneseq
        %v5570 = vshrl.u32 %v5569, 7
        %v5571 = vsub.s32 %v5568, %v5570
        %v5572 = vrot.slane %v5558, %v5571
        %v5573 = vcombine.low %v5517, %v5549
        %v5574 = vcombine.high %v5517, %v5549
        %v5575 = vcombine.low %v5524, %v5556
        %v5576 = vcombine.high %v5524, %v5556
        %v5577 = vcombine.low %v5533, %v5565
        %v5578 = vcombine.high %v5533, %v5565
        %v5579 = vcombine.low %v5540, %v5572
        %v5580 = vcombine.high %v5540, %v5572
        %v5581 = vcombine.low %v2702, %v2750
        %v5582 = vcombine.high %v2702, %v2750
        %v5584 = vunpack.c.l.s4 1983009808
        %v5585 = vunpack.c.0.s8 %v5584
        %v5586 = vlaneseq
        %v5587 = vshrl.u32 %v5586, 7
        %v5588 = vsub.s32 %v5585, %v5587
        %v5589 = vrot.slane %v5581, %v5588
        %v5591 = vunpack.c.l.s4 1983009808
        %v5592 = vunpack.c.0.s8 %v5591
        %v5593 = vlaneseq
        %v5594 = vshrl.u32 %v5593, 7
        %v5595 = vsub.s32 %v5592, %v5594
        %v5596 = vrot.slane %v5582, %v5595
        %v5597 = vcombine.low %v2726, %v2774
        %v5598 = vcombine.high %v2726, %v2774
        %v5600 = vunpack.c.l.s4 1983009808
        %v5601 = vunpack.c.0.s8 %v5600
        %v5602 = vlaneseq
        %v5603 = vshrl.u32 %v5602, 7
        %v5604 = vsub.s32 %v5601, %v5603
        %v5605 = vrot.slane %v5597, %v5604
        %v5607 = vunpack.c.l.s4 1983009808
        %v5608 = vunpack.c.0.s8 %v5607
        %v5609 = vlaneseq
        %v5610 = vshrl.u32 %v5609, 7
        %v5611 = vsub.s32 %v5608, %v5610
        %v5612 = vrot.slane %v5598, %v5611
        %v5613 = vcombine.low %v2798, %v2846
        %v5614 = vcombine.high %v2798, %v2846
        %v5616 = vunpack.c.l.s4 1983009808
        %v5617 = vunpack.c.0.s8 %v5616
        %v5618 = vlaneseq
        %v5619 = vshrl.u32 %v5618, 7
        %v5620 = vsub.s32 %v5617, %v5619
        %v5621 = vrot.slane %v5613, %v5620
        %v5623 = vunpack.c.l.s4 1983009808
        %v5624 = vunpack.c.0.s8 %v5623
        %v5625 = vlaneseq
        %v5626 = vshrl.u32 %v5625, 7
        %v5627 = vsub.s32 %v5624, %v5626
        %v5628 = vrot.slane %v5614, %v5627
        %v5629 = vcombine.low %v2822, %v2870
        %v5630 = vcombine.high %v2822, %v2870
        %v5632 = vunpack.c.l.s4 1983009808
        %v5633 = vunpack.c.0.s8 %v5632
        %v5634 = vlaneseq
        %v5635 = vshrl.u32 %v5634, 7
        %v5636 = vsub.s32 %v5633, %v5635
        %v5637 = vrot.slane %v5629, %v5636
        %v5639 = vunpack.c.l.s4 1983009808
        %v5640 = vunpack.c.0.s8 %v5639
        %v5641 = vlaneseq
        %v5642 = vshrl.u32 %v5641, 7
        %v5643 = vsub.s32 %v5640, %v5642
        %v5644 = vrot.slane %v5630, %v5643
        %v5645 = vcombine.low %v5589, %v5605
        %v5646 = vcombine.high %v5589, %v5605
        %v5648 = vunpack.c.l.s4 1934713408
        %v5649 = vunpack.c.0.s8 %v5648
        %v5650 = vlaneseq
        %v5651 = vshrl.u32 %v5650, 7
        %v5652 = vsub.s32 %v5649, %v5651
        %v5653 = vrot.slane %v5645, %v5652
        %v5655 = vunpack.c.l.s4 1934713408
        %v5656 = vunpack.c.0.s8 %v5655
        %v5657 = vlaneseq
        %v5658 = vshrl.u32 %v5657, 7
        %v5659 = vsub.s32 %v5656, %v5658
        %v5660 = vrot.slane %v5646, %v5659
        %v5661 = vcombine.low %v5596, %v5612
        %v5662 = vcombine.high %v5596, %v5612
        %v5664 = vunpack.c.l.s4 1934713408
        %v5665 = vunpack.c.0.s8 %v5664
        %v5666 = vlaneseq
        %v5667 = vshrl.u32 %v5666, 7
        %v5668 = vsub.s32 %v5665, %v5667
        %v5669 = vrot.slane %v5661, %v5668
        %v5671 = vunpack.c.l.s4 1934713408
        %v5672 = vunpack.c.0.s8 %v5671
        %v5673 = vlaneseq
        %v5674 = vshrl.u32 %v5673, 7
        %v5675 = vsub.s32 %v5672, %v5674
        %v5676 = vrot.slane %v5662, %v5675
        %v5677 = vcombine.low %v5621, %v5637
        %v5678 = vcombine.high %v5621, %v5637
        %v5680 = vunpack.c.l.s4 1934713408
        %v5681 = vunpack.c.0.s8 %v5680
        %v5682 = vlaneseq
        %v5683 = vshrl.u32 %v5682, 7
        %v5684 = vsub.s32 %v5681, %v5683
        %v5685 = vrot.slane %v5677, %v5684
        %v5687 = vunpack.c.l.s4 1934713408
        %v5688 = vunpack.c.0.s8 %v5687
        %v5689 = vlaneseq
        %v5690 = vshrl.u32 %v5689, 7
        %v5691 = vsub.s32 %v5688, %v5690
        %v5692 = vrot.slane %v5678, %v5691
        %v5693 = vcombine.low %v5628, %v5644
        %v5694 = vcombine.high %v5628, %v5644
        %v5696 = vunpack.c.l.s4 1934713408
        %v5697 = vunpack.c.0.s8 %v5696
        %v5698 = vlaneseq
        %v5699 = vshrl.u32 %v5698, 7
        %v5700 = vsub.s32 %v5697, %v5699
        %v5701 = vrot.slane %v5693, %v5700
        %v5703 = vunpack.c.l.s4 1934713408
        %v5704 = vunpack.c.0.s8 %v5703
        %v5705 = vlaneseq
        %v5706 = vshrl.u32 %v5705, 7
        %v5707 = vsub.s32 %v5704, %v5706
        %v5708 = vrot.slane %v5694, %v5707
        %v5709 = vcombine.low %v5653, %v5685
        %v5710 = vcombine.high %v5653, %v5685
        %v5711 = vcombine.low %v5660, %v5692
        %v5712 = vcombine.high %v5660, %v5692
        %v5713 = vcombine.low %v5669, %v5701
        %v5714 = vcombine.high %v5669, %v5701
        %v5715 = vcombine.low %v5676, %v5708
        %v5716 = vcombine.high %v5676, %v5708
        %v5717 = vcombine.low %v2894, %v2942
        %v5718 = vcombine.high %v2894, %v2942
        %v5720 = vunpack.c.l.s4 1983009808
        %v5721 = vunpack.c.0.s8 %v5720
        %v5722 = vlaneseq
        %v5723 = vshrl.u32 %v5722, 7
        %v5724 = vsub.s32 %v5721, %v5723
        %v5725 = vrot.slane %v5717, %v5724
        %v5727 = vunpack.c.l.s4 1983009808
        %v5728 = vunpack.c.0.s8 %v5727
        %v5729 = vlaneseq
        %v5730 = vshrl.u32 %v5729, 7
        %v5731 = vsub.s32 %v5728, %v5730
        %v5732 = vrot.slane %v5718, %v5731
        %v5733 = vcombine.low %v2918, %v2966
        %v5734 = vcombine.high %v2918, %v2966
        %v5736 = vunpack.c.l.s4 1983009808
        %v5737 = vunpack.c.0.s8 %v5736
        %v5738 = vlaneseq
        %v5739 = vshrl.u32 %v5738, 7
        %v5740 = vsub.s32 %v5737, %v5739
        %v5741 = vrot.slane %v5733, %v5740
        %v5743 = vunpack.c.l.s4 1983009808
        %v5744 = vunpack.c.0.s8 %v5743
        %v5745 = vlaneseq
        %v5746 = vshrl.u32 %v5745, 7
        %v5747 = vsub.s32 %v5744, %v5746
        %v5748 = vrot.slane %v5734, %v5747
        %v5749 = vcombine.low %v2990, %v3038
        %v5750 = vcombine.high %v2990, %v3038
        %v5752 = vunpack.c.l.s4 1983009808
        %v5753 = vunpack.c.0.s8 %v5752
        %v5754 = vlaneseq
        %v5755 = vshrl.u32 %v5754, 7
        %v5756 = vsub.s32 %v5753, %v5755
        %v5757 = vrot.slane %v5749, %v5756
        %v5759 = vunpack.c.l.s4 1983009808
        %v5760 = vunpack.c.0.s8 %v5759
        %v5761 = vlaneseq
        %v5762 = vshrl.u32 %v5761, 7
        %v5763 = vsub.s32 %v5760, %v5762
        %v5764 = vrot.slane %v5750, %v5763
        %v5765 = vcombine.low %v3014, %v3062
        %v5766 = vcombine.high %v3014, %v3062
        %v5768 = vunpack.c.l.s4 1983009808
        %v5769 = vunpack.c.0.s8 %v5768
        %v5770 = vlaneseq
        %v5771 = vshrl.u32 %v5770, 7
        %v5772 = vsub.s32 %v5769, %v5771
        %v5773 = vrot.slane %v5765, %v5772
        %v5775 = vunpack.c.l.s4 1983009808
        %v5776 = vunpack.c.0.s8 %v5775
        %v5777 = vlaneseq
        %v5778 = vshrl.u32 %v5777, 7
        %v5779 = vsub.s32 %v5776, %v5778
        %v5780 = vrot.slane %v5766, %v5779
        %v5781 = vcombine.low %v5725, %v5741
        %v5782 = vcombine.high %v5725, %v5741
        %v5784 = vunpack.c.l.s4 1934713408
        %v5785 = vunpack.c.0.s8 %v5784
        %v5786 = vlaneseq
        %v5787 = vshrl.u32 %v5786, 7
        %v5788 = vsub.s32 %v5785, %v5787
        %v5789 = vrot.slane %v5781, %v5788
        %v5791 = vunpack.c.l.s4 1934713408
        %v5792 = vunpack.c.0.s8 %v5791
        %v5793 = vlaneseq
        %v5794 = vshrl.u32 %v5793, 7
        %v5795 = vsub.s32 %v5792, %v5794
        %v5796 = vrot.slane %v5782, %v5795
        %v5797 = vcombine.low %v5732, %v5748
        %v5798 = vcombine.high %v5732, %v5748
        %v5800 = vunpack.c.l.s4 1934713408
        %v5801 = vunpack.c.0.s8 %v5800
        %v5802 = vlaneseq
        %v5803 = vshrl.u32 %v5802, 7
        %v5804 = vsub.s32 %v5801, %v5803
        %v5805 = vrot.slane %v5797, %v5804
        %v5807 = vunpack.c.l.s4 1934713408
        %v5808 = vunpack.c.0.s8 %v5807
        %v5809 = vlaneseq
        %v5810 = vshrl.u32 %v5809, 7
        %v5811 = vsub.s32 %v5808, %v5810
        %v5812 = vrot.slane %v5798, %v5811
        %v5813 = vcombine.low %v5757, %v5773
        %v5814 = vcombine.high %v5757, %v5773
        %v5816 = vunpack.c.l.s4 1934713408
        %v5817 = vunpack.c.0.s8 %v5816
        %v5818 = vlaneseq
        %v5819 = vshrl.u32 %v5818, 7
        %v5820 = vsub.s32 %v5817, %v5819
        %v5821 = vrot.slane %v5813, %v5820
        %v5823 = vunpack.c.l.s4 1934713408
        %v5824 = vunpack.c.0.s8 %v5823
        %v5825 = vlaneseq
        %v5826 = vshrl.u32 %v5825, 7
        %v5827 = vsub.s32 %v5824, %v5826
        %v5828 = vrot.slane %v5814, %v5827
        %v5829 = vcombine.low %v5764, %v5780
        %v5830 = vcombine.high %v5764, %v5780
        %v5832 = vunpack.c.l.s4 1934713408
        %v5833 = vunpack.c.0.s8 %v5832
        %v5834 = vlaneseq
        %v5835 = vshrl.u32 %v5834, 7
        %v5836 = vsub.s32 %v5833, %v5835
        %v5837 = vrot.slane %v5829, %v5836
        %v5839 = vunpack.c.l.s4 1934713408
        %v5840 = vunpack.c.0.s8 %v5839
        %v5841 = vlaneseq
        %v5842 = vshrl.u32 %v5841, 7
        %v5843 = vsub.s32 %v5840, %v5842
        %v5844 = vrot.slane %v5830, %v5843
        %v5845 = vcombine.low %v5789, %v5821
        %v5846 = vcombine.high %v5789, %v5821
        %v5847 = vcombine.low %v5796, %v5828
        %v5848 = vcombine.high %v5796, %v5828
        %v5849 = vcombine.low %v5805, %v5837
        %v5850 = vcombine.high %v5805, %v5837
        %v5851 = vcombine.low %v5812, %v5844
        %v5852 = vcombine.high %v5812, %v5844
        %v5853 = vcombine.low %v3086, %v3134
        %v5854 = vcombine.high %v3086, %v3134
        %v5856 = vunpack.c.l.s4 1983009808
        %v5857 = vunpack.c.0.s8 %v5856
        %v5858 = vlaneseq
        %v5859 = vshrl.u32 %v5858, 7
        %v5860 = vsub.s32 %v5857, %v5859
        %v5861 = vrot.slane %v5853, %v5860
        %v5863 = vunpack.c.l.s4 1983009808
        %v5864 = vunpack.c.0.s8 %v5863
        %v5865 = vlaneseq
        %v5866 = vshrl.u32 %v5865, 7
        %v5867 = vsub.s32 %v5864, %v5866
        %v5868 = vrot.slane %v5854, %v5867
        %v5869 = vcombine.low %v3110, %v3158
        %v5870 = vcombine.high %v3110, %v3158
        %v5872 = vunpack.c.l.s4 1983009808
        %v5873 = vunpack.c.0.s8 %v5872
        %v5874 = vlaneseq
        %v5875 = vshrl.u32 %v5874, 7
        %v5876 = vsub.s32 %v5873, %v5875
        %v5877 = vrot.slane %v5869, %v5876
        %v5879 = vunpack.c.l.s4 1983009808
        %v5880 = vunpack.c.0.s8 %v5879
        %v5881 = vlaneseq
        %v5882 = vshrl.u32 %v5881, 7
        %v5883 = vsub.s32 %v5880, %v5882
        %v5884 = vrot.slane %v5870, %v5883
        %v5885 = vcombine.low %v3182, %v3230
        %v5886 = vcombine.high %v3182, %v3230
        %v5888 = vunpack.c.l.s4 1983009808
        %v5889 = vunpack.c.0.s8 %v5888
        %v5890 = vlaneseq
        %v5891 = vshrl.u32 %v5890, 7
        %v5892 = vsub.s32 %v5889, %v5891
        %v5893 = vrot.slane %v5885, %v5892
        %v5895 = vunpack.c.l.s4 1983009808
        %v5896 = vunpack.c.0.s8 %v5895
        %v5897 = vlaneseq
        %v5898 = vshrl.u32 %v5897, 7
        %v5899 = vsub.s32 %v5896, %v5898
        %v5900 = vrot.slane %v5886, %v5899
        %v5901 = vcombine.low %v3206, %v3254
        %v5902 = vcombine.high %v3206, %v3254
        %v5904 = vunpack.c.l.s4 1983009808
        %v5905 = vunpack.c.0.s8 %v5904
        %v5906 = vlaneseq
        %v5907 = vshrl.u32 %v5906, 7
        %v5908 = vsub.s32 %v5905, %v5907
        %v5909 = vrot.slane %v5901, %v5908
        %v5911 = vunpack.c.l.s4 1983009808
        %v5912 = vunpack.c.0.s8 %v5911
        %v5913 = vlaneseq
        %v5914 = vshrl.u32 %v5913, 7
        %v5915 = vsub.s32 %v5912, %v5914
        %v5916 = vrot.slane %v5902, %v5915
        %v5917 = vcombine.low %v5861, %v5877
        %v5918 = vcombine.high %v5861, %v5877
        %v5920 = vunpack.c.l.s4 1934713408
        %v5921 = vunpack.c.0.s8 %v5920
        %v5922 = vlaneseq
        %v5923 = vshrl.u32 %v5922, 7
        %v5924 = vsub.s32 %v5921, %v5923
        %v5925 = vrot.slane %v5917, %v5924
        %v5927 = vunpack.c.l.s4 1934713408
        %v5928 = vunpack.c.0.s8 %v5927
        %v5929 = vlaneseq
        %v5930 = vshrl.u32 %v5929, 7
        %v5931 = vsub.s32 %v5928, %v5930
        %v5932 = vrot.slane %v5918, %v5931
        %v5933 = vcombine.low %v5868, %v5884
        %v5934 = vcombine.high %v5868, %v5884
        %v5936 = vunpack.c.l.s4 1934713408
        %v5937 = vunpack.c.0.s8 %v5936
        %v5938 = vlaneseq
        %v5939 = vshrl.u32 %v5938, 7
        %v5940 = vsub.s32 %v5937, %v5939
        %v5941 = vrot.slane %v5933, %v5940
        %v5943 = vunpack.c.l.s4 1934713408
        %v5944 = vunpack.c.0.s8 %v5943
        %v5945 = vlaneseq
        %v5946 = vshrl.u32 %v5945, 7
        %v5947 = vsub.s32 %v5944, %v5946
        %v5948 = vrot.slane %v5934, %v5947
        %v5949 = vcombine.low %v5893, %v5909
        %v5950 = vcombine.high %v5893, %v5909
        %v5952 = vunpack.c.l.s4 1934713408
        %v5953 = vunpack.c.0.s8 %v5952
        %v5954 = vlaneseq
        %v5955 = vshrl.u32 %v5954, 7
        %v5956 = vsub.s32 %v5953, %v5955
        %v5957 = vrot.slane %v5949, %v5956
        %v5959 = vunpack.c.l.s4 1934713408
        %v5960 = vunpack.c.0.s8 %v5959
        %v5961 = vlaneseq
        %v5962 = vshrl.u32 %v5961, 7
        %v5963 = vsub.s32 %v5960, %v5962
        %v5964 = vrot.slane %v5950, %v5963
        %v5965 = vcombine.low %v5900, %v5916
        %v5966 = vcombine.high %v5900, %v5916
        %v5968 = vunpack.c.l.s4 1934713408
        %v5969 = vunpack.c.0.s8 %v5968
        %v5970 = vlaneseq
        %v5971 = vshrl.u32 %v5970, 7
        %v5972 = vsub.s32 %v5969, %v5971
        %v5973 = vrot.slane %v5965, %v5972
        %v5975 = vunpack.c.l.s4 1934713408
        %v5976 = vunpack.c.0.s8 %v5975
        %v5977 = vlaneseq
        %v5978 = vshrl.u32 %v5977, 7
        %v5979 = vsub.s32 %v5976, %v5978
        %v5980 = vrot.slane %v5966, %v5979
        %v5981 = vcombine.low %v5925, %v5957
        %v5982 = vcombine.high %v5925, %v5957
        %v5983 = vcombine.low %v5932, %v5964
        %v5984 = vcombine.high %v5932, %v5964
        %v5985 = vcombine.low %v5941, %v5973
        %v5986 = vcombine.high %v5941, %v5973
        %v5987 = vcombine.low %v5948, %v5980
        %v5988 = vcombine.high %v5948, %v5980
        %v5989 = vcombine.low %v2514, %v2560
        %v5990 = vcombine.high %v2514, %v2560
        %v5992 = vunpack.c.l.s4 1983009808
        %v5993 = vunpack.c.0.s8 %v5992
        %v5994 = vlaneseq
        %v5995 = vshrl.u32 %v5994, 7
        %v5996 = vsub.s32 %v5993, %v5995
        %v5997 = vrot.slane %v5989, %v5996
        %v5999 = vunpack.c.l.s4 1983009808
        %v6000 = vunpack.c.0.s8 %v5999
        %v6001 = vlaneseq
        %v6002 = vshrl.u32 %v6001, 7
        %v6003 = vsub.s32 %v6000, %v6002
        %v6004 = vrot.slane %v5990, %v6003
        %v6005 = vcombine.low %v2536, %v2584
        %v6006 = vcombine.high %v2536, %v2584
        %v6008 = vunpack.c.l.s4 1983009808
        %v6009 = vunpack.c.0.s8 %v6008
        %v6010 = vlaneseq
        %v6011 = vshrl.u32 %v6010, 7
        %v6012 = vsub.s32 %v6009, %v6011
        %v6013 = vrot.slane %v6005, %v6012
        %v6015 = vunpack.c.l.s4 1983009808
        %v6016 = vunpack.c.0.s8 %v6015
        %v6017 = vlaneseq
        %v6018 = vshrl.u32 %v6017, 7
        %v6019 = vsub.s32 %v6016, %v6018
        %v6020 = vrot.slane %v6006, %v6019
        %v6021 = vcombine.low %v2608, %v2656
        %v6022 = vcombine.high %v2608, %v2656
        %v6024 = vunpack.c.l.s4 1983009808
        %v6025 = vunpack.c.0.s8 %v6024
        %v6026 = vlaneseq
        %v6027 = vshrl.u32 %v6026, 7
        %v6028 = vsub.s32 %v6025, %v6027
        %v6029 = vrot.slane %v6021, %v6028
        %v6031 = vunpack.c.l.s4 1983009808
        %v6032 = vunpack.c.0.s8 %v6031
        %v6033 = vlaneseq
        %v6034 = vshrl.u32 %v6033, 7
        %v6035 = vsub.s32 %v6032, %v6034
        %v6036 = vrot.slane %v6022, %v6035
        %v6037 = vcombine.low %v2632, %v2680
        %v6038 = vcombine.high %v2632, %v2680
        %v6040 = vunpack.c.l.s4 1983009808
        %v6041 = vunpack.c.0.s8 %v6040
        %v6042 = vlaneseq
        %v6043 = vshrl.u32 %v6042, 7
        %v6044 = vsub.s32 %v6041, %v6043
        %v6045 = vrot.slane %v6037, %v6044
        %v6047 = vunpack.c.l.s4 1983009808
        %v6048 = vunpack.c.0.s8 %v6047
        %v6049 = vlaneseq
        %v6050 = vshrl.u32 %v6049, 7
        %v6051 = vsub.s32 %v6048, %v6050
        %v6052 = vrot.slane %v6038, %v6051
        %v6053 = vcombine.low %v5997, %v6013
        %v6054 = vcombine.high %v5997, %v6013
        %v6056 = vunpack.c.l.s4 1934713408
        %v6057 = vunpack.c.0.s8 %v6056
        %v6058 = vlaneseq
        %v6059 = vshrl.u32 %v6058, 7
        %v6060 = vsub.s32 %v6057, %v6059
        %v6061 = vrot.slane %v6053, %v6060
        %v6063 = vunpack.c.l.s4 1934713408
        %v6064 = vunpack.c.0.s8 %v6063
        %v6065 = vlaneseq
        %v6066 = vshrl.u32 %v6065, 7
        %v6067 = vsub.s32 %v6064, %v6066
        %v6068 = vrot.slane %v6054, %v6067
        %v6069 = vcombine.low %v6004, %v6020
        %v6070 = vcombine.high %v6004, %v6020
        %v6072 = vunpack.c.l.s4 1934713408
        %v6073 = vunpack.c.0.s8 %v6072
        %v6074 = vlaneseq
        %v6075 = vshrl.u32 %v6074, 7
        %v6076 = vsub.s32 %v6073, %v6075
        %v6077 = vrot.slane %v6069, %v6076
        %v6079 = vunpack.c.l.s4 1934713408
        %v6080 = vunpack.c.0.s8 %v6079
        %v6081 = vlaneseq
        %v6082 = vshrl.u32 %v6081, 7
        %v6083 = vsub.s32 %v6080, %v6082
        %v6084 = vrot.slane %v6070, %v6083
        %v6085 = vcombine.low %v6029, %v6045
        %v6086 = vcombine.high %v6029, %v6045
        %v6088 = vunpack.c.l.s4 1934713408
        %v6089 = vunpack.c.0.s8 %v6088
        %v6090 = vlaneseq
        %v6091 = vshrl.u32 %v6090, 7
        %v6092 = vsub.s32 %v6089, %v6091
        %v6093 = vrot.slane %v6085, %v6092
        %v6095 = vunpack.c.l.s4 1934713408
        %v6096 = vunpack.c.0.s8 %v6095
        %v6097 = vlaneseq
        %v6098 = vshrl.u32 %v6097, 7
        %v6099 = vsub.s32 %v6096, %v6098
        %v6100 = vrot.slane %v6086, %v6099
        %v6101 = vcombine.low %v6036, %v6052
        %v6102 = vcombine.high %v6036, %v6052
        %v6104 = vunpack.c.l.s4 1934713408
        %v6105 = vunpack.c.0.s8 %v6104
        %v6106 = vlaneseq
        %v6107 = vshrl.u32 %v6106, 7
        %v6108 = vsub.s32 %v6105, %v6107
        %v6109 = vrot.slane %v6101, %v6108
        %v6111 = vunpack.c.l.s4 1934713408
        %v6112 = vunpack.c.0.s8 %v6111
        %v6113 = vlaneseq
        %v6114 = vshrl.u32 %v6113, 7
        %v6115 = vsub.s32 %v6112, %v6114
        %v6116 = vrot.slane %v6102, %v6115
        %v6117 = vcombine.low %v6061, %v6093
        %v6118 = vcombine.high %v6061, %v6093
        %v6119 = vcombine.low %v6068, %v6100
        %v6120 = vcombine.high %v6068, %v6100
        %v6121 = vcombine.low %v6077, %v6109
        %v6122 = vcombine.high %v6077, %v6109
        %v6123 = vcombine.low %v6084, %v6116
        %v6124 = vcombine.high %v6084, %v6116
        %v6125 = vcombine.low %v2704, %v2752
        %v6126 = vcombine.high %v2704, %v2752
        %v6128 = vunpack.c.l.s4 1983009808
        %v6129 = vunpack.c.0.s8 %v6128
        %v6130 = vlaneseq
        %v6131 = vshrl.u32 %v6130, 7
        %v6132 = vsub.s32 %v6129, %v6131
        %v6133 = vrot.slane %v6125, %v6132
        %v6135 = vunpack.c.l.s4 1983009808
        %v6136 = vunpack.c.0.s8 %v6135
        %v6137 = vlaneseq
        %v6138 = vshrl.u32 %v6137, 7
        %v6139 = vsub.s32 %v6136, %v6138
        %v6140 = vrot.slane %v6126, %v6139
        %v6141 = vcombine.low %v2728, %v2776
        %v6142 = vcombine.high %v2728, %v2776
        %v6144 = vunpack.c.l.s4 1983009808
        %v6145 = vunpack.c.0.s8 %v6144
        %v6146 = vlaneseq
        %v6147 = vshrl.u32 %v6146, 7
        %v6148 = vsub.s32 %v6145, %v6147
        %v6149 = vrot.slane %v6141, %v6148
        %v6151 = vunpack.c.l.s4 1983009808
        %v6152 = vunpack.c.0.s8 %v6151
        %v6153 = vlaneseq
        %v6154 = vshrl.u32 %v6153, 7
        %v6155 = vsub.s32 %v6152, %v6154
        %v6156 = vrot.slane %v6142, %v6155
        %v6157 = vcombine.low %v2800, %v2848
        %v6158 = vcombine.high %v2800, %v2848
        %v6160 = vunpack.c.l.s4 1983009808
        %v6161 = vunpack.c.0.s8 %v6160
        %v6162 = vlaneseq
        %v6163 = vshrl.u32 %v6162, 7
        %v6164 = vsub.s32 %v6161, %v6163
        %v6165 = vrot.slane %v6157, %v6164
        %v6167 = vunpack.c.l.s4 1983009808
        %v6168 = vunpack.c.0.s8 %v6167
        %v6169 = vlaneseq
        %v6170 = vshrl.u32 %v6169, 7
        %v6171 = vsub.s32 %v6168, %v6170
        %v6172 = vrot.slane %v6158, %v6171
        %v6173 = vcombine.low %v2824, %v2872
        %v6174 = vcombine.high %v2824, %v2872
        %v6176 = vunpack.c.l.s4 1983009808
        %v6177 = vunpack.c.0.s8 %v6176
        %v6178 = vlaneseq
        %v6179 = vshrl.u32 %v6178, 7
        %v6180 = vsub.s32 %v6177, %v6179
        %v6181 = vrot.slane %v6173, %v6180
        %v6183 = vunpack.c.l.s4 1983009808
        %v6184 = vunpack.c.0.s8 %v6183
        %v6185 = vlaneseq
        %v6186 = vshrl.u32 %v6185, 7
        %v6187 = vsub.s32 %v6184, %v6186
        %v6188 = vrot.slane %v6174, %v6187
        %v6189 = vcombine.low %v6133, %v6149
        %v6190 = vcombine.high %v6133, %v6149
        %v6192 = vunpack.c.l.s4 1934713408
        %v6193 = vunpack.c.0.s8 %v6192
        %v6194 = vlaneseq
        %v6195 = vshrl.u32 %v6194, 7
        %v6196 = vsub.s32 %v6193, %v6195
        %v6197 = vrot.slane %v6189, %v6196
        %v6199 = vunpack.c.l.s4 1934713408
        %v6200 = vunpack.c.0.s8 %v6199
        %v6201 = vlaneseq
        %v6202 = vshrl.u32 %v6201, 7
        %v6203 = vsub.s32 %v6200, %v6202
        %v6204 = vrot.slane %v6190, %v6203
        %v6205 = vcombine.low %v6140, %v6156
        %v6206 = vcombine.high %v6140, %v6156
        %v6208 = vunpack.c.l.s4 1934713408
        %v6209 = vunpack.c.0.s8 %v6208
        %v6210 = vlaneseq
        %v6211 = vshrl.u32 %v6210, 7
        %v6212 = vsub.s32 %v6209, %v6211
        %v6213 = vrot.slane %v6205, %v6212
        %v6215 = vunpack.c.l.s4 1934713408
        %v6216 = vunpack.c.0.s8 %v6215
        %v6217 = vlaneseq
        %v6218 = vshrl.u32 %v6217, 7
        %v6219 = vsub.s32 %v6216, %v6218
        %v6220 = vrot.slane %v6206, %v6219
        %v6221 = vcombine.low %v6165, %v6181
        %v6222 = vcombine.high %v6165, %v6181
        %v6224 = vunpack.c.l.s4 1934713408
        %v6225 = vunpack.c.0.s8 %v6224
        %v6226 = vlaneseq
        %v6227 = vshrl.u32 %v6226, 7
        %v6228 = vsub.s32 %v6225, %v6227
        %v6229 = vrot.slane %v6221, %v6228
        %v6231 = vunpack.c.l.s4 1934713408
        %v6232 = vunpack.c.0.s8 %v6231
        %v6233 = vlaneseq
        %v6234 = vshrl.u32 %v6233, 7
        %v6235 = vsub.s32 %v6232, %v6234
        %v6236 = vrot.slane %v6222, %v6235
        %v6237 = vcombine.low %v6172, %v6188
        %v6238 = vcombine.high %v6172, %v6188
        %v6240 = vunpack.c.l.s4 1934713408
        %v6241 = vunpack.c.0.s8 %v6240
        %v6242 = vlaneseq
        %v6243 = vshrl.u32 %v6242, 7
        %v6244 = vsub.s32 %v6241, %v6243
        %v6245 = vrot.slane %v6237, %v6244
        %v6247 = vunpack.c.l.s4 1934713408
        %v6248 = vunpack.c.0.s8 %v6247
        %v6249 = vlaneseq
        %v6250 = vshrl.u32 %v6249, 7
        %v6251 = vsub.s32 %v6248, %v6250
        %v6252 = vrot.slane %v6238, %v6251
        %v6253 = vcombine.low %v6197, %v6229
        %v6254 = vcombine.high %v6197, %v6229
        %v6255 = vcombine.low %v6204, %v6236
        %v6256 = vcombine.high %v6204, %v6236
        %v6257 = vcombine.low %v6213, %v6245
        %v6258 = vcombine.high %v6213, %v6245
        %v6259 = vcombine.low %v6220, %v6252
        %v6260 = vcombine.high %v6220, %v6252
        %v6261 = vcombine.low %v2896, %v2944
        %v6262 = vcombine.high %v2896, %v2944
        %v6264 = vunpack.c.l.s4 1983009808
        %v6265 = vunpack.c.0.s8 %v6264
        %v6266 = vlaneseq
        %v6267 = vshrl.u32 %v6266, 7
        %v6268 = vsub.s32 %v6265, %v6267
        %v6269 = vrot.slane %v6261, %v6268
        %v6271 = vunpack.c.l.s4 1983009808
        %v6272 = vunpack.c.0.s8 %v6271
        %v6273 = vlaneseq
        %v6274 = vshrl.u32 %v6273, 7
        %v6275 = vsub.s32 %v6272, %v6274
        %v6276 = vrot.slane %v6262, %v6275
        %v6277 = vcombine.low %v2920, %v2968
        %v6278 = vcombine.high %v2920, %v2968
        %v6280 = vunpack.c.l.s4 1983009808
        %v6281 = vunpack.c.0.s8 %v6280
        %v6282 = vlaneseq
        %v6283 = vshrl.u32 %v6282, 7
        %v6284 = vsub.s32 %v6281, %v6283
        %v6285 = vrot.slane %v6277, %v6284
        %v6287 = vunpack.c.l.s4 1983009808
        %v6288 = vunpack.c.0.s8 %v6287
        %v6289 = vlaneseq
        %v6290 = vshrl.u32 %v6289, 7
        %v6291 = vsub.s32 %v6288, %v6290
        %v6292 = vrot.slane %v6278, %v6291
        %v6293 = vcombine.low %v2992, %v3040
        %v6294 = vcombine.high %v2992, %v3040
        %v6296 = vunpack.c.l.s4 1983009808
        %v6297 = vunpack.c.0.s8 %v6296
        %v6298 = vlaneseq
        %v6299 = vshrl.u32 %v6298, 7
        %v6300 = vsub.s32 %v6297, %v6299
        %v6301 = vrot.slane %v6293, %v6300
        %v6303 = vunpack.c.l.s4 1983009808
        %v6304 = vunpack.c.0.s8 %v6303
        %v6305 = vlaneseq
        %v6306 = vshrl.u32 %v6305, 7
        %v6307 = vsub.s32 %v6304, %v6306
        %v6308 = vrot.slane %v6294, %v6307
        %v6309 = vcombine.low %v3016, %v3064
        %v6310 = vcombine.high %v3016, %v3064
        %v6312 = vunpack.c.l.s4 1983009808
        %v6313 = vunpack.c.0.s8 %v6312
        %v6314 = vlaneseq
        %v6315 = vshrl.u32 %v6314, 7
        %v6316 = vsub.s32 %v6313, %v6315
        %v6317 = vrot.slane %v6309, %v6316
        %v6319 = vunpack.c.l.s4 1983009808
        %v6320 = vunpack.c.0.s8 %v6319
        %v6321 = vlaneseq
        %v6322 = vshrl.u32 %v6321, 7
        %v6323 = vsub.s32 %v6320, %v6322
        %v6324 = vrot.slane %v6310, %v6323
        %v6325 = vcombine.low %v6269, %v6285
        %v6326 = vcombine.high %v6269, %v6285
        %v6328 = vunpack.c.l.s4 1934713408
        %v6329 = vunpack.c.0.s8 %v6328
        %v6330 = vlaneseq
        %v6331 = vshrl.u32 %v6330, 7
        %v6332 = vsub.s32 %v6329, %v6331
        %v6333 = vrot.slane %v6325, %v6332
        %v6335 = vunpack.c.l.s4 1934713408
        %v6336 = vunpack.c.0.s8 %v6335
        %v6337 = vlaneseq
        %v6338 = vshrl.u32 %v6337, 7
        %v6339 = vsub.s32 %v6336, %v6338
        %v6340 = vrot.slane %v6326, %v6339
        %v6341 = vcombine.low %v6276, %v6292
        %v6342 = vcombine.high %v6276, %v6292
        %v6344 = vunpack.c.l.s4 1934713408
        %v6345 = vunpack.c.0.s8 %v6344
        %v6346 = vlaneseq
        %v6347 = vshrl.u32 %v6346, 7
        %v6348 = vsub.s32 %v6345, %v6347
        %v6349 = vrot.slane %v6341, %v6348
        %v6351 = vunpack.c.l.s4 1934713408
        %v6352 = vunpack.c.0.s8 %v6351
        %v6353 = vlaneseq
        %v6354 = vshrl.u32 %v6353, 7
        %v6355 = vsub.s32 %v6352, %v6354
        %v6356 = vrot.slane %v6342, %v6355
        %v6357 = vcombine.low %v6301, %v6317
        %v6358 = vcombine.high %v6301, %v6317
        %v6360 = vunpack.c.l.s4 1934713408
        %v6361 = vunpack.c.0.s8 %v6360
        %v6362 = vlaneseq
        %v6363 = vshrl.u32 %v6362, 7
        %v6364 = vsub.s32 %v6361, %v6363
        %v6365 = vrot.slane %v6357, %v6364
        %v6367 = vunpack.c.l.s4 1934713408
        %v6368 = vunpack.c.0.s8 %v6367
        %v6369 = vlaneseq
        %v6370 = vshrl.u32 %v6369, 7
        %v6371 = vsub.s32 %v6368, %v6370
        %v6372 = vrot.slane %v6358, %v6371
        %v6373 = vcombine.low %v6308, %v6324
        %v6374 = vcombine.high %v6308, %v6324
        %v6376 = vunpack.c.l.s4 1934713408
        %v6377 = vunpack.c.0.s8 %v6376
        %v6378 = vlaneseq
        %v6379 = vshrl.u32 %v6378, 7
        %v6380 = vsub.s32 %v6377, %v6379
        %v6381 = vrot.slane %v6373, %v6380
        %v6383 = vunpack.c.l.s4 1934713408
        %v6384 = vunpack.c.0.s8 %v6383
        %v6385 = vlaneseq
        %v6386 = vshrl.u32 %v6385, 7
        %v6387 = vsub.s32 %v6384, %v6386
        %v6388 = vrot.slane %v6374, %v6387
        %v6389 = vcombine.low %v6333, %v6365
        %v6390 = vcombine.high %v6333, %v6365
        %v6391 = vcombine.low %v6340, %v6372
        %v6392 = vcombine.high %v6340, %v6372
        %v6393 = vcombine.low %v6349, %v6381
        %v6394 = vcombine.high %v6349, %v6381
        %v6395 = vcombine.low %v6356, %v6388
        %v6396 = vcombine.high %v6356, %v6388
        %v6397 = vcombine.low %v3088, %v3136
        %v6398 = vcombine.high %v3088, %v3136
        %v6400 = vunpack.c.l.s4 1983009808
        %v6401 = vunpack.c.0.s8 %v6400
        %v6402 = vlaneseq
        %v6403 = vshrl.u32 %v6402, 7
        %v6404 = vsub.s32 %v6401, %v6403
        %v6405 = vrot.slane %v6397, %v6404
        %v6407 = vunpack.c.l.s4 1983009808
        %v6408 = vunpack.c.0.s8 %v6407
        %v6409 = vlaneseq
        %v6410 = vshrl.u32 %v6409, 7
        %v6411 = vsub.s32 %v6408, %v6410
        %v6412 = vrot.slane %v6398, %v6411
        %v6413 = vcombine.low %v3112, %v3160
        %v6414 = vcombine.high %v3112, %v3160
        %v6416 = vunpack.c.l.s4 1983009808
        %v6417 = vunpack.c.0.s8 %v6416
        %v6418 = vlaneseq
        %v6419 = vshrl.u32 %v6418, 7
        %v6420 = vsub.s32 %v6417, %v6419
        %v6421 = vrot.slane %v6413, %v6420
        %v6423 = vunpack.c.l.s4 1983009808
        %v6424 = vunpack.c.0.s8 %v6423
        %v6425 = vlaneseq
        %v6426 = vshrl.u32 %v6425, 7
        %v6427 = vsub.s32 %v6424, %v6426
        %v6428 = vrot.slane %v6414, %v6427
        %v6429 = vcombine.low %v3184, %v3232
        %v6430 = vcombine.high %v3184, %v3232
        %v6432 = vunpack.c.l.s4 1983009808
        %v6433 = vunpack.c.0.s8 %v6432
        %v6434 = vlaneseq
        %v6435 = vshrl.u32 %v6434, 7
        %v6436 = vsub.s32 %v6433, %v6435
        %v6437 = vrot.slane %v6429, %v6436
        %v6439 = vunpack.c.l.s4 1983009808
        %v6440 = vunpack.c.0.s8 %v6439
        %v6441 = vlaneseq
        %v6442 = vshrl.u32 %v6441, 7
        %v6443 = vsub.s32 %v6440, %v6442
        %v6444 = vrot.slane %v6430, %v6443
        %v6445 = vcombine.low %v3208, %v3256
        %v6446 = vcombine.high %v3208, %v3256
        %v6448 = vunpack.c.l.s4 1983009808
        %v6449 = vunpack.c.0.s8 %v6448
        %v6450 = vlaneseq
        %v6451 = vshrl.u32 %v6450, 7
        %v6452 = vsub.s32 %v6449, %v6451
        %v6453 = vrot.slane %v6445, %v6452
        %v6455 = vunpack.c.l.s4 1983009808
        %v6456 = vunpack.c.0.s8 %v6455
        %v6457 = vlaneseq
        %v6458 = vshrl.u32 %v6457, 7
        %v6459 = vsub.s32 %v6456, %v6458
        %v6460 = vrot.slane %v6446, %v6459
        %v6461 = vcombine.low %v6405, %v6421
        %v6462 = vcombine.high %v6405, %v6421
        %v6464 = vunpack.c.l.s4 1934713408
        %v6465 = vunpack.c.0.s8 %v6464
        %v6466 = vlaneseq
        %v6467 = vshrl.u32 %v6466, 7
        %v6468 = vsub.s32 %v6465, %v6467
        %v6469 = vrot.slane %v6461, %v6468
        %v6471 = vunpack.c.l.s4 1934713408
        %v6472 = vunpack.c.0.s8 %v6471
        %v6473 = vlaneseq
        %v6474 = vshrl.u32 %v6473, 7
        %v6475 = vsub.s32 %v6472, %v6474
        %v6476 = vrot.slane %v6462, %v6475
        %v6477 = vcombine.low %v6412, %v6428
        %v6478 = vcombine.high %v6412, %v6428
        %v6480 = vunpack.c.l.s4 1934713408
        %v6481 = vunpack.c.0.s8 %v6480
        %v6482 = vlaneseq
        %v6483 = vshrl.u32 %v6482, 7
        %v6484 = vsub.s32 %v6481, %v6483
        %v6485 = vrot.slane %v6477, %v6484
        %v6487 = vunpack.c.l.s4 1934713408
        %v6488 = vunpack.c.0.s8 %v6487
        %v6489 = vlaneseq
        %v6490 = vshrl.u32 %v6489, 7
        %v6491 = vsub.s32 %v6488, %v6490
        %v6492 = vrot.slane %v6478, %v6491
        %v6493 = vcombine.low %v6437, %v6453
        %v6494 = vcombine.high %v6437, %v6453
        %v6496 = vunpack.c.l.s4 1934713408
        %v6497 = vunpack.c.0.s8 %v6496
        %v6498 = vlaneseq
        %v6499 = vshrl.u32 %v6498, 7
        %v6500 = vsub.s32 %v6497, %v6499
        %v6501 = vrot.slane %v6493, %v6500
        %v6503 = vunpack.c.l.s4 1934713408
        %v6504 = vunpack.c.0.s8 %v6503
        %v6505 = vlaneseq
        %v6506 = vshrl.u32 %v6505, 7
        %v6507 = vsub.s32 %v6504, %v6506
        %v6508 = vrot.slane %v6494, %v6507
        %v6509 = vcombine.low %v6444, %v6460
        %v6510 = vcombine.high %v6444, %v6460
        %v6512 = vunpack.c.l.s4 1934713408
        %v6513 = vunpack.c.0.s8 %v6512
        %v6514 = vlaneseq
        %v6515 = vshrl.u32 %v6514, 7
        %v6516 = vsub.s32 %v6513, %v6515
        %v6517 = vrot.slane %v6509, %v6516
        %v6519 = vunpack.c.l.s4 1934713408
        %v6520 = vunpack.c.0.s8 %v6519
        %v6521 = vlaneseq
        %v6522 = vshrl.u32 %v6521, 7
        %v6523 = vsub.s32 %v6520, %v6522
        %v6524 = vrot.slane %v6510, %v6523
        %v6525 = vcombine.low %v6469, %v6501
        %v6526 = vcombine.high %v6469, %v6501
        %v6527 = vcombine.low %v6476, %v6508
        %v6528 = vcombine.high %v6476, %v6508
        %v6529 = vcombine.low %v6485, %v6517
        %v6530 = vcombine.high %v6485, %v6517
        %v6531 = vcombine.low %v6492, %v6524
        %v6532 = vcombine.high %v6492, %v6524
        %v6533 = vcombine.low %v2515, %v2562
        %v6534 = vcombine.high %v2515, %v2562
        %v6536 = vunpack.c.l.s4 1983009808
        %v6537 = vunpack.c.0.s8 %v6536
        %v6538 = vlaneseq
        %v6539 = vshrl.u32 %v6538, 7
        %v6540 = vsub.s32 %v6537, %v6539
        %v6541 = vrot.slane %v6533, %v6540
        %v6543 = vunpack.c.l.s4 1983009808
        %v6544 = vunpack.c.0.s8 %v6543
        %v6545 = vlaneseq
        %v6546 = vshrl.u32 %v6545, 7
        %v6547 = vsub.s32 %v6544, %v6546
        %v6548 = vrot.slane %v6534, %v6547
        %v6549 = vcombine.low %v2538, %v2586
        %v6550 = vcombine.high %v2538, %v2586
        %v6552 = vunpack.c.l.s4 1983009808
        %v6553 = vunpack.c.0.s8 %v6552
        %v6554 = vlaneseq
        %v6555 = vshrl.u32 %v6554, 7
        %v6556 = vsub.s32 %v6553, %v6555
        %v6557 = vrot.slane %v6549, %v6556
        %v6559 = vunpack.c.l.s4 1983009808
        %v6560 = vunpack.c.0.s8 %v6559
        %v6561 = vlaneseq
        %v6562 = vshrl.u32 %v6561, 7
        %v6563 = vsub.s32 %v6560, %v6562
        %v6564 = vrot.slane %v6550, %v6563
        %v6565 = vcombine.low %v2610, %v2658
        %v6566 = vcombine.high %v2610, %v2658
        %v6568 = vunpack.c.l.s4 1983009808
        %v6569 = vunpack.c.0.s8 %v6568
        %v6570 = vlaneseq
        %v6571 = vshrl.u32 %v6570, 7
        %v6572 = vsub.s32 %v6569, %v6571
        %v6573 = vrot.slane %v6565, %v6572
        %v6575 = vunpack.c.l.s4 1983009808
        %v6576 = vunpack.c.0.s8 %v6575
        %v6577 = vlaneseq
        %v6578 = vshrl.u32 %v6577, 7
        %v6579 = vsub.s32 %v6576, %v6578
        %v6580 = vrot.slane %v6566, %v6579
        %v6581 = vcombine.low %v2634, %v2682
        %v6582 = vcombine.high %v2634, %v2682
        %v6584 = vunpack.c.l.s4 1983009808
        %v6585 = vunpack.c.0.s8 %v6584
        %v6586 = vlaneseq
        %v6587 = vshrl.u32 %v6586, 7
        %v6588 = vsub.s32 %v6585, %v6587
        %v6589 = vrot.slane %v6581, %v6588
        %v6591 = vunpack.c.l.s4 1983009808
        %v6592 = vunpack.c.0.s8 %v6591
        %v6593 = vlaneseq
        %v6594 = vshrl.u32 %v6593, 7
        %v6595 = vsub.s32 %v6592, %v6594
        %v6596 = vrot.slane %v6582, %v6595
        %v6597 = vcombine.low %v6541, %v6557
        %v6598 = vcombine.high %v6541, %v6557
        %v6600 = vunpack.c.l.s4 1934713408
        %v6601 = vunpack.c.0.s8 %v6600
        %v6602 = vlaneseq
        %v6603 = vshrl.u32 %v6602, 7
        %v6604 = vsub.s32 %v6601, %v6603
        %v6605 = vrot.slane %v6597, %v6604
        %v6607 = vunpack.c.l.s4 1934713408
        %v6608 = vunpack.c.0.s8 %v6607
        %v6609 = vlaneseq
        %v6610 = vshrl.u32 %v6609, 7
        %v6611 = vsub.s32 %v6608, %v6610
        %v6612 = vrot.slane %v6598, %v6611
        %v6613 = vcombine.low %v6548, %v6564
        %v6614 = vcombine.high %v6548, %v6564
        %v6616 = vunpack.c.l.s4 1934713408
        %v6617 = vunpack.c.0.s8 %v6616
        %v6618 = vlaneseq
        %v6619 = vshrl.u32 %v6618, 7
        %v6620 = vsub.s32 %v6617, %v6619
        %v6621 = vrot.slane %v6613, %v6620
        %v6623 = vunpack.c.l.s4 1934713408
        %v6624 = vunpack.c.0.s8 %v6623
        %v6625 = vlaneseq
        %v6626 = vshrl.u32 %v6625, 7
        %v6627 = vsub.s32 %v6624, %v6626
        %v6628 = vrot.slane %v6614, %v6627
        %v6629 = vcombine.low %v6573, %v6589
        %v6630 = vcombine.high %v6573, %v6589
        %v6632 = vunpack.c.l.s4 1934713408
        %v6633 = vunpack.c.0.s8 %v6632
        %v6634 = vlaneseq
        %v6635 = vshrl.u32 %v6634, 7
        %v6636 = vsub.s32 %v6633, %v6635
        %v6637 = vrot.slane %v6629, %v6636
        %v6639 = vunpack.c.l.s4 1934713408
        %v6640 = vunpack.c.0.s8 %v6639
        %v6641 = vlaneseq
        %v6642 = vshrl.u32 %v6641, 7
        %v6643 = vsub.s32 %v6640, %v6642
        %v6644 = vrot.slane %v6630, %v6643
        %v6645 = vcombine.low %v6580, %v6596
        %v6646 = vcombine.high %v6580, %v6596
        %v6648 = vunpack.c.l.s4 1934713408
        %v6649 = vunpack.c.0.s8 %v6648
        %v6650 = vlaneseq
        %v6651 = vshrl.u32 %v6650, 7
        %v6652 = vsub.s32 %v6649, %v6651
        %v6653 = vrot.slane %v6645, %v6652
        %v6655 = vunpack.c.l.s4 1934713408
        %v6656 = vunpack.c.0.s8 %v6655
        %v6657 = vlaneseq
        %v6658 = vshrl.u32 %v6657, 7
        %v6659 = vsub.s32 %v6656, %v6658
        %v6660 = vrot.slane %v6646, %v6659
        %v6661 = vcombine.low %v6605, %v6637
        %v6662 = vcombine.high %v6605, %v6637
        %v6663 = vcombine.low %v6612, %v6644
        %v6664 = vcombine.high %v6612, %v6644
        %v6665 = vcombine.low %v6621, %v6653
        %v6666 = vcombine.high %v6621, %v6653
        %v6667 = vcombine.low %v6628, %v6660
        %v6668 = vcombine.high %v6628, %v6660
        %v6669 = vcombine.low %v2706, %v2754
        %v6670 = vcombine.high %v2706, %v2754
        %v6672 = vunpack.c.l.s4 1983009808
        %v6673 = vunpack.c.0.s8 %v6672
        %v6674 = vlaneseq
        %v6675 = vshrl.u32 %v6674, 7
        %v6676 = vsub.s32 %v6673, %v6675
        %v6677 = vrot.slane %v6669, %v6676
        %v6679 = vunpack.c.l.s4 1983009808
        %v6680 = vunpack.c.0.s8 %v6679
        %v6681 = vlaneseq
        %v6682 = vshrl.u32 %v6681, 7
        %v6683 = vsub.s32 %v6680, %v6682
        %v6684 = vrot.slane %v6670, %v6683
        %v6685 = vcombine.low %v2730, %v2778
        %v6686 = vcombine.high %v2730, %v2778
        %v6688 = vunpack.c.l.s4 1983009808
        %v6689 = vunpack.c.0.s8 %v6688
        %v6690 = vlaneseq
        %v6691 = vshrl.u32 %v6690, 7
        %v6692 = vsub.s32 %v6689, %v6691
        %v6693 = vrot.slane %v6685, %v6692
        %v6695 = vunpack.c.l.s4 1983009808
        %v6696 = vunpack.c.0.s8 %v6695
        %v6697 = vlaneseq
        %v6698 = vshrl.u32 %v6697, 7
        %v6699 = vsub.s32 %v6696, %v6698
        %v6700 = vrot.slane %v6686, %v6699
        %v6701 = vcombine.low %v2802, %v2850
        %v6702 = vcombine.high %v2802, %v2850
        %v6704 = vunpack.c.l.s4 1983009808
        %v6705 = vunpack.c.0.s8 %v6704
        %v6706 = vlaneseq
        %v6707 = vshrl.u32 %v6706, 7
        %v6708 = vsub.s32 %v6705, %v6707
        %v6709 = vrot.slane %v6701, %v6708
        %v6711 = vunpack.c.l.s4 1983009808
        %v6712 = vunpack.c.0.s8 %v6711
        %v6713 = vlaneseq
        %v6714 = vshrl.u32 %v6713, 7
        %v6715 = vsub.s32 %v6712, %v6714
        %v6716 = vrot.slane %v6702, %v6715
        %v6717 = vcombine.low %v2826, %v2874
        %v6718 = vcombine.high %v2826, %v2874
        %v6720 = vunpack.c.l.s4 1983009808
        %v6721 = vunpack.c.0.s8 %v6720
        %v6722 = vlaneseq
        %v6723 = vshrl.u32 %v6722, 7
        %v6724 = vsub.s32 %v6721, %v6723
        %v6725 = vrot.slane %v6717, %v6724
        %v6727 = vunpack.c.l.s4 1983009808
        %v6728 = vunpack.c.0.s8 %v6727
        %v6729 = vlaneseq
        %v6730 = vshrl.u32 %v6729, 7
        %v6731 = vsub.s32 %v6728, %v6730
        %v6732 = vrot.slane %v6718, %v6731
        %v6733 = vcombine.low %v6677, %v6693
        %v6734 = vcombine.high %v6677, %v6693
        %v6736 = vunpack.c.l.s4 1934713408
        %v6737 = vunpack.c.0.s8 %v6736
        %v6738 = vlaneseq
        %v6739 = vshrl.u32 %v6738, 7
        %v6740 = vsub.s32 %v6737, %v6739
        %v6741 = vrot.slane %v6733, %v6740
        %v6743 = vunpack.c.l.s4 1934713408
        %v6744 = vunpack.c.0.s8 %v6743
        %v6745 = vlaneseq
        %v6746 = vshrl.u32 %v6745, 7
        %v6747 = vsub.s32 %v6744, %v6746
        %v6748 = vrot.slane %v6734, %v6747
        %v6749 = vcombine.low %v6684, %v6700
        %v6750 = vcombine.high %v6684, %v6700
        %v6752 = vunpack.c.l.s4 1934713408
        %v6753 = vunpack.c.0.s8 %v6752
        %v6754 = vlaneseq
        %v6755 = vshrl.u32 %v6754, 7
        %v6756 = vsub.s32 %v6753, %v6755
        %v6757 = vrot.slane %v6749, %v6756
        %v6759 = vunpack.c.l.s4 1934713408
        %v6760 = vunpack.c.0.s8 %v6759
        %v6761 = vlaneseq
        %v6762 = vshrl.u32 %v6761, 7
        %v6763 = vsub.s32 %v6760, %v6762
        %v6764 = vrot.slane %v6750, %v6763
        %v6765 = vcombine.low %v6709, %v6725
        %v6766 = vcombine.high %v6709, %v6725
        %v6768 = vunpack.c.l.s4 1934713408
        %v6769 = vunpack.c.0.s8 %v6768
        %v6770 = vlaneseq
        %v6771 = vshrl.u32 %v6770, 7
        %v6772 = vsub.s32 %v6769, %v6771
        %v6773 = vrot.slane %v6765, %v6772
        %v6775 = vunpack.c.l.s4 1934713408
        %v6776 = vunpack.c.0.s8 %v6775
        %v6777 = vlaneseq
        %v6778 = vshrl.u32 %v6777, 7
        %v6779 = vsub.s32 %v6776, %v6778
        %v6780 = vrot.slane %v6766, %v6779
        %v6781 = vcombine.low %v6716, %v6732
        %v6782 = vcombine.high %v6716, %v6732
        %v6784 = vunpack.c.l.s4 1934713408
        %v6785 = vunpack.c.0.s8 %v6784
        %v6786 = vlaneseq
        %v6787 = vshrl.u32 %v6786, 7
        %v6788 = vsub.s32 %v6785, %v6787
        %v6789 = vrot.slane %v6781, %v6788
        %v6791 = vunpack.c.l.s4 1934713408
        %v6792 = vunpack.c.0.s8 %v6791
        %v6793 = vlaneseq
        %v6794 = vshrl.u32 %v6793, 7
        %v6795 = vsub.s32 %v6792, %v6794
        %v6796 = vrot.slane %v6782, %v6795
        %v6797 = vcombine.low %v6741, %v6773
        %v6798 = vcombine.high %v6741, %v6773
        %v6799 = vcombine.low %v6748, %v6780
        %v6800 = vcombine.high %v6748, %v6780
        %v6801 = vcombine.low %v6757, %v6789
        %v6802 = vcombine.high %v6757, %v6789
        %v6803 = vcombine.low %v6764, %v6796
        %v6804 = vcombine.high %v6764, %v6796
        %v6805 = vcombine.low %v2898, %v2946
        %v6806 = vcombine.high %v2898, %v2946
        %v6808 = vunpack.c.l.s4 1983009808
        %v6809 = vunpack.c.0.s8 %v6808
        %v6810 = vlaneseq
        %v6811 = vshrl.u32 %v6810, 7
        %v6812 = vsub.s32 %v6809, %v6811
        %v6813 = vrot.slane %v6805, %v6812
        %v6815 = vunpack.c.l.s4 1983009808
        %v6816 = vunpack.c.0.s8 %v6815
        %v6817 = vlaneseq
        %v6818 = vshrl.u32 %v6817, 7
        %v6819 = vsub.s32 %v6816, %v6818
        %v6820 = vrot.slane %v6806, %v6819
        %v6821 = vcombine.low %v2922, %v2970
        %v6822 = vcombine.high %v2922, %v2970
        %v6824 = vunpack.c.l.s4 1983009808
        %v6825 = vunpack.c.0.s8 %v6824
        %v6826 = vlaneseq
        %v6827 = vshrl.u32 %v6826, 7
        %v6828 = vsub.s32 %v6825, %v6827
        %v6829 = vrot.slane %v6821, %v6828
        %v6831 = vunpack.c.l.s4 1983009808
        %v6832 = vunpack.c.0.s8 %v6831
        %v6833 = vlaneseq
        %v6834 = vshrl.u32 %v6833, 7
        %v6835 = vsub.s32 %v6832, %v6834
        %v6836 = vrot.slane %v6822, %v6835
        %v6837 = vcombine.low %v2994, %v3042
        %v6838 = vcombine.high %v2994, %v3042
        %v6840 = vunpack.c.l.s4 1983009808
        %v6841 = vunpack.c.0.s8 %v6840
        %v6842 = vlaneseq
        %v6843 = vshrl.u32 %v6842, 7
        %v6844 = vsub.s32 %v6841, %v6843
        %v6845 = vrot.slane %v6837, %v6844
        %v6847 = vunpack.c.l.s4 1983009808
        %v6848 = vunpack.c.0.s8 %v6847
        %v6849 = vlaneseq
        %v6850 = vshrl.u32 %v6849, 7
        %v6851 = vsub.s32 %v6848, %v6850
        %v6852 = vrot.slane %v6838, %v6851
        %v6853 = vcombine.low %v3018, %v3066
        %v6854 = vcombine.high %v3018, %v3066
        %v6856 = vunpack.c.l.s4 1983009808
        %v6857 = vunpack.c.0.s8 %v6856
        %v6858 = vlaneseq
        %v6859 = vshrl.u32 %v6858, 7
        %v6860 = vsub.s32 %v6857, %v6859
        %v6861 = vrot.slane %v6853, %v6860
        %v6863 = vunpack.c.l.s4 1983009808
        %v6864 = vunpack.c.0.s8 %v6863
        %v6865 = vlaneseq
        %v6866 = vshrl.u32 %v6865, 7
        %v6867 = vsub.s32 %v6864, %v6866
        %v6868 = vrot.slane %v6854, %v6867
        %v6869 = vcombine.low %v6813, %v6829
        %v6870 = vcombine.high %v6813, %v6829
        %v6872 = vunpack.c.l.s4 1934713408
        %v6873 = vunpack.c.0.s8 %v6872
        %v6874 = vlaneseq
        %v6875 = vshrl.u32 %v6874, 7
        %v6876 = vsub.s32 %v6873, %v6875
        %v6877 = vrot.slane %v6869, %v6876
        %v6879 = vunpack.c.l.s4 1934713408
        %v6880 = vunpack.c.0.s8 %v6879
        %v6881 = vlaneseq
        %v6882 = vshrl.u32 %v6881, 7
        %v6883 = vsub.s32 %v6880, %v6882
        %v6884 = vrot.slane %v6870, %v6883
        %v6885 = vcombine.low %v6820, %v6836
        %v6886 = vcombine.high %v6820, %v6836
        %v6888 = vunpack.c.l.s4 1934713408
        %v6889 = vunpack.c.0.s8 %v6888
        %v6890 = vlaneseq
        %v6891 = vshrl.u32 %v6890, 7
        %v6892 = vsub.s32 %v6889, %v6891
        %v6893 = vrot.slane %v6885, %v6892
        %v6895 = vunpack.c.l.s4 1934713408
        %v6896 = vunpack.c.0.s8 %v6895
        %v6897 = vlaneseq
        %v6898 = vshrl.u32 %v6897, 7
        %v6899 = vsub.s32 %v6896, %v6898
        %v6900 = vrot.slane %v6886, %v6899
        %v6901 = vcombine.low %v6845, %v6861
        %v6902 = vcombine.high %v6845, %v6861
        %v6904 = vunpack.c.l.s4 1934713408
        %v6905 = vunpack.c.0.s8 %v6904
        %v6906 = vlaneseq
        %v6907 = vshrl.u32 %v6906, 7
        %v6908 = vsub.s32 %v6905, %v6907
        %v6909 = vrot.slane %v6901, %v6908
        %v6911 = vunpack.c.l.s4 1934713408
        %v6912 = vunpack.c.0.s8 %v6911
        %v6913 = vlaneseq
        %v6914 = vshrl.u32 %v6913, 7
        %v6915 = vsub.s32 %v6912, %v6914
        %v6916 = vrot.slane %v6902, %v6915
        %v6917 = vcombine.low %v6852, %v6868
        %v6918 = vcombine.high %v6852, %v6868
        %v6920 = vunpack.c.l.s4 1934713408
        %v6921 = vunpack.c.0.s8 %v6920
        %v6922 = vlaneseq
        %v6923 = vshrl.u32 %v6922, 7
        %v6924 = vsub.s32 %v6921, %v6923
        %v6925 = vrot.slane %v6917, %v6924
        %v6927 = vunpack.c.l.s4 1934713408
        %v6928 = vunpack.c.0.s8 %v6927
        %v6929 = vlaneseq
        %v6930 = vshrl.u32 %v6929, 7
        %v6931 = vsub.s32 %v6928, %v6930
        %v6932 = vrot.slane %v6918, %v6931
        %v6933 = vcombine.low %v6877, %v6909
        %v6934 = vcombine.high %v6877, %v6909
        %v6935 = vcombine.low %v6884, %v6916
        %v6936 = vcombine.high %v6884, %v6916
        %v6937 = vcombine.low %v6893, %v6925
        %v6938 = vcombine.high %v6893, %v6925
        %v6939 = vcombine.low %v6900, %v6932
        %v6940 = vcombine.high %v6900, %v6932
        %v6941 = vcombine.low %v3090, %v3138
        %v6942 = vcombine.high %v3090, %v3138
        %v6944 = vunpack.c.l.s4 1983009808
        %v6945 = vunpack.c.0.s8 %v6944
        %v6946 = vlaneseq
        %v6947 = vshrl.u32 %v6946, 7
        %v6948 = vsub.s32 %v6945, %v6947
        %v6949 = vrot.slane %v6941, %v6948
        %v6951 = vunpack.c.l.s4 1983009808
        %v6952 = vunpack.c.0.s8 %v6951
        %v6953 = vlaneseq
        %v6954 = vshrl.u32 %v6953, 7
        %v6955 = vsub.s32 %v6952, %v6954
        %v6956 = vrot.slane %v6942, %v6955
        %v6957 = vcombine.low %v3114, %v3162
        %v6958 = vcombine.high %v3114, %v3162
        %v6960 = vunpack.c.l.s4 1983009808
        %v6961 = vunpack.c.0.s8 %v6960
        %v6962 = vlaneseq
        %v6963 = vshrl.u32 %v6962, 7
        %v6964 = vsub.s32 %v6961, %v6963
        %v6965 = vrot.slane %v6957, %v6964
        %v6967 = vunpack.c.l.s4 1983009808
        %v6968 = vunpack.c.0.s8 %v6967
        %v6969 = vlaneseq
        %v6970 = vshrl.u32 %v6969, 7
        %v6971 = vsub.s32 %v6968, %v6970
        %v6972 = vrot.slane %v6958, %v6971
        %v6973 = vcombine.low %v3186, %v3234
        %v6974 = vcombine.high %v3186, %v3234
        %v6976 = vunpack.c.l.s4 1983009808
        %v6977 = vunpack.c.0.s8 %v6976
        %v6978 = vlaneseq
        %v6979 = vshrl.u32 %v6978, 7
        %v6980 = vsub.s32 %v6977, %v6979
        %v6981 = vrot.slane %v6973, %v6980
        %v6983 = vunpack.c.l.s4 1983009808
        %v6984 = vunpack.c.0.s8 %v6983
        %v6985 = vlaneseq
        %v6986 = vshrl.u32 %v6985, 7
        %v6987 = vsub.s32 %v6984, %v6986
        %v6988 = vrot.slane %v6974, %v6987
        %v6989 = vcombine.low %v3210, %v3258
        %v6990 = vcombine.high %v3210, %v3258
        %v6992 = vunpack.c.l.s4 1983009808
        %v6993 = vunpack.c.0.s8 %v6992
        %v6994 = vlaneseq
        %v6995 = vshrl.u32 %v6994, 7
        %v6996 = vsub.s32 %v6993, %v6995
        %v6997 = vrot.slane %v6989, %v6996
        %v6999 = vunpack.c.l.s4 1983009808
        %v7000 = vunpack.c.0.s8 %v6999
        %v7001 = vlaneseq
        %v7002 = vshrl.u32 %v7001, 7
        %v7003 = vsub.s32 %v7000, %v7002
        %v7004 = vrot.slane %v6990, %v7003
        %v7005 = vcombine.low %v6949, %v6965
        %v7006 = vcombine.high %v6949, %v6965
        %v7008 = vunpack.c.l.s4 1934713408
        %v7009 = vunpack.c.0.s8 %v7008
        %v7010 = vlaneseq
        %v7011 = vshrl.u32 %v7010, 7
        %v7012 = vsub.s32 %v7009, %v7011
        %v7013 = vrot.slane %v7005, %v7012
        %v7015 = vunpack.c.l.s4 1934713408
        %v7016 = vunpack.c.0.s8 %v7015
        %v7017 = vlaneseq
        %v7018 = vshrl.u32 %v7017, 7
        %v7019 = vsub.s32 %v7016, %v7018
        %v7020 = vrot.slane %v7006, %v7019
        %v7021 = vcombine.low %v6956, %v6972
        %v7022 = vcombine.high %v6956, %v6972
        %v7024 = vunpack.c.l.s4 1934713408
        %v7025 = vunpack.c.0.s8 %v7024
        %v7026 = vlaneseq
        %v7027 = vshrl.u32 %v7026, 7
        %v7028 = vsub.s32 %v7025, %v7027
        %v7029 = vrot.slane %v7021, %v7028
        %v7031 = vunpack.c.l.s4 1934713408
        %v7032 = vunpack.c.0.s8 %v7031
        %v7033 = vlaneseq
        %v7034 = vshrl.u32 %v7033, 7
        %v7035 = vsub.s32 %v7032, %v7034
        %v7036 = vrot.slane %v7022, %v7035
        %v7037 = vcombine.low %v6981, %v6997
        %v7038 = vcombine.high %v6981, %v6997
        %v7040 = vunpack.c.l.s4 1934713408
        %v7041 = vunpack.c.0.s8 %v7040
        %v7042 = vlaneseq
        %v7043 = vshrl.u32 %v7042, 7
        %v7044 = vsub.s32 %v7041, %v7043
        %v7045 = vrot.slane %v7037, %v7044
        %v7047 = vunpack.c.l.s4 1934713408
        %v7048 = vunpack.c.0.s8 %v7047
        %v7049 = vlaneseq
        %v7050 = vshrl.u32 %v7049, 7
        %v7051 = vsub.s32 %v7048, %v7050
        %v7052 = vrot.slane %v7038, %v7051
        %v7053 = vcombine.low %v6988, %v7004
        %v7054 = vcombine.high %v6988, %v7004
        %v7056 = vunpack.c.l.s4 1934713408
        %v7057 = vunpack.c.0.s8 %v7056
        %v7058 = vlaneseq
        %v7059 = vshrl.u32 %v7058, 7
        %v7060 = vsub.s32 %v7057, %v7059
        %v7061 = vrot.slane %v7053, %v7060
        %v7063 = vunpack.c.l.s4 1934713408
        %v7064 = vunpack.c.0.s8 %v7063
        %v7065 = vlaneseq
        %v7066 = vshrl.u32 %v7065, 7
        %v7067 = vsub.s32 %v7064, %v7066
        %v7068 = vrot.slane %v7054, %v7067
        %v7069 = vcombine.low %v7013, %v7045
        %v7070 = vcombine.high %v7013, %v7045
        %v7071 = vcombine.low %v7020, %v7052
        %v7072 = vcombine.high %v7020, %v7052
        %v7073 = vcombine.low %v7029, %v7061
        %v7074 = vcombine.high %v7029, %v7061
        %v7075 = vcombine.low %v7036, %v7068
        %v7076 = vcombine.high %v7036, %v7068
        %v7077 = vcombine.low %v2516, %v2564
        %v7078 = vcombine.high %v2516, %v2564
        %v7080 = vunpack.c.l.s4 1983009808
        %v7081 = vunpack.c.0.s8 %v7080
        %v7082 = vlaneseq
        %v7083 = vshrl.u32 %v7082, 7
        %v7084 = vsub.s32 %v7081, %v7083
        %v7085 = vrot.slane %v7077, %v7084
        %v7087 = vunpack.c.l.s4 1983009808
        %v7088 = vunpack.c.0.s8 %v7087
        %v7089 = vlaneseq
        %v7090 = vshrl.u32 %v7089, 7
        %v7091 = vsub.s32 %v7088, %v7090
        %v7092 = vrot.slane %v7078, %v7091
        %v7093 = vcombine.low %v2540, %v2588
        %v7094 = vcombine.high %v2540, %v2588
        %v7096 = vunpack.c.l.s4 1983009808
        %v7097 = vunpack.c.0.s8 %v7096
        %v7098 = vlaneseq
        %v7099 = vshrl.u32 %v7098, 7
        %v7100 = vsub.s32 %v7097, %v7099
        %v7101 = vrot.slane %v7093, %v7100
        %v7103 = vunpack.c.l.s4 1983009808
        %v7104 = vunpack.c.0.s8 %v7103
        %v7105 = vlaneseq
        %v7106 = vshrl.u32 %v7105, 7
        %v7107 = vsub.s32 %v7104, %v7106
        %v7108 = vrot.slane %v7094, %v7107
        %v7109 = vcombine.low %v2612, %v2660
        %v7110 = vcombine.high %v2612, %v2660
        %v7112 = vunpack.c.l.s4 1983009808
        %v7113 = vunpack.c.0.s8 %v7112
        %v7114 = vlaneseq
        %v7115 = vshrl.u32 %v7114, 7
        %v7116 = vsub.s32 %v7113, %v7115
        %v7117 = vrot.slane %v7109, %v7116
        %v7119 = vunpack.c.l.s4 1983009808
        %v7120 = vunpack.c.0.s8 %v7119
        %v7121 = vlaneseq
        %v7122 = vshrl.u32 %v7121, 7
        %v7123 = vsub.s32 %v7120, %v7122
        %v7124 = vrot.slane %v7110, %v7123
        %v7125 = vcombine.low %v2636, %v2684
        %v7126 = vcombine.high %v2636, %v2684
        %v7128 = vunpack.c.l.s4 1983009808
        %v7129 = vunpack.c.0.s8 %v7128
        %v7130 = vlaneseq
        %v7131 = vshrl.u32 %v7130, 7
        %v7132 = vsub.s32 %v7129, %v7131
        %v7133 = vrot.slane %v7125, %v7132
        %v7135 = vunpack.c.l.s4 1983009808
        %v7136 = vunpack.c.0.s8 %v7135
        %v7137 = vlaneseq
        %v7138 = vshrl.u32 %v7137, 7
        %v7139 = vsub.s32 %v7136, %v7138
        %v7140 = vrot.slane %v7126, %v7139
        %v7141 = vcombine.low %v7085, %v7101
        %v7142 = vcombine.high %v7085, %v7101
        %v7144 = vunpack.c.l.s4 1934713408
        %v7145 = vunpack.c.0.s8 %v7144
        %v7146 = vlaneseq
        %v7147 = vshrl.u32 %v7146, 7
        %v7148 = vsub.s32 %v7145, %v7147
        %v7149 = vrot.slane %v7141, %v7148
        %v7151 = vunpack.c.l.s4 1934713408
        %v7152 = vunpack.c.0.s8 %v7151
        %v7153 = vlaneseq
        %v7154 = vshrl.u32 %v7153, 7
        %v7155 = vsub.s32 %v7152, %v7154
        %v7156 = vrot.slane %v7142, %v7155
        %v7157 = vcombine.low %v7092, %v7108
        %v7158 = vcombine.high %v7092, %v7108
        %v7160 = vunpack.c.l.s4 1934713408
        %v7161 = vunpack.c.0.s8 %v7160
        %v7162 = vlaneseq
        %v7163 = vshrl.u32 %v7162, 7
        %v7164 = vsub.s32 %v7161, %v7163
        %v7165 = vrot.slane %v7157, %v7164
        %v7167 = vunpack.c.l.s4 1934713408
        %v7168 = vunpack.c.0.s8 %v7167
        %v7169 = vlaneseq
        %v7170 = vshrl.u32 %v7169, 7
        %v7171 = vsub.s32 %v7168, %v7170
        %v7172 = vrot.slane %v7158, %v7171
        %v7173 = vcombine.low %v7117, %v7133
        %v7174 = vcombine.high %v7117, %v7133
        %v7176 = vunpack.c.l.s4 1934713408
        %v7177 = vunpack.c.0.s8 %v7176
        %v7178 = vlaneseq
        %v7179 = vshrl.u32 %v7178, 7
        %v7180 = vsub.s32 %v7177, %v7179
        %v7181 = vrot.slane %v7173, %v7180
        %v7183 = vunpack.c.l.s4 1934713408
        %v7184 = vunpack.c.0.s8 %v7183
        %v7185 = vlaneseq
        %v7186 = vshrl.u32 %v7185, 7
        %v7187 = vsub.s32 %v7184, %v7186
        %v7188 = vrot.slane %v7174, %v7187
        %v7189 = vcombine.low %v7124, %v7140
        %v7190 = vcombine.high %v7124, %v7140
        %v7192 = vunpack.c.l.s4 1934713408
        %v7193 = vunpack.c.0.s8 %v7192
        %v7194 = vlaneseq
        %v7195 = vshrl.u32 %v7194, 7
        %v7196 = vsub.s32 %v7193, %v7195
        %v7197 = vrot.slane %v7189, %v7196
        %v7199 = vunpack.c.l.s4 1934713408
        %v7200 = vunpack.c.0.s8 %v7199
        %v7201 = vlaneseq
        %v7202 = vshrl.u32 %v7201, 7
        %v7203 = vsub.s32 %v7200, %v7202
        %v7204 = vrot.slane %v7190, %v7203
        %v7205 = vcombine.low %v7149, %v7181
        %v7206 = vcombine.high %v7149, %v7181
        %v7207 = vcombine.low %v7156, %v7188
        %v7208 = vcombine.high %v7156, %v7188
        %v7209 = vcombine.low %v7165, %v7197
        %v7210 = vcombine.high %v7165, %v7197
        %v7211 = vcombine.low %v7172, %v7204
        %v7212 = vcombine.high %v7172, %v7204
        %v7213 = vcombine.low %v2708, %v2756
        %v7214 = vcombine.high %v2708, %v2756
        %v7216 = vunpack.c.l.s4 1983009808
        %v7217 = vunpack.c.0.s8 %v7216
        %v7218 = vlaneseq
        %v7219 = vshrl.u32 %v7218, 7
        %v7220 = vsub.s32 %v7217, %v7219
        %v7221 = vrot.slane %v7213, %v7220
        %v7223 = vunpack.c.l.s4 1983009808
        %v7224 = vunpack.c.0.s8 %v7223
        %v7225 = vlaneseq
        %v7226 = vshrl.u32 %v7225, 7
        %v7227 = vsub.s32 %v7224, %v7226
        %v7228 = vrot.slane %v7214, %v7227
        %v7229 = vcombine.low %v2732, %v2780
        %v7230 = vcombine.high %v2732, %v2780
        %v7232 = vunpack.c.l.s4 1983009808
        %v7233 = vunpack.c.0.s8 %v7232
        %v7234 = vlaneseq
        %v7235 = vshrl.u32 %v7234, 7
        %v7236 = vsub.s32 %v7233, %v7235
        %v7237 = vrot.slane %v7229, %v7236
        %v7239 = vunpack.c.l.s4 1983009808
        %v7240 = vunpack.c.0.s8 %v7239
        %v7241 = vlaneseq
        %v7242 = vshrl.u32 %v7241, 7
        %v7243 = vsub.s32 %v7240, %v7242
        %v7244 = vrot.slane %v7230, %v7243
        %v7245 = vcombine.low %v2804, %v2852
        %v7246 = vcombine.high %v2804, %v2852
        %v7248 = vunpack.c.l.s4 1983009808
        %v7249 = vunpack.c.0.s8 %v7248
        %v7250 = vlaneseq
        %v7251 = vshrl.u32 %v7250, 7
        %v7252 = vsub.s32 %v7249, %v7251
        %v7253 = vrot.slane %v7245, %v7252
        %v7255 = vunpack.c.l.s4 1983009808
        %v7256 = vunpack.c.0.s8 %v7255
        %v7257 = vlaneseq
        %v7258 = vshrl.u32 %v7257, 7
        %v7259 = vsub.s32 %v7256, %v7258
        %v7260 = vrot.slane %v7246, %v7259
        %v7261 = vcombine.low %v2828, %v2876
        %v7262 = vcombine.high %v2828, %v2876
        %v7264 = vunpack.c.l.s4 1983009808
        %v7265 = vunpack.c.0.s8 %v7264
        %v7266 = vlaneseq
        %v7267 = vshrl.u32 %v7266, 7
        %v7268 = vsub.s32 %v7265, %v7267
        %v7269 = vrot.slane %v7261, %v7268
        %v7271 = vunpack.c.l.s4 1983009808
        %v7272 = vunpack.c.0.s8 %v7271
        %v7273 = vlaneseq
        %v7274 = vshrl.u32 %v7273, 7
        %v7275 = vsub.s32 %v7272, %v7274
        %v7276 = vrot.slane %v7262, %v7275
        %v7277 = vcombine.low %v7221, %v7237
        %v7278 = vcombine.high %v7221, %v7237
        %v7280 = vunpack.c.l.s4 1934713408
        %v7281 = vunpack.c.0.s8 %v7280
        %v7282 = vlaneseq
        %v7283 = vshrl.u32 %v7282, 7
        %v7284 = vsub.s32 %v7281, %v7283
        %v7285 = vrot.slane %v7277, %v7284
        %v7287 = vunpack.c.l.s4 1934713408
        %v7288 = vunpack.c.0.s8 %v7287
        %v7289 = vlaneseq
        %v7290 = vshrl.u32 %v7289, 7
        %v7291 = vsub.s32 %v7288, %v7290
        %v7292 = vrot.slane %v7278, %v7291
        %v7293 = vcombine.low %v7228, %v7244
        %v7294 = vcombine.high %v7228, %v7244
        %v7296 = vunpack.c.l.s4 1934713408
        %v7297 = vunpack.c.0.s8 %v7296
        %v7298 = vlaneseq
        %v7299 = vshrl.u32 %v7298, 7
        %v7300 = vsub.s32 %v7297, %v7299
        %v7301 = vrot.slane %v7293, %v7300
        %v7303 = vunpack.c.l.s4 1934713408
        %v7304 = vunpack.c.0.s8 %v7303
        %v7305 = vlaneseq
        %v7306 = vshrl.u32 %v7305, 7
        %v7307 = vsub.s32 %v7304, %v7306
        %v7308 = vrot.slane %v7294, %v7307
        %v7309 = vcombine.low %v7253, %v7269
        %v7310 = vcombine.high %v7253, %v7269
        %v7312 = vunpack.c.l.s4 1934713408
        %v7313 = vunpack.c.0.s8 %v7312
        %v7314 = vlaneseq
        %v7315 = vshrl.u32 %v7314, 7
        %v7316 = vsub.s32 %v7313, %v7315
        %v7317 = vrot.slane %v7309, %v7316
        %v7319 = vunpack.c.l.s4 1934713408
        %v7320 = vunpack.c.0.s8 %v7319
        %v7321 = vlaneseq
        %v7322 = vshrl.u32 %v7321, 7
        %v7323 = vsub.s32 %v7320, %v7322
        %v7324 = vrot.slane %v7310, %v7323
        %v7325 = vcombine.low %v7260, %v7276
        %v7326 = vcombine.high %v7260, %v7276
        %v7328 = vunpack.c.l.s4 1934713408
        %v7329 = vunpack.c.0.s8 %v7328
        %v7330 = vlaneseq
        %v7331 = vshrl.u32 %v7330, 7
        %v7332 = vsub.s32 %v7329, %v7331
        %v7333 = vrot.slane %v7325, %v7332
        %v7335 = vunpack.c.l.s4 1934713408
        %v7336 = vunpack.c.0.s8 %v7335
        %v7337 = vlaneseq
        %v7338 = vshrl.u32 %v7337, 7
        %v7339 = vsub.s32 %v7336, %v7338
        %v7340 = vrot.slane %v7326, %v7339
        %v7341 = vcombine.low %v7285, %v7317
        %v7342 = vcombine.high %v7285, %v7317
        %v7343 = vcombine.low %v7292, %v7324
        %v7344 = vcombine.high %v7292, %v7324
        %v7345 = vcombine.low %v7301, %v7333
        %v7346 = vcombine.high %v7301, %v7333
        %v7347 = vcombine.low %v7308, %v7340
        %v7348 = vcombine.high %v7308, %v7340
        %v7349 = vcombine.low %v2900, %v2948
        %v7350 = vcombine.high %v2900, %v2948
        %v7352 = vunpack.c.l.s4 1983009808
        %v7353 = vunpack.c.0.s8 %v7352
        %v7354 = vlaneseq
        %v7355 = vshrl.u32 %v7354, 7
        %v7356 = vsub.s32 %v7353, %v7355
        %v7357 = vrot.slane %v7349, %v7356
        %v7359 = vunpack.c.l.s4 1983009808
        %v7360 = vunpack.c.0.s8 %v7359
        %v7361 = vlaneseq
        %v7362 = vshrl.u32 %v7361, 7
        %v7363 = vsub.s32 %v7360, %v7362
        %v7364 = vrot.slane %v7350, %v7363
        %v7365 = vcombine.low %v2924, %v2972
        %v7366 = vcombine.high %v2924, %v2972
        %v7368 = vunpack.c.l.s4 1983009808
        %v7369 = vunpack.c.0.s8 %v7368
        %v7370 = vlaneseq
        %v7371 = vshrl.u32 %v7370, 7
        %v7372 = vsub.s32 %v7369, %v7371
        %v7373 = vrot.slane %v7365, %v7372
        %v7375 = vunpack.c.l.s4 1983009808
        %v7376 = vunpack.c.0.s8 %v7375
        %v7377 = vlaneseq
        %v7378 = vshrl.u32 %v7377, 7
        %v7379 = vsub.s32 %v7376, %v7378
        %v7380 = vrot.slane %v7366, %v7379
        %v7381 = vcombine.low %v2996, %v3044
        %v7382 = vcombine.high %v2996, %v3044
        %v7384 = vunpack.c.l.s4 1983009808
        %v7385 = vunpack.c.0.s8 %v7384
        %v7386 = vlaneseq
        %v7387 = vshrl.u32 %v7386, 7
        %v7388 = vsub.s32 %v7385, %v7387
        %v7389 = vrot.slane %v7381, %v7388
        %v7391 = vunpack.c.l.s4 1983009808
        %v7392 = vunpack.c.0.s8 %v7391
        %v7393 = vlaneseq
        %v7394 = vshrl.u32 %v7393, 7
        %v7395 = vsub.s32 %v7392, %v7394
        %v7396 = vrot.slane %v7382, %v7395
        %v7397 = vcombine.low %v3020, %v3068
        %v7398 = vcombine.high %v3020, %v3068
        %v7400 = vunpack.c.l.s4 1983009808
        %v7401 = vunpack.c.0.s8 %v7400
        %v7402 = vlaneseq
        %v7403 = vshrl.u32 %v7402, 7
        %v7404 = vsub.s32 %v7401, %v7403
        %v7405 = vrot.slane %v7397, %v7404
        %v7407 = vunpack.c.l.s4 1983009808
        %v7408 = vunpack.c.0.s8 %v7407
        %v7409 = vlaneseq
        %v7410 = vshrl.u32 %v7409, 7
        %v7411 = vsub.s32 %v7408, %v7410
        %v7412 = vrot.slane %v7398, %v7411
        %v7413 = vcombine.low %v7357, %v7373
        %v7414 = vcombine.high %v7357, %v7373
        %v7416 = vunpack.c.l.s4 1934713408
        %v7417 = vunpack.c.0.s8 %v7416
        %v7418 = vlaneseq
        %v7419 = vshrl.u32 %v7418, 7
        %v7420 = vsub.s32 %v7417, %v7419
        %v7421 = vrot.slane %v7413, %v7420
        %v7423 = vunpack.c.l.s4 1934713408
        %v7424 = vunpack.c.0.s8 %v7423
        %v7425 = vlaneseq
        %v7426 = vshrl.u32 %v7425, 7
        %v7427 = vsub.s32 %v7424, %v7426
        %v7428 = vrot.slane %v7414, %v7427
        %v7429 = vcombine.low %v7364, %v7380
        %v7430 = vcombine.high %v7364, %v7380
        %v7432 = vunpack.c.l.s4 1934713408
        %v7433 = vunpack.c.0.s8 %v7432
        %v7434 = vlaneseq
        %v7435 = vshrl.u32 %v7434, 7
        %v7436 = vsub.s32 %v7433, %v7435
        %v7437 = vrot.slane %v7429, %v7436
        %v7439 = vunpack.c.l.s4 1934713408
        %v7440 = vunpack.c.0.s8 %v7439
        %v7441 = vlaneseq
        %v7442 = vshrl.u32 %v7441, 7
        %v7443 = vsub.s32 %v7440, %v7442
        %v7444 = vrot.slane %v7430, %v7443
        %v7445 = vcombine.low %v7389, %v7405
        %v7446 = vcombine.high %v7389, %v7405
        %v7448 = vunpack.c.l.s4 1934713408
        %v7449 = vunpack.c.0.s8 %v7448
        %v7450 = vlaneseq
        %v7451 = vshrl.u32 %v7450, 7
        %v7452 = vsub.s32 %v7449, %v7451
        %v7453 = vrot.slane %v7445, %v7452
        %v7455 = vunpack.c.l.s4 1934713408
        %v7456 = vunpack.c.0.s8 %v7455
        %v7457 = vlaneseq
        %v7458 = vshrl.u32 %v7457, 7
        %v7459 = vsub.s32 %v7456, %v7458
        %v7460 = vrot.slane %v7446, %v7459
        %v7461 = vcombine.low %v7396, %v7412
        %v7462 = vcombine.high %v7396, %v7412
        %v7464 = vunpack.c.l.s4 1934713408
        %v7465 = vunpack.c.0.s8 %v7464
        %v7466 = vlaneseq
        %v7467 = vshrl.u32 %v7466, 7
        %v7468 = vsub.s32 %v7465, %v7467
        %v7469 = vrot.slane %v7461, %v7468
        %v7471 = vunpack.c.l.s4 1934713408
        %v7472 = vunpack.c.0.s8 %v7471
        %v7473 = vlaneseq
        %v7474 = vshrl.u32 %v7473, 7
        %v7475 = vsub.s32 %v7472, %v7474
        %v7476 = vrot.slane %v7462, %v7475
        %v7477 = vcombine.low %v7421, %v7453
        %v7478 = vcombine.high %v7421, %v7453
        %v7479 = vcombine.low %v7428, %v7460
        %v7480 = vcombine.high %v7428, %v7460
        %v7481 = vcombine.low %v7437, %v7469
        %v7482 = vcombine.high %v7437, %v7469
        %v7483 = vcombine.low %v7444, %v7476
        %v7484 = vcombine.high %v7444, %v7476
        %v7485 = vcombine.low %v3092, %v3140
        %v7486 = vcombine.high %v3092, %v3140
        %v7488 = vunpack.c.l.s4 1983009808
        %v7489 = vunpack.c.0.s8 %v7488
        %v7490 = vlaneseq
        %v7491 = vshrl.u32 %v7490, 7
        %v7492 = vsub.s32 %v7489, %v7491
        %v7493 = vrot.slane %v7485, %v7492
        %v7495 = vunpack.c.l.s4 1983009808
        %v7496 = vunpack.c.0.s8 %v7495
        %v7497 = vlaneseq
        %v7498 = vshrl.u32 %v7497, 7
        %v7499 = vsub.s32 %v7496, %v7498
        %v7500 = vrot.slane %v7486, %v7499
        %v7501 = vcombine.low %v3116, %v3164
        %v7502 = vcombine.high %v3116, %v3164
        %v7504 = vunpack.c.l.s4 1983009808
        %v7505 = vunpack.c.0.s8 %v7504
        %v7506 = vlaneseq
        %v7507 = vshrl.u32 %v7506, 7
        %v7508 = vsub.s32 %v7505, %v7507
        %v7509 = vrot.slane %v7501, %v7508
        %v7511 = vunpack.c.l.s4 1983009808
        %v7512 = vunpack.c.0.s8 %v7511
        %v7513 = vlaneseq
        %v7514 = vshrl.u32 %v7513, 7
        %v7515 = vsub.s32 %v7512, %v7514
        %v7516 = vrot.slane %v7502, %v7515
        %v7517 = vcombine.low %v3188, %v3236
        %v7518 = vcombine.high %v3188, %v3236
        %v7520 = vunpack.c.l.s4 1983009808
        %v7521 = vunpack.c.0.s8 %v7520
        %v7522 = vlaneseq
        %v7523 = vshrl.u32 %v7522, 7
        %v7524 = vsub.s32 %v7521, %v7523
        %v7525 = vrot.slane %v7517, %v7524
        %v7527 = vunpack.c.l.s4 1983009808
        %v7528 = vunpack.c.0.s8 %v7527
        %v7529 = vlaneseq
        %v7530 = vshrl.u32 %v7529, 7
        %v7531 = vsub.s32 %v7528, %v7530
        %v7532 = vrot.slane %v7518, %v7531
        %v7533 = vcombine.low %v3212, %v3260
        %v7534 = vcombine.high %v3212, %v3260
        %v7536 = vunpack.c.l.s4 1983009808
        %v7537 = vunpack.c.0.s8 %v7536
        %v7538 = vlaneseq
        %v7539 = vshrl.u32 %v7538, 7
        %v7540 = vsub.s32 %v7537, %v7539
        %v7541 = vrot.slane %v7533, %v7540
        %v7543 = vunpack.c.l.s4 1983009808
        %v7544 = vunpack.c.0.s8 %v7543
        %v7545 = vlaneseq
        %v7546 = vshrl.u32 %v7545, 7
        %v7547 = vsub.s32 %v7544, %v7546
        %v7548 = vrot.slane %v7534, %v7547
        %v7549 = vcombine.low %v7493, %v7509
        %v7550 = vcombine.high %v7493, %v7509
        %v7552 = vunpack.c.l.s4 1934713408
        %v7553 = vunpack.c.0.s8 %v7552
        %v7554 = vlaneseq
        %v7555 = vshrl.u32 %v7554, 7
        %v7556 = vsub.s32 %v7553, %v7555
        %v7557 = vrot.slane %v7549, %v7556
        %v7559 = vunpack.c.l.s4 1934713408
        %v7560 = vunpack.c.0.s8 %v7559
        %v7561 = vlaneseq
        %v7562 = vshrl.u32 %v7561, 7
        %v7563 = vsub.s32 %v7560, %v7562
        %v7564 = vrot.slane %v7550, %v7563
        %v7565 = vcombine.low %v7500, %v7516
        %v7566 = vcombine.high %v7500, %v7516
        %v7568 = vunpack.c.l.s4 1934713408
        %v7569 = vunpack.c.0.s8 %v7568
        %v7570 = vlaneseq
        %v7571 = vshrl.u32 %v7570, 7
        %v7572 = vsub.s32 %v7569, %v7571
        %v7573 = vrot.slane %v7565, %v7572
        %v7575 = vunpack.c.l.s4 1934713408
        %v7576 = vunpack.c.0.s8 %v7575
        %v7577 = vlaneseq
        %v7578 = vshrl.u32 %v7577, 7
        %v7579 = vsub.s32 %v7576, %v7578
        %v7580 = vrot.slane %v7566, %v7579
        %v7581 = vcombine.low %v7525, %v7541
        %v7582 = vcombine.high %v7525, %v7541
        %v7584 = vunpack.c.l.s4 1934713408
        %v7585 = vunpack.c.0.s8 %v7584
        %v7586 = vlaneseq
        %v7587 = vshrl.u32 %v7586, 7
        %v7588 = vsub.s32 %v7585, %v7587
        %v7589 = vrot.slane %v7581, %v7588
        %v7591 = vunpack.c.l.s4 1934713408
        %v7592 = vunpack.c.0.s8 %v7591
        %v7593 = vlaneseq
        %v7594 = vshrl.u32 %v7593, 7
        %v7595 = vsub.s32 %v7592, %v7594
        %v7596 = vrot.slane %v7582, %v7595
        %v7597 = vcombine.low %v7532, %v7548
        %v7598 = vcombine.high %v7532, %v7548
        %v7600 = vunpack.c.l.s4 1934713408
        %v7601 = vunpack.c.0.s8 %v7600
        %v7602 = vlaneseq
        %v7603 = vshrl.u32 %v7602, 7
        %v7604 = vsub.s32 %v7601, %v7603
        %v7605 = vrot.slane %v7597, %v7604
        %v7607 = vunpack.c.l.s4 1934713408
        %v7608 = vunpack.c.0.s8 %v7607
        %v7609 = vlaneseq
        %v7610 = vshrl.u32 %v7609, 7
        %v7611 = vsub.s32 %v7608, %v7610
        %v7612 = vrot.slane %v7598, %v7611
        %v7613 = vcombine.low %v7557, %v7589
        %v7614 = vcombine.high %v7557, %v7589
        %v7615 = vcombine.low %v7564, %v7596
        %v7616 = vcombine.high %v7564, %v7596
        %v7617 = vcombine.low %v7573, %v7605
        %v7618 = vcombine.high %v7573, %v7605
        %v7619 = vcombine.low %v7580, %v7612
        %v7620 = vcombine.high %v7580, %v7612
        %vm7621 = vcmask 31744
        %v7622 = vsel %vm7621, %v3397, 0.0
        %7623 = vadd.xlane.f32.xlu0 %v7622
        %v7624 = vpop.xlane.xlu0 %7623
        %v7625 = vsel %vm7621, %v3533, 0.0
        %7626 = vadd.xlane.f32.xlu0 %v7625
        %v7627 = vpop.xlane.xlu0 %7626
        %v7628 = vsel %vm7621, %v3669, 0.0
        %7629 = vadd.xlane.f32.xlu0 %v7628
        %v7630 = vpop.xlane.xlu0 %7629
        %v7631 = vsel %vm7621, %v3805, 0.0
        %7632 = vadd.xlane.f32.xlu0 %v7631
        %v7633 = vpop.xlane.xlu0 %7632
        %v7634 = vsel %vm7621, %v3398, 0.0
        %7635 = vadd.xlane.f32.xlu0 %v7634
        %v7636 = vpop.xlane.xlu0 %7635
        %v7637 = vsel %vm7621, %v3534, 0.0
        %7638 = vadd.xlane.f32.xlu0 %v7637
        %v7639 = vpop.xlane.xlu0 %7638
        %v7640 = vsel %vm7621, %v3670, 0.0
        %7641 = vadd.xlane.f32.xlu0 %v7640
        %v7642 = vpop.xlane.xlu0 %7641
        %v7643 = vsel %vm7621, %v3806, 0.0
        %7644 = vadd.xlane.f32.xlu0 %v7643
        %v7645 = vpop.xlane.xlu0 %7644
        %v7646 = vsel %vm7621, %v3399, 0.0
        %7647 = vadd.xlane.f32.xlu0 %v7646
        %v7648 = vpop.xlane.xlu0 %7647
        %v7649 = vsel %vm7621, %v3535, 0.0
        %7650 = vadd.xlane.f32.xlu0 %v7649
        %v7651 = vpop.xlane.xlu0 %7650
        %v7652 = vsel %vm7621, %v3671, 0.0
        %7653 = vadd.xlane.f32.xlu0 %v7652
        %v7654 = vpop.xlane.xlu0 %7653
        %v7655 = vsel %vm7621, %v3807, 0.0
        %7656 = vadd.xlane.f32.xlu0 %v7655
        %v7657 = vpop.xlane.xlu0 %7656
        %v7658 = vsel %vm7621, %v3400, 0.0
        %7659 = vadd.xlane.f32.xlu0 %v7658
        %v7660 = vpop.xlane.xlu0 %7659
        %v7661 = vsel %vm7621, %v3536, 0.0
        %7662 = vadd.xlane.f32.xlu0 %v7661
        %v7663 = vpop.xlane.xlu0 %7662
        %v7664 = vsel %vm7621, %v3672, 0.0
        %7665 = vadd.xlane.f32.xlu0 %v7664
        %v7666 = vpop.xlane.xlu0 %7665
        %v7667 = vsel %vm7621, %v3808, 0.0
        %7668 = vadd.xlane.f32.xlu0 %v7667
        %v7669 = vpop.xlane.xlu0 %7668
        %v7670 = vsel %vm7621, %v3401, 0.0
        %7671 = vadd.xlane.f32.xlu0 %v7670
        %v7672 = vpop.xlane.xlu0 %7671
        %v7673 = vsel %vm7621, %v3537, 0.0
        %7674 = vadd.xlane.f32.xlu0 %v7673
        %v7675 = vpop.xlane.xlu0 %7674
        %v7676 = vsel %vm7621, %v3673, 0.0
        %7677 = vadd.xlane.f32.xlu0 %v7676
        %v7678 = vpop.xlane.xlu0 %7677
        %v7679 = vsel %vm7621, %v3809, 0.0
        %7680 = vadd.xlane.f32.xlu0 %v7679
        %v7681 = vpop.xlane.xlu0 %7680
        %v7682 = vsel %vm7621, %v3402, 0.0
        %7683 = vadd.xlane.f32.xlu0 %v7682
        %v7684 = vpop.xlane.xlu0 %7683
        %v7685 = vsel %vm7621, %v3538, 0.0
        %7686 = vadd.xlane.f32.xlu0 %v7685
        %v7687 = vpop.xlane.xlu0 %7686
        %v7688 = vsel %vm7621, %v3674, 0.0
        %7689 = vadd.xlane.f32.xlu0 %v7688
        %v7690 = vpop.xlane.xlu0 %7689
        %v7691 = vsel %vm7621, %v3810, 0.0
        %7692 = vadd.xlane.f32.xlu0 %v7691
        %v7693 = vpop.xlane.xlu0 %7692
        %v7694 = vsel %vm7621, %v3403, 0.0
        %7695 = vadd.xlane.f32.xlu0 %v7694
        %v7696 = vpop.xlane.xlu0 %7695
        %v7697 = vsel %vm7621, %v3539, 0.0
        %7698 = vadd.xlane.f32.xlu0 %v7697
        %v7699 = vpop.xlane.xlu0 %7698
        %v7700 = vsel %vm7621, %v3675, 0.0
        %7701 = vadd.xlane.f32.xlu0 %v7700
        %v7702 = vpop.xlane.xlu0 %7701
        %v7703 = vsel %vm7621, %v3811, 0.0
        %7704 = vadd.xlane.f32.xlu0 %v7703
        %v7705 = vpop.xlane.xlu0 %7704
        %v7706 = vsel %vm7621, %v3404, 0.0
        %7707 = vadd.xlane.f32.xlu0 %v7706
        %v7708 = vpop.xlane.xlu0 %7707
        %v7709 = vsel %vm7621, %v3540, 0.0
        %7710 = vadd.xlane.f32.xlu0 %v7709
        %v7711 = vpop.xlane.xlu0 %7710
        %v7712 = vsel %vm7621, %v3676, 0.0
        %7713 = vadd.xlane.f32.xlu0 %v7712
        %v7714 = vpop.xlane.xlu0 %7713
        %v7715 = vsel %vm7621, %v3812, 0.0
        %7716 = vadd.xlane.f32.xlu0 %v7715
        %v7717 = vpop.xlane.xlu0 %7716
        %v7718 = vsel %vm7621, %v3941, 0.0
        %7719 = vadd.xlane.f32.xlu0 %v7718
        %v7720 = vpop.xlane.xlu0 %7719
        %v7721 = vsel %vm7621, %v4077, 0.0
        %7722 = vadd.xlane.f32.xlu0 %v7721
        %v7723 = vpop.xlane.xlu0 %7722
        %v7724 = vsel %vm7621, %v4213, 0.0
        %7725 = vadd.xlane.f32.xlu0 %v7724
        %v7726 = vpop.xlane.xlu0 %7725
        %v7727 = vsel %vm7621, %v4349, 0.0
        %7728 = vadd.xlane.f32.xlu0 %v7727
        %v7729 = vpop.xlane.xlu0 %7728
        %v7730 = vsel %vm7621, %v3942, 0.0
        %7731 = vadd.xlane.f32.xlu0 %v7730
        %v7732 = vpop.xlane.xlu0 %7731
        %v7733 = vsel %vm7621, %v4078, 0.0
        %7734 = vadd.xlane.f32.xlu0 %v7733
        %v7735 = vpop.xlane.xlu0 %7734
        %v7736 = vsel %vm7621, %v4214, 0.0
        %7737 = vadd.xlane.f32.xlu0 %v7736
        %v7738 = vpop.xlane.xlu0 %7737
        %v7739 = vsel %vm7621, %v4350, 0.0
        %7740 = vadd.xlane.f32.xlu0 %v7739
        %v7741 = vpop.xlane.xlu0 %7740
        %v7742 = vsel %vm7621, %v3943, 0.0
        %7743 = vadd.xlane.f32.xlu0 %v7742
        %v7744 = vpop.xlane.xlu0 %7743
        %v7745 = vsel %vm7621, %v4079, 0.0
        %7746 = vadd.xlane.f32.xlu0 %v7745
        %v7747 = vpop.xlane.xlu0 %7746
        %v7748 = vsel %vm7621, %v4215, 0.0
        %7749 = vadd.xlane.f32.xlu0 %v7748
        %v7750 = vpop.xlane.xlu0 %7749
        %v7751 = vsel %vm7621, %v4351, 0.0
        %7752 = vadd.xlane.f32.xlu0 %v7751
        %v7753 = vpop.xlane.xlu0 %7752
        %v7754 = vsel %vm7621, %v3944, 0.0
        %7755 = vadd.xlane.f32.xlu0 %v7754
        %v7756 = vpop.xlane.xlu0 %7755
        %v7757 = vsel %vm7621, %v4080, 0.0
        %7758 = vadd.xlane.f32.xlu0 %v7757
        %v7759 = vpop.xlane.xlu0 %7758
        %v7760 = vsel %vm7621, %v4216, 0.0
        %7761 = vadd.xlane.f32.xlu0 %v7760
        %v7762 = vpop.xlane.xlu0 %7761
        %v7763 = vsel %vm7621, %v4352, 0.0
        %7764 = vadd.xlane.f32.xlu0 %v7763
        %v7765 = vpop.xlane.xlu0 %7764
        %v7766 = vsel %vm7621, %v3945, 0.0
        %7767 = vadd.xlane.f32.xlu0 %v7766
        %v7768 = vpop.xlane.xlu0 %7767
        %v7769 = vsel %vm7621, %v4081, 0.0
        %7770 = vadd.xlane.f32.xlu0 %v7769
        %v7771 = vpop.xlane.xlu0 %7770
        %v7772 = vsel %vm7621, %v4217, 0.0
        %7773 = vadd.xlane.f32.xlu0 %v7772
        %v7774 = vpop.xlane.xlu0 %7773
        %v7775 = vsel %vm7621, %v4353, 0.0
        %7776 = vadd.xlane.f32.xlu0 %v7775
        %v7777 = vpop.xlane.xlu0 %7776
        %v7778 = vsel %vm7621, %v3946, 0.0
        %7779 = vadd.xlane.f32.xlu0 %v7778
        %v7780 = vpop.xlane.xlu0 %7779
        %v7781 = vsel %vm7621, %v4082, 0.0
        %7782 = vadd.xlane.f32.xlu0 %v7781
        %v7783 = vpop.xlane.xlu0 %7782
        %v7784 = vsel %vm7621, %v4218, 0.0
        %7785 = vadd.xlane.f32.xlu0 %v7784
        %v7786 = vpop.xlane.xlu0 %7785
        %v7787 = vsel %vm7621, %v4354, 0.0
        %7788 = vadd.xlane.f32.xlu0 %v7787
        %v7789 = vpop.xlane.xlu0 %7788
        %v7790 = vsel %vm7621, %v3947, 0.0
        %7791 = vadd.xlane.f32.xlu0 %v7790
        %v7792 = vpop.xlane.xlu0 %7791
        %v7793 = vsel %vm7621, %v4083, 0.0
        %7794 = vadd.xlane.f32.xlu0 %v7793
        %v7795 = vpop.xlane.xlu0 %7794
        %v7796 = vsel %vm7621, %v4219, 0.0
        %7797 = vadd.xlane.f32.xlu0 %v7796
        %v7798 = vpop.xlane.xlu0 %7797
        %v7799 = vsel %vm7621, %v4355, 0.0
        %7800 = vadd.xlane.f32.xlu0 %v7799
        %v7801 = vpop.xlane.xlu0 %7800
        %v7802 = vsel %vm7621, %v3948, 0.0
        %7803 = vadd.xlane.f32.xlu0 %v7802
        %v7804 = vpop.xlane.xlu0 %7803
        %v7805 = vsel %vm7621, %v4084, 0.0
        %7806 = vadd.xlane.f32.xlu0 %v7805
        %v7807 = vpop.xlane.xlu0 %7806
        %v7808 = vsel %vm7621, %v4220, 0.0
        %7809 = vadd.xlane.f32.xlu0 %v7808
        %v7810 = vpop.xlane.xlu0 %7809
        %v7811 = vsel %vm7621, %v4356, 0.0
        %7812 = vadd.xlane.f32.xlu0 %v7811
        %v7813 = vpop.xlane.xlu0 %7812
        %v7814 = vsel %vm7621, %v4485, 0.0
        %7815 = vadd.xlane.f32.xlu0 %v7814
        %v7816 = vpop.xlane.xlu0 %7815
        %v7817 = vsel %vm7621, %v4621, 0.0
        %7818 = vadd.xlane.f32.xlu0 %v7817
        %v7819 = vpop.xlane.xlu0 %7818
        %v7820 = vsel %vm7621, %v4757, 0.0
        %7821 = vadd.xlane.f32.xlu0 %v7820
        %v7822 = vpop.xlane.xlu0 %7821
        %v7823 = vsel %vm7621, %v4893, 0.0
        %7824 = vadd.xlane.f32.xlu0 %v7823
        %v7825 = vpop.xlane.xlu0 %7824
        %v7826 = vsel %vm7621, %v4486, 0.0
        %7827 = vadd.xlane.f32.xlu0 %v7826
        %v7828 = vpop.xlane.xlu0 %7827
        %v7829 = vsel %vm7621, %v4622, 0.0
        %7830 = vadd.xlane.f32.xlu0 %v7829
        %v7831 = vpop.xlane.xlu0 %7830
        %v7832 = vsel %vm7621, %v4758, 0.0
        %7833 = vadd.xlane.f32.xlu0 %v7832
        %v7834 = vpop.xlane.xlu0 %7833
        %v7835 = vsel %vm7621, %v4894, 0.0
        %7836 = vadd.xlane.f32.xlu0 %v7835
        %v7837 = vpop.xlane.xlu0 %7836
        %v7838 = vsel %vm7621, %v4487, 0.0
        %7839 = vadd.xlane.f32.xlu0 %v7838
        %v7840 = vpop.xlane.xlu0 %7839
        %v7841 = vsel %vm7621, %v4623, 0.0
        %7842 = vadd.xlane.f32.xlu0 %v7841
        %v7843 = vpop.xlane.xlu0 %7842
        %v7844 = vsel %vm7621, %v4759, 0.0
        %7845 = vadd.xlane.f32.xlu0 %v7844
        %v7846 = vpop.xlane.xlu0 %7845
        %v7847 = vsel %vm7621, %v4895, 0.0
        %7848 = vadd.xlane.f32.xlu0 %v7847
        %v7849 = vpop.xlane.xlu0 %7848
        %v7850 = vsel %vm7621, %v4488, 0.0
        %7851 = vadd.xlane.f32.xlu0 %v7850
        %v7852 = vpop.xlane.xlu0 %7851
        %v7853 = vsel %vm7621, %v4624, 0.0
        %7854 = vadd.xlane.f32.xlu0 %v7853
        %v7855 = vpop.xlane.xlu0 %7854
        %v7856 = vsel %vm7621, %v4760, 0.0
        %7857 = vadd.xlane.f32.xlu0 %v7856
        %v7858 = vpop.xlane.xlu0 %7857
        %v7859 = vsel %vm7621, %v4896, 0.0
        %7860 = vadd.xlane.f32.xlu0 %v7859
        %v7861 = vpop.xlane.xlu0 %7860
        %v7862 = vsel %vm7621, %v4489, 0.0
        %7863 = vadd.xlane.f32.xlu0 %v7862
        %v7864 = vpop.xlane.xlu0 %7863
        %v7865 = vsel %vm7621, %v4625, 0.0
        %7866 = vadd.xlane.f32.xlu0 %v7865
        %v7867 = vpop.xlane.xlu0 %7866
        %v7868 = vsel %vm7621, %v4761, 0.0
        %7869 = vadd.xlane.f32.xlu0 %v7868
        %v7870 = vpop.xlane.xlu0 %7869
        %v7871 = vsel %vm7621, %v4897, 0.0
        %7872 = vadd.xlane.f32.xlu0 %v7871
        %v7873 = vpop.xlane.xlu0 %7872
        %v7874 = vsel %vm7621, %v4490, 0.0
        %7875 = vadd.xlane.f32.xlu0 %v7874
        %v7876 = vpop.xlane.xlu0 %7875
        %v7877 = vsel %vm7621, %v4626, 0.0
        %7878 = vadd.xlane.f32.xlu0 %v7877
        %v7879 = vpop.xlane.xlu0 %7878
        %v7880 = vsel %vm7621, %v4762, 0.0
        %7881 = vadd.xlane.f32.xlu0 %v7880
        %v7882 = vpop.xlane.xlu0 %7881
        %v7883 = vsel %vm7621, %v4898, 0.0
        %7884 = vadd.xlane.f32.xlu0 %v7883
        %v7885 = vpop.xlane.xlu0 %7884
        %v7886 = vsel %vm7621, %v4491, 0.0
        %7887 = vadd.xlane.f32.xlu0 %v7886
        %v7888 = vpop.xlane.xlu0 %7887
        %v7889 = vsel %vm7621, %v4627, 0.0
        %7890 = vadd.xlane.f32.xlu0 %v7889
        %v7891 = vpop.xlane.xlu0 %7890
        %v7892 = vsel %vm7621, %v4763, 0.0
        %7893 = vadd.xlane.f32.xlu0 %v7892
        %v7894 = vpop.xlane.xlu0 %7893
        %v7895 = vsel %vm7621, %v4899, 0.0
        %7896 = vadd.xlane.f32.xlu0 %v7895
        %v7897 = vpop.xlane.xlu0 %7896
        %v7898 = vsel %vm7621, %v4492, 0.0
        %7899 = vadd.xlane.f32.xlu0 %v7898
        %v7900 = vpop.xlane.xlu0 %7899
        %v7901 = vsel %vm7621, %v4628, 0.0
        %7902 = vadd.xlane.f32.xlu0 %v7901
        %v7903 = vpop.xlane.xlu0 %7902
        %v7904 = vsel %vm7621, %v4764, 0.0
        %7905 = vadd.xlane.f32.xlu0 %v7904
        %v7906 = vpop.xlane.xlu0 %7905
        %v7907 = vsel %vm7621, %v4900, 0.0
        %7908 = vadd.xlane.f32.xlu0 %v7907
        %v7909 = vpop.xlane.xlu0 %7908
        %v7910 = vsel %vm7621, %v5029, 0.0
        %7911 = vadd.xlane.f32.xlu0 %v7910
        %v7912 = vpop.xlane.xlu0 %7911
        %v7913 = vsel %vm7621, %v5165, 0.0
        %7914 = vadd.xlane.f32.xlu0 %v7913
        %v7915 = vpop.xlane.xlu0 %7914
        %v7916 = vsel %vm7621, %v5301, 0.0
        %7917 = vadd.xlane.f32.xlu0 %v7916
        %v7918 = vpop.xlane.xlu0 %7917
        %v7919 = vsel %vm7621, %v5437, 0.0
        %7920 = vadd.xlane.f32.xlu0 %v7919
        %v7921 = vpop.xlane.xlu0 %7920
        %v7922 = vsel %vm7621, %v5030, 0.0
        %7923 = vadd.xlane.f32.xlu0 %v7922
        %v7924 = vpop.xlane.xlu0 %7923
        %v7925 = vsel %vm7621, %v5166, 0.0
        %7926 = vadd.xlane.f32.xlu0 %v7925
        %v7927 = vpop.xlane.xlu0 %7926
        %v7928 = vsel %vm7621, %v5302, 0.0
        %7929 = vadd.xlane.f32.xlu0 %v7928
        %v7930 = vpop.xlane.xlu0 %7929
        %v7931 = vsel %vm7621, %v5438, 0.0
        %7932 = vadd.xlane.f32.xlu0 %v7931
        %v7933 = vpop.xlane.xlu0 %7932
        %v7934 = vsel %vm7621, %v5031, 0.0
        %7935 = vadd.xlane.f32.xlu0 %v7934
        %v7936 = vpop.xlane.xlu0 %7935
        %v7937 = vsel %vm7621, %v5167, 0.0
        %7938 = vadd.xlane.f32.xlu0 %v7937
        %v7939 = vpop.xlane.xlu0 %7938
        %v7940 = vsel %vm7621, %v5303, 0.0
        %7941 = vadd.xlane.f32.xlu0 %v7940
        %v7942 = vpop.xlane.xlu0 %7941
        %v7943 = vsel %vm7621, %v5439, 0.0
        %7944 = vadd.xlane.f32.xlu0 %v7943
        %v7945 = vpop.xlane.xlu0 %7944
        %v7946 = vsel %vm7621, %v5032, 0.0
        %7947 = vadd.xlane.f32.xlu0 %v7946
        %v7948 = vpop.xlane.xlu0 %7947
        %v7949 = vsel %vm7621, %v5168, 0.0
        %7950 = vadd.xlane.f32.xlu0 %v7949
        %v7951 = vpop.xlane.xlu0 %7950
        %v7952 = vsel %vm7621, %v5304, 0.0
        %7953 = vadd.xlane.f32.xlu0 %v7952
        %v7954 = vpop.xlane.xlu0 %7953
        %v7955 = vsel %vm7621, %v5440, 0.0
        %7956 = vadd.xlane.f32.xlu0 %v7955
        %v7957 = vpop.xlane.xlu0 %7956
        %v7958 = vsel %vm7621, %v5033, 0.0
        %7959 = vadd.xlane.f32.xlu0 %v7958
        %v7960 = vpop.xlane.xlu0 %7959
        %v7961 = vsel %vm7621, %v5169, 0.0
        %7962 = vadd.xlane.f32.xlu0 %v7961
        %v7963 = vpop.xlane.xlu0 %7962
        %v7964 = vsel %vm7621, %v5305, 0.0
        %7965 = vadd.xlane.f32.xlu0 %v7964
        %v7966 = vpop.xlane.xlu0 %7965
        %v7967 = vsel %vm7621, %v5441, 0.0
        %7968 = vadd.xlane.f32.xlu0 %v7967
        %v7969 = vpop.xlane.xlu0 %7968
        %v7970 = vsel %vm7621, %v5034, 0.0
        %7971 = vadd.xlane.f32.xlu0 %v7970
        %v7972 = vpop.xlane.xlu0 %7971
        %v7973 = vsel %vm7621, %v5170, 0.0
        %7974 = vadd.xlane.f32.xlu0 %v7973
        %v7975 = vpop.xlane.xlu0 %7974
        %v7976 = vsel %vm7621, %v5306, 0.0
        %7977 = vadd.xlane.f32.xlu0 %v7976
        %v7978 = vpop.xlane.xlu0 %7977
        %v7979 = vsel %vm7621, %v5442, 0.0
        %7980 = vadd.xlane.f32.xlu0 %v7979
        %v7981 = vpop.xlane.xlu0 %7980
        %v7982 = vsel %vm7621, %v5035, 0.0
        %7983 = vadd.xlane.f32.xlu0 %v7982
        %v7984 = vpop.xlane.xlu0 %7983
        %v7985 = vsel %vm7621, %v5171, 0.0
        %7986 = vadd.xlane.f32.xlu0 %v7985
        %v7987 = vpop.xlane.xlu0 %7986
        %v7988 = vsel %vm7621, %v5307, 0.0
        %7989 = vadd.xlane.f32.xlu0 %v7988
        %v7990 = vpop.xlane.xlu0 %7989
        %v7991 = vsel %vm7621, %v5443, 0.0
        %7992 = vadd.xlane.f32.xlu0 %v7991
        %v7993 = vpop.xlane.xlu0 %7992
        %v7994 = vsel %vm7621, %v5036, 0.0
        %7995 = vadd.xlane.f32.xlu0 %v7994
        %v7996 = vpop.xlane.xlu0 %7995
        %v7997 = vsel %vm7621, %v5172, 0.0
        %7998 = vadd.xlane.f32.xlu0 %v7997
        %v7999 = vpop.xlane.xlu0 %7998
        %v8000 = vsel %vm7621, %v5308, 0.0
        %8001 = vadd.xlane.f32.xlu0 %v8000
        %v8002 = vpop.xlane.xlu0 %8001
        %v8003 = vsel %vm7621, %v5444, 0.0
        %8004 = vadd.xlane.f32.xlu0 %v8003
        %v8005 = vpop.xlane.xlu0 %8004
        %v8006 = vsel %vm7621, %v5573, 0.0
        %8007 = vadd.xlane.f32.xlu0 %v8006
        %v8008 = vpop.xlane.xlu0 %8007
        %v8009 = vsel %vm7621, %v5709, 0.0
        %8010 = vadd.xlane.f32.xlu0 %v8009
        %v8011 = vpop.xlane.xlu0 %8010
        %v8012 = vsel %vm7621, %v5845, 0.0
        %8013 = vadd.xlane.f32.xlu0 %v8012
        %v8014 = vpop.xlane.xlu0 %8013
        %v8015 = vsel %vm7621, %v5981, 0.0
        %8016 = vadd.xlane.f32.xlu0 %v8015
        %v8017 = vpop.xlane.xlu0 %8016
        %v8018 = vsel %vm7621, %v5574, 0.0
        %8019 = vadd.xlane.f32.xlu0 %v8018
        %v8020 = vpop.xlane.xlu0 %8019
        %v8021 = vsel %vm7621, %v5710, 0.0
        %8022 = vadd.xlane.f32.xlu0 %v8021
        %v8023 = vpop.xlane.xlu0 %8022
        %v8024 = vsel %vm7621, %v5846, 0.0
        %8025 = vadd.xlane.f32.xlu0 %v8024
        %v8026 = vpop.xlane.xlu0 %8025
        %v8027 = vsel %vm7621, %v5982, 0.0
        %8028 = vadd.xlane.f32.xlu0 %v8027
        %v8029 = vpop.xlane.xlu0 %8028
        %v8030 = vsel %vm7621, %v5575, 0.0
        %8031 = vadd.xlane.f32.xlu0 %v8030
        %v8032 = vpop.xlane.xlu0 %8031
        %v8033 = vsel %vm7621, %v5711, 0.0
        %8034 = vadd.xlane.f32.xlu0 %v8033
        %v8035 = vpop.xlane.xlu0 %8034
        %v8036 = vsel %vm7621, %v5847, 0.0
        %8037 = vadd.xlane.f32.xlu0 %v8036
        %v8038 = vpop.xlane.xlu0 %8037
        %v8039 = vsel %vm7621, %v5983, 0.0
        %8040 = vadd.xlane.f32.xlu0 %v8039
        %v8041 = vpop.xlane.xlu0 %8040
        %v8042 = vsel %vm7621, %v5576, 0.0
        %8043 = vadd.xlane.f32.xlu0 %v8042
        %v8044 = vpop.xlane.xlu0 %8043
        %v8045 = vsel %vm7621, %v5712, 0.0
        %8046 = vadd.xlane.f32.xlu0 %v8045
        %v8047 = vpop.xlane.xlu0 %8046
        %v8048 = vsel %vm7621, %v5848, 0.0
        %8049 = vadd.xlane.f32.xlu0 %v8048
        %v8050 = vpop.xlane.xlu0 %8049
        %v8051 = vsel %vm7621, %v5984, 0.0
        %8052 = vadd.xlane.f32.xlu0 %v8051
        %v8053 = vpop.xlane.xlu0 %8052
        %v8054 = vsel %vm7621, %v5577, 0.0
        %8055 = vadd.xlane.f32.xlu0 %v8054
        %v8056 = vpop.xlane.xlu0 %8055
        %v8057 = vsel %vm7621, %v5713, 0.0
        %8058 = vadd.xlane.f32.xlu0 %v8057
        %v8059 = vpop.xlane.xlu0 %8058
        %v8060 = vsel %vm7621, %v5849, 0.0
        %8061 = vadd.xlane.f32.xlu0 %v8060
        %v8062 = vpop.xlane.xlu0 %8061
        %v8063 = vsel %vm7621, %v5985, 0.0
        %8064 = vadd.xlane.f32.xlu0 %v8063
        %v8065 = vpop.xlane.xlu0 %8064
        %v8066 = vsel %vm7621, %v5578, 0.0
        %8067 = vadd.xlane.f32.xlu0 %v8066
        %v8068 = vpop.xlane.xlu0 %8067
        %v8069 = vsel %vm7621, %v5714, 0.0
        %8070 = vadd.xlane.f32.xlu0 %v8069
        %v8071 = vpop.xlane.xlu0 %8070
        %v8072 = vsel %vm7621, %v5850, 0.0
        %8073 = vadd.xlane.f32.xlu0 %v8072
        %v8074 = vpop.xlane.xlu0 %8073
        %v8075 = vsel %vm7621, %v5986, 0.0
        %8076 = vadd.xlane.f32.xlu0 %v8075
        %v8077 = vpop.xlane.xlu0 %8076
        %v8078 = vsel %vm7621, %v5579, 0.0
        %8079 = vadd.xlane.f32.xlu0 %v8078
        %v8080 = vpop.xlane.xlu0 %8079
        %v8081 = vsel %vm7621, %v5715, 0.0
        %8082 = vadd.xlane.f32.xlu0 %v8081
        %v8083 = vpop.xlane.xlu0 %8082
        %v8084 = vsel %vm7621, %v5851, 0.0
        %8085 = vadd.xlane.f32.xlu0 %v8084
        %v8086 = vpop.xlane.xlu0 %8085
        %v8087 = vsel %vm7621, %v5987, 0.0
        %8088 = vadd.xlane.f32.xlu0 %v8087
        %v8089 = vpop.xlane.xlu0 %8088
        %v8090 = vsel %vm7621, %v5580, 0.0
        %8091 = vadd.xlane.f32.xlu0 %v8090
        %v8092 = vpop.xlane.xlu0 %8091
        %v8093 = vsel %vm7621, %v5716, 0.0
        %8094 = vadd.xlane.f32.xlu0 %v8093
        %v8095 = vpop.xlane.xlu0 %8094
        %v8096 = vsel %vm7621, %v5852, 0.0
        %8097 = vadd.xlane.f32.xlu0 %v8096
        %v8098 = vpop.xlane.xlu0 %8097
        %v8099 = vsel %vm7621, %v5988, 0.0
        %8100 = vadd.xlane.f32.xlu0 %v8099
        %v8101 = vpop.xlane.xlu0 %8100
        %v8102 = vsel %vm7621, %v6117, 0.0
        %8103 = vadd.xlane.f32.xlu0 %v8102
        %v8104 = vpop.xlane.xlu0 %8103
        %v8105 = vsel %vm7621, %v6253, 0.0
        %8106 = vadd.xlane.f32.xlu0 %v8105
        %v8107 = vpop.xlane.xlu0 %8106
        %v8108 = vsel %vm7621, %v6389, 0.0
        %8109 = vadd.xlane.f32.xlu0 %v8108
        %v8110 = vpop.xlane.xlu0 %8109
        %v8111 = vsel %vm7621, %v6525, 0.0
        %8112 = vadd.xlane.f32.xlu0 %v8111
        %v8113 = vpop.xlane.xlu0 %8112
        %v8114 = vsel %vm7621, %v6118, 0.0
        %8115 = vadd.xlane.f32.xlu0 %v8114
        %v8116 = vpop.xlane.xlu0 %8115
        %v8117 = vsel %vm7621, %v6254, 0.0
        %8118 = vadd.xlane.f32.xlu0 %v8117
        %v8119 = vpop.xlane.xlu0 %8118
        %v8120 = vsel %vm7621, %v6390, 0.0
        %8121 = vadd.xlane.f32.xlu0 %v8120
        %v8122 = vpop.xlane.xlu0 %8121
        %v8123 = vsel %vm7621, %v6526, 0.0
        %8124 = vadd.xlane.f32.xlu0 %v8123
        %v8125 = vpop.xlane.xlu0 %8124
        %v8126 = vsel %vm7621, %v6119, 0.0
        %8127 = vadd.xlane.f32.xlu0 %v8126
        %v8128 = vpop.xlane.xlu0 %8127
        %v8129 = vsel %vm7621, %v6255, 0.0
        %8130 = vadd.xlane.f32.xlu0 %v8129
        %v8131 = vpop.xlane.xlu0 %8130
        %v8132 = vsel %vm7621, %v6391, 0.0
        %8133 = vadd.xlane.f32.xlu0 %v8132
        %v8134 = vpop.xlane.xlu0 %8133
        %v8135 = vsel %vm7621, %v6527, 0.0
        %8136 = vadd.xlane.f32.xlu0 %v8135
        %v8137 = vpop.xlane.xlu0 %8136
        %v8138 = vsel %vm7621, %v6120, 0.0
        %8139 = vadd.xlane.f32.xlu0 %v8138
        %v8140 = vpop.xlane.xlu0 %8139
        %v8141 = vsel %vm7621, %v6256, 0.0
        %8142 = vadd.xlane.f32.xlu0 %v8141
        %v8143 = vpop.xlane.xlu0 %8142
        %v8144 = vsel %vm7621, %v6392, 0.0
        %8145 = vadd.xlane.f32.xlu0 %v8144
        %v8146 = vpop.xlane.xlu0 %8145
        %v8147 = vsel %vm7621, %v6528, 0.0
        %8148 = vadd.xlane.f32.xlu0 %v8147
        %v8149 = vpop.xlane.xlu0 %8148
        %v8150 = vsel %vm7621, %v6121, 0.0
        %8151 = vadd.xlane.f32.xlu0 %v8150
        %v8152 = vpop.xlane.xlu0 %8151
        %v8153 = vsel %vm7621, %v6257, 0.0
        %8154 = vadd.xlane.f32.xlu0 %v8153
        %v8155 = vpop.xlane.xlu0 %8154
        %v8156 = vsel %vm7621, %v6393, 0.0
        %8157 = vadd.xlane.f32.xlu0 %v8156
        %v8158 = vpop.xlane.xlu0 %8157
        %v8159 = vsel %vm7621, %v6529, 0.0
        %8160 = vadd.xlane.f32.xlu0 %v8159
        %v8161 = vpop.xlane.xlu0 %8160
        %v8162 = vsel %vm7621, %v6122, 0.0
        %8163 = vadd.xlane.f32.xlu0 %v8162
        %v8164 = vpop.xlane.xlu0 %8163
        %v8165 = vsel %vm7621, %v6258, 0.0
        %8166 = vadd.xlane.f32.xlu0 %v8165
        %v8167 = vpop.xlane.xlu0 %8166
        %v8168 = vsel %vm7621, %v6394, 0.0
        %8169 = vadd.xlane.f32.xlu0 %v8168
        %v8170 = vpop.xlane.xlu0 %8169
        %v8171 = vsel %vm7621, %v6530, 0.0
        %8172 = vadd.xlane.f32.xlu0 %v8171
        %v8173 = vpop.xlane.xlu0 %8172
        %v8174 = vsel %vm7621, %v6123, 0.0
        %8175 = vadd.xlane.f32.xlu0 %v8174
        %v8176 = vpop.xlane.xlu0 %8175
        %v8177 = vsel %vm7621, %v6259, 0.0
        %8178 = vadd.xlane.f32.xlu0 %v8177
        %v8179 = vpop.xlane.xlu0 %8178
        %v8180 = vsel %vm7621, %v6395, 0.0
        %8181 = vadd.xlane.f32.xlu0 %v8180
        %v8182 = vpop.xlane.xlu0 %8181
        %v8183 = vsel %vm7621, %v6531, 0.0
        %8184 = vadd.xlane.f32.xlu0 %v8183
        %v8185 = vpop.xlane.xlu0 %8184
        %v8186 = vsel %vm7621, %v6124, 0.0
        %8187 = vadd.xlane.f32.xlu0 %v8186
        %v8188 = vpop.xlane.xlu0 %8187
        %v8189 = vsel %vm7621, %v6260, 0.0
        %8190 = vadd.xlane.f32.xlu0 %v8189
        %v8191 = vpop.xlane.xlu0 %8190
        %v8192 = vsel %vm7621, %v6396, 0.0
        %8193 = vadd.xlane.f32.xlu0 %v8192
        %v8194 = vpop.xlane.xlu0 %8193
        %v8195 = vsel %vm7621, %v6532, 0.0
        %8196 = vadd.xlane.f32.xlu0 %v8195
        %v8197 = vpop.xlane.xlu0 %8196
        %v8198 = vsel %vm7621, %v6661, 0.0
        %8199 = vadd.xlane.f32.xlu0 %v8198
        %v8200 = vpop.xlane.xlu0 %8199
        %v8201 = vsel %vm7621, %v6797, 0.0
        %8202 = vadd.xlane.f32.xlu0 %v8201
        %v8203 = vpop.xlane.xlu0 %8202
        %v8204 = vsel %vm7621, %v6933, 0.0
        %8205 = vadd.xlane.f32.xlu0 %v8204
        %v8206 = vpop.xlane.xlu0 %8205
        %v8207 = vsel %vm7621, %v7069, 0.0
        %8208 = vadd.xlane.f32.xlu0 %v8207
        %v8209 = vpop.xlane.xlu0 %8208
        %v8210 = vsel %vm7621, %v6662, 0.0
        %8211 = vadd.xlane.f32.xlu0 %v8210
        %v8212 = vpop.xlane.xlu0 %8211
        %v8213 = vsel %vm7621, %v6798, 0.0
        %8214 = vadd.xlane.f32.xlu0 %v8213
        %v8215 = vpop.xlane.xlu0 %8214
        %v8216 = vsel %vm7621, %v6934, 0.0
        %8217 = vadd.xlane.f32.xlu0 %v8216
        %v8218 = vpop.xlane.xlu0 %8217
        %v8219 = vsel %vm7621, %v7070, 0.0
        %8220 = vadd.xlane.f32.xlu0 %v8219
        %v8221 = vpop.xlane.xlu0 %8220
        %v8222 = vsel %vm7621, %v6663, 0.0
        %8223 = vadd.xlane.f32.xlu0 %v8222
        %v8224 = vpop.xlane.xlu0 %8223
        %v8225 = vsel %vm7621, %v6799, 0.0
        %8226 = vadd.xlane.f32.xlu0 %v8225
        %v8227 = vpop.xlane.xlu0 %8226
        %v8228 = vsel %vm7621, %v6935, 0.0
        %8229 = vadd.xlane.f32.xlu0 %v8228
        %v8230 = vpop.xlane.xlu0 %8229
        %v8231 = vsel %vm7621, %v7071, 0.0
        %8232 = vadd.xlane.f32.xlu0 %v8231
        %v8233 = vpop.xlane.xlu0 %8232
        %v8234 = vsel %vm7621, %v6664, 0.0
        %8235 = vadd.xlane.f32.xlu0 %v8234
        %v8236 = vpop.xlane.xlu0 %8235
        %v8237 = vsel %vm7621, %v6800, 0.0
        %8238 = vadd.xlane.f32.xlu0 %v8237
        %v8239 = vpop.xlane.xlu0 %8238
        %v8240 = vsel %vm7621, %v6936, 0.0
        %8241 = vadd.xlane.f32.xlu0 %v8240
        %v8242 = vpop.xlane.xlu0 %8241
        %v8243 = vsel %vm7621, %v7072, 0.0
        %8244 = vadd.xlane.f32.xlu0 %v8243
        %v8245 = vpop.xlane.xlu0 %8244
        %v8246 = vsel %vm7621, %v6665, 0.0
        %8247 = vadd.xlane.f32.xlu0 %v8246
        %v8248 = vpop.xlane.xlu0 %8247
        %v8249 = vsel %vm7621, %v6801, 0.0
        %8250 = vadd.xlane.f32.xlu0 %v8249
        %v8251 = vpop.xlane.xlu0 %8250
        %v8252 = vsel %vm7621, %v6937, 0.0
        %8253 = vadd.xlane.f32.xlu0 %v8252
        %v8254 = vpop.xlane.xlu0 %8253
        %v8255 = vsel %vm7621, %v7073, 0.0
        %8256 = vadd.xlane.f32.xlu0 %v8255
        %v8257 = vpop.xlane.xlu0 %8256
        %v8258 = vsel %vm7621, %v6666, 0.0
        %8259 = vadd.xlane.f32.xlu0 %v8258
        %v8260 = vpop.xlane.xlu0 %8259
        %v8261 = vsel %vm7621, %v6802, 0.0
        %8262 = vadd.xlane.f32.xlu0 %v8261
        %v8263 = vpop.xlane.xlu0 %8262
        %v8264 = vsel %vm7621, %v6938, 0.0
        %8265 = vadd.xlane.f32.xlu0 %v8264
        %v8266 = vpop.xlane.xlu0 %8265
        %v8267 = vsel %vm7621, %v7074, 0.0
        %8268 = vadd.xlane.f32.xlu0 %v8267
        %v8269 = vpop.xlane.xlu0 %8268
        %v8270 = vsel %vm7621, %v6667, 0.0
        %8271 = vadd.xlane.f32.xlu0 %v8270
        %v8272 = vpop.xlane.xlu0 %8271
        %v8273 = vsel %vm7621, %v6803, 0.0
        %8274 = vadd.xlane.f32.xlu0 %v8273
        %v8275 = vpop.xlane.xlu0 %8274
        %v8276 = vsel %vm7621, %v6939, 0.0
        %8277 = vadd.xlane.f32.xlu0 %v8276
        %v8278 = vpop.xlane.xlu0 %8277
        %v8279 = vsel %vm7621, %v7075, 0.0
        %8280 = vadd.xlane.f32.xlu0 %v8279
        %v8281 = vpop.xlane.xlu0 %8280
        %v8282 = vsel %vm7621, %v6668, 0.0
        %8283 = vadd.xlane.f32.xlu0 %v8282
        %v8284 = vpop.xlane.xlu0 %8283
        %v8285 = vsel %vm7621, %v6804, 0.0
        %8286 = vadd.xlane.f32.xlu0 %v8285
        %v8287 = vpop.xlane.xlu0 %8286
        %v8288 = vsel %vm7621, %v6940, 0.0
        %8289 = vadd.xlane.f32.xlu0 %v8288
        %v8290 = vpop.xlane.xlu0 %8289
        %v8291 = vsel %vm7621, %v7076, 0.0
        %8292 = vadd.xlane.f32.xlu0 %v8291
        %v8293 = vpop.xlane.xlu0 %8292
        %v8294 = vsel %vm7621, %v7205, 0.0
        %8295 = vadd.xlane.f32.xlu0 %v8294
        %v8296 = vpop.xlane.xlu0 %8295
        %v8297 = vsel %vm7621, %v7341, 0.0
        %8298 = vadd.xlane.f32.xlu0 %v8297
        %v8299 = vpop.xlane.xlu0 %8298
        %v8300 = vsel %vm7621, %v7477, 0.0
        %8301 = vadd.xlane.f32.xlu0 %v8300
        %v8302 = vpop.xlane.xlu0 %8301
        %v8303 = vsel %vm7621, %v7613, 0.0
        %8304 = vadd.xlane.f32.xlu0 %v8303
        %v8305 = vpop.xlane.xlu0 %8304
        %v8306 = vsel %vm7621, %v7206, 0.0
        %8307 = vadd.xlane.f32.xlu0 %v8306
        %v8308 = vpop.xlane.xlu0 %8307
        %v8309 = vsel %vm7621, %v7342, 0.0
        %8310 = vadd.xlane.f32.xlu0 %v8309
        %v8311 = vpop.xlane.xlu0 %8310
        %v8312 = vsel %vm7621, %v7478, 0.0
        %8313 = vadd.xlane.f32.xlu0 %v8312
        %v8314 = vpop.xlane.xlu0 %8313
        %v8315 = vsel %vm7621, %v7614, 0.0
        %8316 = vadd.xlane.f32.xlu0 %v8315
        %v8317 = vpop.xlane.xlu0 %8316
        %v8318 = vsel %vm7621, %v7207, 0.0
        %8319 = vadd.xlane.f32.xlu0 %v8318
        %v8320 = vpop.xlane.xlu0 %8319
        %v8321 = vsel %vm7621, %v7343, 0.0
        %8322 = vadd.xlane.f32.xlu0 %v8321
        %v8323 = vpop.xlane.xlu0 %8322
        %v8324 = vsel %vm7621, %v7479, 0.0
        %8325 = vadd.xlane.f32.xlu0 %v8324
        %v8326 = vpop.xlane.xlu0 %8325
        %v8327 = vsel %vm7621, %v7615, 0.0
        %8328 = vadd.xlane.f32.xlu0 %v8327
        %v8329 = vpop.xlane.xlu0 %8328
        %v8330 = vsel %vm7621, %v7208, 0.0
        %8331 = vadd.xlane.f32.xlu0 %v8330
        %v8332 = vpop.xlane.xlu0 %8331
        %v8333 = vsel %vm7621, %v7344, 0.0
        %8334 = vadd.xlane.f32.xlu0 %v8333
        %v8335 = vpop.xlane.xlu0 %8334
        %v8336 = vsel %vm7621, %v7480, 0.0
        %8337 = vadd.xlane.f32.xlu0 %v8336
        %v8338 = vpop.xlane.xlu0 %8337
        %v8339 = vsel %vm7621, %v7616, 0.0
        %8340 = vadd.xlane.f32.xlu0 %v8339
        %v8341 = vpop.xlane.xlu0 %8340
        %v8342 = vsel %vm7621, %v7209, 0.0
        %8343 = vadd.xlane.f32.xlu0 %v8342
        %v8344 = vpop.xlane.xlu0 %8343
        %v8345 = vsel %vm7621, %v7345, 0.0
        %8346 = vadd.xlane.f32.xlu0 %v8345
        %v8347 = vpop.xlane.xlu0 %8346
        %v8348 = vsel %vm7621, %v7481, 0.0
        %8349 = vadd.xlane.f32.xlu0 %v8348
        %v8350 = vpop.xlane.xlu0 %8349
        %v8351 = vsel %vm7621, %v7617, 0.0
        %8352 = vadd.xlane.f32.xlu0 %v8351
        %v8353 = vpop.xlane.xlu0 %8352
        %v8354 = vsel %vm7621, %v7210, 0.0
        %8355 = vadd.xlane.f32.xlu0 %v8354
        %v8356 = vpop.xlane.xlu0 %8355
        %v8357 = vsel %vm7621, %v7346, 0.0
        %8358 = vadd.xlane.f32.xlu0 %v8357
        %v8359 = vpop.xlane.xlu0 %8358
        %v8360 = vsel %vm7621, %v7482, 0.0
        %8361 = vadd.xlane.f32.xlu0 %v8360
        %v8362 = vpop.xlane.xlu0 %8361
        %v8363 = vsel %vm7621, %v7618, 0.0
        %8364 = vadd.xlane.f32.xlu0 %v8363
        %v8365 = vpop.xlane.xlu0 %8364
        %v8366 = vsel %vm7621, %v7211, 0.0
        %8367 = vadd.xlane.f32.xlu0 %v8366
        %v8368 = vpop.xlane.xlu0 %8367
        %v8369 = vsel %vm7621, %v7347, 0.0
        %8370 = vadd.xlane.f32.xlu0 %v8369
        %v8371 = vpop.xlane.xlu0 %8370
        %v8372 = vsel %vm7621, %v7483, 0.0
        %8373 = vadd.xlane.f32.xlu0 %v8372
        %v8374 = vpop.xlane.xlu0 %8373
        %v8375 = vsel %vm7621, %v7619, 0.0
        %8376 = vadd.xlane.f32.xlu0 %v8375
        %v8377 = vpop.xlane.xlu0 %8376
        %v8378 = vsel %vm7621, %v7212, 0.0
        %8379 = vadd.xlane.f32.xlu0 %v8378
        %v8380 = vpop.xlane.xlu0 %8379
        %v8381 = vsel %vm7621, %v7348, 0.0
        %8382 = vadd.xlane.f32.xlu0 %v8381
        %v8383 = vpop.xlane.xlu0 %8382
        %v8384 = vsel %vm7621, %v7484, 0.0
        %8385 = vadd.xlane.f32.xlu0 %v8384
        %v8386 = vpop.xlane.xlu0 %8385
        %v8387 = vsel %vm7621, %v7620, 0.0
        %8388 = vadd.xlane.f32.xlu0 %v8387
        %v8389 = vpop.xlane.xlu0 %8388
        %v8390 = vrcp.pop 4.0
        %v8391 = vmul.f32 %v7624, %v8390
        %v8392 = vmul.f32 %v7627, %v8390
        %v8393 = vmul.f32 %v7630, %v8390
        %v8394 = vmul.f32 %v7633, %v8390
        %v8395 = vmul.f32 %v7636, %v8390
        %v8396 = vmul.f32 %v7639, %v8390
        %v8397 = vmul.f32 %v7642, %v8390
        %v8398 = vmul.f32 %v7645, %v8390
        %v8399 = vmul.f32 %v7648, %v8390
        %v8400 = vmul.f32 %v7651, %v8390
        %v8401 = vmul.f32 %v7654, %v8390
        %v8402 = vmul.f32 %v7657, %v8390
        %v8403 = vmul.f32 %v7660, %v8390
        %v8404 = vmul.f32 %v7663, %v8390
        %v8405 = vmul.f32 %v7666, %v8390
        %v8406 = vmul.f32 %v7669, %v8390
        %v8407 = vmul.f32 %v7672, %v8390
        %v8408 = vmul.f32 %v7675, %v8390
        %v8409 = vmul.f32 %v7678, %v8390
        %v8410 = vmul.f32 %v7681, %v8390
        %v8411 = vmul.f32 %v7684, %v8390
        %v8412 = vmul.f32 %v7687, %v8390
        %v8413 = vmul.f32 %v7690, %v8390
        %v8414 = vmul.f32 %v7693, %v8390
        %v8415 = vmul.f32 %v7696, %v8390
        %v8416 = vmul.f32 %v7699, %v8390
        %v8417 = vmul.f32 %v7702, %v8390
        %v8418 = vmul.f32 %v7705, %v8390
        %v8419 = vmul.f32 %v7708, %v8390
        %v8420 = vmul.f32 %v7711, %v8390
        %v8421 = vmul.f32 %v7714, %v8390
        %v8422 = vmul.f32 %v7717, %v8390
        %v8423 = vmul.f32 %v7720, %v8390
        %v8424 = vmul.f32 %v7723, %v8390
        %v8425 = vmul.f32 %v7726, %v8390
        %v8426 = vmul.f32 %v7729, %v8390
        %v8427 = vmul.f32 %v7732, %v8390
        %v8428 = vmul.f32 %v7735, %v8390
        %v8429 = vmul.f32 %v7738, %v8390
        %v8430 = vmul.f32 %v7741, %v8390
        %v8431 = vmul.f32 %v7744, %v8390
        %v8432 = vmul.f32 %v7747, %v8390
        %v8433 = vmul.f32 %v7750, %v8390
        %v8434 = vmul.f32 %v7753, %v8390
        %v8435 = vmul.f32 %v7756, %v8390
        %v8436 = vmul.f32 %v7759, %v8390
        %v8437 = vmul.f32 %v7762, %v8390
        %v8438 = vmul.f32 %v7765, %v8390
        %v8439 = vmul.f32 %v7768, %v8390
        %v8440 = vmul.f32 %v7771, %v8390
        %v8441 = vmul.f32 %v7774, %v8390
        %v8442 = vmul.f32 %v7777, %v8390
        %v8443 = vmul.f32 %v7780, %v8390
        %v8444 = vmul.f32 %v7783, %v8390
        %v8445 = vmul.f32 %v7786, %v8390
        %v8446 = vmul.f32 %v7789, %v8390
        %v8447 = vmul.f32 %v7792, %v8390
        %v8448 = vmul.f32 %v7795, %v8390
        %v8449 = vmul.f32 %v7798, %v8390
        %v8450 = vmul.f32 %v7801, %v8390
        %v8451 = vmul.f32 %v7804, %v8390
        %v8452 = vmul.f32 %v7807, %v8390
        %v8453 = vmul.f32 %v7810, %v8390
        %v8454 = vmul.f32 %v7813, %v8390
        %v8455 = vmul.f32 %v7816, %v8390
        %v8456 = vmul.f32 %v7819, %v8390
        %v8457 = vmul.f32 %v7822, %v8390
        %v8458 = vmul.f32 %v7825, %v8390
        %v8459 = vmul.f32 %v7828, %v8390
        %v8460 = vmul.f32 %v7831, %v8390
        %v8461 = vmul.f32 %v7834, %v8390
        %v8462 = vmul.f32 %v7837, %v8390
        %v8463 = vmul.f32 %v7840, %v8390
        %v8464 = vmul.f32 %v7843, %v8390
        %v8465 = vmul.f32 %v7846, %v8390
        %v8466 = vmul.f32 %v7849, %v8390
        %v8467 = vmul.f32 %v7852, %v8390
        %v8468 = vmul.f32 %v7855, %v8390
        %v8469 = vmul.f32 %v7858, %v8390
        %v8470 = vmul.f32 %v7861, %v8390
        %v8471 = vmul.f32 %v7864, %v8390
        %v8472 = vmul.f32 %v7867, %v8390
        %v8473 = vmul.f32 %v7870, %v8390
        %v8474 = vmul.f32 %v7873, %v8390
        %v8475 = vmul.f32 %v7876, %v8390
        %v8476 = vmul.f32 %v7879, %v8390
        %v8477 = vmul.f32 %v7882, %v8390
        %v8478 = vmul.f32 %v7885, %v8390
        %v8479 = vmul.f32 %v7888, %v8390
        %v8480 = vmul.f32 %v7891, %v8390
        %v8481 = vmul.f32 %v7894, %v8390
        %v8482 = vmul.f32 %v7897, %v8390
        %v8483 = vmul.f32 %v7900, %v8390
        %v8484 = vmul.f32 %v7903, %v8390
        %v8485 = vmul.f32 %v7906, %v8390
        %v8486 = vmul.f32 %v7909, %v8390
        %v8487 = vmul.f32 %v7912, %v8390
        %v8488 = vmul.f32 %v7915, %v8390
        %v8489 = vmul.f32 %v7918, %v8390
        %v8490 = vmul.f32 %v7921, %v8390
        %v8491 = vmul.f32 %v7924, %v8390
        %v8492 = vmul.f32 %v7927, %v8390
        %v8493 = vmul.f32 %v7930, %v8390
        %v8494 = vmul.f32 %v7933, %v8390
        %v8495 = vmul.f32 %v7936, %v8390
        %v8496 = vmul.f32 %v7939, %v8390
        %v8497 = vmul.f32 %v7942, %v8390
        %v8498 = vmul.f32 %v7945, %v8390
        %v8499 = vmul.f32 %v7948, %v8390
        %v8500 = vmul.f32 %v7951, %v8390
        %v8501 = vmul.f32 %v7954, %v8390
        %v8502 = vmul.f32 %v7957, %v8390
        %v8503 = vmul.f32 %v7960, %v8390
        %v8504 = vmul.f32 %v7963, %v8390
        %v8505 = vmul.f32 %v7966, %v8390
        %v8506 = vmul.f32 %v7969, %v8390
        %v8507 = vmul.f32 %v7972, %v8390
        %v8508 = vmul.f32 %v7975, %v8390
        %v8509 = vmul.f32 %v7978, %v8390
        %v8510 = vmul.f32 %v7981, %v8390
        %v8511 = vmul.f32 %v7984, %v8390
        %v8512 = vmul.f32 %v7987, %v8390
        %v8513 = vmul.f32 %v7990, %v8390
        %v8514 = vmul.f32 %v7993, %v8390
        %v8515 = vmul.f32 %v7996, %v8390
        %v8516 = vmul.f32 %v7999, %v8390
        %v8517 = vmul.f32 %v8002, %v8390
        %v8518 = vmul.f32 %v8005, %v8390
        %v8519 = vmul.f32 %v8008, %v8390
        %v8520 = vmul.f32 %v8011, %v8390
        %v8521 = vmul.f32 %v8014, %v8390
        %v8522 = vmul.f32 %v8017, %v8390
        %v8523 = vmul.f32 %v8020, %v8390
        %v8524 = vmul.f32 %v8023, %v8390
        %v8525 = vmul.f32 %v8026, %v8390
        %v8526 = vmul.f32 %v8029, %v8390
        %v8527 = vmul.f32 %v8032, %v8390
        %v8528 = vmul.f32 %v8035, %v8390
        %v8529 = vmul.f32 %v8038, %v8390
        %v8530 = vmul.f32 %v8041, %v8390
        %v8531 = vmul.f32 %v8044, %v8390
        %v8532 = vmul.f32 %v8047, %v8390
        %v8533 = vmul.f32 %v8050, %v8390
        %v8534 = vmul.f32 %v8053, %v8390
        %v8535 = vmul.f32 %v8056, %v8390
        %v8536 = vmul.f32 %v8059, %v8390
        %v8537 = vmul.f32 %v8062, %v8390
        %v8538 = vmul.f32 %v8065, %v8390
        %v8539 = vmul.f32 %v8068, %v8390
        %v8540 = vmul.f32 %v8071, %v8390
        %v8541 = vmul.f32 %v8074, %v8390
        %v8542 = vmul.f32 %v8077, %v8390
        %v8543 = vmul.f32 %v8080, %v8390
        %v8544 = vmul.f32 %v8083, %v8390
        %v8545 = vmul.f32 %v8086, %v8390
        %v8546 = vmul.f32 %v8089, %v8390
        %v8547 = vmul.f32 %v8092, %v8390
        %v8548 = vmul.f32 %v8095, %v8390
        %v8549 = vmul.f32 %v8098, %v8390
        %v8550 = vmul.f32 %v8101, %v8390
        %v8551 = vmul.f32 %v8104, %v8390
        %v8552 = vmul.f32 %v8107, %v8390
        %v8553 = vmul.f32 %v8110, %v8390
        %v8554 = vmul.f32 %v8113, %v8390
        %v8555 = vmul.f32 %v8116, %v8390
        %v8556 = vmul.f32 %v8119, %v8390
        %v8557 = vmul.f32 %v8122, %v8390
        %v8558 = vmul.f32 %v8125, %v8390
        %v8559 = vmul.f32 %v8128, %v8390
        %v8560 = vmul.f32 %v8131, %v8390
        %v8561 = vmul.f32 %v8134, %v8390
        %v8562 = vmul.f32 %v8137, %v8390
        %v8563 = vmul.f32 %v8140, %v8390
        %v8564 = vmul.f32 %v8143, %v8390
        %v8565 = vmul.f32 %v8146, %v8390
        %v8566 = vmul.f32 %v8149, %v8390
        %v8567 = vmul.f32 %v8152, %v8390
        %v8568 = vmul.f32 %v8155, %v8390
        %v8569 = vmul.f32 %v8158, %v8390
        %v8570 = vmul.f32 %v8161, %v8390
        %v8571 = vmul.f32 %v8164, %v8390
        %v8572 = vmul.f32 %v8167, %v8390
        %v8573 = vmul.f32 %v8170, %v8390
        %v8574 = vmul.f32 %v8173, %v8390
        %v8575 = vmul.f32 %v8176, %v8390
        %v8576 = vmul.f32 %v8179, %v8390
        %v8577 = vmul.f32 %v8182, %v8390
        %v8578 = vmul.f32 %v8185, %v8390
        %v8579 = vmul.f32 %v8188, %v8390
        %v8580 = vmul.f32 %v8191, %v8390
        %v8581 = vmul.f32 %v8194, %v8390
        %v8582 = vmul.f32 %v8197, %v8390
        %v8583 = vmul.f32 %v8200, %v8390
        %v8584 = vmul.f32 %v8203, %v8390
        %v8585 = vmul.f32 %v8206, %v8390
        %v8586 = vmul.f32 %v8209, %v8390
        %v8587 = vmul.f32 %v8212, %v8390
        %v8588 = vmul.f32 %v8215, %v8390
        %v8589 = vmul.f32 %v8218, %v8390
        %v8590 = vmul.f32 %v8221, %v8390
        %v8591 = vmul.f32 %v8224, %v8390
        %v8592 = vmul.f32 %v8227, %v8390
        %v8593 = vmul.f32 %v8230, %v8390
        %v8594 = vmul.f32 %v8233, %v8390
        %v8595 = vmul.f32 %v8236, %v8390
        %v8596 = vmul.f32 %v8239, %v8390
        %v8597 = vmul.f32 %v8242, %v8390
        %v8598 = vmul.f32 %v8245, %v8390
        %v8599 = vmul.f32 %v8248, %v8390
        %v8600 = vmul.f32 %v8251, %v8390
        %v8601 = vmul.f32 %v8254, %v8390
        %v8602 = vmul.f32 %v8257, %v8390
        %v8603 = vmul.f32 %v8260, %v8390
        %v8604 = vmul.f32 %v8263, %v8390
        %v8605 = vmul.f32 %v8266, %v8390
        %v8606 = vmul.f32 %v8269, %v8390
        %v8607 = vmul.f32 %v8272, %v8390
        %v8608 = vmul.f32 %v8275, %v8390
        %v8609 = vmul.f32 %v8278, %v8390
        %v8610 = vmul.f32 %v8281, %v8390
        %v8611 = vmul.f32 %v8284, %v8390
        %v8612 = vmul.f32 %v8287, %v8390
        %v8613 = vmul.f32 %v8290, %v8390
        %v8614 = vmul.f32 %v8293, %v8390
        %v8615 = vmul.f32 %v8296, %v8390
        %v8616 = vmul.f32 %v8299, %v8390
        %v8617 = vmul.f32 %v8302, %v8390
        %v8618 = vmul.f32 %v8305, %v8390
        %v8619 = vmul.f32 %v8308, %v8390
        %v8620 = vmul.f32 %v8311, %v8390
        %v8621 = vmul.f32 %v8314, %v8390
        %v8622 = vmul.f32 %v8317, %v8390
        %v8623 = vmul.f32 %v8320, %v8390
        %v8624 = vmul.f32 %v8323, %v8390
        %v8625 = vmul.f32 %v8326, %v8390
        %v8626 = vmul.f32 %v8329, %v8390
        %v8627 = vmul.f32 %v8332, %v8390
        %v8628 = vmul.f32 %v8335, %v8390
        %v8629 = vmul.f32 %v8338, %v8390
        %v8630 = vmul.f32 %v8341, %v8390
        %v8631 = vmul.f32 %v8344, %v8390
        %v8632 = vmul.f32 %v8347, %v8390
        %v8633 = vmul.f32 %v8350, %v8390
        %v8634 = vmul.f32 %v8353, %v8390
        %v8635 = vmul.f32 %v8356, %v8390
        %v8636 = vmul.f32 %v8359, %v8390
        %v8637 = vmul.f32 %v8362, %v8390
        %v8638 = vmul.f32 %v8365, %v8390
        %v8639 = vmul.f32 %v8368, %v8390
        %v8640 = vmul.f32 %v8371, %v8390
        %v8641 = vmul.f32 %v8374, %v8390
        %v8642 = vmul.f32 %v8377, %v8390
        %v8643 = vmul.f32 %v8380, %v8390
        %v8644 = vmul.f32 %v8383, %v8390
        %v8645 = vmul.f32 %v8386, %v8390
        %v8646 = vmul.f32 %v8389, %v8390
        %v8903 = vlaneseq
        %v8904 = vand.u32 %v8903, 127
        %v8905 = vlaneseq
        %v8906 = vshrl.u32 %v8905, 7
        %v8907 = vsub.s32 %v8904, %v8906
        %v8908 = vrot.slane %v8391, %v8907
        %v8909 = vadd.s32 %v8904, 4294967288
        %v8910 = vlaneseq
        %v8911 = vshrl.u32 %v8910, 7
        %v8912 = vsub.s32 %v8909, %v8911
        %v8913 = vrot.slane %v8392, %v8912
        %vm8914 = vcmask 130112
        %v8915 = vsel %vm8914, %v8913, %v8908
        %v8916 = vadd.s32 %v8904, 4294967280
        %v8917 = vlaneseq
        %v8918 = vshrl.u32 %v8917, 7
        %v8919 = vsub.s32 %v8916, %v8918
        %v8920 = vrot.slane %v8393, %v8919
        %vm8921 = vcmask 195712
        %v8922 = vsel %vm8921, %v8920, %v8915
        %v8923 = vadd.s32 %v8904, 4294967272
        %v8924 = vlaneseq
        %v8925 = vshrl.u32 %v8924, 7
        %v8926 = vsub.s32 %v8923, %v8925
        %v8927 = vrot.slane %v8394, %v8926
        %vm8928 = vcmask 261312
        %v8929 = vsel %vm8928, %v8927, %v8922
        %v8930 = vlaneseq
        %v8931 = vshrl.u32 %v8930, 7
        %v8932 = vsub.s32 %v8904, %v8931
        %v8933 = vrot.slane %v8395, %v8932
        %v8934 = vlaneseq
        %v8935 = vshrl.u32 %v8934, 7
        %v8936 = vsub.s32 %v8909, %v8935
        %v8937 = vrot.slane %v8396, %v8936
        %v8938 = vsel %vm8914, %v8937, %v8933
        %v8939 = vlaneseq
        %v8940 = vshrl.u32 %v8939, 7
        %v8941 = vsub.s32 %v8916, %v8940
        %v8942 = vrot.slane %v8397, %v8941
        %v8943 = vsel %vm8921, %v8942, %v8938
        %v8944 = vlaneseq
        %v8945 = vshrl.u32 %v8944, 7
        %v8946 = vsub.s32 %v8923, %v8945
        %v8947 = vrot.slane %v8398, %v8946
        %v8948 = vsel %vm8928, %v8947, %v8943
        %v8949 = vlaneseq
        %v8950 = vshrl.u32 %v8949, 7
        %v8951 = vsub.s32 %v8904, %v8950
        %v8952 = vrot.slane %v8399, %v8951
        %v8953 = vlaneseq
        %v8954 = vshrl.u32 %v8953, 7
        %v8955 = vsub.s32 %v8909, %v8954
        %v8956 = vrot.slane %v8400, %v8955
        %v8957 = vsel %vm8914, %v8956, %v8952
        %v8958 = vlaneseq
        %v8959 = vshrl.u32 %v8958, 7
        %v8960 = vsub.s32 %v8916, %v8959
        %v8961 = vrot.slane %v8401, %v8960
        %v8962 = vsel %vm8921, %v8961, %v8957
        %v8963 = vlaneseq
        %v8964 = vshrl.u32 %v8963, 7
        %v8965 = vsub.s32 %v8923, %v8964
        %v8966 = vrot.slane %v8402, %v8965
        %v8967 = vsel %vm8928, %v8966, %v8962
        %v8968 = vlaneseq
        %v8969 = vshrl.u32 %v8968, 7
        %v8970 = vsub.s32 %v8904, %v8969
        %v8971 = vrot.slane %v8403, %v8970
        %v8972 = vlaneseq
        %v8973 = vshrl.u32 %v8972, 7
        %v8974 = vsub.s32 %v8909, %v8973
        %v8975 = vrot.slane %v8404, %v8974
        %v8976 = vsel %vm8914, %v8975, %v8971
        %v8977 = vlaneseq
        %v8978 = vshrl.u32 %v8977, 7
        %v8979 = vsub.s32 %v8916, %v8978
        %v8980 = vrot.slane %v8405, %v8979
        %v8981 = vsel %vm8921, %v8980, %v8976
        %v8982 = vlaneseq
        %v8983 = vshrl.u32 %v8982, 7
        %v8984 = vsub.s32 %v8923, %v8983
        %v8985 = vrot.slane %v8406, %v8984
        %v8986 = vsel %vm8928, %v8985, %v8981
        %v8987 = vlaneseq
        %v8988 = vshrl.u32 %v8987, 7
        %v8989 = vsub.s32 %v8904, %v8988
        %v8990 = vrot.slane %v8407, %v8989
        %v8991 = vlaneseq
        %v8992 = vshrl.u32 %v8991, 7
        %v8993 = vsub.s32 %v8909, %v8992
        %v8994 = vrot.slane %v8408, %v8993
        %v8995 = vsel %vm8914, %v8994, %v8990
        %v8996 = vlaneseq
        %v8997 = vshrl.u32 %v8996, 7
        %v8998 = vsub.s32 %v8916, %v8997
        %v8999 = vrot.slane %v8409, %v8998
        %v9000 = vsel %vm8921, %v8999, %v8995
        %v9001 = vlaneseq
        %v9002 = vshrl.u32 %v9001, 7
        %v9003 = vsub.s32 %v8923, %v9002
        %v9004 = vrot.slane %v8410, %v9003
        %v9005 = vsel %vm8928, %v9004, %v9000
        %v9006 = vlaneseq
        %v9007 = vshrl.u32 %v9006, 7
        %v9008 = vsub.s32 %v8904, %v9007
        %v9009 = vrot.slane %v8411, %v9008
        %v9010 = vlaneseq
        %v9011 = vshrl.u32 %v9010, 7
        %v9012 = vsub.s32 %v8909, %v9011
        %v9013 = vrot.slane %v8412, %v9012
        %v9014 = vsel %vm8914, %v9013, %v9009
        %v9015 = vlaneseq
        %v9016 = vshrl.u32 %v9015, 7
        %v9017 = vsub.s32 %v8916, %v9016
        %v9018 = vrot.slane %v8413, %v9017
        %v9019 = vsel %vm8921, %v9018, %v9014
        %v9020 = vlaneseq
        %v9021 = vshrl.u32 %v9020, 7
        %v9022 = vsub.s32 %v8923, %v9021
        %v9023 = vrot.slane %v8414, %v9022
        %v9024 = vsel %vm8928, %v9023, %v9019
        %v9025 = vlaneseq
        %v9026 = vshrl.u32 %v9025, 7
        %v9027 = vsub.s32 %v8904, %v9026
        %v9028 = vrot.slane %v8415, %v9027
        %v9029 = vlaneseq
        %v9030 = vshrl.u32 %v9029, 7
        %v9031 = vsub.s32 %v8909, %v9030
        %v9032 = vrot.slane %v8416, %v9031
        %v9033 = vsel %vm8914, %v9032, %v9028
        %v9034 = vlaneseq
        %v9035 = vshrl.u32 %v9034, 7
        %v9036 = vsub.s32 %v8916, %v9035
        %v9037 = vrot.slane %v8417, %v9036
        %v9038 = vsel %vm8921, %v9037, %v9033
        %v9039 = vlaneseq
        %v9040 = vshrl.u32 %v9039, 7
        %v9041 = vsub.s32 %v8923, %v9040
        %v9042 = vrot.slane %v8418, %v9041
        %v9043 = vsel %vm8928, %v9042, %v9038
        %v9044 = vlaneseq
        %v9045 = vshrl.u32 %v9044, 7
        %v9046 = vsub.s32 %v8904, %v9045
        %v9047 = vrot.slane %v8419, %v9046
        %v9048 = vlaneseq
        %v9049 = vshrl.u32 %v9048, 7
        %v9050 = vsub.s32 %v8909, %v9049
        %v9051 = vrot.slane %v8420, %v9050
        %v9052 = vsel %vm8914, %v9051, %v9047
        %v9053 = vlaneseq
        %v9054 = vshrl.u32 %v9053, 7
        %v9055 = vsub.s32 %v8916, %v9054
        %v9056 = vrot.slane %v8421, %v9055
        %v9057 = vsel %vm8921, %v9056, %v9052
        %v9058 = vlaneseq
        %v9059 = vshrl.u32 %v9058, 7
        %v9060 = vsub.s32 %v8923, %v9059
        %v9061 = vrot.slane %v8422, %v9060
        %v9062 = vsel %vm8928, %v9061, %v9057
        %v9063 = vlaneseq
        %v9064 = vshrl.u32 %v9063, 7
        %v9065 = vsub.s32 %v8904, %v9064
        %v9066 = vrot.slane %v8423, %v9065
        %v9067 = vlaneseq
        %v9068 = vshrl.u32 %v9067, 7
        %v9069 = vsub.s32 %v8909, %v9068
        %v9070 = vrot.slane %v8424, %v9069
        %v9071 = vsel %vm8914, %v9070, %v9066
        %v9072 = vlaneseq
        %v9073 = vshrl.u32 %v9072, 7
        %v9074 = vsub.s32 %v8916, %v9073
        %v9075 = vrot.slane %v8425, %v9074
        %v9076 = vsel %vm8921, %v9075, %v9071
        %v9077 = vlaneseq
        %v9078 = vshrl.u32 %v9077, 7
        %v9079 = vsub.s32 %v8923, %v9078
        %v9080 = vrot.slane %v8426, %v9079
        %v9081 = vsel %vm8928, %v9080, %v9076
        %v9082 = vlaneseq
        %v9083 = vshrl.u32 %v9082, 7
        %v9084 = vsub.s32 %v8904, %v9083
        %v9085 = vrot.slane %v8427, %v9084
        %v9086 = vlaneseq
        %v9087 = vshrl.u32 %v9086, 7
        %v9088 = vsub.s32 %v8909, %v9087
        %v9089 = vrot.slane %v8428, %v9088
        %v9090 = vsel %vm8914, %v9089, %v9085
        %v9091 = vlaneseq
        %v9092 = vshrl.u32 %v9091, 7
        %v9093 = vsub.s32 %v8916, %v9092
        %v9094 = vrot.slane %v8429, %v9093
        %v9095 = vsel %vm8921, %v9094, %v9090
        %v9096 = vlaneseq
        %v9097 = vshrl.u32 %v9096, 7
        %v9098 = vsub.s32 %v8923, %v9097
        %v9099 = vrot.slane %v8430, %v9098
        %v9100 = vsel %vm8928, %v9099, %v9095
        %v9101 = vlaneseq
        %v9102 = vshrl.u32 %v9101, 7
        %v9103 = vsub.s32 %v8904, %v9102
        %v9104 = vrot.slane %v8431, %v9103
        %v9105 = vlaneseq
        %v9106 = vshrl.u32 %v9105, 7
        %v9107 = vsub.s32 %v8909, %v9106
        %v9108 = vrot.slane %v8432, %v9107
        %v9109 = vsel %vm8914, %v9108, %v9104
        %v9110 = vlaneseq
        %v9111 = vshrl.u32 %v9110, 7
        %v9112 = vsub.s32 %v8916, %v9111
        %v9113 = vrot.slane %v8433, %v9112
        %v9114 = vsel %vm8921, %v9113, %v9109
        %v9115 = vlaneseq
        %v9116 = vshrl.u32 %v9115, 7
        %v9117 = vsub.s32 %v8923, %v9116
        %v9118 = vrot.slane %v8434, %v9117
        %v9119 = vsel %vm8928, %v9118, %v9114
        %v9120 = vlaneseq
        %v9121 = vshrl.u32 %v9120, 7
        %v9122 = vsub.s32 %v8904, %v9121
        %v9123 = vrot.slane %v8435, %v9122
        %v9124 = vlaneseq
        %v9125 = vshrl.u32 %v9124, 7
        %v9126 = vsub.s32 %v8909, %v9125
        %v9127 = vrot.slane %v8436, %v9126
        %v9128 = vsel %vm8914, %v9127, %v9123
        %v9129 = vlaneseq
        %v9130 = vshrl.u32 %v9129, 7
        %v9131 = vsub.s32 %v8916, %v9130
        %v9132 = vrot.slane %v8437, %v9131
        %v9133 = vsel %vm8921, %v9132, %v9128
        %v9134 = vlaneseq
        %v9135 = vshrl.u32 %v9134, 7
        %v9136 = vsub.s32 %v8923, %v9135
        %v9137 = vrot.slane %v8438, %v9136
        %v9138 = vsel %vm8928, %v9137, %v9133
        %v9139 = vlaneseq
        %v9140 = vshrl.u32 %v9139, 7
        %v9141 = vsub.s32 %v8904, %v9140
        %v9142 = vrot.slane %v8439, %v9141
        %v9143 = vlaneseq
        %v9144 = vshrl.u32 %v9143, 7
        %v9145 = vsub.s32 %v8909, %v9144
        %v9146 = vrot.slane %v8440, %v9145
        %v9147 = vsel %vm8914, %v9146, %v9142
        %v9148 = vlaneseq
        %v9149 = vshrl.u32 %v9148, 7
        %v9150 = vsub.s32 %v8916, %v9149
        %v9151 = vrot.slane %v8441, %v9150
        %v9152 = vsel %vm8921, %v9151, %v9147
        %v9153 = vlaneseq
        %v9154 = vshrl.u32 %v9153, 7
        %v9155 = vsub.s32 %v8923, %v9154
        %v9156 = vrot.slane %v8442, %v9155
        %v9157 = vsel %vm8928, %v9156, %v9152
        %v9158 = vlaneseq
        %v9159 = vshrl.u32 %v9158, 7
        %v9160 = vsub.s32 %v8904, %v9159
        %v9161 = vrot.slane %v8443, %v9160
        %v9162 = vlaneseq
        %v9163 = vshrl.u32 %v9162, 7
        %v9164 = vsub.s32 %v8909, %v9163
        %v9165 = vrot.slane %v8444, %v9164
        %v9166 = vsel %vm8914, %v9165, %v9161
        %v9167 = vlaneseq
        %v9168 = vshrl.u32 %v9167, 7
        %v9169 = vsub.s32 %v8916, %v9168
        %v9170 = vrot.slane %v8445, %v9169
        %v9171 = vsel %vm8921, %v9170, %v9166
        %v9172 = vlaneseq
        %v9173 = vshrl.u32 %v9172, 7
        %v9174 = vsub.s32 %v8923, %v9173
        %v9175 = vrot.slane %v8446, %v9174
        %v9176 = vsel %vm8928, %v9175, %v9171
        %v9177 = vlaneseq
        %v9178 = vshrl.u32 %v9177, 7
        %v9179 = vsub.s32 %v8904, %v9178
        %v9180 = vrot.slane %v8447, %v9179
        %v9181 = vlaneseq
        %v9182 = vshrl.u32 %v9181, 7
        %v9183 = vsub.s32 %v8909, %v9182
        %v9184 = vrot.slane %v8448, %v9183
        %v9185 = vsel %vm8914, %v9184, %v9180
        %v9186 = vlaneseq
        %v9187 = vshrl.u32 %v9186, 7
        %v9188 = vsub.s32 %v8916, %v9187
        %v9189 = vrot.slane %v8449, %v9188
        %v9190 = vsel %vm8921, %v9189, %v9185
        %v9191 = vlaneseq
        %v9192 = vshrl.u32 %v9191, 7
        %v9193 = vsub.s32 %v8923, %v9192
        %v9194 = vrot.slane %v8450, %v9193
        %v9195 = vsel %vm8928, %v9194, %v9190
        %v9196 = vlaneseq
        %v9197 = vshrl.u32 %v9196, 7
        %v9198 = vsub.s32 %v8904, %v9197
        %v9199 = vrot.slane %v8451, %v9198
        %v9200 = vlaneseq
        %v9201 = vshrl.u32 %v9200, 7
        %v9202 = vsub.s32 %v8909, %v9201
        %v9203 = vrot.slane %v8452, %v9202
        %v9204 = vsel %vm8914, %v9203, %v9199
        %v9205 = vlaneseq
        %v9206 = vshrl.u32 %v9205, 7
        %v9207 = vsub.s32 %v8916, %v9206
        %v9208 = vrot.slane %v8453, %v9207
        %v9209 = vsel %vm8921, %v9208, %v9204
        %v9210 = vlaneseq
        %v9211 = vshrl.u32 %v9210, 7
        %v9212 = vsub.s32 %v8923, %v9211
        %v9213 = vrot.slane %v8454, %v9212
        %v9214 = vsel %vm8928, %v9213, %v9209
        %v9215 = vlaneseq
        %v9216 = vshrl.u32 %v9215, 7
        %v9217 = vsub.s32 %v8904, %v9216
        %v9218 = vrot.slane %v8455, %v9217
        %v9219 = vlaneseq
        %v9220 = vshrl.u32 %v9219, 7
        %v9221 = vsub.s32 %v8909, %v9220
        %v9222 = vrot.slane %v8456, %v9221
        %v9223 = vsel %vm8914, %v9222, %v9218
        %v9224 = vlaneseq
        %v9225 = vshrl.u32 %v9224, 7
        %v9226 = vsub.s32 %v8916, %v9225
        %v9227 = vrot.slane %v8457, %v9226
        %v9228 = vsel %vm8921, %v9227, %v9223
        %v9229 = vlaneseq
        %v9230 = vshrl.u32 %v9229, 7
        %v9231 = vsub.s32 %v8923, %v9230
        %v9232 = vrot.slane %v8458, %v9231
        %v9233 = vsel %vm8928, %v9232, %v9228
        %v9234 = vlaneseq
        %v9235 = vshrl.u32 %v9234, 7
        %v9236 = vsub.s32 %v8904, %v9235
        %v9237 = vrot.slane %v8459, %v9236
        %v9238 = vlaneseq
        %v9239 = vshrl.u32 %v9238, 7
        %v9240 = vsub.s32 %v8909, %v9239
        %v9241 = vrot.slane %v8460, %v9240
        %v9242 = vsel %vm8914, %v9241, %v9237
        %v9243 = vlaneseq
        %v9244 = vshrl.u32 %v9243, 7
        %v9245 = vsub.s32 %v8916, %v9244
        %v9246 = vrot.slane %v8461, %v9245
        %v9247 = vsel %vm8921, %v9246, %v9242
        %v9248 = vlaneseq
        %v9249 = vshrl.u32 %v9248, 7
        %v9250 = vsub.s32 %v8923, %v9249
        %v9251 = vrot.slane %v8462, %v9250
        %v9252 = vsel %vm8928, %v9251, %v9247
        %v9253 = vlaneseq
        %v9254 = vshrl.u32 %v9253, 7
        %v9255 = vsub.s32 %v8904, %v9254
        %v9256 = vrot.slane %v8463, %v9255
        %v9257 = vlaneseq
        %v9258 = vshrl.u32 %v9257, 7
        %v9259 = vsub.s32 %v8909, %v9258
        %v9260 = vrot.slane %v8464, %v9259
        %v9261 = vsel %vm8914, %v9260, %v9256
        %v9262 = vlaneseq
        %v9263 = vshrl.u32 %v9262, 7
        %v9264 = vsub.s32 %v8916, %v9263
        %v9265 = vrot.slane %v8465, %v9264
        %v9266 = vsel %vm8921, %v9265, %v9261
        %v9267 = vlaneseq
        %v9268 = vshrl.u32 %v9267, 7
        %v9269 = vsub.s32 %v8923, %v9268
        %v9270 = vrot.slane %v8466, %v9269
        %v9271 = vsel %vm8928, %v9270, %v9266
        %v9272 = vlaneseq
        %v9273 = vshrl.u32 %v9272, 7
        %v9274 = vsub.s32 %v8904, %v9273
        %v9275 = vrot.slane %v8467, %v9274
        %v9276 = vlaneseq
        %v9277 = vshrl.u32 %v9276, 7
        %v9278 = vsub.s32 %v8909, %v9277
        %v9279 = vrot.slane %v8468, %v9278
        %v9280 = vsel %vm8914, %v9279, %v9275
        %v9281 = vlaneseq
        %v9282 = vshrl.u32 %v9281, 7
        %v9283 = vsub.s32 %v8916, %v9282
        %v9284 = vrot.slane %v8469, %v9283
        %v9285 = vsel %vm8921, %v9284, %v9280
        %v9286 = vlaneseq
        %v9287 = vshrl.u32 %v9286, 7
        %v9288 = vsub.s32 %v8923, %v9287
        %v9289 = vrot.slane %v8470, %v9288
        %v9290 = vsel %vm8928, %v9289, %v9285
        %v9291 = vlaneseq
        %v9292 = vshrl.u32 %v9291, 7
        %v9293 = vsub.s32 %v8904, %v9292
        %v9294 = vrot.slane %v8471, %v9293
        %v9295 = vlaneseq
        %v9296 = vshrl.u32 %v9295, 7
        %v9297 = vsub.s32 %v8909, %v9296
        %v9298 = vrot.slane %v8472, %v9297
        %v9299 = vsel %vm8914, %v9298, %v9294
        %v9300 = vlaneseq
        %v9301 = vshrl.u32 %v9300, 7
        %v9302 = vsub.s32 %v8916, %v9301
        %v9303 = vrot.slane %v8473, %v9302
        %v9304 = vsel %vm8921, %v9303, %v9299
        %v9305 = vlaneseq
        %v9306 = vshrl.u32 %v9305, 7
        %v9307 = vsub.s32 %v8923, %v9306
        %v9308 = vrot.slane %v8474, %v9307
        %v9309 = vsel %vm8928, %v9308, %v9304
        %v9310 = vlaneseq
        %v9311 = vshrl.u32 %v9310, 7
        %v9312 = vsub.s32 %v8904, %v9311
        %v9313 = vrot.slane %v8475, %v9312
        %v9314 = vlaneseq
        %v9315 = vshrl.u32 %v9314, 7
        %v9316 = vsub.s32 %v8909, %v9315
        %v9317 = vrot.slane %v8476, %v9316
        %v9318 = vsel %vm8914, %v9317, %v9313
        %v9319 = vlaneseq
        %v9320 = vshrl.u32 %v9319, 7
        %v9321 = vsub.s32 %v8916, %v9320
        %v9322 = vrot.slane %v8477, %v9321
        %v9323 = vsel %vm8921, %v9322, %v9318
        %v9324 = vlaneseq
        %v9325 = vshrl.u32 %v9324, 7
        %v9326 = vsub.s32 %v8923, %v9325
        %v9327 = vrot.slane %v8478, %v9326
        %v9328 = vsel %vm8928, %v9327, %v9323
        %v9329 = vlaneseq
        %v9330 = vshrl.u32 %v9329, 7
        %v9331 = vsub.s32 %v8904, %v9330
        %v9332 = vrot.slane %v8479, %v9331
        %v9333 = vlaneseq
        %v9334 = vshrl.u32 %v9333, 7
        %v9335 = vsub.s32 %v8909, %v9334
        %v9336 = vrot.slane %v8480, %v9335
        %v9337 = vsel %vm8914, %v9336, %v9332
        %v9338 = vlaneseq
        %v9339 = vshrl.u32 %v9338, 7
        %v9340 = vsub.s32 %v8916, %v9339
        %v9341 = vrot.slane %v8481, %v9340
        %v9342 = vsel %vm8921, %v9341, %v9337
        %v9343 = vlaneseq
        %v9344 = vshrl.u32 %v9343, 7
        %v9345 = vsub.s32 %v8923, %v9344
        %v9346 = vrot.slane %v8482, %v9345
        %v9347 = vsel %vm8928, %v9346, %v9342
        %v9348 = vlaneseq
        %v9349 = vshrl.u32 %v9348, 7
        %v9350 = vsub.s32 %v8904, %v9349
        %v9351 = vrot.slane %v8483, %v9350
        %v9352 = vlaneseq
        %v9353 = vshrl.u32 %v9352, 7
        %v9354 = vsub.s32 %v8909, %v9353
        %v9355 = vrot.slane %v8484, %v9354
        %v9356 = vsel %vm8914, %v9355, %v9351
        %v9357 = vlaneseq
        %v9358 = vshrl.u32 %v9357, 7
        %v9359 = vsub.s32 %v8916, %v9358
        %v9360 = vrot.slane %v8485, %v9359
        %v9361 = vsel %vm8921, %v9360, %v9356
        %v9362 = vlaneseq
        %v9363 = vshrl.u32 %v9362, 7
        %v9364 = vsub.s32 %v8923, %v9363
        %v9365 = vrot.slane %v8486, %v9364
        %v9366 = vsel %vm8928, %v9365, %v9361
        %v9367 = vlaneseq
        %v9368 = vshrl.u32 %v9367, 7
        %v9369 = vsub.s32 %v8904, %v9368
        %v9370 = vrot.slane %v8487, %v9369
        %v9371 = vlaneseq
        %v9372 = vshrl.u32 %v9371, 7
        %v9373 = vsub.s32 %v8909, %v9372
        %v9374 = vrot.slane %v8488, %v9373
        %v9375 = vsel %vm8914, %v9374, %v9370
        %v9376 = vlaneseq
        %v9377 = vshrl.u32 %v9376, 7
        %v9378 = vsub.s32 %v8916, %v9377
        %v9379 = vrot.slane %v8489, %v9378
        %v9380 = vsel %vm8921, %v9379, %v9375
        %v9381 = vlaneseq
        %v9382 = vshrl.u32 %v9381, 7
        %v9383 = vsub.s32 %v8923, %v9382
        %v9384 = vrot.slane %v8490, %v9383
        %v9385 = vsel %vm8928, %v9384, %v9380
        %v9386 = vlaneseq
        %v9387 = vshrl.u32 %v9386, 7
        %v9388 = vsub.s32 %v8904, %v9387
        %v9389 = vrot.slane %v8491, %v9388
        %v9390 = vlaneseq
        %v9391 = vshrl.u32 %v9390, 7
        %v9392 = vsub.s32 %v8909, %v9391
        %v9393 = vrot.slane %v8492, %v9392
        %v9394 = vsel %vm8914, %v9393, %v9389
        %v9395 = vlaneseq
        %v9396 = vshrl.u32 %v9395, 7
        %v9397 = vsub.s32 %v8916, %v9396
        %v9398 = vrot.slane %v8493, %v9397
        %v9399 = vsel %vm8921, %v9398, %v9394
        %v9400 = vlaneseq
        %v9401 = vshrl.u32 %v9400, 7
        %v9402 = vsub.s32 %v8923, %v9401
        %v9403 = vrot.slane %v8494, %v9402
        %v9404 = vsel %vm8928, %v9403, %v9399
        %v9405 = vlaneseq
        %v9406 = vshrl.u32 %v9405, 7
        %v9407 = vsub.s32 %v8904, %v9406
        %v9408 = vrot.slane %v8495, %v9407
        %v9409 = vlaneseq
        %v9410 = vshrl.u32 %v9409, 7
        %v9411 = vsub.s32 %v8909, %v9410
        %v9412 = vrot.slane %v8496, %v9411
        %v9413 = vsel %vm8914, %v9412, %v9408
        %v9414 = vlaneseq
        %v9415 = vshrl.u32 %v9414, 7
        %v9416 = vsub.s32 %v8916, %v9415
        %v9417 = vrot.slane %v8497, %v9416
        %v9418 = vsel %vm8921, %v9417, %v9413
        %v9419 = vlaneseq
        %v9420 = vshrl.u32 %v9419, 7
        %v9421 = vsub.s32 %v8923, %v9420
        %v9422 = vrot.slane %v8498, %v9421
        %v9423 = vsel %vm8928, %v9422, %v9418
        %v9424 = vlaneseq
        %v9425 = vshrl.u32 %v9424, 7
        %v9426 = vsub.s32 %v8904, %v9425
        %v9427 = vrot.slane %v8499, %v9426
        %v9428 = vlaneseq
        %v9429 = vshrl.u32 %v9428, 7
        %v9430 = vsub.s32 %v8909, %v9429
        %v9431 = vrot.slane %v8500, %v9430
        %v9432 = vsel %vm8914, %v9431, %v9427
        %v9433 = vlaneseq
        %v9434 = vshrl.u32 %v9433, 7
        %v9435 = vsub.s32 %v8916, %v9434
        %v9436 = vrot.slane %v8501, %v9435
        %v9437 = vsel %vm8921, %v9436, %v9432
        %v9438 = vlaneseq
        %v9439 = vshrl.u32 %v9438, 7
        %v9440 = vsub.s32 %v8923, %v9439
        %v9441 = vrot.slane %v8502, %v9440
        %v9442 = vsel %vm8928, %v9441, %v9437
        %v9443 = vlaneseq
        %v9444 = vshrl.u32 %v9443, 7
        %v9445 = vsub.s32 %v8904, %v9444
        %v9446 = vrot.slane %v8503, %v9445
        %v9447 = vlaneseq
        %v9448 = vshrl.u32 %v9447, 7
        %v9449 = vsub.s32 %v8909, %v9448
        %v9450 = vrot.slane %v8504, %v9449
        %v9451 = vsel %vm8914, %v9450, %v9446
        %v9452 = vlaneseq
        %v9453 = vshrl.u32 %v9452, 7
        %v9454 = vsub.s32 %v8916, %v9453
        %v9455 = vrot.slane %v8505, %v9454
        %v9456 = vsel %vm8921, %v9455, %v9451
        %v9457 = vlaneseq
        %v9458 = vshrl.u32 %v9457, 7
        %v9459 = vsub.s32 %v8923, %v9458
        %v9460 = vrot.slane %v8506, %v9459
        %v9461 = vsel %vm8928, %v9460, %v9456
        %v9462 = vlaneseq
        %v9463 = vshrl.u32 %v9462, 7
        %v9464 = vsub.s32 %v8904, %v9463
        %v9465 = vrot.slane %v8507, %v9464
        %v9466 = vlaneseq
        %v9467 = vshrl.u32 %v9466, 7
        %v9468 = vsub.s32 %v8909, %v9467
        %v9469 = vrot.slane %v8508, %v9468
        %v9470 = vsel %vm8914, %v9469, %v9465
        %v9471 = vlaneseq
        %v9472 = vshrl.u32 %v9471, 7
        %v9473 = vsub.s32 %v8916, %v9472
        %v9474 = vrot.slane %v8509, %v9473
        %v9475 = vsel %vm8921, %v9474, %v9470
        %v9476 = vlaneseq
        %v9477 = vshrl.u32 %v9476, 7
        %v9478 = vsub.s32 %v8923, %v9477
        %v9479 = vrot.slane %v8510, %v9478
        %v9480 = vsel %vm8928, %v9479, %v9475
        %v9481 = vlaneseq
        %v9482 = vshrl.u32 %v9481, 7
        %v9483 = vsub.s32 %v8904, %v9482
        %v9484 = vrot.slane %v8511, %v9483
        %v9485 = vlaneseq
        %v9486 = vshrl.u32 %v9485, 7
        %v9487 = vsub.s32 %v8909, %v9486
        %v9488 = vrot.slane %v8512, %v9487
        %v9489 = vsel %vm8914, %v9488, %v9484
        %v9490 = vlaneseq
        %v9491 = vshrl.u32 %v9490, 7
        %v9492 = vsub.s32 %v8916, %v9491
        %v9493 = vrot.slane %v8513, %v9492
        %v9494 = vsel %vm8921, %v9493, %v9489
        %v9495 = vlaneseq
        %v9496 = vshrl.u32 %v9495, 7
        %v9497 = vsub.s32 %v8923, %v9496
        %v9498 = vrot.slane %v8514, %v9497
        %v9499 = vsel %vm8928, %v9498, %v9494
        %v9500 = vlaneseq
        %v9501 = vshrl.u32 %v9500, 7
        %v9502 = vsub.s32 %v8904, %v9501
        %v9503 = vrot.slane %v8515, %v9502
        %v9504 = vlaneseq
        %v9505 = vshrl.u32 %v9504, 7
        %v9506 = vsub.s32 %v8909, %v9505
        %v9507 = vrot.slane %v8516, %v9506
        %v9508 = vsel %vm8914, %v9507, %v9503
        %v9509 = vlaneseq
        %v9510 = vshrl.u32 %v9509, 7
        %v9511 = vsub.s32 %v8916, %v9510
        %v9512 = vrot.slane %v8517, %v9511
        %v9513 = vsel %vm8921, %v9512, %v9508
        %v9514 = vlaneseq
        %v9515 = vshrl.u32 %v9514, 7
        %v9516 = vsub.s32 %v8923, %v9515
        %v9517 = vrot.slane %v8518, %v9516
        %v9518 = vsel %vm8928, %v9517, %v9513
        %v9519 = vlaneseq
        %v9520 = vshrl.u32 %v9519, 7
        %v9521 = vsub.s32 %v8904, %v9520
        %v9522 = vrot.slane %v8519, %v9521
        %v9523 = vlaneseq
        %v9524 = vshrl.u32 %v9523, 7
        %v9525 = vsub.s32 %v8909, %v9524
        %v9526 = vrot.slane %v8520, %v9525
        %v9527 = vsel %vm8914, %v9526, %v9522
        %v9528 = vlaneseq
        %v9529 = vshrl.u32 %v9528, 7
        %v9530 = vsub.s32 %v8916, %v9529
        %v9531 = vrot.slane %v8521, %v9530
        %v9532 = vsel %vm8921, %v9531, %v9527
        %v9533 = vlaneseq
        %v9534 = vshrl.u32 %v9533, 7
        %v9535 = vsub.s32 %v8923, %v9534
        %v9536 = vrot.slane %v8522, %v9535
        %v9537 = vsel %vm8928, %v9536, %v9532
        %v9538 = vlaneseq
        %v9539 = vshrl.u32 %v9538, 7
        %v9540 = vsub.s32 %v8904, %v9539
        %v9541 = vrot.slane %v8523, %v9540
        %v9542 = vlaneseq
        %v9543 = vshrl.u32 %v9542, 7
        %v9544 = vsub.s32 %v8909, %v9543
        %v9545 = vrot.slane %v8524, %v9544
        %v9546 = vsel %vm8914, %v9545, %v9541
        %v9547 = vlaneseq
        %v9548 = vshrl.u32 %v9547, 7
        %v9549 = vsub.s32 %v8916, %v9548
        %v9550 = vrot.slane %v8525, %v9549
        %v9551 = vsel %vm8921, %v9550, %v9546
        %v9552 = vlaneseq
        %v9553 = vshrl.u32 %v9552, 7
        %v9554 = vsub.s32 %v8923, %v9553
        %v9555 = vrot.slane %v8526, %v9554
        %v9556 = vsel %vm8928, %v9555, %v9551
        %v9557 = vlaneseq
        %v9558 = vshrl.u32 %v9557, 7
        %v9559 = vsub.s32 %v8904, %v9558
        %v9560 = vrot.slane %v8527, %v9559
        %v9561 = vlaneseq
        %v9562 = vshrl.u32 %v9561, 7
        %v9563 = vsub.s32 %v8909, %v9562
        %v9564 = vrot.slane %v8528, %v9563
        %v9565 = vsel %vm8914, %v9564, %v9560
        %v9566 = vlaneseq
        %v9567 = vshrl.u32 %v9566, 7
        %v9568 = vsub.s32 %v8916, %v9567
        %v9569 = vrot.slane %v8529, %v9568
        %v9570 = vsel %vm8921, %v9569, %v9565
        %v9571 = vlaneseq
        %v9572 = vshrl.u32 %v9571, 7
        %v9573 = vsub.s32 %v8923, %v9572
        %v9574 = vrot.slane %v8530, %v9573
        %v9575 = vsel %vm8928, %v9574, %v9570
        %v9576 = vlaneseq
        %v9577 = vshrl.u32 %v9576, 7
        %v9578 = vsub.s32 %v8904, %v9577
        %v9579 = vrot.slane %v8531, %v9578
        %v9580 = vlaneseq
        %v9581 = vshrl.u32 %v9580, 7
        %v9582 = vsub.s32 %v8909, %v9581
        %v9583 = vrot.slane %v8532, %v9582
        %v9584 = vsel %vm8914, %v9583, %v9579
        %v9585 = vlaneseq
        %v9586 = vshrl.u32 %v9585, 7
        %v9587 = vsub.s32 %v8916, %v9586
        %v9588 = vrot.slane %v8533, %v9587
        %v9589 = vsel %vm8921, %v9588, %v9584
        %v9590 = vlaneseq
        %v9591 = vshrl.u32 %v9590, 7
        %v9592 = vsub.s32 %v8923, %v9591
        %v9593 = vrot.slane %v8534, %v9592
        %v9594 = vsel %vm8928, %v9593, %v9589
        %v9595 = vlaneseq
        %v9596 = vshrl.u32 %v9595, 7
        %v9597 = vsub.s32 %v8904, %v9596
        %v9598 = vrot.slane %v8535, %v9597
        %v9599 = vlaneseq
        %v9600 = vshrl.u32 %v9599, 7
        %v9601 = vsub.s32 %v8909, %v9600
        %v9602 = vrot.slane %v8536, %v9601
        %v9603 = vsel %vm8914, %v9602, %v9598
        %v9604 = vlaneseq
        %v9605 = vshrl.u32 %v9604, 7
        %v9606 = vsub.s32 %v8916, %v9605
        %v9607 = vrot.slane %v8537, %v9606
        %v9608 = vsel %vm8921, %v9607, %v9603
        %v9609 = vlaneseq
        %v9610 = vshrl.u32 %v9609, 7
        %v9611 = vsub.s32 %v8923, %v9610
        %v9612 = vrot.slane %v8538, %v9611
        %v9613 = vsel %vm8928, %v9612, %v9608
        %v9614 = vlaneseq
        %v9615 = vshrl.u32 %v9614, 7
        %v9616 = vsub.s32 %v8904, %v9615
        %v9617 = vrot.slane %v8539, %v9616
        %v9618 = vlaneseq
        %v9619 = vshrl.u32 %v9618, 7
        %v9620 = vsub.s32 %v8909, %v9619
        %v9621 = vrot.slane %v8540, %v9620
        %v9622 = vsel %vm8914, %v9621, %v9617
        %v9623 = vlaneseq
        %v9624 = vshrl.u32 %v9623, 7
        %v9625 = vsub.s32 %v8916, %v9624
        %v9626 = vrot.slane %v8541, %v9625
        %v9627 = vsel %vm8921, %v9626, %v9622
        %v9628 = vlaneseq
        %v9629 = vshrl.u32 %v9628, 7
        %v9630 = vsub.s32 %v8923, %v9629
        %v9631 = vrot.slane %v8542, %v9630
        %v9632 = vsel %vm8928, %v9631, %v9627
        %v9633 = vlaneseq
        %v9634 = vshrl.u32 %v9633, 7
        %v9635 = vsub.s32 %v8904, %v9634
        %v9636 = vrot.slane %v8543, %v9635
        %v9637 = vlaneseq
        %v9638 = vshrl.u32 %v9637, 7
        %v9639 = vsub.s32 %v8909, %v9638
        %v9640 = vrot.slane %v8544, %v9639
        %v9641 = vsel %vm8914, %v9640, %v9636
        %v9642 = vlaneseq
        %v9643 = vshrl.u32 %v9642, 7
        %v9644 = vsub.s32 %v8916, %v9643
        %v9645 = vrot.slane %v8545, %v9644
        %v9646 = vsel %vm8921, %v9645, %v9641
        %v9647 = vlaneseq
        %v9648 = vshrl.u32 %v9647, 7
        %v9649 = vsub.s32 %v8923, %v9648
        %v9650 = vrot.slane %v8546, %v9649
        %v9651 = vsel %vm8928, %v9650, %v9646
        %v9652 = vlaneseq
        %v9653 = vshrl.u32 %v9652, 7
        %v9654 = vsub.s32 %v8904, %v9653
        %v9655 = vrot.slane %v8547, %v9654
        %v9656 = vlaneseq
        %v9657 = vshrl.u32 %v9656, 7
        %v9658 = vsub.s32 %v8909, %v9657
        %v9659 = vrot.slane %v8548, %v9658
        %v9660 = vsel %vm8914, %v9659, %v9655
        %v9661 = vlaneseq
        %v9662 = vshrl.u32 %v9661, 7
        %v9663 = vsub.s32 %v8916, %v9662
        %v9664 = vrot.slane %v8549, %v9663
        %v9665 = vsel %vm8921, %v9664, %v9660
        %v9666 = vlaneseq
        %v9667 = vshrl.u32 %v9666, 7
        %v9668 = vsub.s32 %v8923, %v9667
        %v9669 = vrot.slane %v8550, %v9668
        %v9670 = vsel %vm8928, %v9669, %v9665
        %v9671 = vlaneseq
        %v9672 = vshrl.u32 %v9671, 7
        %v9673 = vsub.s32 %v8904, %v9672
        %v9674 = vrot.slane %v8551, %v9673
        %v9675 = vlaneseq
        %v9676 = vshrl.u32 %v9675, 7
        %v9677 = vsub.s32 %v8909, %v9676
        %v9678 = vrot.slane %v8552, %v9677
        %v9679 = vsel %vm8914, %v9678, %v9674
        %v9680 = vlaneseq
        %v9681 = vshrl.u32 %v9680, 7
        %v9682 = vsub.s32 %v8916, %v9681
        %v9683 = vrot.slane %v8553, %v9682
        %v9684 = vsel %vm8921, %v9683, %v9679
        %v9685 = vlaneseq
        %v9686 = vshrl.u32 %v9685, 7
        %v9687 = vsub.s32 %v8923, %v9686
        %v9688 = vrot.slane %v8554, %v9687
        %v9689 = vsel %vm8928, %v9688, %v9684
        %v9690 = vlaneseq
        %v9691 = vshrl.u32 %v9690, 7
        %v9692 = vsub.s32 %v8904, %v9691
        %v9693 = vrot.slane %v8555, %v9692
        %v9694 = vlaneseq
        %v9695 = vshrl.u32 %v9694, 7
        %v9696 = vsub.s32 %v8909, %v9695
        %v9697 = vrot.slane %v8556, %v9696
        %v9698 = vsel %vm8914, %v9697, %v9693
        %v9699 = vlaneseq
        %v9700 = vshrl.u32 %v9699, 7
        %v9701 = vsub.s32 %v8916, %v9700
        %v9702 = vrot.slane %v8557, %v9701
        %v9703 = vsel %vm8921, %v9702, %v9698
        %v9704 = vlaneseq
        %v9705 = vshrl.u32 %v9704, 7
        %v9706 = vsub.s32 %v8923, %v9705
        %v9707 = vrot.slane %v8558, %v9706
        %v9708 = vsel %vm8928, %v9707, %v9703
        %v9709 = vlaneseq
        %v9710 = vshrl.u32 %v9709, 7
        %v9711 = vsub.s32 %v8904, %v9710
        %v9712 = vrot.slane %v8559, %v9711
        %v9713 = vlaneseq
        %v9714 = vshrl.u32 %v9713, 7
        %v9715 = vsub.s32 %v8909, %v9714
        %v9716 = vrot.slane %v8560, %v9715
        %v9717 = vsel %vm8914, %v9716, %v9712
        %v9718 = vlaneseq
        %v9719 = vshrl.u32 %v9718, 7
        %v9720 = vsub.s32 %v8916, %v9719
        %v9721 = vrot.slane %v8561, %v9720
        %v9722 = vsel %vm8921, %v9721, %v9717
        %v9723 = vlaneseq
        %v9724 = vshrl.u32 %v9723, 7
        %v9725 = vsub.s32 %v8923, %v9724
        %v9726 = vrot.slane %v8562, %v9725
        %v9727 = vsel %vm8928, %v9726, %v9722
        %v9728 = vlaneseq
        %v9729 = vshrl.u32 %v9728, 7
        %v9730 = vsub.s32 %v8904, %v9729
        %v9731 = vrot.slane %v8563, %v9730
        %v9732 = vlaneseq
        %v9733 = vshrl.u32 %v9732, 7
        %v9734 = vsub.s32 %v8909, %v9733
        %v9735 = vrot.slane %v8564, %v9734
        %v9736 = vsel %vm8914, %v9735, %v9731
        %v9737 = vlaneseq
        %v9738 = vshrl.u32 %v9737, 7
        %v9739 = vsub.s32 %v8916, %v9738
        %v9740 = vrot.slane %v8565, %v9739
        %v9741 = vsel %vm8921, %v9740, %v9736
        %v9742 = vlaneseq
        %v9743 = vshrl.u32 %v9742, 7
        %v9744 = vsub.s32 %v8923, %v9743
        %v9745 = vrot.slane %v8566, %v9744
        %v9746 = vsel %vm8928, %v9745, %v9741
        %v9747 = vlaneseq
        %v9748 = vshrl.u32 %v9747, 7
        %v9749 = vsub.s32 %v8904, %v9748
        %v9750 = vrot.slane %v8567, %v9749
        %v9751 = vlaneseq
        %v9752 = vshrl.u32 %v9751, 7
        %v9753 = vsub.s32 %v8909, %v9752
        %v9754 = vrot.slane %v8568, %v9753
        %v9755 = vsel %vm8914, %v9754, %v9750
        %v9756 = vlaneseq
        %v9757 = vshrl.u32 %v9756, 7
        %v9758 = vsub.s32 %v8916, %v9757
        %v9759 = vrot.slane %v8569, %v9758
        %v9760 = vsel %vm8921, %v9759, %v9755
        %v9761 = vlaneseq
        %v9762 = vshrl.u32 %v9761, 7
        %v9763 = vsub.s32 %v8923, %v9762
        %v9764 = vrot.slane %v8570, %v9763
        %v9765 = vsel %vm8928, %v9764, %v9760
        %v9766 = vlaneseq
        %v9767 = vshrl.u32 %v9766, 7
        %v9768 = vsub.s32 %v8904, %v9767
        %v9769 = vrot.slane %v8571, %v9768
        %v9770 = vlaneseq
        %v9771 = vshrl.u32 %v9770, 7
        %v9772 = vsub.s32 %v8909, %v9771
        %v9773 = vrot.slane %v8572, %v9772
        %v9774 = vsel %vm8914, %v9773, %v9769
        %v9775 = vlaneseq
        %v9776 = vshrl.u32 %v9775, 7
        %v9777 = vsub.s32 %v8916, %v9776
        %v9778 = vrot.slane %v8573, %v9777
        %v9779 = vsel %vm8921, %v9778, %v9774
        %v9780 = vlaneseq
        %v9781 = vshrl.u32 %v9780, 7
        %v9782 = vsub.s32 %v8923, %v9781
        %v9783 = vrot.slane %v8574, %v9782
        %v9784 = vsel %vm8928, %v9783, %v9779
        %v9785 = vlaneseq
        %v9786 = vshrl.u32 %v9785, 7
        %v9787 = vsub.s32 %v8904, %v9786
        %v9788 = vrot.slane %v8575, %v9787
        %v9789 = vlaneseq
        %v9790 = vshrl.u32 %v9789, 7
        %v9791 = vsub.s32 %v8909, %v9790
        %v9792 = vrot.slane %v8576, %v9791
        %v9793 = vsel %vm8914, %v9792, %v9788
        %v9794 = vlaneseq
        %v9795 = vshrl.u32 %v9794, 7
        %v9796 = vsub.s32 %v8916, %v9795
        %v9797 = vrot.slane %v8577, %v9796
        %v9798 = vsel %vm8921, %v9797, %v9793
        %v9799 = vlaneseq
        %v9800 = vshrl.u32 %v9799, 7
        %v9801 = vsub.s32 %v8923, %v9800
        %v9802 = vrot.slane %v8578, %v9801
        %v9803 = vsel %vm8928, %v9802, %v9798
        %v9804 = vlaneseq
        %v9805 = vshrl.u32 %v9804, 7
        %v9806 = vsub.s32 %v8904, %v9805
        %v9807 = vrot.slane %v8579, %v9806
        %v9808 = vlaneseq
        %v9809 = vshrl.u32 %v9808, 7
        %v9810 = vsub.s32 %v8909, %v9809
        %v9811 = vrot.slane %v8580, %v9810
        %v9812 = vsel %vm8914, %v9811, %v9807
        %v9813 = vlaneseq
        %v9814 = vshrl.u32 %v9813, 7
        %v9815 = vsub.s32 %v8916, %v9814
        %v9816 = vrot.slane %v8581, %v9815
        %v9817 = vsel %vm8921, %v9816, %v9812
        %v9818 = vlaneseq
        %v9819 = vshrl.u32 %v9818, 7
        %v9820 = vsub.s32 %v8923, %v9819
        %v9821 = vrot.slane %v8582, %v9820
        %v9822 = vsel %vm8928, %v9821, %v9817
        %v9823 = vlaneseq
        %v9824 = vshrl.u32 %v9823, 7
        %v9825 = vsub.s32 %v8904, %v9824
        %v9826 = vrot.slane %v8583, %v9825
        %v9827 = vlaneseq
        %v9828 = vshrl.u32 %v9827, 7
        %v9829 = vsub.s32 %v8909, %v9828
        %v9830 = vrot.slane %v8584, %v9829
        %v9831 = vsel %vm8914, %v9830, %v9826
        %v9832 = vlaneseq
        %v9833 = vshrl.u32 %v9832, 7
        %v9834 = vsub.s32 %v8916, %v9833
        %v9835 = vrot.slane %v8585, %v9834
        %v9836 = vsel %vm8921, %v9835, %v9831
        %v9837 = vlaneseq
        %v9838 = vshrl.u32 %v9837, 7
        %v9839 = vsub.s32 %v8923, %v9838
        %v9840 = vrot.slane %v8586, %v9839
        %v9841 = vsel %vm8928, %v9840, %v9836
        %v9842 = vlaneseq
        %v9843 = vshrl.u32 %v9842, 7
        %v9844 = vsub.s32 %v8904, %v9843
        %v9845 = vrot.slane %v8587, %v9844
        %v9846 = vlaneseq
        %v9847 = vshrl.u32 %v9846, 7
        %v9848 = vsub.s32 %v8909, %v9847
        %v9849 = vrot.slane %v8588, %v9848
        %v9850 = vsel %vm8914, %v9849, %v9845
        %v9851 = vlaneseq
        %v9852 = vshrl.u32 %v9851, 7
        %v9853 = vsub.s32 %v8916, %v9852
        %v9854 = vrot.slane %v8589, %v9853
        %v9855 = vsel %vm8921, %v9854, %v9850
        %v9856 = vlaneseq
        %v9857 = vshrl.u32 %v9856, 7
        %v9858 = vsub.s32 %v8923, %v9857
        %v9859 = vrot.slane %v8590, %v9858
        %v9860 = vsel %vm8928, %v9859, %v9855
        %v9861 = vlaneseq
        %v9862 = vshrl.u32 %v9861, 7
        %v9863 = vsub.s32 %v8904, %v9862
        %v9864 = vrot.slane %v8591, %v9863
        %v9865 = vlaneseq
        %v9866 = vshrl.u32 %v9865, 7
        %v9867 = vsub.s32 %v8909, %v9866
        %v9868 = vrot.slane %v8592, %v9867
        %v9869 = vsel %vm8914, %v9868, %v9864
        %v9870 = vlaneseq
        %v9871 = vshrl.u32 %v9870, 7
        %v9872 = vsub.s32 %v8916, %v9871
        %v9873 = vrot.slane %v8593, %v9872
        %v9874 = vsel %vm8921, %v9873, %v9869
        %v9875 = vlaneseq
        %v9876 = vshrl.u32 %v9875, 7
        %v9877 = vsub.s32 %v8923, %v9876
        %v9878 = vrot.slane %v8594, %v9877
        %v9879 = vsel %vm8928, %v9878, %v9874
        %v9880 = vlaneseq
        %v9881 = vshrl.u32 %v9880, 7
        %v9882 = vsub.s32 %v8904, %v9881
        %v9883 = vrot.slane %v8595, %v9882
        %v9884 = vlaneseq
        %v9885 = vshrl.u32 %v9884, 7
        %v9886 = vsub.s32 %v8909, %v9885
        %v9887 = vrot.slane %v8596, %v9886
        %v9888 = vsel %vm8914, %v9887, %v9883
        %v9889 = vlaneseq
        %v9890 = vshrl.u32 %v9889, 7
        %v9891 = vsub.s32 %v8916, %v9890
        %v9892 = vrot.slane %v8597, %v9891
        %v9893 = vsel %vm8921, %v9892, %v9888
        %v9894 = vlaneseq
        %v9895 = vshrl.u32 %v9894, 7
        %v9896 = vsub.s32 %v8923, %v9895
        %v9897 = vrot.slane %v8598, %v9896
        %v9898 = vsel %vm8928, %v9897, %v9893
        %v9899 = vlaneseq
        %v9900 = vshrl.u32 %v9899, 7
        %v9901 = vsub.s32 %v8904, %v9900
        %v9902 = vrot.slane %v8599, %v9901
        %v9903 = vlaneseq
        %v9904 = vshrl.u32 %v9903, 7
        %v9905 = vsub.s32 %v8909, %v9904
        %v9906 = vrot.slane %v8600, %v9905
        %v9907 = vsel %vm8914, %v9906, %v9902
        %v9908 = vlaneseq
        %v9909 = vshrl.u32 %v9908, 7
        %v9910 = vsub.s32 %v8916, %v9909
        %v9911 = vrot.slane %v8601, %v9910
        %v9912 = vsel %vm8921, %v9911, %v9907
        %v9913 = vlaneseq
        %v9914 = vshrl.u32 %v9913, 7
        %v9915 = vsub.s32 %v8923, %v9914
        %v9916 = vrot.slane %v8602, %v9915
        %v9917 = vsel %vm8928, %v9916, %v9912
        %v9918 = vlaneseq
        %v9919 = vshrl.u32 %v9918, 7
        %v9920 = vsub.s32 %v8904, %v9919
        %v9921 = vrot.slane %v8603, %v9920
        %v9922 = vlaneseq
        %v9923 = vshrl.u32 %v9922, 7
        %v9924 = vsub.s32 %v8909, %v9923
        %v9925 = vrot.slane %v8604, %v9924
        %v9926 = vsel %vm8914, %v9925, %v9921
        %v9927 = vlaneseq
        %v9928 = vshrl.u32 %v9927, 7
        %v9929 = vsub.s32 %v8916, %v9928
        %v9930 = vrot.slane %v8605, %v9929
        %v9931 = vsel %vm8921, %v9930, %v9926
        %v9932 = vlaneseq
        %v9933 = vshrl.u32 %v9932, 7
        %v9934 = vsub.s32 %v8923, %v9933
        %v9935 = vrot.slane %v8606, %v9934
        %v9936 = vsel %vm8928, %v9935, %v9931
        %v9937 = vlaneseq
        %v9938 = vshrl.u32 %v9937, 7
        %v9939 = vsub.s32 %v8904, %v9938
        %v9940 = vrot.slane %v8607, %v9939
        %v9941 = vlaneseq
        %v9942 = vshrl.u32 %v9941, 7
        %v9943 = vsub.s32 %v8909, %v9942
        %v9944 = vrot.slane %v8608, %v9943
        %v9945 = vsel %vm8914, %v9944, %v9940
        %v9946 = vlaneseq
        %v9947 = vshrl.u32 %v9946, 7
        %v9948 = vsub.s32 %v8916, %v9947
        %v9949 = vrot.slane %v8609, %v9948
        %v9950 = vsel %vm8921, %v9949, %v9945
        %v9951 = vlaneseq
        %v9952 = vshrl.u32 %v9951, 7
        %v9953 = vsub.s32 %v8923, %v9952
        %v9954 = vrot.slane %v8610, %v9953
        %v9955 = vsel %vm8928, %v9954, %v9950
        %v9956 = vlaneseq
        %v9957 = vshrl.u32 %v9956, 7
        %v9958 = vsub.s32 %v8904, %v9957
        %v9959 = vrot.slane %v8611, %v9958
        %v9960 = vlaneseq
        %v9961 = vshrl.u32 %v9960, 7
        %v9962 = vsub.s32 %v8909, %v9961
        %v9963 = vrot.slane %v8612, %v9962
        %v9964 = vsel %vm8914, %v9963, %v9959
        %v9965 = vlaneseq
        %v9966 = vshrl.u32 %v9965, 7
        %v9967 = vsub.s32 %v8916, %v9966
        %v9968 = vrot.slane %v8613, %v9967
        %v9969 = vsel %vm8921, %v9968, %v9964
        %v9970 = vlaneseq
        %v9971 = vshrl.u32 %v9970, 7
        %v9972 = vsub.s32 %v8923, %v9971
        %v9973 = vrot.slane %v8614, %v9972
        %v9974 = vsel %vm8928, %v9973, %v9969
        %v9975 = vlaneseq
        %v9976 = vshrl.u32 %v9975, 7
        %v9977 = vsub.s32 %v8904, %v9976
        %v9978 = vrot.slane %v8615, %v9977
        %v9979 = vlaneseq
        %v9980 = vshrl.u32 %v9979, 7
        %v9981 = vsub.s32 %v8909, %v9980
        %v9982 = vrot.slane %v8616, %v9981
        %v9983 = vsel %vm8914, %v9982, %v9978
        %v9984 = vlaneseq
        %v9985 = vshrl.u32 %v9984, 7
        %v9986 = vsub.s32 %v8916, %v9985
        %v9987 = vrot.slane %v8617, %v9986
        %v9988 = vsel %vm8921, %v9987, %v9983
        %v9989 = vlaneseq
        %v9990 = vshrl.u32 %v9989, 7
        %v9991 = vsub.s32 %v8923, %v9990
        %v9992 = vrot.slane %v8618, %v9991
        %v9993 = vsel %vm8928, %v9992, %v9988
        %v9994 = vlaneseq
        %v9995 = vshrl.u32 %v9994, 7
        %v9996 = vsub.s32 %v8904, %v9995
        %v9997 = vrot.slane %v8619, %v9996
        %v9998 = vlaneseq
        %v9999 = vshrl.u32 %v9998, 7
        %v10000 = vsub.s32 %v8909, %v9999
        %v10001 = vrot.slane %v8620, %v10000
        %v10002 = vsel %vm8914, %v10001, %v9997
        %v10003 = vlaneseq
        %v10004 = vshrl.u32 %v10003, 7
        %v10005 = vsub.s32 %v8916, %v10004
        %v10006 = vrot.slane %v8621, %v10005
        %v10007 = vsel %vm8921, %v10006, %v10002
        %v10008 = vlaneseq
        %v10009 = vshrl.u32 %v10008, 7
        %v10010 = vsub.s32 %v8923, %v10009
        %v10011 = vrot.slane %v8622, %v10010
        %v10012 = vsel %vm8928, %v10011, %v10007
        %v10013 = vlaneseq
        %v10014 = vshrl.u32 %v10013, 7
        %v10015 = vsub.s32 %v8904, %v10014
        %v10016 = vrot.slane %v8623, %v10015
        %v10017 = vlaneseq
        %v10018 = vshrl.u32 %v10017, 7
        %v10019 = vsub.s32 %v8909, %v10018
        %v10020 = vrot.slane %v8624, %v10019
        %v10021 = vsel %vm8914, %v10020, %v10016
        %v10022 = vlaneseq
        %v10023 = vshrl.u32 %v10022, 7
        %v10024 = vsub.s32 %v8916, %v10023
        %v10025 = vrot.slane %v8625, %v10024
        %v10026 = vsel %vm8921, %v10025, %v10021
        %v10027 = vlaneseq
        %v10028 = vshrl.u32 %v10027, 7
        %v10029 = vsub.s32 %v8923, %v10028
        %v10030 = vrot.slane %v8626, %v10029
        %v10031 = vsel %vm8928, %v10030, %v10026
        %v10032 = vlaneseq
        %v10033 = vshrl.u32 %v10032, 7
        %v10034 = vsub.s32 %v8904, %v10033
        %v10035 = vrot.slane %v8627, %v10034
        %v10036 = vlaneseq
        %v10037 = vshrl.u32 %v10036, 7
        %v10038 = vsub.s32 %v8909, %v10037
        %v10039 = vrot.slane %v8628, %v10038
        %v10040 = vsel %vm8914, %v10039, %v10035
        %v10041 = vlaneseq
        %v10042 = vshrl.u32 %v10041, 7
        %v10043 = vsub.s32 %v8916, %v10042
        %v10044 = vrot.slane %v8629, %v10043
        %v10045 = vsel %vm8921, %v10044, %v10040
        %v10046 = vlaneseq
        %v10047 = vshrl.u32 %v10046, 7
        %v10048 = vsub.s32 %v8923, %v10047
        %v10049 = vrot.slane %v8630, %v10048
        %v10050 = vsel %vm8928, %v10049, %v10045
        %v10051 = vlaneseq
        %v10052 = vshrl.u32 %v10051, 7
        %v10053 = vsub.s32 %v8904, %v10052
        %v10054 = vrot.slane %v8631, %v10053
        %v10055 = vlaneseq
        %v10056 = vshrl.u32 %v10055, 7
        %v10057 = vsub.s32 %v8909, %v10056
        %v10058 = vrot.slane %v8632, %v10057
        %v10059 = vsel %vm8914, %v10058, %v10054
        %v10060 = vlaneseq
        %v10061 = vshrl.u32 %v10060, 7
        %v10062 = vsub.s32 %v8916, %v10061
        %v10063 = vrot.slane %v8633, %v10062
        %v10064 = vsel %vm8921, %v10063, %v10059
        %v10065 = vlaneseq
        %v10066 = vshrl.u32 %v10065, 7
        %v10067 = vsub.s32 %v8923, %v10066
        %v10068 = vrot.slane %v8634, %v10067
        %v10069 = vsel %vm8928, %v10068, %v10064
        %v10070 = vlaneseq
        %v10071 = vshrl.u32 %v10070, 7
        %v10072 = vsub.s32 %v8904, %v10071
        %v10073 = vrot.slane %v8635, %v10072
        %v10074 = vlaneseq
        %v10075 = vshrl.u32 %v10074, 7
        %v10076 = vsub.s32 %v8909, %v10075
        %v10077 = vrot.slane %v8636, %v10076
        %v10078 = vsel %vm8914, %v10077, %v10073
        %v10079 = vlaneseq
        %v10080 = vshrl.u32 %v10079, 7
        %v10081 = vsub.s32 %v8916, %v10080
        %v10082 = vrot.slane %v8637, %v10081
        %v10083 = vsel %vm8921, %v10082, %v10078
        %v10084 = vlaneseq
        %v10085 = vshrl.u32 %v10084, 7
        %v10086 = vsub.s32 %v8923, %v10085
        %v10087 = vrot.slane %v8638, %v10086
        %v10088 = vsel %vm8928, %v10087, %v10083
        %v10089 = vlaneseq
        %v10090 = vshrl.u32 %v10089, 7
        %v10091 = vsub.s32 %v8904, %v10090
        %v10092 = vrot.slane %v8639, %v10091
        %v10093 = vlaneseq
        %v10094 = vshrl.u32 %v10093, 7
        %v10095 = vsub.s32 %v8909, %v10094
        %v10096 = vrot.slane %v8640, %v10095
        %v10097 = vsel %vm8914, %v10096, %v10092
        %v10098 = vlaneseq
        %v10099 = vshrl.u32 %v10098, 7
        %v10100 = vsub.s32 %v8916, %v10099
        %v10101 = vrot.slane %v8641, %v10100
        %v10102 = vsel %vm8921, %v10101, %v10097
        %v10103 = vlaneseq
        %v10104 = vshrl.u32 %v10103, 7
        %v10105 = vsub.s32 %v8923, %v10104
        %v10106 = vrot.slane %v8642, %v10105
        %v10107 = vsel %vm8928, %v10106, %v10102
        %v10108 = vlaneseq
        %v10109 = vshrl.u32 %v10108, 7
        %v10110 = vsub.s32 %v8904, %v10109
        %v10111 = vrot.slane %v8643, %v10110
        %v10112 = vlaneseq
        %v10113 = vshrl.u32 %v10112, 7
        %v10114 = vsub.s32 %v8909, %v10113
        %v10115 = vrot.slane %v8644, %v10114
        %v10116 = vsel %vm8914, %v10115, %v10111
        %v10117 = vlaneseq
        %v10118 = vshrl.u32 %v10117, 7
        %v10119 = vsub.s32 %v8916, %v10118
        %v10120 = vrot.slane %v8645, %v10119
        %v10121 = vsel %vm8921, %v10120, %v10116
        %v10122 = vlaneseq
        %v10123 = vshrl.u32 %v10122, 7
        %v10124 = vsub.s32 %v8923, %v10123
        %v10125 = vrot.slane %v8646, %v10124
        %v10126 = vsel %vm8928, %v10125, %v10121
        %vm10127 = vcmask 1041409
        %v10128 = vsel %vm10127, %v8948, %v8929
        %vm10129 = vcmask 1042434
        %v10130 = vsel %vm10129, %v8967, %v10128
        %vm10131 = vcmask 1043459
        %v10132 = vsel %vm10131, %v8986, %v10130
        %vm10133 = vcmask 1044484
        %v10134 = vsel %vm10133, %v9005, %v10132
        %vm10135 = vcmask 1045509
        %v10136 = vsel %vm10135, %v9024, %v10134
        %vm10137 = vcmask 1046534
        %v10138 = vsel %vm10137, %v9043, %v10136
        %vm10139 = vcmask 1047559
        %v10140 = vsel %vm10139, %v9062, %v10138
        %v10141 = vsel %vm10127, %v9100, %v9081
        %v10142 = vsel %vm10129, %v9119, %v10141
        %v10143 = vsel %vm10131, %v9138, %v10142
        %v10144 = vsel %vm10133, %v9157, %v10143
        %v10145 = vsel %vm10135, %v9176, %v10144
        %v10146 = vsel %vm10137, %v9195, %v10145
        %v10147 = vsel %vm10139, %v9214, %v10146
        %v10148 = vsel %vm10127, %v9252, %v9233
        %v10149 = vsel %vm10129, %v9271, %v10148
        %v10150 = vsel %vm10131, %v9290, %v10149
        %v10151 = vsel %vm10133, %v9309, %v10150
        %v10152 = vsel %vm10135, %v9328, %v10151
        %v10153 = vsel %vm10137, %v9347, %v10152
        %v10154 = vsel %vm10139, %v9366, %v10153
        %v10155 = vsel %vm10127, %v9404, %v9385
        %v10156 = vsel %vm10129, %v9423, %v10155
        %v10157 = vsel %vm10131, %v9442, %v10156
        %v10158 = vsel %vm10133, %v9461, %v10157
        %v10159 = vsel %vm10135, %v9480, %v10158
        %v10160 = vsel %vm10137, %v9499, %v10159
        %v10161 = vsel %vm10139, %v9518, %v10160
        %v10162 = vsel %vm10127, %v9556, %v9537
        %v10163 = vsel %vm10129, %v9575, %v10162
        %v10164 = vsel %vm10131, %v9594, %v10163
        %v10165 = vsel %vm10133, %v9613, %v10164
        %v10166 = vsel %vm10135, %v9632, %v10165
        %v10167 = vsel %vm10137, %v9651, %v10166
        %v10168 = vsel %vm10139, %v9670, %v10167
        %v10169 = vsel %vm10127, %v9708, %v9689
        %v10170 = vsel %vm10129, %v9727, %v10169
        %v10171 = vsel %vm10131, %v9746, %v10170
        %v10172 = vsel %vm10133, %v9765, %v10171
        %v10173 = vsel %vm10135, %v9784, %v10172
        %v10174 = vsel %vm10137, %v9803, %v10173
        %v10175 = vsel %vm10139, %v9822, %v10174
        %v10176 = vsel %vm10127, %v9860, %v9841
        %v10177 = vsel %vm10129, %v9879, %v10176
        %v10178 = vsel %vm10131, %v9898, %v10177
        %v10179 = vsel %vm10133, %v9917, %v10178
        %v10180 = vsel %vm10135, %v9936, %v10179
        %v10181 = vsel %vm10137, %v9955, %v10180
        %v10182 = vsel %vm10139, %v9974, %v10181
        %v10183 = vsel %vm10127, %v10012, %v9993
        %v10184 = vsel %vm10129, %v10031, %v10183
        %v10185 = vsel %vm10131, %v10050, %v10184
        %v10186 = vsel %vm10133, %v10069, %v10185
        %v10187 = vsel %vm10135, %v10088, %v10186
        %v10188 = vsel %vm10137, %v10107, %v10187
        %v10189 = vsel %vm10139, %v10126, %v10188
        %v10198 = vadd.f32 %v2069, %v10140
        %v10199 = vadd.f32 %v2070, %v10147
        %v10200 = vadd.f32 %v2071, %v10154
        %v10201 = vadd.f32 %v2072, %v10161
        %v10202 = vadd.f32 %v2073, %v10168
        %v10203 = vadd.f32 %v2074, %v10175
        %v10204 = vadd.f32 %v2075, %v10182
        %v10205 = vadd.f32 %v2076, %v10189
        %10206 = vst.msk [vmem:[%s11] sm:$0xff] %vm723, %v10198
        %10207 = vst.msk [vmem:[%s11 + $0x8] sm:$0xff] %vm723, %v10199
        %10208 = vst.msk [vmem:[%s11 + $0x10] sm:$0xff] %vm723, %v10200
        %10209 = vst.msk [vmem:[%s11 + $0x18] sm:$0xff] %vm723, %v10201
        %10210 = vst.msk [vmem:[%s11 + $0x20] sm:$0xff] %vm723, %v10202
        %10211 = vst.msk [vmem:[%s11 + $0x28] sm:$0xff] %vm723, %v10203
        %10212 = vst.msk [vmem:[%s11 + $0x30] sm:$0xff] %vm723, %v10204
        %10213 = vst.msk [vmem:[%s11 + $0x38] sm:$0xff] %vm723, %v10205
        // Predicated region
        $region81: #{tpu_custom_call.1} parent=63 // pred_check
          %p10214 = pneg %p288
        $region82: #{tpu_custom_call.1} parent=63 // pred_check_branch
          %10216 = sbr.rel (%p10214) target = $region84
        $region83: #{tpu_custom_call.1} parent=63 // pred_region
          _
        $region84: #{tpu_custom_call.1} parent=63 // pred_fallthru
          _
        // Predicated region
        $region85: #{tpu_custom_call.1} parent=63 // pred_check
          %p10217 = pneg %p288
        $region86: #{tpu_custom_call.1} parent=63 // pred_check_branch
          %10219 = sbr.rel (%p10217) target = $region88
        $region87: #{tpu_custom_call.1} parent=63 // pred_region
          _
        $region88: #{tpu_custom_call.1} parent=63 // pred_fallthru
          _
      $region64: #{tpu_custom_call.1} parent=5 // pred_fallthru
        _
      %p10220 = scmp.le.s32.totalorder 2, %s19
      // Predicated region
      $region89: #{tpu_custom_call.1} parent=5 // pred_check
        %p10221 = pneg %p10220
      $region90: #{tpu_custom_call.1} parent=5 // pred_check_branch
        %10223 = sbr.rel (%p10221) target = $region92
      $region91: #{tpu_custom_call.1} parent=5 // pred_region
        %s10224 = ssub.s32 %s19, 2
      $region92: #{tpu_custom_call.1} parent=5 // pred_fallthru
        _
    $region6: #{tpu_custom_call.1} parent=1 // loop_footer
      %s23 = sadd.s32 1, %s19
    $region7: #{tpu_custom_call.1} parent=1 // loop_footer_branch
      %18 = sbr.rel target = $region3
    $region8: #{tpu_custom_call.1} parent=1 // loop_exit
      _
    %10225 = vsyncpa [#allocation3], 1
    %s10226 = scalar_lea.sflag [#allocation3], 1
    %10227 = vsyncpa %s10226, 1
    %10228 = vsyncpa [#allocation5], 1

</llo_original>
